<compile_context>
chip_gen: v6e
topology: v6e:2x2x1
jax: 0.10.0
libtpu: 0.0.40
codegen_flags: <defaults>
</compile_context>

<pallas_src>
import functools
import math

import jax
import jax.numpy as jnp
from jax.experimental import pallas as pl
from jax.experimental.pallas import tpu as pltpu


def _round_up(v, m):
    return ((v + m - 1) // m) * m


# -----------------------------------------------------------------------------
# Pallas kernels
# -----------------------------------------------------------------------------
def _mm_bias_relu_kernel(x_ref, w_ref, b_ref, o_ref):
    # (tm, K) @ (K, N) on the MXU (bf16 in, f32 accumulate); bias + ReLU in f32.
    acc = jnp.dot(x_ref[...], w_ref[...], preferred_element_type=jnp.float32)
    acc = jnp.maximum(acc + b_ref[...], 0.0)
    o_ref[...] = acc.astype(o_ref.dtype)


def _fc_head_kernel(x_ref, w4_ref, b4_ref, w5_ref, b5_ref, o_ref):
    # Fused fc4 (+ReLU) and fc5: all weights VMEM-resident, one launch.
    h = jnp.dot(x_ref[...], w4_ref[...], preferred_element_type=jnp.float32)
    h = jnp.maximum(h + b4_ref[...], 0.0).astype(jnp.bfloat16)
    q = jnp.dot(h, w5_ref[...], preferred_element_type=jnp.float32)
    o_ref[...] = (q + b5_ref[...]).astype(o_ref.dtype)


_CONV_COMPILER_PARAMS = pltpu.CompilerParams(
    dimension_semantics=("parallel",),
    vmem_limit_bytes=32 << 20,  # stay well under v7x's 64 MiB physical VMEM
)


def matmul_bias_relu(cols, w_pad, b_pad, *, out_channels, tm=None):
    """relu(cols @ w + b). w_pad: pre-padded bf16 (Kp, Np); b_pad: f32 (1, Np)."""
    M, K = cols.shape
    Kp, Np = w_pad.shape
    if tm is None:
        Mp = _round_up(M, 8)
        tm = Mp
    else:
        Mp = _round_up(M, tm)
    x = cols.astype(jnp.bfloat16)
    if (Mp, Kp) != (M, K):
        x = jnp.zeros((Mp, Kp), jnp.bfloat16).at[:M, :K].set(x)

    out = pl.pallas_call(
        _mm_bias_relu_kernel,
        out_shape=jax.ShapeDtypeStruct((Mp, Np), jnp.bfloat16),
        grid_spec=pltpu.PrefetchScalarGridSpec(
            num_scalar_prefetch=0,
            grid=(Mp // tm,),
            in_specs=[
                pl.BlockSpec((tm, Kp), lambda i: (i, 0)),
                pl.BlockSpec((Kp, Np), lambda i: (0, 0)),
                pl.BlockSpec((1, Np), lambda i: (0, 0)),
            ],
            out_specs=pl.BlockSpec((tm, Np), lambda i: (i, 0)),
        ),
        compiler_params=_CONV_COMPILER_PARAMS,
    )(x, w_pad, b_pad)
    return out[:M, :out_channels]


def fc_head(x_flat, w4p, b4p, w5p, b5p):
    """Fused relu(x @ W4 + b4) @ W5 + b5. Returns (B, 128) f32 (padded actions)."""
    B, K = x_flat.shape
    Kp, H = w4p.shape          # (3200, 512)
    _, Np = w5p.shape          # (512, 128)
    Mp = _round_up(max(B, 8), 8)
    xp = jnp.zeros((Mp, Kp), jnp.bfloat16).at[:B, :K].set(x_flat.astype(jnp.bfloat16))

    out = pl.pallas_call(
        _fc_head_kernel,
        out_shape=jax.ShapeDtypeStruct((Mp, Np), jnp.float32),
        grid_spec=pltpu.PrefetchScalarGridSpec(
            num_scalar_prefetch=0,
            grid=(1,),
            in_specs=[
                pl.BlockSpec((Mp, Kp), lambda i: (0, 0)),
                pl.BlockSpec((Kp, H), lambda i: (0, 0)),
                pl.BlockSpec((1, H), lambda i: (0, 0)),
                pl.BlockSpec((H, Np), lambda i: (0, 0)),
                pl.BlockSpec((1, Np), lambda i: (0, 0)),
            ],
            out_specs=pl.BlockSpec((Mp, Np), lambda i: (0, 0)),
        ),
        compiler_params=pltpu.CompilerParams(
            dimension_semantics=("arbitrary",),
            vmem_limit_bytes=32 << 20,
        ),
    )(xp, w4p, b4p, w5p, b5p)
    return out[:B]


# -----------------------------------------------------------------------------
# im2col glue (plain JAX, runs fused under jit): tap-major column order.
# column index = (i*KW + j)*C + c  -- conv weights are permuted at init to match.
# -----------------------------------------------------------------------------
def extract_patches(x_nhwc, kh, kw, stride):
    B, H, W, C = x_nhwc.shape
    oh = (H - kh) // stride + 1
    ow = (W - kw) // stride + 1
    taps = []
    for i in range(kh):
        for j in range(kw):
            taps.append(
                x_nhwc[:, i:i + stride * (oh - 1) + 1:stride,
                          j:j + stride * (ow - 1) + 1:stride, :])
    cols = jnp.concatenate(taps, axis=-1)            # (B, oh, ow, kh*kw*C)
    return cols.reshape(B * oh * ow, kh * kw * C), oh, ow


# -----------------------------------------------------------------------------
# Parameter init (PyTorch layout / bounds) + one-time prep into kernel layout
# -----------------------------------------------------------------------------
def _init_conv(key, out_c, in_c, k):
    fan_in = in_c * k * k
    bound = 1.0 / math.sqrt(fan_in)
    kw_, kb = jax.random.split(key)
    w = jax.random.uniform(kw_, (out_c, in_c, k, k), jnp.float32, -bound, bound)
    b = jax.random.uniform(kb, (out_c,), jnp.float32, -bound, bound)
    return w, b


def _init_linear(key, in_f, out_f):
    bound = 1.0 / math.sqrt(in_f)
    kw_, kb = jax.random.split(key)
    w = jax.random.uniform(kw_, (out_f, in_f), jnp.float32, -bound, bound)
    b = jax.random.uniform(kb, (out_f,), jnp.float32, -bound, bound)
    return w, b


def init_dqn_params(key, in_channels=4, num_actions=18):
    k1, k2, k3, k4, k5 = jax.random.split(key, 5)
    return {
        "conv1": _init_conv(k1, 32, in_channels, 8),
        "conv2": _init_conv(k2, 64, 32, 4),
        "conv3": _init_conv(k3, 64, 64, 3),
        "fc4": _init_linear(k4, 7 * 7 * 64, 512),
        "fc5": _init_linear(k5, 512, num_actions),
    }


def _prep_conv(w, b):
    O, C, KH, KW = w.shape
    K = KH * KW * C
    Kp = _round_up(K, 128)
    Np = _round_up(O, 128)
    # row index = (i*KW + j)*C + c  (matches extract_patches column order)
    w2d = jnp.transpose(w, (2, 3, 1, 0)).reshape(K, O)
    wp = jnp.zeros((Kp, Np), jnp.bfloat16).at[:K, :O].set(w2d.astype(jnp.bfloat16))
    bp = jnp.zeros((1, Np), jnp.float32).at[0, :O].set(b)
    return wp, bp


def prepare_params(raw):
    """One-time: permute/transpose/pad/cast weights into the kernels' layout."""
    prepared = {
        "conv1": _prep_conv(*raw["conv1"]),
        "conv2": _prep_conv(*raw["conv2"]),
        "conv3": _prep_conv(*raw["conv3"]),
    }

    w4, b4 = raw["fc4"]                      # (512, 3136), columns in (c, h, w) order
    H4, K4 = w4.shape
    # Permute columns to the NHWC (h, w, c) flatten order produced by the conv stack.
    w4 = w4.reshape(H4, 64, 7, 7)                            # (n, c, h, w)
    w4 = jnp.transpose(w4, (2, 3, 1, 0)).reshape(K4, H4)     # row = h*7*64 + w*64 + c
    K4p = _round_up(K4, 128)                                  # 3200
    w4p = jnp.zeros((K4p, H4), jnp.bfloat16).at[:K4, :].set(w4.astype(jnp.bfloat16))
    b4p = b4.reshape(1, H4).astype(jnp.float32)

    w5, b5 = raw["fc5"]                      # (A, 512)
    A = w5.shape[0]
    Np = _round_up(A, 128)
    w5p = jnp.zeros((512, Np), jnp.bfloat16).at[:, :A].set(w5.T.astype(jnp.bfloat16))
    b5p = jnp.zeros((1, Np), jnp.float32).at[0, :A].set(b5)

    prepared["fc4"] = (w4p, b4p)
    prepared["fc5"] = (w5p, b5p)
    return prepared


# -----------------------------------------------------------------------------
# Forward pass (matches DQN.forward)
# -----------------------------------------------------------------------------
@functools.partial(jax.jit, static_argnames=("num_actions",))
def dqn_forward(prepared, x_nchw, *, num_actions=18):
    B = x_nchw.shape[0]
    x = jnp.transpose(x_nchw, (0, 2, 3, 1)).astype(jnp.bfloat16)   # NCHW -> NHWC

    w1, b1 = prepared["conv1"]
    w2, b2 = prepared["conv2"]
    w3, b3 = prepared["conv3"]
    w4, b4 = prepared["fc4"]
    w5, b5 = prepared["fc5"]

    cols, oh, ow = extract_patches(x, 8, 8, 4)                     # (B*400, 256)
    h = matmul_bias_relu(cols, w1, b1, out_channels=32, tm=400)    # grid = B
    h = h.reshape(B, oh, ow, 32)                                   # (B, 20, 20, 32)

    cols, oh, ow = extract_patches(h, 4, 4, 2)                     # (B*81, 512)
    h = matmul_bias_relu(cols, w2, b2, out_channels=64)
    h = h.reshape(B, oh, ow, 64)                                   # (B, 9, 9, 64)

    cols, oh, ow = extract_patches(h, 3, 3, 1)                     # (B*49, 576)
    h = matmul_bias_relu(cols, w3, b3, out_channels=64)            # (B*49, 64)

    x_flat = h.reshape(B, oh * ow * 64)                            # (h, w, c) flatten
    q = fc_head(x_flat, w4, b4, w5, b5)                            # (B, 128) f32
    return q[:, :num_actions]


# -----------------------------------------------------------------------------
# Pure-JAX f32 reference (exact PyTorch semantics) for correctness checking
# -----------------------------------------------------------------------------
def dqn_reference(raw, x_nchw):
    def conv(h, w, b, stride):
        y = jax.lax.conv_general_dilated(
            h, w, window_strides=(stride, stride), padding="VALID",
            dimension_numbers=("NCHW", "OIHW", "NCHW"))
        return jax.nn.relu(y + b[None, :, None, None])

    w1, b1 = raw["conv1"]
    w2, b2 = raw["conv2"]
    w3, b3 = raw["conv3"]
    w4, b4 = raw["fc4"]
    w5, b5 = raw["fc5"]
    h = conv(x_nchw, w1, b1, 4)
    h = conv(h, w2, b2, 2)
    h = conv(h, w3, b3, 1)
    h = h.reshape(x_nchw.shape[0], -1)        # PyTorch .view: (C, H, W) order
    h = jax.nn.relu(h @ w4.T + b4)
    return h @ w5.T + b5


if __name__ == "__main__":
    key = jax.random.PRNGKey(0)
    k_params, k_input = jax.random.split(key)

    num_actions = 18
    raw_params = init_dqn_params(k_params, in_channels=4, num_actions=num_actions)
    prepared = prepare_params(raw_params)     # one-time weight prep, hoisted out of forward

    # fc4 = Linear(7*7*64, 512) forces 84x84 spatial input (as in Atari DQN).
    x = jax.random.normal(k_input, (2, 4, 84, 84), jnp.float32)

    q_values = dqn_forward(prepared, x, num_actions=num_actions)
    q_values = jax.block_until_ready(q_values)
    assert q_values.shape == (2, num_actions), q_values.shape
    assert bool(jnp.all(jnp.isfinite(q_values)))

    # Correctness vs the f32 reference (tolerance accounts for bf16 weights/activations).
    q_ref = dqn_reference(raw_params, x)
    err = float(jnp.max(jnp.abs(q_values - q_ref)))
    scale = max(1.0, float(jnp.max(jnp.abs(q_ref))))
    assert err <= 0.05 * scale + 0.02, (err, scale)

    print("KERNEL_OK")
</pallas_src>

<mosaic_0001>
module attributes {stable_mosaic.version = 11 : i64} {
  func.func @_mm_bias_relu_kernel(%arg0: i32, %arg1: memref<400x256xbf16, #tpu.memory_space<vmem>>, %arg2: memref<256x128xbf16, #tpu.memory_space<vmem>>, %arg3: memref<1x128xf32, #tpu.memory_space<vmem>>, %arg4: memref<400x128xbf16, #tpu.memory_space<vmem>>) attributes {dimension_semantics = [#tpu.dimension_semantics<parallel>], iteration_bounds = array<i64: 2>, scalar_prefetch = 0 : i64, scratch_operands = 0 : i64, tpu.core_type = #tpu.core_type<tc>, window_params = [{transform_indices = @transform_0, window_bounds = array<i64: 400, 256>}, {pipeline_mode = #tpu.pipeline_mode<synchronous>, transform_indices = @transform_1, window_bounds = array<i64: 256, 128>}, {pipeline_mode = #tpu.pipeline_mode<synchronous>, transform_indices = @transform_2, window_bounds = array<i64: 1, 128>}, {transform_indices = @transform_3, window_bounds = array<i64: 400, 128>}]} {
    %c0 = arith.constant 0 : index
    %c0_0 = arith.constant 0 : index
    %0 = vector.load %arg1[%c0, %c0_0] : memref<400x256xbf16, #tpu.memory_space<vmem>>, vector<400x256xbf16>
    %c0_1 = arith.constant 0 : index
    %c0_2 = arith.constant 0 : index
    %1 = vector.load %arg2[%c0_1, %c0_2] : memref<256x128xbf16, #tpu.memory_space<vmem>>, vector<256x128xbf16>
    %cst = arith.constant dense<0.000000e+00> : vector<400x128xf32>
    %2 = tpu.matmul %0, %1, %cst {dimension_numbers = #tpu.dot_dimension_numbers<[1], [0], [0], [1], [0, 0, 1, 1], [], []>} : vector<400x256xbf16>, vector<256x128xbf16>, vector<400x128xf32> -> vector<400x128xf32>
    %c0_3 = arith.constant 0 : index
    %c0_4 = arith.constant 0 : index
    %3 = vector.load %arg3[%c0_3, %c0_4] : memref<1x128xf32, #tpu.memory_space<vmem>>, vector<1x128xf32>
    %4 = vector.broadcast %3 : vector<1x128xf32> to vector<400x128xf32>
    %5 = arith.addf %2, %4 : vector<400x128xf32>
    %cst_5 = arith.constant 0.000000e+00 : f32
    %6 = vector.broadcast %cst_5 : f32 to vector<400x128xf32>
    %7 = arith.maximumf %5, %6 : vector<400x128xf32>
    %8 = arith.truncf %7 : vector<400x128xf32> to vector<400x128xbf16>
    %c0_6 = arith.constant 0 : index
    %c0_7 = arith.constant 0 : index
    %9 = vector.load %arg4[%c0_6, %c0_7] : memref<400x128xbf16, #tpu.memory_space<vmem>>, vector<400x128xbf16>
    tpu.vector_store %arg4[%c0_6, %c0_7], %8 {strides = array<i32>} : memref<400x128xbf16, #tpu.memory_space<vmem>>, vector<400x128xbf16>,
    return
  }
  func.func @transform_0(%arg0: i32) -> (i32, i32) {
    %c0_i32 = arith.constant 0 : i32
    %c0_i32_0 = arith.constant 0 : i32
    return %arg0, %c0_i32 : i32, i32
  }
  func.func @transform_1(%arg0: i32) -> (i32, i32) {
    %c0_i32 = arith.constant 0 : i32
    %c0_i32_0 = arith.constant 0 : i32
    %c0_i32_1 = arith.constant 0 : i32
    return %c0_i32, %c0_i32_0 : i32, i32
  }
  func.func @transform_2(%arg0: i32) -> (i32, i32) {
    %c0_i32 = arith.constant 0 : i32
    %c0_i32_0 = arith.constant 0 : i32
    %c0_i32_1 = arith.constant 0 : i32
    return %c0_i32, %c0_i32_0 : i32, i32
  }
  func.func @transform_3(%arg0: i32) -> (i32, i32) {
    %c0_i32 = arith.constant 0 : i32
    %c0_i32_0 = arith.constant 0 : i32
    return %arg0, %c0_i32 : i32, i32
  }
}

module attributes {stable_mosaic.version = 11 : i64} {
  func.func @_mm_bias_relu_kernel(%arg0: i32, %arg1: memref<168x512xbf16, #tpu.memory_space<vmem>>, %arg2: memref<512x128xbf16, #tpu.memory_space<vmem>>, %arg3: memref<1x128xf32, #tpu.memory_space<vmem>>, %arg4: memref<168x128xbf16, #tpu.memory_space<vmem>>) attributes {dimension_semantics = [#tpu.dimension_semantics<parallel>], iteration_bounds = array<i64: 1>, scalar_prefetch = 0 : i64, scratch_operands = 0 : i64, tpu.core_type = #tpu.core_type<tc>, window_params = [{transform_indices = @transform_0, window_bounds = array<i64: 168, 512>}, {pipeline_mode = #tpu.pipeline_mode<synchronous>, transform_indices = @transform_1, window_bounds = array<i64: 512, 128>}, {pipeline_mode = #tpu.pipeline_mode<synchronous>, transform_indices = @transform_2, window_bounds = array<i64: 1, 128>}, {transform_indices = @transform_3, window_bounds = array<i64: 168, 128>}]} {
    %c0 = arith.constant 0 : index
    %c0_0 = arith.constant 0 : index
    %0 = vector.load %arg1[%c0, %c0_0] : memref<168x512xbf16, #tpu.memory_space<vmem>>, vector<168x512xbf16>
    %c0_1 = arith.constant 0 : index
    %c0_2 = arith.constant 0 : index
    %1 = vector.load %arg2[%c0_1, %c0_2] : memref<512x128xbf16, #tpu.memory_space<vmem>>, vector<512x128xbf16>
    %cst = arith.constant dense<0.000000e+00> : vector<168x128xf32>
    %2 = tpu.matmul %0, %1, %cst {dimension_numbers = #tpu.dot_dimension_numbers<[1], [0], [0], [1], [0, 0, 1, 1], [], []>} : vector<168x512xbf16>, vector<512x128xbf16>, vector<168x128xf32> -> vector<168x128xf32>
    %c0_3 = arith.constant 0 : index
    %c0_4 = arith.constant 0 : index
    %3 = vector.load %arg3[%c0_3, %c0_4] : memref<1x128xf32, #tpu.memory_space<vmem>>, vector<1x128xf32>
    %4 = vector.broadcast %3 : vector<1x128xf32> to vector<168x128xf32>
    %5 = arith.addf %2, %4 : vector<168x128xf32>
    %cst_5 = arith.constant 0.000000e+00 : f32
    %6 = vector.broadcast %cst_5 : f32 to vector<168x128xf32>
    %7 = arith.maximumf %5, %6 : vector<168x128xf32>
    %8 = arith.truncf %7 : vector<168x128xf32> to vector<168x128xbf16>
    %c0_6 = arith.constant 0 : index
    %c0_7 = arith.constant 0 : index
    %9 = vector.load %arg4[%c0_6, %c0_7] : memref<168x128xbf16, #tpu.memory_space<vmem>>, vector<168x128xbf16>
    tpu.vector_store %arg4[%c0_6, %c0_7], %8 {strides = array<i32>} : memref<168x128xbf16, #tpu.memory_space<vmem>>, vector<168x128xbf16>,
    return
  }
  func.func @transform_0(%arg0: i32) -> (i32, i32) {
    %c0_i32 = arith.constant 0 : i32
    %c0_i32_0 = arith.constant 0 : i32
    return %arg0, %c0_i32 : i32, i32
  }
  func.func @transform_1(%arg0: i32) -> (i32, i32) {
    %c0_i32 = arith.constant 0 : i32
    %c0_i32_0 = arith.constant 0 : i32
    %c0_i32_1 = arith.constant 0 : i32
    return %c0_i32, %c0_i32_0 : i32, i32
  }
  func.func @transform_2(%arg0: i32) -> (i32, i32) {
    %c0_i32 = arith.constant 0 : i32
    %c0_i32_0 = arith.constant 0 : i32
    %c0_i32_1 = arith.constant 0 : i32
    return %c0_i32, %c0_i32_0 : i32, i32
  }
  func.func @transform_3(%arg0: i32) -> (i32, i32) {
    %c0_i32 = arith.constant 0 : i32
    %c0_i32_0 = arith.constant 0 : i32
    return %arg0, %c0_i32 : i32, i32
  }
}

module attributes {stable_mosaic.version = 11 : i64} {
  func.func @_mm_bias_relu_kernel(%arg0: i32, %arg1: memref<104x640xbf16, #tpu.memory_space<vmem>>, %arg2: memref<640x128xbf16, #tpu.memory_space<vmem>>, %arg3: memref<1x128xf32, #tpu.memory_space<vmem>>, %arg4: memref<104x128xbf16, #tpu.memory_space<vmem>>) attributes {dimension_semantics = [#tpu.dimension_semantics<parallel>], iteration_bounds = array<i64: 1>, scalar_prefetch = 0 : i64, scratch_operands = 0 : i64, tpu.core_type = #tpu.core_type<tc>, window_params = [{transform_indices = @transform_0, window_bounds = array<i64: 104, 640>}, {pipeline_mode = #tpu.pipeline_mode<synchronous>, transform_indices = @transform_1, window_bounds = array<i64: 640, 128>}, {pipeline_mode = #tpu.pipeline_mode<synchronous>, transform_indices = @transform_2, window_bounds = array<i64: 1, 128>}, {transform_indices = @transform_3, window_bounds = array<i64: 104, 128>}]} {
    %c0 = arith.constant 0 : index
    %c0_0 = arith.constant 0 : index
    %0 = vector.load %arg1[%c0, %c0_0] : memref<104x640xbf16, #tpu.memory_space<vmem>>, vector<104x640xbf16>
    %c0_1 = arith.constant 0 : index
    %c0_2 = arith.constant 0 : index
    %1 = vector.load %arg2[%c0_1, %c0_2] : memref<640x128xbf16, #tpu.memory_space<vmem>>, vector<640x128xbf16>
    %cst = arith.constant dense<0.000000e+00> : vector<104x128xf32>
    %2 = tpu.matmul %0, %1, %cst {dimension_numbers = #tpu.dot_dimension_numbers<[1], [0], [0], [1], [0, 0, 1, 1], [], []>} : vector<104x640xbf16>, vector<640x128xbf16>, vector<104x128xf32> -> vector<104x128xf32>
    %c0_3 = arith.constant 0 : index
    %c0_4 = arith.constant 0 : index
    %3 = vector.load %arg3[%c0_3, %c0_4] : memref<1x128xf32, #tpu.memory_space<vmem>>, vector<1x128xf32>
    %4 = vector.broadcast %3 : vector<1x128xf32> to vector<104x128xf32>
    %5 = arith.addf %2, %4 : vector<104x128xf32>
    %cst_5 = arith.constant 0.000000e+00 : f32
    %6 = vector.broadcast %cst_5 : f32 to vector<104x128xf32>
    %7 = arith.maximumf %5, %6 : vector<104x128xf32>
    %8 = arith.truncf %7 : vector<104x128xf32> to vector<104x128xbf16>
    %c0_6 = arith.constant 0 : index
    %c0_7 = arith.constant 0 : index
    %9 = vector.load %arg4[%c0_6, %c0_7] : memref<104x128xbf16, #tpu.memory_space<vmem>>, vector<104x128xbf16>
    tpu.vector_store %arg4[%c0_6, %c0_7], %8 {strides = array<i32>} : memref<104x128xbf16, #tpu.memory_space<vmem>>, vector<104x128xbf16>,
    return
  }
  func.func @transform_0(%arg0: i32) -> (i32, i32) {
    %c0_i32 = arith.constant 0 : i32
    %c0_i32_0 = arith.constant 0 : i32
    return %arg0, %c0_i32 : i32, i32
  }
  func.func @transform_1(%arg0: i32) -> (i32, i32) {
    %c0_i32 = arith.constant 0 : i32
    %c0_i32_0 = arith.constant 0 : i32
    %c0_i32_1 = arith.constant 0 : i32
    return %c0_i32, %c0_i32_0 : i32, i32
  }
  func.func @transform_2(%arg0: i32) -> (i32, i32) {
    %c0_i32 = arith.constant 0 : i32
    %c0_i32_0 = arith.constant 0 : i32
    %c0_i32_1 = arith.constant 0 : i32
    return %c0_i32, %c0_i32_0 : i32, i32
  }
  func.func @transform_3(%arg0: i32) -> (i32, i32) {
    %c0_i32 = arith.constant 0 : i32
    %c0_i32_0 = arith.constant 0 : i32
    return %arg0, %c0_i32 : i32, i32
  }
}

module attributes {stable_mosaic.version = 11 : i64} {
  func.func @_fc_head_kernel(%arg0: i32, %arg1: memref<8x3200xbf16, #tpu.memory_space<vmem>>, %arg2: memref<3200x512xbf16, #tpu.memory_space<vmem>>, %arg3: memref<1x512xf32, #tpu.memory_space<vmem>>, %arg4: memref<512x128xbf16, #tpu.memory_space<vmem>>, %arg5: memref<1x128xf32, #tpu.memory_space<vmem>>, %arg6: memref<8x128xf32, #tpu.memory_space<vmem>>) attributes {dimension_semantics = [#tpu.dimension_semantics<arbitrary>], iteration_bounds = array<i64: 1>, scalar_prefetch = 0 : i64, scratch_operands = 0 : i64, tpu.core_type = #tpu.core_type<tc>, window_params = [{pipeline_mode = #tpu.pipeline_mode<synchronous>, transform_indices = @transform_0, window_bounds = array<i64: 8, 3200>}, {pipeline_mode = #tpu.pipeline_mode<synchronous>, transform_indices = @transform_1, window_bounds = array<i64: 3200, 512>}, {pipeline_mode = #tpu.pipeline_mode<synchronous>, transform_indices = @transform_2, window_bounds = array<i64: 1, 512>}, {pipeline_mode = #tpu.pipeline_mode<synchronous>, transform_indices = @transform_3, window_bounds = array<i64: 512, 128>}, {pipeline_mode = #tpu.pipeline_mode<synchronous>, transform_indices = @transform_4, window_bounds = array<i64: 1, 128>}, {pipeline_mode = #tpu.pipeline_mode<synchronous>, transform_indices = @transform_5, window_bounds = array<i64: 8, 128>}]} {
    %c0 = arith.constant 0 : index
    %c0_0 = arith.constant 0 : index
    %0 = vector.load %arg1[%c0, %c0_0] : memref<8x3200xbf16, #tpu.memory_space<vmem>>, vector<8x3200xbf16>
    %c0_1 = arith.constant 0 : index
    %c0_2 = arith.constant 0 : index
    %1 = vector.load %arg2[%c0_1, %c0_2] : memref<3200x512xbf16, #tpu.memory_space<vmem>>, vector<3200x512xbf16>
    %cst = arith.constant dense<0.000000e+00> : vector<8x512xf32>
    %2 = tpu.matmul %0, %1, %cst {dimension_numbers = #tpu.dot_dimension_numbers<[1], [0], [0], [1], [0, 0, 1, 1], [], []>} : vector<8x3200xbf16>, vector<3200x512xbf16>, vector<8x512xf32> -> vector<8x512xf32>
    %c0_3 = arith.constant 0 : index
    %c0_4 = arith.constant 0 : index
    %3 = vector.load %arg3[%c0_3, %c0_4] : memref<1x512xf32, #tpu.memory_space<vmem>>, vector<1x512xf32>
    %4 = vector.broadcast %3 : vector<1x512xf32> to vector<8x512xf32>
    %5 = arith.addf %2, %4 : vector<8x512xf32>
    %cst_5 = arith.constant 0.000000e+00 : f32
    %6 = vector.broadcast %cst_5 : f32 to vector<8x512xf32>
    %7 = arith.maximumf %5, %6 : vector<8x512xf32>
    %8 = arith.truncf %7 : vector<8x512xf32> to vector<8x512xbf16>
    %c0_6 = arith.constant 0 : index
    %c0_7 = arith.constant 0 : index
    %9 = vector.load %arg4[%c0_6, %c0_7] : memref<512x128xbf16, #tpu.memory_space<vmem>>, vector<512x128xbf16>
    %cst_8 = arith.constant dense<0.000000e+00> : vector<8x128xf32>
    %10 = tpu.matmul %8, %9, %cst_8 {dimension_numbers = #tpu.dot_dimension_numbers<[1], [0], [0], [1], [0, 0, 1, 1], [], []>} : vector<8x512xbf16>, vector<512x128xbf16>, vector<8x128xf32> -> vector<8x128xf32>
    %c0_9 = arith.constant 0 : index
    %c0_10 = arith.constant 0 : index
    %11 = vector.load %arg5[%c0_9, %c0_10] : memref<1x128xf32, #tpu.memory_space<vmem>>, vector<1x128xf32>
    %12 = vector.broadcast %11 : vector<1x128xf32> to vector<8x128xf32>
    %13 = arith.addf %10, %12 : vector<8x128xf32>
    %c0_11 = arith.constant 0 : index
    %c0_12 = arith.constant 0 : index
    %14 = vector.load %arg6[%c0_11, %c0_12] : memref<8x128xf32, #tpu.memory_space<vmem>>, vector<8x128xf32>
    tpu.vector_store %arg6[%c0_11, %c0_12], %13 {strides = array<i32>} : memref<8x128xf32, #tpu.memory_space<vmem>>, vector<8x128xf32>,
    return
  }
  func.func @transform_0(%arg0: i32) -> (i32, i32) {
    %c0_i32 = arith.constant 0 : i32
    %c0_i32_0 = arith.constant 0 : i32
    %c0_i32_1 = arith.constant 0 : i32
    return %c0_i32, %c0_i32_0 : i32, i32
  }
  func.func @transform_1(%arg0: i32) -> (i32, i32) {
    %c0_i32 = arith.constant 0 : i32
    %c0_i32_0 = arith.constant 0 : i32
    %c0_i32_1 = arith.constant 0 : i32
    return %c0_i32, %c0_i32_0 : i32, i32
  }
  func.func @transform_2(%arg0: i32) -> (i32, i32) {
    %c0_i32 = arith.constant 0 : i32
    %c0_i32_0 = arith.constant 0 : i32
    %c0_i32_1 = arith.constant 0 : i32
    return %c0_i32, %c0_i32_0 : i32, i32
  }
  func.func @transform_3(%arg0: i32) -> (i32, i32) {
    %c0_i32 = arith.constant 0 : i32
    %c0_i32_0 = arith.constant 0 : i32
    %c0_i32_1 = arith.constant 0 : i32
    return %c0_i32, %c0_i32_0 : i32, i32
  }
  func.func @transform_4(%arg0: i32) -> (i32, i32) {
    %c0_i32 = arith.constant 0 : i32
    %c0_i32_0 = arith.constant 0 : i32
    %c0_i32_1 = arith.constant 0 : i32
    return %c0_i32, %c0_i32_0 : i32, i32
  }
  func.func @transform_5(%arg0: i32) -> (i32, i32) {
    %c0_i32 = arith.constant 0 : i32
    %c0_i32_0 = arith.constant 0 : i32
    %c0_i32_1 = arith.constant 0 : i32
    return %c0_i32, %c0_i32_0 : i32, i32
  }
}

</mosaic_0001>

<llo_original>
// kernel: dqn_forward.4
$region0: #{dqn_forward.4}
  #allocation0 [shape = 'u32[]', space=smem, size = 0x4, offset = 0x4, fixed_abs, tag = 'smem constant byte address 0x4 - core index']
  #allocation1 [shape = 'u32[144,128]{1,0:T(1,128)}', space=vmem, size = 0x12000, scoped, tag = 'internal scratch']
  %s0 = inlined_call_operand.vmem [shape: bf16[800,256], index: 0, kind: input, shape index: {}]
  %s1 = inlined_call_operand.vmem [shape: bf16[256,128], index: 1, kind: input, shape index: {}]
  %s2 = inlined_call_operand.vmem [shape: f32[1,128], index: 2, kind: input, shape index: {}]
  %s3 = inlined_call_operand.vmem [shape: bf16[800,128], index: 3, kind: output, shape index: {}]
  %s4 = sld [smem:[#allocation0]]
  $region45: #{dqn_forward.4} parent=0
    _
  %s6 = ssub.s32 1, %s4
  %s7 = scalar_select 0, %s6, %s4
  loop: start=0, step=1, limit=4
  $region2: #{dqn_forward.4} parent=0 // loop_pre_header
    _
  $region3: #{dqn_forward.4} parent=0 // loop_header
    %s9 = sphi 0, %s13
    %p10 = scmp.ge.s32.totalorder %s9, 4
    %s19 = sphi 0, %s21
    %s22 = sphi 0, %s19
    %s23 = sphi 0, %s22
    %s39 = sphi 0, %s23
    %s43 = sphi 0, %s43
    %s45 = sphi 0, %s43
    %s46 = sphi 0, %s45
    %s60 = sphi 0, %s46
    %s64 = sphi 0, %s64
    %s66 = sphi 0, %s64
    %s67 = sphi 0, %s66
    %s81 = sphi 0, %s67
    %s87 = sphi 0, %s89
    %s90 = sphi 0, %s87
    %s91 = sphi 0, %s90
    %s107 = sphi 0, %s91
  $region4: #{dqn_forward.4} parent=0 // loop_header_branch
    %12 = sbr.rel (%p10) target = $region8
  $region5: #{dqn_forward.4} parent=0 // loop_body
    %s14 = ssub.s32 %s9, 1
    %s15 = ssub.s32 %s9, 2
    %s16 = sadd.s32 %s9, 1
    %s17 = ssub.s32 %s9, %s16
    %p18 = scmp.eq.s32.totalorder %s17, 0
    %s20 = sadd.s32 %s19, 1
    %s21 = scalar_select %p18, %s19, %s20
    %p24 = pneg %p18
    %p25 = scmp.eq.s32.totalorder %s9, 1
    %p26 = por %p24, %p25
    %p27 = scmp.ne.s32.totalorder %s19, %s22
    %p28 = scmp.eq.s32.totalorder %s9, 0
    %p29 = por %p27, %p28
    %p30 = scmp.ne.s32.totalorder %s19, %s22
    %p31 = scmp.eq.s32.totalorder %s14, 1
    %p32 = por %p30, %p31
    %p33 = scmp.ne.s32.totalorder %s22, %s23
    %p34 = scmp.eq.s32.totalorder %s14, 0
    %p35 = por %p33, %p34
    %p36 = scmp.ne.s32.totalorder %s22, %s23
    %p37 = scmp.eq.s32.totalorder %s15, 1
    %p38 = por %p36, %p37
    %p40 = scmp.ne.s32.totalorder %s23, %s39
    %p41 = scmp.eq.s32.totalorder %s15, 0
    %p42 = por %p40, %p41
    %s44 = sadd.s32 %s43, 1
    %p47 = scmp.eq.s32.totalorder %s9, 1
    %p48 = scmp.ne.s32.totalorder %s43, %s45
    %p49 = scmp.eq.s32.totalorder %s9, 0
    %p50 = por %p48, %p49
    %p51 = scmp.ne.s32.totalorder %s43, %s45
    %p52 = scmp.eq.s32.totalorder %s14, 1
    %p53 = por %p51, %p52
    %p54 = scmp.ne.s32.totalorder %s45, %s46
    %p55 = scmp.eq.s32.totalorder %s14, 0
    %p56 = por %p54, %p55
    %p57 = scmp.ne.s32.totalorder %s45, %s46
    %p58 = scmp.eq.s32.totalorder %s15, 1
    %p59 = por %p57, %p58
    %p61 = scmp.ne.s32.totalorder %s46, %s60
    %p62 = scmp.eq.s32.totalorder %s15, 0
    %p63 = por %p61, %p62
    %s65 = sadd.s32 %s64, 1
    %p68 = scmp.eq.s32.totalorder %s9, 1
    %p69 = scmp.ne.s32.totalorder %s64, %s66
    %p70 = scmp.eq.s32.totalorder %s9, 0
    %p71 = por %p69, %p70
    %p72 = scmp.ne.s32.totalorder %s64, %s66
    %p73 = scmp.eq.s32.totalorder %s14, 1
    %p74 = por %p72, %p73
    %p75 = scmp.ne.s32.totalorder %s66, %s67
    %p76 = scmp.eq.s32.totalorder %s14, 0
    %p77 = por %p75, %p76
    %p78 = scmp.ne.s32.totalorder %s66, %s67
    %p79 = scmp.eq.s32.totalorder %s15, 1
    %p80 = por %p78, %p79
    %p82 = scmp.ne.s32.totalorder %s67, %s81
    %p83 = scmp.eq.s32.totalorder %s15, 0
    %p84 = por %p82, %p83
    %s85 = ssub.s32 %s9, %s16
    %p86 = scmp.eq.s32.totalorder %s85, 0
    %s88 = sadd.s32 %s87, 1
    %s89 = scalar_select %p86, %s87, %s88
    %p92 = pneg %p86
    %p93 = scmp.eq.s32.totalorder %s9, 1
    %p94 = por %p92, %p93
    %p95 = scmp.ne.s32.totalorder %s87, %s90
    %p96 = scmp.eq.s32.totalorder %s9, 0
    %p97 = por %p95, %p96
    %p98 = scmp.ne.s32.totalorder %s87, %s90
    %p99 = scmp.eq.s32.totalorder %s14, 1
    %p100 = por %p98, %p99
    %p101 = scmp.ne.s32.totalorder %s90, %s91
    %p102 = scmp.eq.s32.totalorder %s14, 0
    %p103 = por %p101, %p102
    %p104 = scmp.ne.s32.totalorder %s90, %s91
    %p105 = scmp.eq.s32.totalorder %s15, 1
    %p106 = por %p104, %p105
    %p108 = scmp.ne.s32.totalorder %s91, %s107
    %p109 = scmp.eq.s32.totalorder %s15, 0
    %p110 = por %p108, %p109
    %p111 = scmp.le.s32.totalorder 1, %s9
    %p112 = scmp.lt.s32.totalorder %s9, 3
    %p113 = pnand %p111, %p112
    %p114 = pneg %p113
    // Predicated region
    $region9: #{dqn_forward.4} parent=5 // pred_check
      _
    $region10: #{dqn_forward.4} parent=5 // pred_check_branch
      %116 = sbr.rel (%p113) target = $region12
    $region11: #{dqn_forward.4} parent=5 // pred_region
      %s117 = ssub.s32 %s9, 1
      // Predicated region
      $region13: #{dqn_forward.4} parent=11 // pred_check
        %p118 = pneg %p56
      $region14: #{dqn_forward.4} parent=11 // pred_check_branch
        %120 = sbr.rel (%p118) target = $region16
      $region15: #{dqn_forward.4} parent=11 // pred_region
        _
      $region16: #{dqn_forward.4} parent=11 // pred_fallthru
        _
      // Predicated region
      $region17: #{dqn_forward.4} parent=11 // pred_check
        %p121 = pneg %p77
      $region18: #{dqn_forward.4} parent=11 // pred_check_branch
        %123 = sbr.rel (%p121) target = $region20
      $region19: #{dqn_forward.4} parent=11 // pred_region
        _
      $region20: #{dqn_forward.4} parent=11 // pred_fallthru
        _
    $region12: #{dqn_forward.4} parent=5 // pred_fallthru
      _
    %p124 = scmp.lt.s32.totalorder %s9, 2
    // Predicated region
    $region21: #{dqn_forward.4} parent=5 // pred_check
      %p125 = pneg %p124
    $region22: #{dqn_forward.4} parent=5 // pred_check_branch
      %127 = sbr.rel (%p125) target = $region24
    $region23: #{dqn_forward.4} parent=5 // pred_region
      // Predicated region
      $region25: #{dqn_forward.4} parent=23 // pred_check
        %p128 = pneg %p29
      $region26: #{dqn_forward.4} parent=23 // pred_check_branch
        %130 = sbr.rel (%p128) target = $region28
      $region27: #{dqn_forward.4} parent=23 // pred_region
        %s131 = smul.u32 50, %s9
        %p132 = scmp.lt.s32.totalorder %s131, 99
        %s133 = scalar_select %p132, %s131, 99
        %s134 = smul.addr %s133, 2
        %s135 = smul.addr %s134, 4
        %s136 = scalar_lea.vmem %s0, %s135
        %s137 = smul.u32 50, %s9
      $region28: #{dqn_forward.4} parent=23 // pred_fallthru
        _
    $region24: #{dqn_forward.4} parent=5 // pred_fallthru
      _
    %p138 = scmp.le.s32.totalorder 1, %s9
    %p139 = scmp.lt.s32.totalorder %s9, 3
    %p140 = pnand %p138, %p139
    %p141 = pneg %p140
    // Predicated region
    $region29: #{dqn_forward.4} parent=5 // pred_check
      _
    $region30: #{dqn_forward.4} parent=5 // pred_check_branch
      %143 = sbr.rel (%p140) target = $region32
    $region31: #{dqn_forward.4} parent=5 // pred_region
      %s144 = ssub.s32 %s9, 1
      %s145 = smul.u32 50, %s14
      %p146 = scmp.lt.s32.totalorder %s145, 99
      %s147 = scalar_select %p146, %s145, 99
      %s148 = smul.addr %s147, 2
      %s149 = smul.addr %s148, 4
      %s150 = scalar_lea.vmem %s0, %s149
      %p151 = pneg %p35
      %p152 = pneg %p32
      %p153 = pneg %p56
      %p154 = pneg %p53
      %p155 = pneg %p77
      %p156 = pneg %p74
      %p157 = pneg %p103
      %p158 = pneg %p100
      %s159 = smul.u32 50, %s14
      %p160 = scmp.lt.s32.totalorder %s159, 99
      %s161 = scalar_select %p160, %s159, 99
      %s162 = smul.addr %s161, 4
      %s163 = scalar_lea.vmem %s3, %s162
      %s164 = smul.u32 50, %s14
      %p165 = scmp.lt.s32.totalorder %s164, 99
      %s166 = scalar_select %p165, %s164, 99
      %s167 = smul.addr %s166, 2
      %s168 = smul.addr %s167, 4
      %s169 = scalar_lea.vmem %s0, %s168
      %s170 = smul.u32 50, %s14
      %s171 = smul.u32 50, %s14
      %p172 = scmp.lt.s32.totalorder %s171, 99
      %s173 = scalar_select %p172, %s171, 99
      %s174 = smul.addr %s173, 4
      %s175 = scalar_lea.vmem %s3, %s174
      %s176 = smul.u32 50, %s14
      %v178 = vld [vmem:[%s169] sm:$0xff]
      %v179 = vld [vmem:[%s169 + $0x8] sm:$0xff]
      %v180 = vld [vmem:[%s169 + $0x10] sm:$0xff]
      %v181 = vld [vmem:[%s169 + $0x18] sm:$0xff]
      %v182 = vld [vmem:[%s169 + $0x20] sm:$0xff]
      %v183 = vld [vmem:[%s169 + $0x28] sm:$0xff]
      %v184 = vld [vmem:[%s169 + $0x30] sm:$0xff]
      %v185 = vld [vmem:[%s169 + $0x38] sm:$0xff]
      %v186 = vld [vmem:[%s169 + $0x40] sm:$0xff]
      %v187 = vld [vmem:[%s169 + $0x48] sm:$0xff]
      %v188 = vld [vmem:[%s169 + $0x50] sm:$0xff]
      %v189 = vld [vmem:[%s169 + $0x58] sm:$0xff]
      %v190 = vld [vmem:[%s169 + $0x60] sm:$0xff]
      %v191 = vld [vmem:[%s169 + $0x68] sm:$0xff]
      %v192 = vld [vmem:[%s169 + $0x70] sm:$0xff]
      %v193 = vld [vmem:[%s169 + $0x78] sm:$0xff]
      %v194 = vld [vmem:[%s169 + $0x80] sm:$0xff]
      %v195 = vld [vmem:[%s169 + $0x88] sm:$0xff]
      %v196 = vld [vmem:[%s169 + $0x90] sm:$0xff]
      %v197 = vld [vmem:[%s169 + $0x98] sm:$0xff]
      %v198 = vld [vmem:[%s169 + $0xa0] sm:$0xff]
      %v199 = vld [vmem:[%s169 + $0xa8] sm:$0xff]
      %v200 = vld [vmem:[%s169 + $0xb0] sm:$0xff]
      %v201 = vld [vmem:[%s169 + $0xb8] sm:$0xff]
      %v202 = vld [vmem:[%s169 + $0xc0] sm:$0xff]
      %v203 = vld [vmem:[%s169 + $0xc8] sm:$0xff]
      %v204 = vld [vmem:[%s169 + $0xd0] sm:$0xff]
      %v205 = vld [vmem:[%s169 + $0xd8] sm:$0xff]
      %v206 = vld [vmem:[%s169 + $0xe0] sm:$0xff]
      %v207 = vld [vmem:[%s169 + $0xe8] sm:$0xff]
      %v208 = vld [vmem:[%s169 + $0xf0] sm:$0xff]
      %v209 = vld [vmem:[%s169 + $0xf8] sm:$0xff]
      %v210 = vld [vmem:[%s169 + $0x100] sm:$0xff]
      %v211 = vld [vmem:[%s169 + $0x108] sm:$0xff]
      %v212 = vld [vmem:[%s169 + $0x110] sm:$0xff]
      %v213 = vld [vmem:[%s169 + $0x118] sm:$0xff]
      %v214 = vld [vmem:[%s169 + $0x120] sm:$0xff]
      %v215 = vld [vmem:[%s169 + $0x128] sm:$0xff]
      %v216 = vld [vmem:[%s169 + $0x130] sm:$0xff]
      %v217 = vld [vmem:[%s169 + $0x138] sm:$0xff]
      %v218 = vld [vmem:[%s169 + $0x140] sm:$0xff]
      %v219 = vld [vmem:[%s169 + $0x148] sm:$0xff]
      %v220 = vld [vmem:[%s169 + $0x150] sm:$0xff]
      %v221 = vld [vmem:[%s169 + $0x158] sm:$0xff]
      %v222 = vld [vmem:[%s169 + $0x160] sm:$0xff]
      %v223 = vld [vmem:[%s169 + $0x168] sm:$0xff]
      %v224 = vld [vmem:[%s169 + $0x170] sm:$0xff]
      %v225 = vld [vmem:[%s169 + $0x178] sm:$0xff]
      %v226 = vld [vmem:[%s169 + $0x180] sm:$0xff]
      %v227 = vld [vmem:[%s169 + $0x188] sm:$0xff]
      %v228 = vld [vmem:[%s1] sm:$0xf]
      %v229 = vld [vmem:[%s1 + $0x4] sm:$0xf]
      %v230 = vld [vmem:[%s1 + $0x8] sm:$0xf]
      %v231 = vld [vmem:[%s1 + $0xc] sm:$0xf]
      %v232 = vld [vmem:[%s1 + $0x10] sm:$0xf]
      %v233 = vld [vmem:[%s1 + $0x14] sm:$0xf]
      %v234 = vld [vmem:[%s1 + $0x18] sm:$0xf]
      %v235 = vld [vmem:[%s1 + $0x1c] sm:$0xf]
      %v236 = vld [vmem:[%s1 + $0x20] sm:$0xf]
      %v237 = vld [vmem:[%s1 + $0x24] sm:$0xf]
      %v238 = vld [vmem:[%s1 + $0x28] sm:$0xf]
      %v239 = vld [vmem:[%s1 + $0x2c] sm:$0xf]
      %v240 = vld [vmem:[%s1 + $0x30] sm:$0xf]
      %v241 = vld [vmem:[%s1 + $0x34] sm:$0xf]
      %v242 = vld [vmem:[%s1 + $0x38] sm:$0xf]
      %v243 = vld [vmem:[%s1 + $0x3c] sm:$0xf]
      %v244 = vld [vmem:[%s1 + $0x40] sm:$0xf]
      %v245 = vld [vmem:[%s1 + $0x44] sm:$0xf]
      %v246 = vld [vmem:[%s1 + $0x48] sm:$0xf]
      %v247 = vld [vmem:[%s1 + $0x4c] sm:$0xf]
      %v248 = vld [vmem:[%s1 + $0x50] sm:$0xf]
      %v249 = vld [vmem:[%s1 + $0x54] sm:$0xf]
      %v250 = vld [vmem:[%s1 + $0x58] sm:$0xf]
      %v251 = vld [vmem:[%s1 + $0x5c] sm:$0xf]
      %v252 = vld [vmem:[%s1 + $0x60] sm:$0xf]
      %v253 = vld [vmem:[%s1 + $0x64] sm:$0xf]
      %v254 = vld [vmem:[%s1 + $0x68] sm:$0xf]
      %v255 = vld [vmem:[%s1 + $0x6c] sm:$0xf]
      %v256 = vld [vmem:[%s1 + $0x70] sm:$0xf]
      %v257 = vld [vmem:[%s1 + $0x74] sm:$0xf]
      %v258 = vld [vmem:[%s1 + $0x78] sm:$0xf]
      %v259 = vld [vmem:[%s1 + $0x7c] sm:$0xf]
      %v260 = vld [vmem:[%s2] sm:$0x1]
      %v262 = vlaneseq
      %v263 = vshrl.u32 %v262, 7
      %v264 = vsub.s32 0, %v263
      %v265 = vrot.slane %v260, %v264
      %v317 = vunpack.c.l.b16 %v178
      %v318 = vunpack.c.h.b16 %v178
      %v319 = vunpack.c.l.b16 %v179
      %v320 = vunpack.c.h.b16 %v179
      %v321 = vunpack.c.l.b16 %v180
      %v322 = vunpack.c.h.b16 %v180
      %v323 = vunpack.c.l.b16 %v181
      %v324 = vunpack.c.h.b16 %v181
      %v325 = vunpack.c.l.b16 %v182
      %v326 = vunpack.c.h.b16 %v182
      %v327 = vunpack.c.l.b16 %v183
      %v328 = vunpack.c.h.b16 %v183
      %v329 = vunpack.c.l.b16 %v184
      %v330 = vunpack.c.h.b16 %v184
      %v331 = vunpack.c.l.b16 %v185
      %v332 = vunpack.c.h.b16 %v185
      %v333 = vunpack.c.l.b16 %v186
      %v334 = vunpack.c.h.b16 %v186
      %v335 = vunpack.c.l.b16 %v187
      %v336 = vunpack.c.h.b16 %v187
      %v337 = vunpack.c.l.b16 %v188
      %v338 = vunpack.c.h.b16 %v188
      %v339 = vunpack.c.l.b16 %v189
      %v340 = vunpack.c.h.b16 %v189
      %v341 = vunpack.c.l.b16 %v190
      %v342 = vunpack.c.h.b16 %v190
      %v343 = vunpack.c.l.b16 %v191
      %v344 = vunpack.c.h.b16 %v191
      %v345 = vunpack.c.l.b16 %v192
      %v346 = vunpack.c.h.b16 %v192
      %v347 = vunpack.c.l.b16 %v193
      %v348 = vunpack.c.h.b16 %v193
      %v349 = vunpack.c.l.b16 %v194
      %v350 = vunpack.c.h.b16 %v194
      %v351 = vunpack.c.l.b16 %v195
      %v352 = vunpack.c.h.b16 %v195
      %v353 = vunpack.c.l.b16 %v196
      %v354 = vunpack.c.h.b16 %v196
      %v355 = vunpack.c.l.b16 %v197
      %v356 = vunpack.c.h.b16 %v197
      %v357 = vunpack.c.l.b16 %v198
      %v358 = vunpack.c.h.b16 %v198
      %v359 = vunpack.c.l.b16 %v199
      %v360 = vunpack.c.h.b16 %v199
      %v361 = vunpack.c.l.b16 %v200
      %v362 = vunpack.c.h.b16 %v200
      %v363 = vunpack.c.l.b16 %v201
      %v364 = vunpack.c.h.b16 %v201
      %v365 = vunpack.c.l.b16 %v202
      %v366 = vunpack.c.h.b16 %v202
      %v367 = vunpack.c.l.b16 %v203
      %v368 = vunpack.c.h.b16 %v203
      %v369 = vunpack.c.l.b16 %v204
      %v370 = vunpack.c.h.b16 %v204
      %v371 = vunpack.c.l.b16 %v205
      %v372 = vunpack.c.h.b16 %v205
      %v373 = vunpack.c.l.b16 %v206
      %v374 = vunpack.c.h.b16 %v206
      %v375 = vunpack.c.l.b16 %v207
      %v376 = vunpack.c.h.b16 %v207
      %v377 = vunpack.c.l.b16 %v208
      %v378 = vunpack.c.h.b16 %v208
      %v379 = vunpack.c.l.b16 %v209
      %v380 = vunpack.c.h.b16 %v209
      %v381 = vunpack.c.l.b16 %v210
      %v382 = vunpack.c.h.b16 %v210
      %v383 = vunpack.c.l.b16 %v211
      %v384 = vunpack.c.h.b16 %v211
      %v385 = vunpack.c.l.b16 %v212
      %v386 = vunpack.c.h.b16 %v212
      %v387 = vunpack.c.l.b16 %v213
      %v388 = vunpack.c.h.b16 %v213
      %v389 = vunpack.c.l.b16 %v214
      %v390 = vunpack.c.h.b16 %v214
      %v391 = vunpack.c.l.b16 %v215
      %v392 = vunpack.c.h.b16 %v215
      %v393 = vunpack.c.l.b16 %v216
      %v394 = vunpack.c.h.b16 %v216
      %v395 = vunpack.c.l.b16 %v217
      %v396 = vunpack.c.h.b16 %v217
      %v397 = vunpack.c.l.b16 %v218
      %v398 = vunpack.c.h.b16 %v218
      %v399 = vunpack.c.l.b16 %v219
      %v400 = vunpack.c.h.b16 %v219
      %v401 = vunpack.c.l.b16 %v220
      %v402 = vunpack.c.h.b16 %v220
      %v403 = vunpack.c.l.b16 %v221
      %v404 = vunpack.c.h.b16 %v221
      %v405 = vunpack.c.l.b16 %v222
      %v406 = vunpack.c.h.b16 %v222
      %v407 = vunpack.c.l.b16 %v223
      %v408 = vunpack.c.h.b16 %v223
      %v409 = vunpack.c.l.b16 %v224
      %v410 = vunpack.c.h.b16 %v224
      %v411 = vunpack.c.l.b16 %v225
      %v412 = vunpack.c.h.b16 %v225
      %v413 = vunpack.c.l.b16 %v226
      %v414 = vunpack.c.h.b16 %v226
      %v415 = vunpack.c.l.b16 %v227
      %v416 = vunpack.c.h.b16 %v227
      %v417 = vpack.c.b16 %v319, %v317
      %v418 = vpack.c.b16 %v320, %v318
      %v419 = vpack.c.b16 %v323, %v321
      %v420 = vpack.c.b16 %v324, %v322
      %v421 = vpack.c.b16 %v327, %v325
      %v422 = vpack.c.b16 %v328, %v326
      %v423 = vpack.c.b16 %v331, %v329
      %v424 = vpack.c.b16 %v332, %v330
      %v425 = vpack.c.b16 %v335, %v333
      %v426 = vpack.c.b16 %v336, %v334
      %v427 = vpack.c.b16 %v339, %v337
      %v428 = vpack.c.b16 %v340, %v338
      %v429 = vpack.c.b16 %v343, %v341
      %v430 = vpack.c.b16 %v344, %v342
      %v431 = vpack.c.b16 %v347, %v345
      %v432 = vpack.c.b16 %v348, %v346
      %v433 = vpack.c.b16 %v351, %v349
      %v434 = vpack.c.b16 %v352, %v350
      %v435 = vpack.c.b16 %v355, %v353
      %v436 = vpack.c.b16 %v356, %v354
      %v437 = vpack.c.b16 %v359, %v357
      %v438 = vpack.c.b16 %v360, %v358
      %v439 = vpack.c.b16 %v363, %v361
      %v440 = vpack.c.b16 %v364, %v362
      %v441 = vpack.c.b16 %v367, %v365
      %v442 = vpack.c.b16 %v368, %v366
      %v443 = vpack.c.b16 %v371, %v369
      %v444 = vpack.c.b16 %v372, %v370
      %v445 = vpack.c.b16 %v375, %v373
      %v446 = vpack.c.b16 %v376, %v374
      %v447 = vpack.c.b16 %v379, %v377
      %v448 = vpack.c.b16 %v380, %v378
      %v449 = vpack.c.b16 %v383, %v381
      %v450 = vpack.c.b16 %v384, %v382
      %v451 = vpack.c.b16 %v387, %v385
      %v452 = vpack.c.b16 %v388, %v386
      %v453 = vpack.c.b16 %v391, %v389
      %v454 = vpack.c.b16 %v392, %v390
      %v455 = vpack.c.b16 %v395, %v393
      %v456 = vpack.c.b16 %v396, %v394
      %v457 = vpack.c.b16 %v399, %v397
      %v458 = vpack.c.b16 %v400, %v398
      %v459 = vpack.c.b16 %v403, %v401
      %v460 = vpack.c.b16 %v404, %v402
      %v461 = vpack.c.b16 %v407, %v405
      %v462 = vpack.c.b16 %v408, %v406
      %v463 = vpack.c.b16 %v411, %v409
      %v464 = vpack.c.b16 %v412, %v410
      %v465 = vpack.c.b16 %v415, %v413
      %v466 = vpack.c.b16 %v416, %v414
      %v549 = vunpack.c.l.b16 %v228
      %v550 = vunpack.c.l.b16 %v229
      %v551 = vunpack.c.l.b16 %v230
      %v552 = vunpack.c.l.b16 %v231
      %v553 = vunpack.c.l.b16 %v232
      %v554 = vunpack.c.l.b16 %v233
      %v555 = vunpack.c.l.b16 %v234
      %v556 = vunpack.c.l.b16 %v235
      %v557 = vunpack.c.l.b16 %v236
      %v558 = vunpack.c.l.b16 %v237
      %v559 = vunpack.c.l.b16 %v238
      %v560 = vunpack.c.l.b16 %v239
      %v561 = vunpack.c.l.b16 %v240
      %v562 = vunpack.c.l.b16 %v241
      %v563 = vunpack.c.l.b16 %v242
      %v564 = vunpack.c.l.b16 %v243
      %v565 = vunpack.c.l.b16 %v244
      %v566 = vunpack.c.l.b16 %v245
      %v567 = vunpack.c.l.b16 %v246
      %v568 = vunpack.c.l.b16 %v247
      %v569 = vunpack.c.l.b16 %v248
      %v570 = vunpack.c.l.b16 %v249
      %v571 = vunpack.c.l.b16 %v250
      %v572 = vunpack.c.l.b16 %v251
      %v573 = vunpack.c.l.b16 %v252
      %v574 = vunpack.c.l.b16 %v253
      %v575 = vunpack.c.l.b16 %v254
      %v576 = vunpack.c.l.b16 %v255
      %v577 = vunpack.c.l.b16 %v256
      %v578 = vunpack.c.l.b16 %v257
      %v579 = vunpack.c.l.b16 %v258
      %v580 = vunpack.c.l.b16 %v259
      %v581 = vpack.c.b16 %v550, %v549
      %v582 = vpack.c.b16 %v552, %v551
      %v583 = vpack.c.b16 %v554, %v553
      %v584 = vpack.c.b16 %v556, %v555
      %v585 = vpack.c.b16 %v558, %v557
      %v586 = vpack.c.b16 %v560, %v559
      %v587 = vpack.c.b16 %v562, %v561
      %v588 = vpack.c.b16 %v564, %v563
      %v589 = vpack.c.b16 %v566, %v565
      %v590 = vpack.c.b16 %v568, %v567
      %v591 = vpack.c.b16 %v570, %v569
      %v592 = vpack.c.b16 %v572, %v571
      %v593 = vpack.c.b16 %v574, %v573
      %v594 = vpack.c.b16 %v576, %v575
      %v595 = vpack.c.b16 %v578, %v577
      %v596 = vpack.c.b16 %v580, %v579
      %613 = vmatprep.subr.bf16.mxu0 0
      %614 = vmatpush1.bf16.msra.mxu0 %v588
      %615 = vmatprep.subr.bf16.mxu0 0
      %616 = vmatpush1.bf16.msra.mxu0 %v587
      %617 = vmatprep.subr.bf16.mxu0 0
      %618 = vmatpush1.bf16.msra.mxu0 %v586
      %619 = vmatprep.subr.bf16.mxu0 0
      %620 = vmatpush1.bf16.msra.mxu0 %v585
      %621 = vmatprep.subr.bf16.mxu0 0
      %622 = vmatpush1.bf16.msra.mxu0 %v584
      %623 = vmatprep.subr.bf16.mxu0 0
      %624 = vmatpush1.bf16.msra.mxu0 %v583
      %625 = vmatprep.subr.bf16.mxu0 0
      %626 = vmatpush1.bf16.msra.mxu0 %v582
      %627 = vmatprep.subr.bf16.mxu0 0
      %628 = vmatpush1.bf16.msra.mxu0 %v581
      %629 = vmatprep.subr.bf16.mxu0 0
      %630 = vmatpush2.bf16.msra.mxu0 %v596
      %631 = vmatprep.subr.bf16.mxu0 0
      %632 = vmatpush2.bf16.msra.mxu0 %v595
      %633 = vmatprep.subr.bf16.mxu0 0
      %634 = vmatpush2.bf16.msra.mxu0 %v594
      %635 = vmatprep.subr.bf16.mxu0 0
      %636 = vmatpush2.bf16.msra.mxu0 %v593
      %637 = vmatprep.subr.bf16.mxu0 0
      %638 = vmatpush2.bf16.msra.mxu0 %v592
      %639 = vmatprep.subr.bf16.mxu0 0
      %640 = vmatpush2.bf16.msra.mxu0 %v591
      %641 = vmatprep.subr.bf16.mxu0 0
      %642 = vmatpush2.bf16.msra.mxu0 %v590
      %643 = vmatprep.subr.bf16.mxu0 0
      %644 = vmatpush2.bf16.msra.mxu0 %v589
      %645 = vmatprep.mubr.bf16.mxu0 %v418
      %646 = vmatmul.mubr.bf16.gmra.mxu0 %v417
      %v647 = vpop.f32.mrf.mxu0
      %v648 = vadd.f32 %v265, %v647
      %v649 = vpop.f32.mrf.mxu0
      %v650 = vpop.f32.mrf.mxu0
      %v651 = vadd.f32 %v265, %v650
      %v652 = vpop.f32.mrf.mxu0
      %653 = vmatprep.mubr.bf16.mxu0 %v420
      %654 = vmatmul.mubr.bf16.gmra.mxu0 %v419
      %v655 = vpop.f32.mrf.mxu0
      %v656 = vadd.f32 %v265, %v655
      %v657 = vpop.f32.mrf.mxu0
      %v658 = vpop.f32.mrf.mxu0
      %v659 = vadd.f32 %v265, %v658
      %v660 = vpop.f32.mrf.mxu0
      %661 = vmatprep.mubr.bf16.mxu0 %v422
      %662 = vmatmul.mubr.bf16.gmra.mxu0 %v421
      %v663 = vpop.f32.mrf.mxu0
      %v664 = vadd.f32 %v265, %v663
      %v665 = vpop.f32.mrf.mxu0
      %v666 = vpop.f32.mrf.mxu0
      %v667 = vadd.f32 %v265, %v666
      %v668 = vpop.f32.mrf.mxu0
      %669 = vmatprep.mubr.bf16.mxu0 %v424
      %670 = vmatmul.mubr.bf16.gmra.mxu0 %v423
      %v671 = vpop.f32.mrf.mxu0
      %v672 = vadd.f32 %v265, %v671
      %v673 = vpop.f32.mrf.mxu0
      %v674 = vpop.f32.mrf.mxu0
      %v675 = vadd.f32 %v265, %v674
      %v676 = vpop.f32.mrf.mxu0
      %677 = vmatprep.mubr.bf16.mxu0 %v426
      %678 = vmatmul.mubr.bf16.gmra.mxu0 %v425
      %v679 = vpop.f32.mrf.mxu0
      %v680 = vadd.f32 %v265, %v679
      %v681 = vpop.f32.mrf.mxu0
      %v682 = vpop.f32.mrf.mxu0
      %v683 = vadd.f32 %v265, %v682
      %v684 = vpop.f32.mrf.mxu0
      %685 = vmatprep.mubr.bf16.mxu0 %v428
      %686 = vmatmul.mubr.bf16.gmra.mxu0 %v427
      %v687 = vpop.f32.mrf.mxu0
      %v688 = vadd.f32 %v265, %v687
      %v689 = vpop.f32.mrf.mxu0
      %v690 = vpop.f32.mrf.mxu0
      %v691 = vadd.f32 %v265, %v690
      %v692 = vpop.f32.mrf.mxu0
      %693 = vmatprep.mubr.bf16.mxu0 %v430
      %694 = vmatmul.mubr.bf16.gmra.mxu0 %v429
      %v695 = vpop.f32.mrf.mxu0
      %v696 = vadd.f32 %v265, %v695
      %v697 = vpop.f32.mrf.mxu0
      %v698 = vpop.f32.mrf.mxu0
      %v699 = vadd.f32 %v265, %v698
      %v700 = vpop.f32.mrf.mxu0
      %701 = vmatprep.mubr.bf16.mxu0 %v432
      %702 = vmatmul.mubr.bf16.gmra.mxu0 %v431
      %v703 = vpop.f32.mrf.mxu0
      %v704 = vadd.f32 %v265, %v703
      %v705 = vpop.f32.mrf.mxu0
      %v706 = vpop.f32.mrf.mxu0
      %v707 = vadd.f32 %v265, %v706
      %v708 = vpop.f32.mrf.mxu0
      %709 = vmatprep.mubr.bf16.mxu0 %v434
      %710 = vmatmul.mubr.bf16.gmra.mxu0 %v433
      %v711 = vpop.f32.mrf.mxu0
      %v712 = vadd.f32 %v265, %v711
      %v713 = vpop.f32.mrf.mxu0
      %v714 = vpop.f32.mrf.mxu0
      %v715 = vadd.f32 %v265, %v714
      %v716 = vpop.f32.mrf.mxu0
      %717 = vmatprep.mubr.bf16.mxu0 %v436
      %718 = vmatmul.mubr.bf16.gmra.mxu0 %v435
      %v719 = vpop.f32.mrf.mxu0
      %v720 = vadd.f32 %v265, %v719
      %v721 = vpop.f32.mrf.mxu0
      %v722 = vpop.f32.mrf.mxu0
      %v723 = vadd.f32 %v265, %v722
      %v724 = vpop.f32.mrf.mxu0
      %725 = vmatprep.mubr.bf16.mxu0 %v438
      %726 = vmatmul.mubr.bf16.gmra.mxu0 %v437
      %v727 = vpop.f32.mrf.mxu0
      %v728 = vadd.f32 %v265, %v727
      %v729 = vpop.f32.mrf.mxu0
      %v730 = vpop.f32.mrf.mxu0
      %v731 = vadd.f32 %v265, %v730
      %v732 = vpop.f32.mrf.mxu0
      %733 = vmatprep.mubr.bf16.mxu0 %v440
      %734 = vmatmul.mubr.bf16.gmra.mxu0 %v439
      %v735 = vpop.f32.mrf.mxu0
      %v736 = vadd.f32 %v265, %v735
      %v737 = vpop.f32.mrf.mxu0
      %v738 = vpop.f32.mrf.mxu0
      %v739 = vadd.f32 %v265, %v738
      %v740 = vpop.f32.mrf.mxu0
      %741 = vmatprep.mubr.bf16.mxu0 %v442
      %742 = vmatmul.mubr.bf16.gmra.mxu0 %v441
      %v743 = vpop.f32.mrf.mxu0
      %v744 = vadd.f32 %v265, %v743
      %v745 = vpop.f32.mrf.mxu0
      %v746 = vpop.f32.mrf.mxu0
      %v747 = vadd.f32 %v265, %v746
      %v748 = vpop.f32.mrf.mxu0
      %749 = vmatprep.mubr.bf16.mxu0 %v444
      %750 = vmatmul.mubr.bf16.gmra.mxu0 %v443
      %v751 = vpop.f32.mrf.mxu0
      %v752 = vadd.f32 %v265, %v751
      %v753 = vpop.f32.mrf.mxu0
      %v754 = vpop.f32.mrf.mxu0
      %v755 = vadd.f32 %v265, %v754
      %v756 = vpop.f32.mrf.mxu0
      %757 = vmatprep.mubr.bf16.mxu0 %v446
      %758 = vmatmul.mubr.bf16.gmra.mxu0 %v445
      %v759 = vpop.f32.mrf.mxu0
      %v760 = vadd.f32 %v265, %v759
      %v761 = vpop.f32.mrf.mxu0
      %v762 = vpop.f32.mrf.mxu0
      %v763 = vadd.f32 %v265, %v762
      %v764 = vpop.f32.mrf.mxu0
      %765 = vmatprep.mubr.bf16.mxu0 %v448
      %766 = vmatmul.mubr.bf16.gmra.mxu0 %v447
      %v767 = vpop.f32.mrf.mxu0
      %v768 = vadd.f32 %v265, %v767
      %v769 = vpop.f32.mrf.mxu0
      %v770 = vpop.f32.mrf.mxu0
      %v771 = vadd.f32 %v265, %v770
      %v772 = vpop.f32.mrf.mxu0
      %773 = vmatprep.mubr.bf16.mxu0 %v450
      %774 = vmatmul.mubr.bf16.gmra.mxu0 %v449
      %v775 = vpop.f32.mrf.mxu0
      %v776 = vadd.f32 %v265, %v775
      %v777 = vpop.f32.mrf.mxu0
      %v778 = vpop.f32.mrf.mxu0
      %v779 = vadd.f32 %v265, %v778
      %v780 = vpop.f32.mrf.mxu0
      %781 = vmatprep.mubr.bf16.mxu0 %v452
      %782 = vmatmul.mubr.bf16.gmra.mxu0 %v451
      %v783 = vpop.f32.mrf.mxu0
      %v784 = vadd.f32 %v265, %v783
      %v785 = vpop.f32.mrf.mxu0
      %v786 = vpop.f32.mrf.mxu0
      %v787 = vadd.f32 %v265, %v786
      %v788 = vpop.f32.mrf.mxu0
      %789 = vmatprep.mubr.bf16.mxu0 %v454
      %790 = vmatmul.mubr.bf16.gmra.mxu0 %v453
      %v791 = vpop.f32.mrf.mxu0
      %v792 = vadd.f32 %v265, %v791
      %v793 = vpop.f32.mrf.mxu0
      %v794 = vpop.f32.mrf.mxu0
      %v795 = vadd.f32 %v265, %v794
      %v796 = vpop.f32.mrf.mxu0
      %797 = vmatprep.mubr.bf16.mxu0 %v456
      %798 = vmatmul.mubr.bf16.gmra.mxu0 %v455
      %v799 = vpop.f32.mrf.mxu0
      %v800 = vadd.f32 %v265, %v799
      %v801 = vpop.f32.mrf.mxu0
      %v802 = vpop.f32.mrf.mxu0
      %v803 = vadd.f32 %v265, %v802
      %v804 = vpop.f32.mrf.mxu0
      %805 = vmatprep.mubr.bf16.mxu0 %v458
      %806 = vmatmul.mubr.bf16.gmra.mxu0 %v457
      %v807 = vpop.f32.mrf.mxu0
      %v808 = vadd.f32 %v265, %v807
      %v809 = vpop.f32.mrf.mxu0
      %v810 = vpop.f32.mrf.mxu0
      %v811 = vadd.f32 %v265, %v810
      %v812 = vpop.f32.mrf.mxu0
      %813 = vmatprep.mubr.bf16.mxu0 %v460
      %814 = vmatmul.mubr.bf16.gmra.mxu0 %v459
      %v815 = vpop.f32.mrf.mxu0
      %v816 = vadd.f32 %v265, %v815
      %v817 = vpop.f32.mrf.mxu0
      %v818 = vpop.f32.mrf.mxu0
      %v819 = vadd.f32 %v265, %v818
      %v820 = vpop.f32.mrf.mxu0
      %821 = vmatprep.mubr.bf16.mxu0 %v462
      %822 = vmatmul.mubr.bf16.gmra.mxu0 %v461
      %v823 = vpop.f32.mrf.mxu0
      %v824 = vadd.f32 %v265, %v823
      %v825 = vpop.f32.mrf.mxu0
      %v826 = vpop.f32.mrf.mxu0
      %v827 = vadd.f32 %v265, %v826
      %v828 = vpop.f32.mrf.mxu0
      %829 = vmatprep.mubr.bf16.mxu0 %v464
      %830 = vmatmul.mubr.bf16.gmra.mxu0 %v463
      %v831 = vpop.f32.mrf.mxu0
      %v832 = vadd.f32 %v265, %v831
      %v833 = vpop.f32.mrf.mxu0
      %v834 = vpop.f32.mrf.mxu0
      %v835 = vadd.f32 %v265, %v834
      %v836 = vpop.f32.mrf.mxu0
      %837 = vmatprep.mubr.bf16.mxu0 %v466
      %838 = vmatmul.mubr.bf16.gmra.mxu0 %v465
      %v839 = vpop.f32.mrf.mxu0
      %v840 = vadd.f32 %v265, %v839
      %v841 = vpop.f32.mrf.mxu0
      %v842 = vpop.f32.mrf.mxu0
      %v843 = vadd.f32 %v265, %v842
      %v844 = vpop.f32.mrf.mxu0
      %845 = vdwg.mxu0
      %v846 = vmax.f32 %v648, 0.0
      %v847 = vmax.f32 %v651, 0.0
      %v848 = vmax.f32 %v656, 0.0
      %v849 = vmax.f32 %v659, 0.0
      %v850 = vmax.f32 %v664, 0.0
      %v851 = vmax.f32 %v667, 0.0
      %v852 = vmax.f32 %v672, 0.0
      %v853 = vmax.f32 %v675, 0.0
      %v854 = vmax.f32 %v680, 0.0
      %v855 = vmax.f32 %v683, 0.0
      %v856 = vmax.f32 %v688, 0.0
      %v857 = vmax.f32 %v691, 0.0
      %v858 = vmax.f32 %v696, 0.0
      %v859 = vmax.f32 %v699, 0.0
      %v860 = vmax.f32 %v704, 0.0
      %v861 = vmax.f32 %v707, 0.0
      %v862 = vmax.f32 %v712, 0.0
      %v863 = vmax.f32 %v715, 0.0
      %v864 = vmax.f32 %v720, 0.0
      %v865 = vmax.f32 %v723, 0.0
      %v866 = vmax.f32 %v728, 0.0
      %v867 = vmax.f32 %v731, 0.0
      %v868 = vmax.f32 %v736, 0.0
      %v869 = vmax.f32 %v739, 0.0
      %v870 = vmax.f32 %v744, 0.0
      %v871 = vmax.f32 %v747, 0.0
      %v872 = vmax.f32 %v752, 0.0
      %v873 = vmax.f32 %v755, 0.0
      %v874 = vmax.f32 %v760, 0.0
      %v875 = vmax.f32 %v763, 0.0
      %v876 = vmax.f32 %v768, 0.0
      %v877 = vmax.f32 %v771, 0.0
      %v878 = vmax.f32 %v776, 0.0
      %v879 = vmax.f32 %v779, 0.0
      %v880 = vmax.f32 %v784, 0.0
      %v881 = vmax.f32 %v787, 0.0
      %v882 = vmax.f32 %v792, 0.0
      %v883 = vmax.f32 %v795, 0.0
      %v884 = vmax.f32 %v800, 0.0
      %v885 = vmax.f32 %v803, 0.0
      %v886 = vmax.f32 %v808, 0.0
      %v887 = vmax.f32 %v811, 0.0
      %v888 = vmax.f32 %v816, 0.0
      %v889 = vmax.f32 %v819, 0.0
      %v890 = vmax.f32 %v824, 0.0
      %v891 = vmax.f32 %v827, 0.0
      %v892 = vmax.f32 %v832, 0.0
      %v893 = vmax.f32 %v835, 0.0
      %v894 = vmax.f32 %v840, 0.0
      %v895 = vmax.f32 %v843, 0.0
      %v896 = vpack.c.bf16 %v847, %v846
      %v897 = vpack.c.bf16 %v849, %v848
      %v898 = vpack.c.bf16 %v851, %v850
      %v899 = vpack.c.bf16 %v853, %v852
      %v900 = vpack.c.bf16 %v855, %v854
      %v901 = vpack.c.bf16 %v857, %v856
      %v902 = vpack.c.bf16 %v859, %v858
      %v903 = vpack.c.bf16 %v861, %v860
      %v904 = vpack.c.bf16 %v863, %v862
      %v905 = vpack.c.bf16 %v865, %v864
      %v906 = vpack.c.bf16 %v867, %v866
      %v907 = vpack.c.bf16 %v869, %v868
      %v908 = vpack.c.bf16 %v871, %v870
      %v909 = vpack.c.bf16 %v873, %v872
      %v910 = vpack.c.bf16 %v875, %v874
      %v911 = vpack.c.bf16 %v877, %v876
      %v912 = vpack.c.bf16 %v879, %v878
      %v913 = vpack.c.bf16 %v881, %v880
      %v914 = vpack.c.bf16 %v883, %v882
      %v915 = vpack.c.bf16 %v885, %v884
      %v916 = vpack.c.bf16 %v887, %v886
      %v917 = vpack.c.bf16 %v889, %v888
      %v918 = vpack.c.bf16 %v891, %v890
      %v919 = vpack.c.bf16 %v893, %v892
      %v920 = vpack.c.bf16 %v895, %v894
      %v946 = vunpack.c.l.b16 %v896
      %v947 = vunpack.c.h.b16 %v896
      %v948 = vunpack.c.l.b16 %v897
      %v949 = vunpack.c.h.b16 %v897
      %v950 = vunpack.c.l.b16 %v898
      %v951 = vunpack.c.h.b16 %v898
      %v952 = vunpack.c.l.b16 %v899
      %v953 = vunpack.c.h.b16 %v899
      %v954 = vunpack.c.l.b16 %v900
      %v955 = vunpack.c.h.b16 %v900
      %v956 = vunpack.c.l.b16 %v901
      %v957 = vunpack.c.h.b16 %v901
      %v958 = vunpack.c.l.b16 %v902
      %v959 = vunpack.c.h.b16 %v902
      %v960 = vunpack.c.l.b16 %v903
      %v961 = vunpack.c.h.b16 %v903
      %v962 = vunpack.c.l.b16 %v904
      %v963 = vunpack.c.h.b16 %v904
      %v964 = vunpack.c.l.b16 %v905
      %v965 = vunpack.c.h.b16 %v905
      %v966 = vunpack.c.l.b16 %v906
      %v967 = vunpack.c.h.b16 %v906
      %v968 = vunpack.c.l.b16 %v907
      %v969 = vunpack.c.h.b16 %v907
      %v970 = vunpack.c.l.b16 %v908
      %v971 = vunpack.c.h.b16 %v908
      %v972 = vunpack.c.l.b16 %v909
      %v973 = vunpack.c.h.b16 %v909
      %v974 = vunpack.c.l.b16 %v910
      %v975 = vunpack.c.h.b16 %v910
      %v976 = vunpack.c.l.b16 %v911
      %v977 = vunpack.c.h.b16 %v911
      %v978 = vunpack.c.l.b16 %v912
      %v979 = vunpack.c.h.b16 %v912
      %v980 = vunpack.c.l.b16 %v913
      %v981 = vunpack.c.h.b16 %v913
      %v982 = vunpack.c.l.b16 %v914
      %v983 = vunpack.c.h.b16 %v914
      %v984 = vunpack.c.l.b16 %v915
      %v985 = vunpack.c.h.b16 %v915
      %v986 = vunpack.c.l.b16 %v916
      %v987 = vunpack.c.h.b16 %v916
      %v988 = vunpack.c.l.b16 %v917
      %v989 = vunpack.c.h.b16 %v917
      %v990 = vunpack.c.l.b16 %v918
      %v991 = vunpack.c.h.b16 %v918
      %v992 = vunpack.c.l.b16 %v919
      %v993 = vunpack.c.h.b16 %v919
      %v994 = vunpack.c.l.b16 %v920
      %v995 = vunpack.c.h.b16 %v920
      %v996 = vpack.c.b16 %v946, %v946
      %v997 = vpack.c.b16 %v947, %v947
      %v998 = vpack.c.b16 %v948, %v948
      %v999 = vpack.c.b16 %v949, %v949
      %v1000 = vpack.c.b16 %v950, %v950
      %v1001 = vpack.c.b16 %v951, %v951
      %v1002 = vpack.c.b16 %v952, %v952
      %v1003 = vpack.c.b16 %v953, %v953
      %v1004 = vpack.c.b16 %v954, %v954
      %v1005 = vpack.c.b16 %v955, %v955
      %v1006 = vpack.c.b16 %v956, %v956
      %v1007 = vpack.c.b16 %v957, %v957
      %v1008 = vpack.c.b16 %v958, %v958
      %v1009 = vpack.c.b16 %v959, %v959
      %v1010 = vpack.c.b16 %v960, %v960
      %v1011 = vpack.c.b16 %v961, %v961
      %v1012 = vpack.c.b16 %v962, %v962
      %v1013 = vpack.c.b16 %v963, %v963
      %v1014 = vpack.c.b16 %v964, %v964
      %v1015 = vpack.c.b16 %v965, %v965
      %v1016 = vpack.c.b16 %v966, %v966
      %v1017 = vpack.c.b16 %v967, %v967
      %v1018 = vpack.c.b16 %v968, %v968
      %v1019 = vpack.c.b16 %v969, %v969
      %v1020 = vpack.c.b16 %v970, %v970
      %v1021 = vpack.c.b16 %v971, %v971
      %v1022 = vpack.c.b16 %v972, %v972
      %v1023 = vpack.c.b16 %v973, %v973
      %v1024 = vpack.c.b16 %v974, %v974
      %v1025 = vpack.c.b16 %v975, %v975
      %v1026 = vpack.c.b16 %v976, %v976
      %v1027 = vpack.c.b16 %v977, %v977
      %v1028 = vpack.c.b16 %v978, %v978
      %v1029 = vpack.c.b16 %v979, %v979
      %v1030 = vpack.c.b16 %v980, %v980
      %v1031 = vpack.c.b16 %v981, %v981
      %v1032 = vpack.c.b16 %v982, %v982
      %v1033 = vpack.c.b16 %v983, %v983
      %v1034 = vpack.c.b16 %v984, %v984
      %v1035 = vpack.c.b16 %v985, %v985
      %v1036 = vpack.c.b16 %v986, %v986
      %v1037 = vpack.c.b16 %v987, %v987
      %v1038 = vpack.c.b16 %v988, %v988
      %v1039 = vpack.c.b16 %v989, %v989
      %v1040 = vpack.c.b16 %v990, %v990
      %v1041 = vpack.c.b16 %v991, %v991
      %v1042 = vpack.c.b16 %v992, %v992
      %v1043 = vpack.c.b16 %v993, %v993
      %v1044 = vpack.c.b16 %v994, %v994
      %v1045 = vpack.c.b16 %v995, %v995
      %1096 = vst [vmem:[%s175] sm:$0xf] %v996
      %1097 = vst [vmem:[%s175 + $0x4] sm:$0xf] %v997
      %1098 = vst [vmem:[%s175 + $0x8] sm:$0xf] %v998
      %1099 = vst [vmem:[%s175 + $0xc] sm:$0xf] %v999
      %1100 = vst [vmem:[%s175 + $0x10] sm:$0xf] %v1000
      %1101 = vst [vmem:[%s175 + $0x14] sm:$0xf] %v1001
      %1102 = vst [vmem:[%s175 + $0x18] sm:$0xf] %v1002
      %1103 = vst [vmem:[%s175 + $0x1c] sm:$0xf] %v1003
      %1104 = vst [vmem:[%s175 + $0x20] sm:$0xf] %v1004
      %1105 = vst [vmem:[%s175 + $0x24] sm:$0xf] %v1005
      %1106 = vst [vmem:[%s175 + $0x28] sm:$0xf] %v1006
      %1107 = vst [vmem:[%s175 + $0x2c] sm:$0xf] %v1007
      %1108 = vst [vmem:[%s175 + $0x30] sm:$0xf] %v1008
      %1109 = vst [vmem:[%s175 + $0x34] sm:$0xf] %v1009
      %1110 = vst [vmem:[%s175 + $0x38] sm:$0xf] %v1010
      %1111 = vst [vmem:[%s175 + $0x3c] sm:$0xf] %v1011
      %1112 = vst [vmem:[%s175 + $0x40] sm:$0xf] %v1012
      %1113 = vst [vmem:[%s175 + $0x44] sm:$0xf] %v1013
      %1114 = vst [vmem:[%s175 + $0x48] sm:$0xf] %v1014
      %1115 = vst [vmem:[%s175 + $0x4c] sm:$0xf] %v1015
      %1116 = vst [vmem:[%s175 + $0x50] sm:$0xf] %v1016
      %1117 = vst [vmem:[%s175 + $0x54] sm:$0xf] %v1017
      %1118 = vst [vmem:[%s175 + $0x58] sm:$0xf] %v1018
      %1119 = vst [vmem:[%s175 + $0x5c] sm:$0xf] %v1019
      %1120 = vst [vmem:[%s175 + $0x60] sm:$0xf] %v1020
      %1121 = vst [vmem:[%s175 + $0x64] sm:$0xf] %v1021
      %1122 = vst [vmem:[%s175 + $0x68] sm:$0xf] %v1022
      %1123 = vst [vmem:[%s175 + $0x6c] sm:$0xf] %v1023
      %1124 = vst [vmem:[%s175 + $0x70] sm:$0xf] %v1024
      %1125 = vst [vmem:[%s175 + $0x74] sm:$0xf] %v1025
      %1126 = vst [vmem:[%s175 + $0x78] sm:$0xf] %v1026
      %1127 = vst [vmem:[%s175 + $0x7c] sm:$0xf] %v1027
      %1128 = vst [vmem:[%s175 + $0x80] sm:$0xf] %v1028
      %1129 = vst [vmem:[%s175 + $0x84] sm:$0xf] %v1029
      %1130 = vst [vmem:[%s175 + $0x88] sm:$0xf] %v1030
      %1131 = vst [vmem:[%s175 + $0x8c] sm:$0xf] %v1031
      %1132 = vst [vmem:[%s175 + $0x90] sm:$0xf] %v1032
      %1133 = vst [vmem:[%s175 + $0x94] sm:$0xf] %v1033
      %1134 = vst [vmem:[%s175 + $0x98] sm:$0xf] %v1034
      %1135 = vst [vmem:[%s175 + $0x9c] sm:$0xf] %v1035
      %1136 = vst [vmem:[%s175 + $0xa0] sm:$0xf] %v1036
      %1137 = vst [vmem:[%s175 + $0xa4] sm:$0xf] %v1037
      %1138 = vst [vmem:[%s175 + $0xa8] sm:$0xf] %v1038
      %1139 = vst [vmem:[%s175 + $0xac] sm:$0xf] %v1039
      %1140 = vst [vmem:[%s175 + $0xb0] sm:$0xf] %v1040
      %1141 = vst [vmem:[%s175 + $0xb4] sm:$0xf] %v1041
      %1142 = vst [vmem:[%s175 + $0xb8] sm:$0xf] %v1042
      %1143 = vst [vmem:[%s175 + $0xbc] sm:$0xf] %v1043
      %1144 = vst [vmem:[%s175 + $0xc0] sm:$0xf] %v1044
      %1145 = vst [vmem:[%s175 + $0xc4] sm:$0xf] %v1045
      %s1146 = smul.u32 50, %s14
      %p1147 = scmp.lt.s32.totalorder %s1146, 99
      %s1148 = scalar_select %p1147, %s1146, 99
      %s1149 = smul.addr %s1148, 4
      %s1150 = scalar_lea.vmem %s3, %s1149
      // Predicated region
      $region33: #{dqn_forward.4} parent=31 // pred_check
        %p1151 = pneg %p100
      $region34: #{dqn_forward.4} parent=31 // pred_check_branch
        %1153 = sbr.rel (%p1151) target = $region36
      $region35: #{dqn_forward.4} parent=31 // pred_region
        %s1154 = smul.u32 50, %s14
      $region36: #{dqn_forward.4} parent=31 // pred_fallthru
        _
    $region32: #{dqn_forward.4} parent=5 // pred_fallthru
      _
    %p1155 = scmp.le.s32.totalorder 2, %s9
    // Predicated region
    $region37: #{dqn_forward.4} parent=5 // pred_check
      %p1156 = pneg %p1155
    $region38: #{dqn_forward.4} parent=5 // pred_check_branch
      %1158 = sbr.rel (%p1156) target = $region40
    $region39: #{dqn_forward.4} parent=5 // pred_region
      %s1159 = ssub.s32 %s9, 2
      // Predicated region
      $region41: #{dqn_forward.4} parent=39 // pred_check
        %p1160 = pneg %p106
      $region42: #{dqn_forward.4} parent=39 // pred_check_branch
        %1162 = sbr.rel (%p1160) target = $region44
      $region43: #{dqn_forward.4} parent=39 // pred_region
        %s1163 = smul.u32 50, %s15
        %p1164 = scmp.lt.s32.totalorder %s1163, 99
        %s1165 = scalar_select %p1164, %s1163, 99
        %s1166 = smul.addr %s1165, 4
        %s1167 = scalar_lea.vmem %s3, %s1166
      $region44: #{dqn_forward.4} parent=39 // pred_fallthru
        _
    $region40: #{dqn_forward.4} parent=5 // pred_fallthru
      _
  $region6: #{dqn_forward.4} parent=0 // loop_footer
    %s13 = sadd.s32 1, %s9
  $region7: #{dqn_forward.4} parent=0 // loop_footer_branch
    %8 = sbr.rel target = $region3
  $region8: #{dqn_forward.4} parent=0 // loop_exit
    _

// kernel: dqn_forward.5
$region0: #{dqn_forward.5}
  #allocation0 [shape = 'u32[]', space=smem, size = 0x4, offset = 0x4, fixed_abs, tag = 'smem constant byte address 0x4 - core index']
  #allocation1 [shape = 'u32[144,128]{1,0:T(1,128)}', space=vmem, size = 0x12000, scoped, tag = 'internal scratch']
  %s0 = inlined_call_operand.vmem [shape: bf16[168,512], index: 0, kind: input, shape index: {}]
  %s1 = inlined_call_operand.vmem [shape: bf16[512,128], index: 1, kind: input, shape index: {}]
  %s2 = inlined_call_operand.vmem [shape: f32[1,128], index: 2, kind: input, shape index: {}]
  %s3 = inlined_call_operand.vmem [shape: bf16[168,128], index: 3, kind: output, shape index: {}]
  %s4 = sld [smem:[#allocation0]]
  $region22: #{dqn_forward.5} parent=0
    _
  %s6 = ssub.s32 1, %s4
  %s7 = scalar_select 0, %s6, %s4
  // Predicated region
  $region2: #{dqn_forward.5} parent=0 // pred_check
    _
  $region3: #{dqn_forward.5} parent=0 // pred_check_branch
    %9 = sbr.rel (0) target = $region5
  $region4: #{dqn_forward.5} parent=0 // pred_region
    _
  $region5: #{dqn_forward.5} parent=0 // pred_fallthru
    _
  // Predicated region
  $region6: #{dqn_forward.5} parent=0 // pred_check
    _
  $region7: #{dqn_forward.5} parent=0 // pred_check_branch
    %11 = sbr.rel (0) target = $region9
  $region8: #{dqn_forward.5} parent=0 // pred_region
    _
  $region9: #{dqn_forward.5} parent=0 // pred_fallthru
    _
  // Predicated region
  $region10: #{dqn_forward.5} parent=0 // pred_check
    _
  $region11: #{dqn_forward.5} parent=0 // pred_check_branch
    %13 = sbr.rel (0) target = $region13
  $region12: #{dqn_forward.5} parent=0 // pred_region
    _
  $region13: #{dqn_forward.5} parent=0 // pred_fallthru
    _
  %v15 = vld [vmem:[%s0] sm:$0xff]
  %v16 = vld [vmem:[%s0 + $0x8] sm:$0xff]
  %v17 = vld [vmem:[%s0 + $0x10] sm:$0xff]
  %v18 = vld [vmem:[%s0 + $0x18] sm:$0xff]
  %v19 = vld [vmem:[%s0 + $0x20] sm:$0xff]
  %v20 = vld [vmem:[%s0 + $0x28] sm:$0xff]
  %v21 = vld [vmem:[%s0 + $0x30] sm:$0xff]
  %v22 = vld [vmem:[%s0 + $0x38] sm:$0xff]
  %v23 = vld [vmem:[%s0 + $0x40] sm:$0xff]
  %v24 = vld [vmem:[%s0 + $0x48] sm:$0xff]
  %v25 = vld [vmem:[%s0 + $0x50] sm:$0xff]
  %v26 = vld [vmem:[%s0 + $0x58] sm:$0xff]
  %v27 = vld [vmem:[%s0 + $0x60] sm:$0xff]
  %v28 = vld [vmem:[%s0 + $0x68] sm:$0xff]
  %v29 = vld [vmem:[%s0 + $0x70] sm:$0xff]
  %v30 = vld [vmem:[%s0 + $0x78] sm:$0xff]
  %v31 = vld [vmem:[%s0 + $0x80] sm:$0xff]
  %v32 = vld [vmem:[%s0 + $0x88] sm:$0xff]
  %v33 = vld [vmem:[%s0 + $0x90] sm:$0xff]
  %v34 = vld [vmem:[%s0 + $0x98] sm:$0xff]
  %v35 = vld [vmem:[%s0 + $0xa0] sm:$0xff]
  %v36 = vld [vmem:[%s0 + $0xa8] sm:$0xff]
  %v37 = vld [vmem:[%s0 + $0xb0] sm:$0xff]
  %v38 = vld [vmem:[%s0 + $0xb8] sm:$0xff]
  %v39 = vld [vmem:[%s0 + $0xc0] sm:$0xff]
  %v40 = vld [vmem:[%s0 + $0xc8] sm:$0xff]
  %v41 = vld [vmem:[%s0 + $0xd0] sm:$0xff]
  %v42 = vld [vmem:[%s0 + $0xd8] sm:$0xff]
  %v43 = vld [vmem:[%s0 + $0xe0] sm:$0xff]
  %v44 = vld [vmem:[%s0 + $0xe8] sm:$0xff]
  %v45 = vld [vmem:[%s0 + $0xf0] sm:$0xff]
  %v46 = vld [vmem:[%s0 + $0xf8] sm:$0xff]
  %v47 = vld [vmem:[%s0 + $0x100] sm:$0xff]
  %v48 = vld [vmem:[%s0 + $0x108] sm:$0xff]
  %v49 = vld [vmem:[%s0 + $0x110] sm:$0xff]
  %v50 = vld [vmem:[%s0 + $0x118] sm:$0xff]
  %v51 = vld [vmem:[%s0 + $0x120] sm:$0xff]
  %v52 = vld [vmem:[%s0 + $0x128] sm:$0xff]
  %v53 = vld [vmem:[%s0 + $0x130] sm:$0xff]
  %v54 = vld [vmem:[%s0 + $0x138] sm:$0xff]
  %v55 = vld [vmem:[%s0 + $0x140] sm:$0xff]
  %v56 = vld [vmem:[%s0 + $0x148] sm:$0xff]
  %v57 = vld [vmem:[%s1] sm:$0xf]
  %v58 = vld [vmem:[%s1 + $0x4] sm:$0xf]
  %v59 = vld [vmem:[%s1 + $0x8] sm:$0xf]
  %v60 = vld [vmem:[%s1 + $0xc] sm:$0xf]
  %v61 = vld [vmem:[%s1 + $0x10] sm:$0xf]
  %v62 = vld [vmem:[%s1 + $0x14] sm:$0xf]
  %v63 = vld [vmem:[%s1 + $0x18] sm:$0xf]
  %v64 = vld [vmem:[%s1 + $0x1c] sm:$0xf]
  %v65 = vld [vmem:[%s1 + $0x20] sm:$0xf]
  %v66 = vld [vmem:[%s1 + $0x24] sm:$0xf]
  %v67 = vld [vmem:[%s1 + $0x28] sm:$0xf]
  %v68 = vld [vmem:[%s1 + $0x2c] sm:$0xf]
  %v69 = vld [vmem:[%s1 + $0x30] sm:$0xf]
  %v70 = vld [vmem:[%s1 + $0x34] sm:$0xf]
  %v71 = vld [vmem:[%s1 + $0x38] sm:$0xf]
  %v72 = vld [vmem:[%s1 + $0x3c] sm:$0xf]
  %v73 = vld [vmem:[%s1 + $0x40] sm:$0xf]
  %v74 = vld [vmem:[%s1 + $0x44] sm:$0xf]
  %v75 = vld [vmem:[%s1 + $0x48] sm:$0xf]
  %v76 = vld [vmem:[%s1 + $0x4c] sm:$0xf]
  %v77 = vld [vmem:[%s1 + $0x50] sm:$0xf]
  %v78 = vld [vmem:[%s1 + $0x54] sm:$0xf]
  %v79 = vld [vmem:[%s1 + $0x58] sm:$0xf]
  %v80 = vld [vmem:[%s1 + $0x5c] sm:$0xf]
  %v81 = vld [vmem:[%s1 + $0x60] sm:$0xf]
  %v82 = vld [vmem:[%s1 + $0x64] sm:$0xf]
  %v83 = vld [vmem:[%s1 + $0x68] sm:$0xf]
  %v84 = vld [vmem:[%s1 + $0x6c] sm:$0xf]
  %v85 = vld [vmem:[%s1 + $0x70] sm:$0xf]
  %v86 = vld [vmem:[%s1 + $0x74] sm:$0xf]
  %v87 = vld [vmem:[%s1 + $0x78] sm:$0xf]
  %v88 = vld [vmem:[%s1 + $0x7c] sm:$0xf]
  %v89 = vld [vmem:[%s1 + $0x80] sm:$0xf]
  %v90 = vld [vmem:[%s1 + $0x84] sm:$0xf]
  %v91 = vld [vmem:[%s1 + $0x88] sm:$0xf]
  %v92 = vld [vmem:[%s1 + $0x8c] sm:$0xf]
  %v93 = vld [vmem:[%s1 + $0x90] sm:$0xf]
  %v94 = vld [vmem:[%s1 + $0x94] sm:$0xf]
  %v95 = vld [vmem:[%s1 + $0x98] sm:$0xf]
  %v96 = vld [vmem:[%s1 + $0x9c] sm:$0xf]
  %v97 = vld [vmem:[%s1 + $0xa0] sm:$0xf]
  %v98 = vld [vmem:[%s1 + $0xa4] sm:$0xf]
  %v99 = vld [vmem:[%s1 + $0xa8] sm:$0xf]
  %v100 = vld [vmem:[%s1 + $0xac] sm:$0xf]
  %v101 = vld [vmem:[%s1 + $0xb0] sm:$0xf]
  %v102 = vld [vmem:[%s1 + $0xb4] sm:$0xf]
  %v103 = vld [vmem:[%s1 + $0xb8] sm:$0xf]
  %v104 = vld [vmem:[%s1 + $0xbc] sm:$0xf]
  %v105 = vld [vmem:[%s1 + $0xc0] sm:$0xf]
  %v106 = vld [vmem:[%s1 + $0xc4] sm:$0xf]
  %v107 = vld [vmem:[%s1 + $0xc8] sm:$0xf]
  %v108 = vld [vmem:[%s1 + $0xcc] sm:$0xf]
  %v109 = vld [vmem:[%s1 + $0xd0] sm:$0xf]
  %v110 = vld [vmem:[%s1 + $0xd4] sm:$0xf]
  %v111 = vld [vmem:[%s1 + $0xd8] sm:$0xf]
  %v112 = vld [vmem:[%s1 + $0xdc] sm:$0xf]
  %v113 = vld [vmem:[%s1 + $0xe0] sm:$0xf]
  %v114 = vld [vmem:[%s1 + $0xe4] sm:$0xf]
  %v115 = vld [vmem:[%s1 + $0xe8] sm:$0xf]
  %v116 = vld [vmem:[%s1 + $0xec] sm:$0xf]
  %v117 = vld [vmem:[%s1 + $0xf0] sm:$0xf]
  %v118 = vld [vmem:[%s1 + $0xf4] sm:$0xf]
  %v119 = vld [vmem:[%s1 + $0xf8] sm:$0xf]
  %v120 = vld [vmem:[%s1 + $0xfc] sm:$0xf]
  %v121 = vld [vmem:[%s2] sm:$0x1]
  %v123 = vlaneseq
  %v124 = vshrl.u32 %v123, 7
  %v125 = vsub.s32 0, %v124
  %v126 = vrot.slane %v121, %v125
  %v170 = vunpack.c.l.b16 %v15
  %v171 = vunpack.c.h.b16 %v15
  %v172 = vunpack.c.l.b16 %v16
  %v173 = vunpack.c.h.b16 %v16
  %v174 = vunpack.c.l.b16 %v17
  %v175 = vunpack.c.h.b16 %v17
  %v176 = vunpack.c.l.b16 %v18
  %v177 = vunpack.c.h.b16 %v18
  %v178 = vunpack.c.l.b16 %v19
  %v179 = vunpack.c.h.b16 %v19
  %v180 = vunpack.c.l.b16 %v20
  %v181 = vunpack.c.h.b16 %v20
  %v182 = vunpack.c.l.b16 %v21
  %v183 = vunpack.c.h.b16 %v21
  %v184 = vunpack.c.l.b16 %v22
  %v185 = vunpack.c.h.b16 %v22
  %v186 = vunpack.c.l.b16 %v23
  %v187 = vunpack.c.h.b16 %v23
  %v188 = vunpack.c.l.b16 %v24
  %v189 = vunpack.c.h.b16 %v24
  %v190 = vunpack.c.l.b16 %v25
  %v191 = vunpack.c.h.b16 %v25
  %v192 = vunpack.c.l.b16 %v26
  %v193 = vunpack.c.h.b16 %v26
  %v194 = vunpack.c.l.b16 %v27
  %v195 = vunpack.c.h.b16 %v27
  %v196 = vunpack.c.l.b16 %v28
  %v197 = vunpack.c.h.b16 %v28
  %v198 = vunpack.c.l.b16 %v29
  %v199 = vunpack.c.h.b16 %v29
  %v200 = vunpack.c.l.b16 %v30
  %v201 = vunpack.c.h.b16 %v30
  %v202 = vunpack.c.l.b16 %v31
  %v203 = vunpack.c.h.b16 %v31
  %v204 = vunpack.c.l.b16 %v32
  %v205 = vunpack.c.h.b16 %v32
  %v206 = vunpack.c.l.b16 %v33
  %v207 = vunpack.c.h.b16 %v33
  %v208 = vunpack.c.l.b16 %v34
  %v209 = vunpack.c.h.b16 %v34
  %v210 = vunpack.c.l.b16 %v35
  %v211 = vunpack.c.h.b16 %v35
  %v212 = vunpack.c.l.b16 %v36
  %v213 = vunpack.c.h.b16 %v36
  %v214 = vunpack.c.l.b16 %v37
  %v215 = vunpack.c.h.b16 %v37
  %v216 = vunpack.c.l.b16 %v38
  %v217 = vunpack.c.h.b16 %v38
  %v218 = vunpack.c.l.b16 %v39
  %v219 = vunpack.c.h.b16 %v39
  %v220 = vunpack.c.l.b16 %v40
  %v221 = vunpack.c.h.b16 %v40
  %v222 = vunpack.c.l.b16 %v41
  %v223 = vunpack.c.h.b16 %v41
  %v224 = vunpack.c.l.b16 %v42
  %v225 = vunpack.c.h.b16 %v42
  %v226 = vunpack.c.l.b16 %v43
  %v227 = vunpack.c.h.b16 %v43
  %v228 = vunpack.c.l.b16 %v44
  %v229 = vunpack.c.h.b16 %v44
  %v230 = vunpack.c.l.b16 %v45
  %v231 = vunpack.c.h.b16 %v45
  %v232 = vunpack.c.l.b16 %v46
  %v233 = vunpack.c.h.b16 %v46
  %v234 = vunpack.c.l.b16 %v47
  %v235 = vunpack.c.h.b16 %v47
  %v236 = vunpack.c.l.b16 %v48
  %v237 = vunpack.c.h.b16 %v48
  %v238 = vunpack.c.l.b16 %v49
  %v239 = vunpack.c.h.b16 %v49
  %v240 = vunpack.c.l.b16 %v50
  %v241 = vunpack.c.h.b16 %v50
  %v242 = vunpack.c.l.b16 %v51
  %v243 = vunpack.c.h.b16 %v51
  %v244 = vunpack.c.l.b16 %v52
  %v245 = vunpack.c.h.b16 %v52
  %v246 = vunpack.c.l.b16 %v53
  %v247 = vunpack.c.h.b16 %v53
  %v248 = vunpack.c.l.b16 %v54
  %v249 = vunpack.c.h.b16 %v54
  %v250 = vunpack.c.l.b16 %v55
  %v251 = vunpack.c.h.b16 %v55
  %v252 = vunpack.c.l.b16 %v56
  %v253 = vunpack.c.h.b16 %v56
  %v254 = vpack.c.b16 %v174, %v170
  %v255 = vpack.c.b16 %v175, %v171
  %v256 = vpack.c.b16 %v176, %v172
  %v257 = vpack.c.b16 %v177, %v173
  %v258 = vpack.c.b16 %v182, %v178
  %v259 = vpack.c.b16 %v183, %v179
  %v260 = vpack.c.b16 %v184, %v180
  %v261 = vpack.c.b16 %v185, %v181
  %v262 = vpack.c.b16 %v190, %v186
  %v263 = vpack.c.b16 %v191, %v187
  %v264 = vpack.c.b16 %v192, %v188
  %v265 = vpack.c.b16 %v193, %v189
  %v266 = vpack.c.b16 %v198, %v194
  %v267 = vpack.c.b16 %v199, %v195
  %v268 = vpack.c.b16 %v200, %v196
  %v269 = vpack.c.b16 %v201, %v197
  %v270 = vpack.c.b16 %v206, %v202
  %v271 = vpack.c.b16 %v207, %v203
  %v272 = vpack.c.b16 %v208, %v204
  %v273 = vpack.c.b16 %v209, %v205
  %v274 = vpack.c.b16 %v214, %v210
  %v275 = vpack.c.b16 %v215, %v211
  %v276 = vpack.c.b16 %v216, %v212
  %v277 = vpack.c.b16 %v217, %v213
  %v278 = vpack.c.b16 %v222, %v218
  %v279 = vpack.c.b16 %v223, %v219
  %v280 = vpack.c.b16 %v224, %v220
  %v281 = vpack.c.b16 %v225, %v221
  %v282 = vpack.c.b16 %v230, %v226
  %v283 = vpack.c.b16 %v231, %v227
  %v284 = vpack.c.b16 %v232, %v228
  %v285 = vpack.c.b16 %v233, %v229
  %v286 = vpack.c.b16 %v238, %v234
  %v287 = vpack.c.b16 %v239, %v235
  %v288 = vpack.c.b16 %v240, %v236
  %v289 = vpack.c.b16 %v241, %v237
  %v290 = vpack.c.b16 %v246, %v242
  %v291 = vpack.c.b16 %v247, %v243
  %v292 = vpack.c.b16 %v248, %v244
  %v293 = vpack.c.b16 %v249, %v245
  %v294 = vpack.c.b16 %v250, %v250
  %v295 = vpack.c.b16 %v251, %v251
  %v296 = vpack.c.b16 %v252, %v252
  %v297 = vpack.c.b16 %v253, %v253
  %v406 = vunpack.c.l.b16 %v57
  %v407 = vunpack.c.l.b16 %v58
  %v408 = vunpack.c.l.b16 %v59
  %v409 = vunpack.c.l.b16 %v60
  %v410 = vunpack.c.l.b16 %v61
  %v411 = vunpack.c.l.b16 %v62
  %v412 = vunpack.c.l.b16 %v63
  %v413 = vunpack.c.l.b16 %v64
  %v414 = vunpack.c.l.b16 %v65
  %v415 = vunpack.c.l.b16 %v66
  %v416 = vunpack.c.l.b16 %v67
  %v417 = vunpack.c.l.b16 %v68
  %v418 = vunpack.c.l.b16 %v69
  %v419 = vunpack.c.l.b16 %v70
  %v420 = vunpack.c.l.b16 %v71
  %v421 = vunpack.c.l.b16 %v72
  %v422 = vunpack.c.l.b16 %v73
  %v423 = vunpack.c.l.b16 %v74
  %v424 = vunpack.c.l.b16 %v75
  %v425 = vunpack.c.l.b16 %v76
  %v426 = vunpack.c.l.b16 %v77
  %v427 = vunpack.c.l.b16 %v78
  %v428 = vunpack.c.l.b16 %v79
  %v429 = vunpack.c.l.b16 %v80
  %v430 = vunpack.c.l.b16 %v81
  %v431 = vunpack.c.l.b16 %v82
  %v432 = vunpack.c.l.b16 %v83
  %v433 = vunpack.c.l.b16 %v84
  %v434 = vunpack.c.l.b16 %v85
  %v435 = vunpack.c.l.b16 %v86
  %v436 = vunpack.c.l.b16 %v87
  %v437 = vunpack.c.l.b16 %v88
  %v438 = vunpack.c.l.b16 %v89
  %v439 = vunpack.c.l.b16 %v90
  %v440 = vunpack.c.l.b16 %v91
  %v441 = vunpack.c.l.b16 %v92
  %v442 = vunpack.c.l.b16 %v93
  %v443 = vunpack.c.l.b16 %v94
  %v444 = vunpack.c.l.b16 %v95
  %v445 = vunpack.c.l.b16 %v96
  %v446 = vunpack.c.l.b16 %v97
  %v447 = vunpack.c.l.b16 %v98
  %v448 = vunpack.c.l.b16 %v99
  %v449 = vunpack.c.l.b16 %v100
  %v450 = vunpack.c.l.b16 %v101
  %v451 = vunpack.c.l.b16 %v102
  %v452 = vunpack.c.l.b16 %v103
  %v453 = vunpack.c.l.b16 %v104
  %v454 = vunpack.c.l.b16 %v105
  %v455 = vunpack.c.l.b16 %v106
  %v456 = vunpack.c.l.b16 %v107
  %v457 = vunpack.c.l.b16 %v108
  %v458 = vunpack.c.l.b16 %v109
  %v459 = vunpack.c.l.b16 %v110
  %v460 = vunpack.c.l.b16 %v111
  %v461 = vunpack.c.l.b16 %v112
  %v462 = vunpack.c.l.b16 %v113
  %v463 = vunpack.c.l.b16 %v114
  %v464 = vunpack.c.l.b16 %v115
  %v465 = vunpack.c.l.b16 %v116
  %v466 = vunpack.c.l.b16 %v117
  %v467 = vunpack.c.l.b16 %v118
  %v468 = vunpack.c.l.b16 %v119
  %v469 = vunpack.c.l.b16 %v120
  %v470 = vpack.c.b16 %v407, %v406
  %v471 = vpack.c.b16 %v409, %v408
  %v472 = vpack.c.b16 %v411, %v410
  %v473 = vpack.c.b16 %v413, %v412
  %v474 = vpack.c.b16 %v415, %v414
  %v475 = vpack.c.b16 %v417, %v416
  %v476 = vpack.c.b16 %v419, %v418
  %v477 = vpack.c.b16 %v421, %v420
  %v478 = vpack.c.b16 %v423, %v422
  %v479 = vpack.c.b16 %v425, %v424
  %v480 = vpack.c.b16 %v427, %v426
  %v481 = vpack.c.b16 %v429, %v428
  %v482 = vpack.c.b16 %v431, %v430
  %v483 = vpack.c.b16 %v433, %v432
  %v484 = vpack.c.b16 %v435, %v434
  %v485 = vpack.c.b16 %v437, %v436
  %v486 = vpack.c.b16 %v439, %v438
  %v487 = vpack.c.b16 %v441, %v440
  %v488 = vpack.c.b16 %v443, %v442
  %v489 = vpack.c.b16 %v445, %v444
  %v490 = vpack.c.b16 %v447, %v446
  %v491 = vpack.c.b16 %v449, %v448
  %v492 = vpack.c.b16 %v451, %v450
  %v493 = vpack.c.b16 %v453, %v452
  %v494 = vpack.c.b16 %v455, %v454
  %v495 = vpack.c.b16 %v457, %v456
  %v496 = vpack.c.b16 %v459, %v458
  %v497 = vpack.c.b16 %v461, %v460
  %v498 = vpack.c.b16 %v463, %v462
  %v499 = vpack.c.b16 %v465, %v464
  %v500 = vpack.c.b16 %v467, %v466
  %v501 = vpack.c.b16 %v469, %v468
  %534 = vmatprep.subr.bf16.mxu0 0
  %535 = vmatpush1.bf16.msra.mxu0 %v477
  %536 = vmatprep.subr.bf16.mxu0 0
  %537 = vmatpush1.bf16.msra.mxu0 %v476
  %538 = vmatprep.subr.bf16.mxu0 0
  %539 = vmatpush1.bf16.msra.mxu0 %v475
  %540 = vmatprep.subr.bf16.mxu0 0
  %541 = vmatpush1.bf16.msra.mxu0 %v474
  %542 = vmatprep.subr.bf16.mxu0 0
  %543 = vmatpush1.bf16.msra.mxu0 %v473
  %544 = vmatprep.subr.bf16.mxu0 0
  %545 = vmatpush1.bf16.msra.mxu0 %v472
  %546 = vmatprep.subr.bf16.mxu0 0
  %547 = vmatpush1.bf16.msra.mxu0 %v471
  %548 = vmatprep.subr.bf16.mxu0 0
  %549 = vmatpush1.bf16.msra.mxu0 %v470
  %550 = vmatprep.subr.bf16.mxu0 0
  %551 = vmatpush2.bf16.msra.mxu0 %v485
  %552 = vmatprep.subr.bf16.mxu0 0
  %553 = vmatpush2.bf16.msra.mxu0 %v484
  %554 = vmatprep.subr.bf16.mxu0 0
  %555 = vmatpush2.bf16.msra.mxu0 %v483
  %556 = vmatprep.subr.bf16.mxu0 0
  %557 = vmatpush2.bf16.msra.mxu0 %v482
  %558 = vmatprep.subr.bf16.mxu0 0
  %559 = vmatpush2.bf16.msra.mxu0 %v481
  %560 = vmatprep.subr.bf16.mxu0 0
  %561 = vmatpush2.bf16.msra.mxu0 %v480
  %562 = vmatprep.subr.bf16.mxu0 0
  %563 = vmatpush2.bf16.msra.mxu0 %v479
  %564 = vmatprep.subr.bf16.mxu0 0
  %565 = vmatpush2.bf16.msra.mxu0 %v478
  %566 = vmatprep.mubr.bf16.mxu0 %v255
  %567 = vmatmul.mubr.bf16.gmra.mxu0 %v254
  %v568 = vpop.f32.mrf.mxu0
  %v569 = vadd.f32 %v126, %v568
  %v570 = vpop.f32.mrf.mxu0
  %v571 = vpop.f32.mrf.mxu0
  %v572 = vadd.f32 %v126, %v571
  %v573 = vpop.f32.mrf.mxu0
  %574 = vmatprep.mubr.bf16.mxu0 %v259
  %575 = vmatmul.mubr.bf16.gmra.mxu0 %v258
  %v576 = vpop.f32.mrf.mxu0
  %v577 = vadd.f32 %v126, %v576
  %v578 = vpop.f32.mrf.mxu0
  %v579 = vpop.f32.mrf.mxu0
  %v580 = vadd.f32 %v126, %v579
  %v581 = vpop.f32.mrf.mxu0
  %582 = vmatprep.mubr.bf16.mxu0 %v263
  %583 = vmatmul.mubr.bf16.gmra.mxu0 %v262
  %v584 = vpop.f32.mrf.mxu0
  %v585 = vadd.f32 %v126, %v584
  %v586 = vpop.f32.mrf.mxu0
  %v587 = vpop.f32.mrf.mxu0
  %v588 = vadd.f32 %v126, %v587
  %v589 = vpop.f32.mrf.mxu0
  %590 = vmatprep.mubr.bf16.mxu0 %v267
  %591 = vmatmul.mubr.bf16.gmra.mxu0 %v266
  %v592 = vpop.f32.mrf.mxu0
  %v593 = vadd.f32 %v126, %v592
  %v594 = vpop.f32.mrf.mxu0
  %v595 = vpop.f32.mrf.mxu0
  %v596 = vadd.f32 %v126, %v595
  %v597 = vpop.f32.mrf.mxu0
  %598 = vmatprep.mubr.bf16.mxu0 %v271
  %599 = vmatmul.mubr.bf16.gmra.mxu0 %v270
  %v600 = vpop.f32.mrf.mxu0
  %v601 = vadd.f32 %v126, %v600
  %v602 = vpop.f32.mrf.mxu0
  %v603 = vpop.f32.mrf.mxu0
  %v604 = vadd.f32 %v126, %v603
  %v605 = vpop.f32.mrf.mxu0
  %606 = vmatprep.mubr.bf16.mxu0 %v275
  %607 = vmatmul.mubr.bf16.gmra.mxu0 %v274
  %v608 = vpop.f32.mrf.mxu0
  %v609 = vadd.f32 %v126, %v608
  %v610 = vpop.f32.mrf.mxu0
  %v611 = vpop.f32.mrf.mxu0
  %v612 = vadd.f32 %v126, %v611
  %v613 = vpop.f32.mrf.mxu0
  %614 = vmatprep.mubr.bf16.mxu0 %v279
  %615 = vmatmul.mubr.bf16.gmra.mxu0 %v278
  %v616 = vpop.f32.mrf.mxu0
  %v617 = vadd.f32 %v126, %v616
  %v618 = vpop.f32.mrf.mxu0
  %v619 = vpop.f32.mrf.mxu0
  %v620 = vadd.f32 %v126, %v619
  %v621 = vpop.f32.mrf.mxu0
  %622 = vmatprep.mubr.bf16.mxu0 %v283
  %623 = vmatmul.mubr.bf16.gmra.mxu0 %v282
  %v624 = vpop.f32.mrf.mxu0
  %v625 = vadd.f32 %v126, %v624
  %v626 = vpop.f32.mrf.mxu0
  %v627 = vpop.f32.mrf.mxu0
  %v628 = vadd.f32 %v126, %v627
  %v629 = vpop.f32.mrf.mxu0
  %630 = vmatprep.mubr.bf16.mxu0 %v287
  %631 = vmatmul.mubr.bf16.gmra.mxu0 %v286
  %v632 = vpop.f32.mrf.mxu0
  %v633 = vadd.f32 %v126, %v632
  %v634 = vpop.f32.mrf.mxu0
  %v635 = vpop.f32.mrf.mxu0
  %v636 = vadd.f32 %v126, %v635
  %v637 = vpop.f32.mrf.mxu0
  %638 = vmatprep.mubr.bf16.mxu0 %v291
  %639 = vmatmul.mubr.bf16.gmra.mxu0 %v290
  %v640 = vpop.f32.mrf.mxu0
  %v641 = vadd.f32 %v126, %v640
  %v642 = vpop.f32.mrf.mxu0
  %v643 = vpop.f32.mrf.mxu0
  %v644 = vadd.f32 %v126, %v643
  %v645 = vpop.f32.mrf.mxu0
  %646 = vmatprep.mubr.bf16.mxu0 %v295
  %647 = vmatmul.mubr.bf16.gmra.mxu0 %v294
  %v648 = vpop.f32.mrf.mxu0
  %v649 = vadd.f32 %v126, %v648
  %v650 = vpop.f32.mrf.mxu0
  %v651 = vpop.f32.mrf.mxu0
  %v652 = vpop.f32.mrf.mxu0
  %653 = vdwg.mxu0
  %654 = vmatprep.subr.bf16.mxu0 0
  %655 = vmatpush1.bf16.msra.mxu0 %v493
  %656 = vmatprep.subr.bf16.mxu0 0
  %657 = vmatpush1.bf16.msra.mxu0 %v492
  %658 = vmatprep.subr.bf16.mxu0 0
  %659 = vmatpush1.bf16.msra.mxu0 %v491
  %660 = vmatprep.subr.bf16.mxu0 0
  %661 = vmatpush1.bf16.msra.mxu0 %v490
  %662 = vmatprep.subr.bf16.mxu0 0
  %663 = vmatpush1.bf16.msra.mxu0 %v489
  %664 = vmatprep.subr.bf16.mxu0 0
  %665 = vmatpush1.bf16.msra.mxu0 %v488
  %666 = vmatprep.subr.bf16.mxu0 0
  %667 = vmatpush1.bf16.msra.mxu0 %v487
  %668 = vmatprep.subr.bf16.mxu0 0
  %669 = vmatpush1.bf16.msra.mxu0 %v486
  %670 = vmatprep.subr.bf16.mxu0 0
  %671 = vmatpush2.bf16.msra.mxu0 %v501
  %672 = vmatprep.subr.bf16.mxu0 0
  %673 = vmatpush2.bf16.msra.mxu0 %v500
  %674 = vmatprep.subr.bf16.mxu0 0
  %675 = vmatpush2.bf16.msra.mxu0 %v499
  %676 = vmatprep.subr.bf16.mxu0 0
  %677 = vmatpush2.bf16.msra.mxu0 %v498
  %678 = vmatprep.subr.bf16.mxu0 0
  %679 = vmatpush2.bf16.msra.mxu0 %v497
  %680 = vmatprep.subr.bf16.mxu0 0
  %681 = vmatpush2.bf16.msra.mxu0 %v496
  %682 = vmatprep.subr.bf16.mxu0 0
  %683 = vmatpush2.bf16.msra.mxu0 %v495
  %684 = vmatprep.subr.bf16.mxu0 0
  %685 = vmatpush2.bf16.msra.mxu0 %v494
  %686 = vmatprep.mubr.bf16.mxu0 %v257
  %687 = vmatmul.mubr.bf16.gmra.mxu0 %v256
  %v688 = vpop.f32.mrf.mxu0
  %v689 = vadd.f32 %v569, %v688
  %v690 = vpop.f32.mrf.mxu0
  %v691 = vpop.f32.mrf.mxu0
  %v692 = vadd.f32 %v572, %v691
  %v693 = vpop.f32.mrf.mxu0
  %694 = vmatprep.mubr.bf16.mxu0 %v261
  %695 = vmatmul.mubr.bf16.gmra.mxu0 %v260
  %v696 = vpop.f32.mrf.mxu0
  %v697 = vadd.f32 %v577, %v696
  %v698 = vpop.f32.mrf.mxu0
  %v699 = vpop.f32.mrf.mxu0
  %v700 = vadd.f32 %v580, %v699
  %v701 = vpop.f32.mrf.mxu0
  %702 = vmatprep.mubr.bf16.mxu0 %v265
  %703 = vmatmul.mubr.bf16.gmra.mxu0 %v264
  %v704 = vpop.f32.mrf.mxu0
  %v705 = vadd.f32 %v585, %v704
  %v706 = vpop.f32.mrf.mxu0
  %v707 = vpop.f32.mrf.mxu0
  %v708 = vadd.f32 %v588, %v707
  %v709 = vpop.f32.mrf.mxu0
  %710 = vmatprep.mubr.bf16.mxu0 %v269
  %711 = vmatmul.mubr.bf16.gmra.mxu0 %v268
  %v712 = vpop.f32.mrf.mxu0
  %v713 = vadd.f32 %v593, %v712
  %v714 = vpop.f32.mrf.mxu0
  %v715 = vpop.f32.mrf.mxu0
  %v716 = vadd.f32 %v596, %v715
  %v717 = vpop.f32.mrf.mxu0
  %718 = vmatprep.mubr.bf16.mxu0 %v273
  %719 = vmatmul.mubr.bf16.gmra.mxu0 %v272
  %v720 = vpop.f32.mrf.mxu0
  %v721 = vadd.f32 %v601, %v720
  %v722 = vpop.f32.mrf.mxu0
  %v723 = vpop.f32.mrf.mxu0
  %v724 = vadd.f32 %v604, %v723
  %v725 = vpop.f32.mrf.mxu0
  %726 = vmatprep.mubr.bf16.mxu0 %v277
  %727 = vmatmul.mubr.bf16.gmra.mxu0 %v276
  %v728 = vpop.f32.mrf.mxu0
  %v729 = vadd.f32 %v609, %v728
  %v730 = vpop.f32.mrf.mxu0
  %v731 = vpop.f32.mrf.mxu0
  %v732 = vadd.f32 %v612, %v731
  %v733 = vpop.f32.mrf.mxu0
  %734 = vmatprep.mubr.bf16.mxu0 %v281
  %735 = vmatmul.mubr.bf16.gmra.mxu0 %v280
  %v736 = vpop.f32.mrf.mxu0
  %v737 = vadd.f32 %v617, %v736
  %v738 = vpop.f32.mrf.mxu0
  %v739 = vpop.f32.mrf.mxu0
  %v740 = vadd.f32 %v620, %v739
  %v741 = vpop.f32.mrf.mxu0
  %742 = vmatprep.mubr.bf16.mxu0 %v285
  %743 = vmatmul.mubr.bf16.gmra.mxu0 %v284
  %v744 = vpop.f32.mrf.mxu0
  %v745 = vadd.f32 %v625, %v744
  %v746 = vpop.f32.mrf.mxu0
  %v747 = vpop.f32.mrf.mxu0
  %v748 = vadd.f32 %v628, %v747
  %v749 = vpop.f32.mrf.mxu0
  %750 = vmatprep.mubr.bf16.mxu0 %v289
  %751 = vmatmul.mubr.bf16.gmra.mxu0 %v288
  %v752 = vpop.f32.mrf.mxu0
  %v753 = vadd.f32 %v633, %v752
  %v754 = vpop.f32.mrf.mxu0
  %v755 = vpop.f32.mrf.mxu0
  %v756 = vadd.f32 %v636, %v755
  %v757 = vpop.f32.mrf.mxu0
  %758 = vmatprep.mubr.bf16.mxu0 %v293
  %759 = vmatmul.mubr.bf16.gmra.mxu0 %v292
  %v760 = vpop.f32.mrf.mxu0
  %v761 = vadd.f32 %v641, %v760
  %v762 = vpop.f32.mrf.mxu0
  %v763 = vpop.f32.mrf.mxu0
  %v764 = vadd.f32 %v644, %v763
  %v765 = vpop.f32.mrf.mxu0
  %766 = vmatprep.mubr.bf16.mxu0 %v297
  %767 = vmatmul.mubr.bf16.gmra.mxu0 %v296
  %v768 = vpop.f32.mrf.mxu0
  %v769 = vadd.f32 %v649, %v768
  %v770 = vpop.f32.mrf.mxu0
  %v771 = vpop.f32.mrf.mxu0
  %v772 = vpop.f32.mrf.mxu0
  %773 = vdwg.mxu0
  %v774 = vmax.f32 %v689, 0.0
  %v775 = vmax.f32 %v692, 0.0
  %v776 = vmax.f32 %v697, 0.0
  %v777 = vmax.f32 %v700, 0.0
  %v778 = vmax.f32 %v705, 0.0
  %v779 = vmax.f32 %v708, 0.0
  %v780 = vmax.f32 %v713, 0.0
  %v781 = vmax.f32 %v716, 0.0
  %v782 = vmax.f32 %v721, 0.0
  %v783 = vmax.f32 %v724, 0.0
  %v784 = vmax.f32 %v729, 0.0
  %v785 = vmax.f32 %v732, 0.0
  %v786 = vmax.f32 %v737, 0.0
  %v787 = vmax.f32 %v740, 0.0
  %v788 = vmax.f32 %v745, 0.0
  %v789 = vmax.f32 %v748, 0.0
  %v790 = vmax.f32 %v753, 0.0
  %v791 = vmax.f32 %v756, 0.0
  %v792 = vmax.f32 %v761, 0.0
  %v793 = vmax.f32 %v764, 0.0
  %v794 = vmax.f32 %v769, 0.0
  %v795 = vpack.c.bf16 %v775, %v774
  %v796 = vpack.c.bf16 %v777, %v776
  %v797 = vpack.c.bf16 %v779, %v778
  %v798 = vpack.c.bf16 %v781, %v780
  %v799 = vpack.c.bf16 %v783, %v782
  %v800 = vpack.c.bf16 %v785, %v784
  %v801 = vpack.c.bf16 %v787, %v786
  %v802 = vpack.c.bf16 %v789, %v788
  %v803 = vpack.c.bf16 %v791, %v790
  %v804 = vpack.c.bf16 %v793, %v792
  %v805 = vpack.c.bf16 %v794, %v794
  %v817 = vunpack.c.l.b16 %v795
  %v818 = vunpack.c.h.b16 %v795
  %v819 = vunpack.c.l.b16 %v796
  %v820 = vunpack.c.h.b16 %v796
  %v821 = vunpack.c.l.b16 %v797
  %v822 = vunpack.c.h.b16 %v797
  %v823 = vunpack.c.l.b16 %v798
  %v824 = vunpack.c.h.b16 %v798
  %v825 = vunpack.c.l.b16 %v799
  %v826 = vunpack.c.h.b16 %v799
  %v827 = vunpack.c.l.b16 %v800
  %v828 = vunpack.c.h.b16 %v800
  %v829 = vunpack.c.l.b16 %v801
  %v830 = vunpack.c.h.b16 %v801
  %v831 = vunpack.c.l.b16 %v802
  %v832 = vunpack.c.h.b16 %v802
  %v833 = vunpack.c.l.b16 %v803
  %v834 = vunpack.c.h.b16 %v803
  %v835 = vunpack.c.l.b16 %v804
  %v836 = vunpack.c.h.b16 %v804
  %v837 = vunpack.c.l.b16 %v805
  %v838 = vpack.c.b16 %v817, %v817
  %v839 = vpack.c.b16 %v818, %v818
  %v840 = vpack.c.b16 %v819, %v819
  %v841 = vpack.c.b16 %v820, %v820
  %v842 = vpack.c.b16 %v821, %v821
  %v843 = vpack.c.b16 %v822, %v822
  %v844 = vpack.c.b16 %v823, %v823
  %v845 = vpack.c.b16 %v824, %v824
  %v846 = vpack.c.b16 %v825, %v825
  %v847 = vpack.c.b16 %v826, %v826
  %v848 = vpack.c.b16 %v827, %v827
  %v849 = vpack.c.b16 %v828, %v828
  %v850 = vpack.c.b16 %v829, %v829
  %v851 = vpack.c.b16 %v830, %v830
  %v852 = vpack.c.b16 %v831, %v831
  %v853 = vpack.c.b16 %v832, %v832
  %v854 = vpack.c.b16 %v833, %v833
  %v855 = vpack.c.b16 %v834, %v834
  %v856 = vpack.c.b16 %v835, %v835
  %v857 = vpack.c.b16 %v836, %v836
  %v858 = vpack.c.b16 %v837, %v837
  %880 = vst [vmem:[%s3] sm:$0xf] %v838
  %881 = vst [vmem:[%s3 + $0x4] sm:$0xf] %v839
  %882 = vst [vmem:[%s3 + $0x8] sm:$0xf] %v840
  %883 = vst [vmem:[%s3 + $0xc] sm:$0xf] %v841
  %884 = vst [vmem:[%s3 + $0x10] sm:$0xf] %v842
  %885 = vst [vmem:[%s3 + $0x14] sm:$0xf] %v843
  %886 = vst [vmem:[%s3 + $0x18] sm:$0xf] %v844
  %887 = vst [vmem:[%s3 + $0x1c] sm:$0xf] %v845
  %888 = vst [vmem:[%s3 + $0x20] sm:$0xf] %v846
  %889 = vst [vmem:[%s3 + $0x24] sm:$0xf] %v847
  %890 = vst [vmem:[%s3 + $0x28] sm:$0xf] %v848
  %891 = vst [vmem:[%s3 + $0x2c] sm:$0xf] %v849
  %892 = vst [vmem:[%s3 + $0x30] sm:$0xf] %v850
  %893 = vst [vmem:[%s3 + $0x34] sm:$0xf] %v851
  %894 = vst [vmem:[%s3 + $0x38] sm:$0xf] %v852
  %895 = vst [vmem:[%s3 + $0x3c] sm:$0xf] %v853
  %896 = vst [vmem:[%s3 + $0x40] sm:$0xf] %v854
  %897 = vst [vmem:[%s3 + $0x44] sm:$0xf] %v855
  %898 = vst [vmem:[%s3 + $0x48] sm:$0xf] %v856
  %899 = vst [vmem:[%s3 + $0x4c] sm:$0xf] %v857
  %900 = vst [vmem:[%s3 + $0x50] sm:$0xf] %v858
  // Predicated region
  $region14: #{dqn_forward.5} parent=0 // pred_check
    _
  $region15: #{dqn_forward.5} parent=0 // pred_check_branch
    %902 = sbr.rel (0) target = $region17
  $region16: #{dqn_forward.5} parent=0 // pred_region
    _
  $region17: #{dqn_forward.5} parent=0 // pred_fallthru
    _
  // Predicated region
  $region18: #{dqn_forward.5} parent=0 // pred_check
    _
  $region19: #{dqn_forward.5} parent=0 // pred_check_branch
    %904 = sbr.rel (0) target = $region21
  $region20: #{dqn_forward.5} parent=0 // pred_region
    _
  $region21: #{dqn_forward.5} parent=0 // pred_fallthru
    _

// kernel: dqn_forward.6
$region0: #{dqn_forward.6}
  #allocation0 [shape = 'u32[]', space=smem, size = 0x4, offset = 0x4, fixed_abs, tag = 'smem constant byte address 0x4 - core index']
  #allocation1 [shape = 'u32[144,128]{1,0:T(1,128)}', space=vmem, size = 0x12000, scoped, tag = 'internal scratch']
  %s0 = inlined_call_operand.vmem [shape: bf16[104,640], index: 0, kind: input, shape index: {}]
  %s1 = inlined_call_operand.vmem [shape: bf16[640,128], index: 1, kind: input, shape index: {}]
  %s2 = inlined_call_operand.vmem [shape: f32[1,128], index: 2, kind: input, shape index: {}]
  %s3 = inlined_call_operand.vmem [shape: bf16[104,128], index: 3, kind: output, shape index: {}]
  %s4 = sld [smem:[#allocation0]]
  $region22: #{dqn_forward.6} parent=0
    _
  %s6 = ssub.s32 1, %s4
  %s7 = scalar_select 0, %s6, %s4
  // Predicated region
  $region2: #{dqn_forward.6} parent=0 // pred_check
    _
  $region3: #{dqn_forward.6} parent=0 // pred_check_branch
    %9 = sbr.rel (0) target = $region5
  $region4: #{dqn_forward.6} parent=0 // pred_region
    _
  $region5: #{dqn_forward.6} parent=0 // pred_fallthru
    _
  // Predicated region
  $region6: #{dqn_forward.6} parent=0 // pred_check
    _
  $region7: #{dqn_forward.6} parent=0 // pred_check_branch
    %11 = sbr.rel (0) target = $region9
  $region8: #{dqn_forward.6} parent=0 // pred_region
    _
  $region9: #{dqn_forward.6} parent=0 // pred_fallthru
    _
  // Predicated region
  $region10: #{dqn_forward.6} parent=0 // pred_check
    _
  $region11: #{dqn_forward.6} parent=0 // pred_check_branch
    %13 = sbr.rel (0) target = $region13
  $region12: #{dqn_forward.6} parent=0 // pred_region
    _
  $region13: #{dqn_forward.6} parent=0 // pred_fallthru
    _
  %v15 = vld [vmem:[%s0] sm:$0xff]
  %v16 = vld [vmem:[%s0 + $0x8] sm:$0xff]
  %v17 = vld [vmem:[%s0 + $0x10] sm:$0xf]
  %v18 = vld [vmem:[%s0 + $0x14] sm:$0xff]
  %v19 = vld [vmem:[%s0 + $0x1c] sm:$0xff]
  %v20 = vld [vmem:[%s0 + $0x24] sm:$0xf]
  %v21 = vld [vmem:[%s0 + $0x28] sm:$0xff]
  %v22 = vld [vmem:[%s0 + $0x30] sm:$0xff]
  %v23 = vld [vmem:[%s0 + $0x38] sm:$0xf]
  %v24 = vld [vmem:[%s0 + $0x3c] sm:$0xff]
  %v25 = vld [vmem:[%s0 + $0x44] sm:$0xff]
  %v26 = vld [vmem:[%s0 + $0x4c] sm:$0xf]
  %v27 = vld [vmem:[%s0 + $0x50] sm:$0xff]
  %v28 = vld [vmem:[%s0 + $0x58] sm:$0xff]
  %v29 = vld [vmem:[%s0 + $0x60] sm:$0xf]
  %v30 = vld [vmem:[%s0 + $0x64] sm:$0xff]
  %v31 = vld [vmem:[%s0 + $0x6c] sm:$0xff]
  %v32 = vld [vmem:[%s0 + $0x74] sm:$0xf]
  %v33 = vld [vmem:[%s0 + $0x78] sm:$0xff]
  %v34 = vld [vmem:[%s0 + $0x80] sm:$0xff]
  %v35 = vld [vmem:[%s0 + $0x88] sm:$0xf]
  %v36 = vld [vmem:[%s0 + $0x8c] sm:$0xff]
  %v37 = vld [vmem:[%s0 + $0x94] sm:$0xff]
  %v38 = vld [vmem:[%s0 + $0x9c] sm:$0xf]
  %v39 = vld [vmem:[%s0 + $0xa0] sm:$0xff]
  %v40 = vld [vmem:[%s0 + $0xa8] sm:$0xff]
  %v41 = vld [vmem:[%s0 + $0xb0] sm:$0xf]
  %v42 = vld [vmem:[%s0 + $0xb4] sm:$0xff]
  %v43 = vld [vmem:[%s0 + $0xbc] sm:$0xff]
  %v44 = vld [vmem:[%s0 + $0xc4] sm:$0xf]
  %v45 = vld [vmem:[%s0 + $0xc8] sm:$0xff]
  %v46 = vld [vmem:[%s0 + $0xd0] sm:$0xff]
  %v47 = vld [vmem:[%s0 + $0xd8] sm:$0xf]
  %v48 = vld [vmem:[%s0 + $0xdc] sm:$0xff]
  %v49 = vld [vmem:[%s0 + $0xe4] sm:$0xff]
  %v50 = vld [vmem:[%s0 + $0xec] sm:$0xf]
  %v51 = vld [vmem:[%s0 + $0xf0] sm:$0xff]
  %v52 = vld [vmem:[%s0 + $0xf8] sm:$0xff]
  %v53 = vld [vmem:[%s0 + $0x100] sm:$0xf]
  %v54 = vld [vmem:[%s1] sm:$0xf]
  %v55 = vld [vmem:[%s1 + $0x4] sm:$0xf]
  %v56 = vld [vmem:[%s1 + $0x8] sm:$0xf]
  %v57 = vld [vmem:[%s1 + $0xc] sm:$0xf]
  %v58 = vld [vmem:[%s1 + $0x10] sm:$0xf]
  %v59 = vld [vmem:[%s1 + $0x14] sm:$0xf]
  %v60 = vld [vmem:[%s1 + $0x18] sm:$0xf]
  %v61 = vld [vmem:[%s1 + $0x1c] sm:$0xf]
  %v62 = vld [vmem:[%s1 + $0x20] sm:$0xf]
  %v63 = vld [vmem:[%s1 + $0x24] sm:$0xf]
  %v64 = vld [vmem:[%s1 + $0x28] sm:$0xf]
  %v65 = vld [vmem:[%s1 + $0x2c] sm:$0xf]
  %v66 = vld [vmem:[%s1 + $0x30] sm:$0xf]
  %v67 = vld [vmem:[%s1 + $0x34] sm:$0xf]
  %v68 = vld [vmem:[%s1 + $0x38] sm:$0xf]
  %v69 = vld [vmem:[%s1 + $0x3c] sm:$0xf]
  %v70 = vld [vmem:[%s1 + $0x40] sm:$0xf]
  %v71 = vld [vmem:[%s1 + $0x44] sm:$0xf]
  %v72 = vld [vmem:[%s1 + $0x48] sm:$0xf]
  %v73 = vld [vmem:[%s1 + $0x4c] sm:$0xf]
  %v74 = vld [vmem:[%s1 + $0x50] sm:$0xf]
  %v75 = vld [vmem:[%s1 + $0x54] sm:$0xf]
  %v76 = vld [vmem:[%s1 + $0x58] sm:$0xf]
  %v77 = vld [vmem:[%s1 + $0x5c] sm:$0xf]
  %v78 = vld [vmem:[%s1 + $0x60] sm:$0xf]
  %v79 = vld [vmem:[%s1 + $0x64] sm:$0xf]
  %v80 = vld [vmem:[%s1 + $0x68] sm:$0xf]
  %v81 = vld [vmem:[%s1 + $0x6c] sm:$0xf]
  %v82 = vld [vmem:[%s1 + $0x70] sm:$0xf]
  %v83 = vld [vmem:[%s1 + $0x74] sm:$0xf]
  %v84 = vld [vmem:[%s1 + $0x78] sm:$0xf]
  %v85 = vld [vmem:[%s1 + $0x7c] sm:$0xf]
  %v86 = vld [vmem:[%s1 + $0x80] sm:$0xf]
  %v87 = vld [vmem:[%s1 + $0x84] sm:$0xf]
  %v88 = vld [vmem:[%s1 + $0x88] sm:$0xf]
  %v89 = vld [vmem:[%s1 + $0x8c] sm:$0xf]
  %v90 = vld [vmem:[%s1 + $0x90] sm:$0xf]
  %v91 = vld [vmem:[%s1 + $0x94] sm:$0xf]
  %v92 = vld [vmem:[%s1 + $0x98] sm:$0xf]
  %v93 = vld [vmem:[%s1 + $0x9c] sm:$0xf]
  %v94 = vld [vmem:[%s1 + $0xa0] sm:$0xf]
  %v95 = vld [vmem:[%s1 + $0xa4] sm:$0xf]
  %v96 = vld [vmem:[%s1 + $0xa8] sm:$0xf]
  %v97 = vld [vmem:[%s1 + $0xac] sm:$0xf]
  %v98 = vld [vmem:[%s1 + $0xb0] sm:$0xf]
  %v99 = vld [vmem:[%s1 + $0xb4] sm:$0xf]
  %v100 = vld [vmem:[%s1 + $0xb8] sm:$0xf]
  %v101 = vld [vmem:[%s1 + $0xbc] sm:$0xf]
  %v102 = vld [vmem:[%s1 + $0xc0] sm:$0xf]
  %v103 = vld [vmem:[%s1 + $0xc4] sm:$0xf]
  %v104 = vld [vmem:[%s1 + $0xc8] sm:$0xf]
  %v105 = vld [vmem:[%s1 + $0xcc] sm:$0xf]
  %v106 = vld [vmem:[%s1 + $0xd0] sm:$0xf]
  %v107 = vld [vmem:[%s1 + $0xd4] sm:$0xf]
  %v108 = vld [vmem:[%s1 + $0xd8] sm:$0xf]
  %v109 = vld [vmem:[%s1 + $0xdc] sm:$0xf]
  %v110 = vld [vmem:[%s1 + $0xe0] sm:$0xf]
  %v111 = vld [vmem:[%s1 + $0xe4] sm:$0xf]
  %v112 = vld [vmem:[%s1 + $0xe8] sm:$0xf]
  %v113 = vld [vmem:[%s1 + $0xec] sm:$0xf]
  %v114 = vld [vmem:[%s1 + $0xf0] sm:$0xf]
  %v115 = vld [vmem:[%s1 + $0xf4] sm:$0xf]
  %v116 = vld [vmem:[%s1 + $0xf8] sm:$0xf]
  %v117 = vld [vmem:[%s1 + $0xfc] sm:$0xf]
  %v118 = vld [vmem:[%s1 + $0x100] sm:$0xf]
  %v119 = vld [vmem:[%s1 + $0x104] sm:$0xf]
  %v120 = vld [vmem:[%s1 + $0x108] sm:$0xf]
  %v121 = vld [vmem:[%s1 + $0x10c] sm:$0xf]
  %v122 = vld [vmem:[%s1 + $0x110] sm:$0xf]
  %v123 = vld [vmem:[%s1 + $0x114] sm:$0xf]
  %v124 = vld [vmem:[%s1 + $0x118] sm:$0xf]
  %v125 = vld [vmem:[%s1 + $0x11c] sm:$0xf]
  %v126 = vld [vmem:[%s1 + $0x120] sm:$0xf]
  %v127 = vld [vmem:[%s1 + $0x124] sm:$0xf]
  %v128 = vld [vmem:[%s1 + $0x128] sm:$0xf]
  %v129 = vld [vmem:[%s1 + $0x12c] sm:$0xf]
  %v130 = vld [vmem:[%s1 + $0x130] sm:$0xf]
  %v131 = vld [vmem:[%s1 + $0x134] sm:$0xf]
  %v132 = vld [vmem:[%s1 + $0x138] sm:$0xf]
  %v133 = vld [vmem:[%s1 + $0x13c] sm:$0xf]
  %v134 = vld [vmem:[%s2] sm:$0x1]
  %v136 = vlaneseq
  %v137 = vshrl.u32 %v136, 7
  %v138 = vsub.s32 0, %v137
  %v139 = vrot.slane %v134, %v138
  %v180 = vunpack.c.l.b16 %v15
  %v181 = vunpack.c.h.b16 %v15
  %v182 = vunpack.c.l.b16 %v16
  %v183 = vunpack.c.h.b16 %v16
  %v184 = vunpack.c.l.b16 %v17
  %v185 = vunpack.c.l.b16 %v18
  %v186 = vunpack.c.h.b16 %v18
  %v187 = vunpack.c.l.b16 %v19
  %v188 = vunpack.c.h.b16 %v19
  %v189 = vunpack.c.l.b16 %v20
  %v190 = vunpack.c.l.b16 %v21
  %v191 = vunpack.c.h.b16 %v21
  %v192 = vunpack.c.l.b16 %v22
  %v193 = vunpack.c.h.b16 %v22
  %v194 = vunpack.c.l.b16 %v23
  %v195 = vunpack.c.l.b16 %v24
  %v196 = vunpack.c.h.b16 %v24
  %v197 = vunpack.c.l.b16 %v25
  %v198 = vunpack.c.h.b16 %v25
  %v199 = vunpack.c.l.b16 %v26
  %v200 = vunpack.c.l.b16 %v27
  %v201 = vunpack.c.h.b16 %v27
  %v202 = vunpack.c.l.b16 %v28
  %v203 = vunpack.c.h.b16 %v28
  %v204 = vunpack.c.l.b16 %v29
  %v205 = vunpack.c.l.b16 %v30
  %v206 = vunpack.c.h.b16 %v30
  %v207 = vunpack.c.l.b16 %v31
  %v208 = vunpack.c.h.b16 %v31
  %v209 = vunpack.c.l.b16 %v32
  %v210 = vunpack.c.l.b16 %v33
  %v211 = vunpack.c.h.b16 %v33
  %v212 = vunpack.c.l.b16 %v34
  %v213 = vunpack.c.h.b16 %v34
  %v214 = vunpack.c.l.b16 %v35
  %v215 = vunpack.c.l.b16 %v36
  %v216 = vunpack.c.h.b16 %v36
  %v217 = vunpack.c.l.b16 %v37
  %v218 = vunpack.c.h.b16 %v37
  %v219 = vunpack.c.l.b16 %v38
  %v220 = vunpack.c.l.b16 %v39
  %v221 = vunpack.c.h.b16 %v39
  %v222 = vunpack.c.l.b16 %v40
  %v223 = vunpack.c.h.b16 %v40
  %v224 = vunpack.c.l.b16 %v41
  %v225 = vunpack.c.l.b16 %v42
  %v226 = vunpack.c.h.b16 %v42
  %v227 = vunpack.c.l.b16 %v43
  %v228 = vunpack.c.h.b16 %v43
  %v229 = vunpack.c.l.b16 %v44
  %v230 = vunpack.c.l.b16 %v45
  %v231 = vunpack.c.h.b16 %v45
  %v232 = vunpack.c.l.b16 %v46
  %v233 = vunpack.c.h.b16 %v46
  %v234 = vunpack.c.l.b16 %v47
  %v235 = vunpack.c.l.b16 %v48
  %v236 = vunpack.c.h.b16 %v48
  %v237 = vunpack.c.l.b16 %v49
  %v238 = vunpack.c.h.b16 %v49
  %v239 = vunpack.c.l.b16 %v50
  %v240 = vunpack.c.l.b16 %v51
  %v241 = vunpack.c.h.b16 %v51
  %v242 = vunpack.c.l.b16 %v52
  %v243 = vunpack.c.h.b16 %v52
  %v244 = vunpack.c.l.b16 %v53
  %v245 = vpack.c.b16 %v185, %v180
  %v246 = vpack.c.b16 %v186, %v181
  %v247 = vpack.c.b16 %v187, %v182
  %v248 = vpack.c.b16 %v188, %v183
  %v249 = vpack.c.b16 %v189, %v184
  %v250 = vpack.c.b16 %v195, %v190
  %v251 = vpack.c.b16 %v196, %v191
  %v252 = vpack.c.b16 %v197, %v192
  %v253 = vpack.c.b16 %v198, %v193
  %v254 = vpack.c.b16 %v199, %v194
  %v255 = vpack.c.b16 %v205, %v200
  %v256 = vpack.c.b16 %v206, %v201
  %v257 = vpack.c.b16 %v207, %v202
  %v258 = vpack.c.b16 %v208, %v203
  %v259 = vpack.c.b16 %v209, %v204
  %v260 = vpack.c.b16 %v215, %v210
  %v261 = vpack.c.b16 %v216, %v211
  %v262 = vpack.c.b16 %v217, %v212
  %v263 = vpack.c.b16 %v218, %v213
  %v264 = vpack.c.b16 %v219, %v214
  %v265 = vpack.c.b16 %v225, %v220
  %v266 = vpack.c.b16 %v226, %v221
  %v267 = vpack.c.b16 %v227, %v222
  %v268 = vpack.c.b16 %v228, %v223
  %v269 = vpack.c.b16 %v229, %v224
  %v270 = vpack.c.b16 %v235, %v230
  %v271 = vpack.c.b16 %v236, %v231
  %v272 = vpack.c.b16 %v237, %v232
  %v273 = vpack.c.b16 %v238, %v233
  %v274 = vpack.c.b16 %v239, %v234
  %v275 = vpack.c.b16 %v240, %v240
  %v276 = vpack.c.b16 %v241, %v241
  %v277 = vpack.c.b16 %v242, %v242
  %v278 = vpack.c.b16 %v243, %v243
  %v279 = vpack.c.b16 %v244, %v244
  %v395 = vunpack.c.l.b16 %v54
  %v396 = vunpack.c.l.b16 %v55
  %v397 = vunpack.c.l.b16 %v56
  %v398 = vunpack.c.l.b16 %v57
  %v399 = vunpack.c.l.b16 %v58
  %v400 = vunpack.c.l.b16 %v59
  %v401 = vunpack.c.l.b16 %v60
  %v402 = vunpack.c.l.b16 %v61
  %v403 = vunpack.c.l.b16 %v62
  %v404 = vunpack.c.l.b16 %v63
  %v405 = vunpack.c.l.b16 %v64
  %v406 = vunpack.c.l.b16 %v65
  %v407 = vunpack.c.l.b16 %v66
  %v408 = vunpack.c.l.b16 %v67
  %v409 = vunpack.c.l.b16 %v68
  %v410 = vunpack.c.l.b16 %v69
  %v411 = vunpack.c.l.b16 %v70
  %v412 = vunpack.c.l.b16 %v71
  %v413 = vunpack.c.l.b16 %v72
  %v414 = vunpack.c.l.b16 %v73
  %v415 = vunpack.c.l.b16 %v74
  %v416 = vunpack.c.l.b16 %v75
  %v417 = vunpack.c.l.b16 %v76
  %v418 = vunpack.c.l.b16 %v77
  %v419 = vunpack.c.l.b16 %v78
  %v420 = vunpack.c.l.b16 %v79
  %v421 = vunpack.c.l.b16 %v80
  %v422 = vunpack.c.l.b16 %v81
  %v423 = vunpack.c.l.b16 %v82
  %v424 = vunpack.c.l.b16 %v83
  %v425 = vunpack.c.l.b16 %v84
  %v426 = vunpack.c.l.b16 %v85
  %v427 = vunpack.c.l.b16 %v86
  %v428 = vunpack.c.l.b16 %v87
  %v429 = vunpack.c.l.b16 %v88
  %v430 = vunpack.c.l.b16 %v89
  %v431 = vunpack.c.l.b16 %v90
  %v432 = vunpack.c.l.b16 %v91
  %v433 = vunpack.c.l.b16 %v92
  %v434 = vunpack.c.l.b16 %v93
  %v435 = vunpack.c.l.b16 %v94
  %v436 = vunpack.c.l.b16 %v95
  %v437 = vunpack.c.l.b16 %v96
  %v438 = vunpack.c.l.b16 %v97
  %v439 = vunpack.c.l.b16 %v98
  %v440 = vunpack.c.l.b16 %v99
  %v441 = vunpack.c.l.b16 %v100
  %v442 = vunpack.c.l.b16 %v101
  %v443 = vunpack.c.l.b16 %v102
  %v444 = vunpack.c.l.b16 %v103
  %v445 = vunpack.c.l.b16 %v104
  %v446 = vunpack.c.l.b16 %v105
  %v447 = vunpack.c.l.b16 %v106
  %v448 = vunpack.c.l.b16 %v107
  %v449 = vunpack.c.l.b16 %v108
  %v450 = vunpack.c.l.b16 %v109
  %v451 = vunpack.c.l.b16 %v110
  %v452 = vunpack.c.l.b16 %v111
  %v453 = vunpack.c.l.b16 %v112
  %v454 = vunpack.c.l.b16 %v113
  %v455 = vunpack.c.l.b16 %v114
  %v456 = vunpack.c.l.b16 %v115
  %v457 = vunpack.c.l.b16 %v116
  %v458 = vunpack.c.l.b16 %v117
  %v459 = vunpack.c.l.b16 %v118
  %v460 = vunpack.c.l.b16 %v119
  %v461 = vunpack.c.l.b16 %v120
  %v462 = vunpack.c.l.b16 %v121
  %v463 = vunpack.c.l.b16 %v122
  %v464 = vunpack.c.l.b16 %v123
  %v465 = vunpack.c.l.b16 %v124
  %v466 = vunpack.c.l.b16 %v125
  %v467 = vunpack.c.l.b16 %v126
  %v468 = vunpack.c.l.b16 %v127
  %v469 = vunpack.c.l.b16 %v128
  %v470 = vunpack.c.l.b16 %v129
  %v471 = vunpack.c.l.b16 %v130
  %v472 = vunpack.c.l.b16 %v131
  %v473 = vunpack.c.l.b16 %v132
  %v474 = vunpack.c.l.b16 %v133
  %v475 = vpack.c.b16 %v396, %v395
  %v476 = vpack.c.b16 %v398, %v397
  %v477 = vpack.c.b16 %v400, %v399
  %v478 = vpack.c.b16 %v402, %v401
  %v479 = vpack.c.b16 %v404, %v403
  %v480 = vpack.c.b16 %v406, %v405
  %v481 = vpack.c.b16 %v408, %v407
  %v482 = vpack.c.b16 %v410, %v409
  %v483 = vpack.c.b16 %v412, %v411
  %v484 = vpack.c.b16 %v414, %v413
  %v485 = vpack.c.b16 %v416, %v415
  %v486 = vpack.c.b16 %v418, %v417
  %v487 = vpack.c.b16 %v420, %v419
  %v488 = vpack.c.b16 %v422, %v421
  %v489 = vpack.c.b16 %v424, %v423
  %v490 = vpack.c.b16 %v426, %v425
  %v491 = vpack.c.b16 %v428, %v427
  %v492 = vpack.c.b16 %v430, %v429
  %v493 = vpack.c.b16 %v432, %v431
  %v494 = vpack.c.b16 %v434, %v433
  %v495 = vpack.c.b16 %v436, %v435
  %v496 = vpack.c.b16 %v438, %v437
  %v497 = vpack.c.b16 %v440, %v439
  %v498 = vpack.c.b16 %v442, %v441
  %v499 = vpack.c.b16 %v444, %v443
  %v500 = vpack.c.b16 %v446, %v445
  %v501 = vpack.c.b16 %v448, %v447
  %v502 = vpack.c.b16 %v450, %v449
  %v503 = vpack.c.b16 %v452, %v451
  %v504 = vpack.c.b16 %v454, %v453
  %v505 = vpack.c.b16 %v456, %v455
  %v506 = vpack.c.b16 %v458, %v457
  %v507 = vpack.c.b16 %v460, %v459
  %v508 = vpack.c.b16 %v462, %v461
  %v509 = vpack.c.b16 %v464, %v463
  %v510 = vpack.c.b16 %v466, %v465
  %v511 = vpack.c.b16 %v468, %v467
  %v512 = vpack.c.b16 %v470, %v469
  %v513 = vpack.c.b16 %v472, %v471
  %v514 = vpack.c.b16 %v474, %v473
  %555 = vmatprep.subr.bf16.mxu0 0
  %556 = vmatpush1.bf16.msra.mxu0 %v482
  %557 = vmatprep.subr.bf16.mxu0 0
  %558 = vmatpush1.bf16.msra.mxu0 %v481
  %559 = vmatprep.subr.bf16.mxu0 0
  %560 = vmatpush1.bf16.msra.mxu0 %v480
  %561 = vmatprep.subr.bf16.mxu0 0
  %562 = vmatpush1.bf16.msra.mxu0 %v479
  %563 = vmatprep.subr.bf16.mxu0 0
  %564 = vmatpush1.bf16.msra.mxu0 %v478
  %565 = vmatprep.subr.bf16.mxu0 0
  %566 = vmatpush1.bf16.msra.mxu0 %v477
  %567 = vmatprep.subr.bf16.mxu0 0
  %568 = vmatpush1.bf16.msra.mxu0 %v476
  %569 = vmatprep.subr.bf16.mxu0 0
  %570 = vmatpush1.bf16.msra.mxu0 %v475
  %571 = vmatprep.subr.bf16.mxu0 0
  %572 = vmatpush2.bf16.msra.mxu0 %v490
  %573 = vmatprep.subr.bf16.mxu0 0
  %574 = vmatpush2.bf16.msra.mxu0 %v489
  %575 = vmatprep.subr.bf16.mxu0 0
  %576 = vmatpush2.bf16.msra.mxu0 %v488
  %577 = vmatprep.subr.bf16.mxu0 0
  %578 = vmatpush2.bf16.msra.mxu0 %v487
  %579 = vmatprep.subr.bf16.mxu0 0
  %580 = vmatpush2.bf16.msra.mxu0 %v486
  %581 = vmatprep.subr.bf16.mxu0 0
  %582 = vmatpush2.bf16.msra.mxu0 %v485
  %583 = vmatprep.subr.bf16.mxu0 0
  %584 = vmatpush2.bf16.msra.mxu0 %v484
  %585 = vmatprep.subr.bf16.mxu0 0
  %586 = vmatpush2.bf16.msra.mxu0 %v483
  %587 = vmatprep.mubr.bf16.mxu0 %v246
  %588 = vmatmul.mubr.bf16.gmra.mxu0 %v245
  %v589 = vpop.f32.mrf.mxu0
  %v590 = vadd.f32 %v139, %v589
  %v591 = vpop.f32.mrf.mxu0
  %v592 = vpop.f32.mrf.mxu0
  %v593 = vadd.f32 %v139, %v592
  %v594 = vpop.f32.mrf.mxu0
  %595 = vmatprep.mubr.bf16.mxu0 %v251
  %596 = vmatmul.mubr.bf16.gmra.mxu0 %v250
  %v597 = vpop.f32.mrf.mxu0
  %v598 = vadd.f32 %v139, %v597
  %v599 = vpop.f32.mrf.mxu0
  %v600 = vpop.f32.mrf.mxu0
  %v601 = vadd.f32 %v139, %v600
  %v602 = vpop.f32.mrf.mxu0
  %603 = vmatprep.mubr.bf16.mxu0 %v256
  %604 = vmatmul.mubr.bf16.gmra.mxu0 %v255
  %v605 = vpop.f32.mrf.mxu0
  %v606 = vadd.f32 %v139, %v605
  %v607 = vpop.f32.mrf.mxu0
  %v608 = vpop.f32.mrf.mxu0
  %v609 = vadd.f32 %v139, %v608
  %v610 = vpop.f32.mrf.mxu0
  %611 = vmatprep.mubr.bf16.mxu0 %v261
  %612 = vmatmul.mubr.bf16.gmra.mxu0 %v260
  %v613 = vpop.f32.mrf.mxu0
  %v614 = vadd.f32 %v139, %v613
  %v615 = vpop.f32.mrf.mxu0
  %v616 = vpop.f32.mrf.mxu0
  %v617 = vadd.f32 %v139, %v616
  %v618 = vpop.f32.mrf.mxu0
  %619 = vmatprep.mubr.bf16.mxu0 %v266
  %620 = vmatmul.mubr.bf16.gmra.mxu0 %v265
  %v621 = vpop.f32.mrf.mxu0
  %v622 = vadd.f32 %v139, %v621
  %v623 = vpop.f32.mrf.mxu0
  %v624 = vpop.f32.mrf.mxu0
  %v625 = vadd.f32 %v139, %v624
  %v626 = vpop.f32.mrf.mxu0
  %627 = vmatprep.mubr.bf16.mxu0 %v271
  %628 = vmatmul.mubr.bf16.gmra.mxu0 %v270
  %v629 = vpop.f32.mrf.mxu0
  %v630 = vadd.f32 %v139, %v629
  %v631 = vpop.f32.mrf.mxu0
  %v632 = vpop.f32.mrf.mxu0
  %v633 = vadd.f32 %v139, %v632
  %v634 = vpop.f32.mrf.mxu0
  %635 = vmatprep.mubr.bf16.mxu0 %v276
  %636 = vmatmul.mubr.bf16.gmra.mxu0 %v275
  %v637 = vpop.f32.mrf.mxu0
  %v638 = vadd.f32 %v139, %v637
  %v639 = vpop.f32.mrf.mxu0
  %v640 = vpop.f32.mrf.mxu0
  %v641 = vpop.f32.mrf.mxu0
  %642 = vdwg.mxu0
  %643 = vmatprep.subr.bf16.mxu0 0
  %644 = vmatpush1.bf16.msra.mxu0 %v498
  %645 = vmatprep.subr.bf16.mxu0 0
  %646 = vmatpush1.bf16.msra.mxu0 %v497
  %647 = vmatprep.subr.bf16.mxu0 0
  %648 = vmatpush1.bf16.msra.mxu0 %v496
  %649 = vmatprep.subr.bf16.mxu0 0
  %650 = vmatpush1.bf16.msra.mxu0 %v495
  %651 = vmatprep.subr.bf16.mxu0 0
  %652 = vmatpush1.bf16.msra.mxu0 %v494
  %653 = vmatprep.subr.bf16.mxu0 0
  %654 = vmatpush1.bf16.msra.mxu0 %v493
  %655 = vmatprep.subr.bf16.mxu0 0
  %656 = vmatpush1.bf16.msra.mxu0 %v492
  %657 = vmatprep.subr.bf16.mxu0 0
  %658 = vmatpush1.bf16.msra.mxu0 %v491
  %659 = vmatprep.subr.bf16.mxu0 0
  %660 = vmatpush2.bf16.msra.mxu0 %v506
  %661 = vmatprep.subr.bf16.mxu0 0
  %662 = vmatpush2.bf16.msra.mxu0 %v505
  %663 = vmatprep.subr.bf16.mxu0 0
  %664 = vmatpush2.bf16.msra.mxu0 %v504
  %665 = vmatprep.subr.bf16.mxu0 0
  %666 = vmatpush2.bf16.msra.mxu0 %v503
  %667 = vmatprep.subr.bf16.mxu0 0
  %668 = vmatpush2.bf16.msra.mxu0 %v502
  %669 = vmatprep.subr.bf16.mxu0 0
  %670 = vmatpush2.bf16.msra.mxu0 %v501
  %671 = vmatprep.subr.bf16.mxu0 0
  %672 = vmatpush2.bf16.msra.mxu0 %v500
  %673 = vmatprep.subr.bf16.mxu0 0
  %674 = vmatpush2.bf16.msra.mxu0 %v499
  %675 = vmatprep.mubr.bf16.mxu0 %v248
  %676 = vmatmul.mubr.bf16.gmra.mxu0 %v247
  %v677 = vpop.f32.mrf.mxu0
  %v678 = vadd.f32 %v590, %v677
  %v679 = vpop.f32.mrf.mxu0
  %v680 = vpop.f32.mrf.mxu0
  %v681 = vadd.f32 %v593, %v680
  %v682 = vpop.f32.mrf.mxu0
  %683 = vmatprep.mubr.bf16.mxu0 %v253
  %684 = vmatmul.mubr.bf16.gmra.mxu0 %v252
  %v685 = vpop.f32.mrf.mxu0
  %v686 = vadd.f32 %v598, %v685
  %v687 = vpop.f32.mrf.mxu0
  %v688 = vpop.f32.mrf.mxu0
  %v689 = vadd.f32 %v601, %v688
  %v690 = vpop.f32.mrf.mxu0
  %691 = vmatprep.mubr.bf16.mxu0 %v258
  %692 = vmatmul.mubr.bf16.gmra.mxu0 %v257
  %v693 = vpop.f32.mrf.mxu0
  %v694 = vadd.f32 %v606, %v693
  %v695 = vpop.f32.mrf.mxu0
  %v696 = vpop.f32.mrf.mxu0
  %v697 = vadd.f32 %v609, %v696
  %v698 = vpop.f32.mrf.mxu0
  %699 = vmatprep.mubr.bf16.mxu0 %v263
  %700 = vmatmul.mubr.bf16.gmra.mxu0 %v262
  %v701 = vpop.f32.mrf.mxu0
  %v702 = vadd.f32 %v614, %v701
  %v703 = vpop.f32.mrf.mxu0
  %v704 = vpop.f32.mrf.mxu0
  %v705 = vadd.f32 %v617, %v704
  %v706 = vpop.f32.mrf.mxu0
  %707 = vmatprep.mubr.bf16.mxu0 %v268
  %708 = vmatmul.mubr.bf16.gmra.mxu0 %v267
  %v709 = vpop.f32.mrf.mxu0
  %v710 = vadd.f32 %v622, %v709
  %v711 = vpop.f32.mrf.mxu0
  %v712 = vpop.f32.mrf.mxu0
  %v713 = vadd.f32 %v625, %v712
  %v714 = vpop.f32.mrf.mxu0
  %715 = vmatprep.mubr.bf16.mxu0 %v273
  %716 = vmatmul.mubr.bf16.gmra.mxu0 %v272
  %v717 = vpop.f32.mrf.mxu0
  %v718 = vadd.f32 %v630, %v717
  %v719 = vpop.f32.mrf.mxu0
  %v720 = vpop.f32.mrf.mxu0
  %v721 = vadd.f32 %v633, %v720
  %v722 = vpop.f32.mrf.mxu0
  %723 = vmatprep.mubr.bf16.mxu0 %v278
  %724 = vmatmul.mubr.bf16.gmra.mxu0 %v277
  %v725 = vpop.f32.mrf.mxu0
  %v726 = vadd.f32 %v638, %v725
  %v727 = vpop.f32.mrf.mxu0
  %v728 = vpop.f32.mrf.mxu0
  %v729 = vpop.f32.mrf.mxu0
  %730 = vdwg.mxu0
  %731 = vmatprep.subr.bf16.mxu0 0
  %732 = vmatpush1.bf16.msra.mxu0 %v514
  %733 = vmatprep.subr.bf16.mxu0 0
  %734 = vmatpush1.bf16.msra.mxu0 %v513
  %735 = vmatprep.subr.bf16.mxu0 0
  %736 = vmatpush1.bf16.msra.mxu0 %v512
  %737 = vmatprep.subr.bf16.mxu0 0
  %738 = vmatpush1.bf16.msra.mxu0 %v511
  %739 = vmatprep.subr.bf16.mxu0 0
  %740 = vmatpush1.bf16.msra.mxu0 %v510
  %741 = vmatprep.subr.bf16.mxu0 0
  %742 = vmatpush1.bf16.msra.mxu0 %v509
  %743 = vmatprep.subr.bf16.mxu0 0
  %744 = vmatpush1.bf16.msra.mxu0 %v508
  %745 = vmatprep.subr.bf16.mxu0 0
  %746 = vmatpush1.bf16.msra.mxu0 %v507
  %747 = vmatprep.subr.bf16.mxu0 0
  %748 = vmatpush2.bf16.msra.mxu0 0
  %749 = vmatprep.subr.bf16.mxu0 0
  %750 = vmatpush2.bf16.msra.mxu0 0
  %751 = vmatprep.subr.bf16.mxu0 0
  %752 = vmatpush2.bf16.msra.mxu0 0
  %753 = vmatprep.subr.bf16.mxu0 0
  %754 = vmatpush2.bf16.msra.mxu0 0
  %755 = vmatprep.subr.bf16.mxu0 0
  %756 = vmatpush2.bf16.msra.mxu0 0
  %757 = vmatprep.subr.bf16.mxu0 0
  %758 = vmatpush2.bf16.msra.mxu0 0
  %759 = vmatprep.subr.bf16.mxu0 0
  %760 = vmatpush2.bf16.msra.mxu0 0
  %761 = vmatprep.subr.bf16.mxu0 0
  %762 = vmatpush2.bf16.msra.mxu0 0
  %763 = vmatprep.mubr.bf16.mxu0 0
  %764 = vmatmul.mubr.bf16.gmra.mxu0 %v249
  %v765 = vpop.f32.mrf.mxu0
  %v766 = vadd.f32 %v678, %v765
  %v767 = vpop.f32.mrf.mxu0
  %v768 = vpop.f32.mrf.mxu0
  %v769 = vadd.f32 %v681, %v768
  %v770 = vpop.f32.mrf.mxu0
  %771 = vmatprep.mubr.bf16.mxu0 0
  %772 = vmatmul.mubr.bf16.gmra.mxu0 %v254
  %v773 = vpop.f32.mrf.mxu0
  %v774 = vadd.f32 %v686, %v773
  %v775 = vpop.f32.mrf.mxu0
  %v776 = vpop.f32.mrf.mxu0
  %v777 = vadd.f32 %v689, %v776
  %v778 = vpop.f32.mrf.mxu0
  %779 = vmatprep.mubr.bf16.mxu0 0
  %780 = vmatmul.mubr.bf16.gmra.mxu0 %v259
  %v781 = vpop.f32.mrf.mxu0
  %v782 = vadd.f32 %v694, %v781
  %v783 = vpop.f32.mrf.mxu0
  %v784 = vpop.f32.mrf.mxu0
  %v785 = vadd.f32 %v697, %v784
  %v786 = vpop.f32.mrf.mxu0
  %787 = vmatprep.mubr.bf16.mxu0 0
  %788 = vmatmul.mubr.bf16.gmra.mxu0 %v264
  %v789 = vpop.f32.mrf.mxu0
  %v790 = vadd.f32 %v702, %v789
  %v791 = vpop.f32.mrf.mxu0
  %v792 = vpop.f32.mrf.mxu0
  %v793 = vadd.f32 %v705, %v792
  %v794 = vpop.f32.mrf.mxu0
  %795 = vmatprep.mubr.bf16.mxu0 0
  %796 = vmatmul.mubr.bf16.gmra.mxu0 %v269
  %v797 = vpop.f32.mrf.mxu0
  %v798 = vadd.f32 %v710, %v797
  %v799 = vpop.f32.mrf.mxu0
  %v800 = vpop.f32.mrf.mxu0
  %v801 = vadd.f32 %v713, %v800
  %v802 = vpop.f32.mrf.mxu0
  %803 = vmatprep.mubr.bf16.mxu0 0
  %804 = vmatmul.mubr.bf16.gmra.mxu0 %v274
  %v805 = vpop.f32.mrf.mxu0
  %v806 = vadd.f32 %v718, %v805
  %v807 = vpop.f32.mrf.mxu0
  %v808 = vpop.f32.mrf.mxu0
  %v809 = vadd.f32 %v721, %v808
  %v810 = vpop.f32.mrf.mxu0
  %811 = vmatprep.mubr.bf16.mxu0 0
  %812 = vmatmul.mubr.bf16.gmra.mxu0 %v279
  %v813 = vpop.f32.mrf.mxu0
  %v814 = vadd.f32 %v726, %v813
  %v815 = vpop.f32.mrf.mxu0
  %v816 = vpop.f32.mrf.mxu0
  %v817 = vpop.f32.mrf.mxu0
  %818 = vdwg.mxu0
  %v819 = vmax.f32 %v766, 0.0
  %v820 = vmax.f32 %v769, 0.0
  %v821 = vmax.f32 %v774, 0.0
  %v822 = vmax.f32 %v777, 0.0
  %v823 = vmax.f32 %v782, 0.0
  %v824 = vmax.f32 %v785, 0.0
  %v825 = vmax.f32 %v790, 0.0
  %v826 = vmax.f32 %v793, 0.0
  %v827 = vmax.f32 %v798, 0.0
  %v828 = vmax.f32 %v801, 0.0
  %v829 = vmax.f32 %v806, 0.0
  %v830 = vmax.f32 %v809, 0.0
  %v831 = vmax.f32 %v814, 0.0
  %v832 = vpack.c.bf16 %v820, %v819
  %v833 = vpack.c.bf16 %v822, %v821
  %v834 = vpack.c.bf16 %v824, %v823
  %v835 = vpack.c.bf16 %v826, %v825
  %v836 = vpack.c.bf16 %v828, %v827
  %v837 = vpack.c.bf16 %v830, %v829
  %v838 = vpack.c.bf16 %v831, %v831
  %v846 = vunpack.c.l.b16 %v832
  %v847 = vunpack.c.h.b16 %v832
  %v848 = vunpack.c.l.b16 %v833
  %v849 = vunpack.c.h.b16 %v833
  %v850 = vunpack.c.l.b16 %v834
  %v851 = vunpack.c.h.b16 %v834
  %v852 = vunpack.c.l.b16 %v835
  %v853 = vunpack.c.h.b16 %v835
  %v854 = vunpack.c.l.b16 %v836
  %v855 = vunpack.c.h.b16 %v836
  %v856 = vunpack.c.l.b16 %v837
  %v857 = vunpack.c.h.b16 %v837
  %v858 = vunpack.c.l.b16 %v838
  %v859 = vpack.c.b16 %v846, %v846
  %v860 = vpack.c.b16 %v847, %v847
  %v861 = vpack.c.b16 %v848, %v848
  %v862 = vpack.c.b16 %v849, %v849
  %v863 = vpack.c.b16 %v850, %v850
  %v864 = vpack.c.b16 %v851, %v851
  %v865 = vpack.c.b16 %v852, %v852
  %v866 = vpack.c.b16 %v853, %v853
  %v867 = vpack.c.b16 %v854, %v854
  %v868 = vpack.c.b16 %v855, %v855
  %v869 = vpack.c.b16 %v856, %v856
  %v870 = vpack.c.b16 %v857, %v857
  %v871 = vpack.c.b16 %v858, %v858
  %885 = vst [vmem:[%s3] sm:$0xf] %v859
  %886 = vst [vmem:[%s3 + $0x4] sm:$0xf] %v860
  %887 = vst [vmem:[%s3 + $0x8] sm:$0xf] %v861
  %888 = vst [vmem:[%s3 + $0xc] sm:$0xf] %v862
  %889 = vst [vmem:[%s3 + $0x10] sm:$0xf] %v863
  %890 = vst [vmem:[%s3 + $0x14] sm:$0xf] %v864
  %891 = vst [vmem:[%s3 + $0x18] sm:$0xf] %v865
  %892 = vst [vmem:[%s3 + $0x1c] sm:$0xf] %v866
  %893 = vst [vmem:[%s3 + $0x20] sm:$0xf] %v867
  %894 = vst [vmem:[%s3 + $0x24] sm:$0xf] %v868
  %895 = vst [vmem:[%s3 + $0x28] sm:$0xf] %v869
  %896 = vst [vmem:[%s3 + $0x2c] sm:$0xf] %v870
  %897 = vst [vmem:[%s3 + $0x30] sm:$0xf] %v871
  // Predicated region
  $region14: #{dqn_forward.6} parent=0 // pred_check
    _
  $region15: #{dqn_forward.6} parent=0 // pred_check_branch
    %899 = sbr.rel (0) target = $region17
  $region16: #{dqn_forward.6} parent=0 // pred_region
    _
  $region17: #{dqn_forward.6} parent=0 // pred_fallthru
    _
  // Predicated region
  $region18: #{dqn_forward.6} parent=0 // pred_check
    _
  $region19: #{dqn_forward.6} parent=0 // pred_check_branch
    %901 = sbr.rel (0) target = $region21
  $region20: #{dqn_forward.6} parent=0 // pred_region
    _
  $region21: #{dqn_forward.6} parent=0 // pred_fallthru
    _

// kernel: dqn_forward.7
$region0: #{dqn_forward.7}
  #allocation0 [shape = 'u32[]', space=smem, size = 0x4, offset = 0x4, fixed_abs, tag = 'smem constant byte address 0x4 - core index']
  #allocation1 [shape = 'u32[144,128]{1,0:T(1,128)}', space=vmem, size = 0x12000, scoped, tag = 'internal scratch']
  %s0 = inlined_call_operand.vmem [shape: bf16[8,3200], index: 0, kind: input, shape index: {}]
  %s1 = inlined_call_operand.vmem [shape: bf16[3200,512], index: 1, kind: input, shape index: {}]
  %s2 = inlined_call_operand.vmem [shape: f32[1,512], index: 2, kind: input, shape index: {}]
  %s3 = inlined_call_operand.vmem [shape: bf16[512,128], index: 3, kind: input, shape index: {}]
  %s4 = inlined_call_operand.vmem [shape: f32[1,128], index: 4, kind: input, shape index: {}]
  %s5 = inlined_call_operand.vmem [shape: f32[8,128], index: 5, kind: output, shape index: {}]
  %s6 = sld [smem:[#allocation0]]
  $region30: #{dqn_forward.7} parent=0
    _
  %s8 = ssub.s32 1, %s6
  %s9 = scalar_select 0, %s8, %s6
  // Predicated region
  $region2: #{dqn_forward.7} parent=0 // pred_check
    _
  $region3: #{dqn_forward.7} parent=0 // pred_check_branch
    %11 = sbr.rel (0) target = $region5
  $region4: #{dqn_forward.7} parent=0 // pred_region
    _
  $region5: #{dqn_forward.7} parent=0 // pred_fallthru
    _
  // Predicated region
  $region6: #{dqn_forward.7} parent=0 // pred_check
    _
  $region7: #{dqn_forward.7} parent=0 // pred_check_branch
    %13 = sbr.rel (0) target = $region9
  $region8: #{dqn_forward.7} parent=0 // pred_region
    _
  $region9: #{dqn_forward.7} parent=0 // pred_fallthru
    _
  // Predicated region
  $region10: #{dqn_forward.7} parent=0 // pred_check
    _
  $region11: #{dqn_forward.7} parent=0 // pred_check_branch
    %15 = sbr.rel (0) target = $region13
  $region12: #{dqn_forward.7} parent=0 // pred_region
    _
  $region13: #{dqn_forward.7} parent=0 // pred_fallthru
    _
  // Predicated region
  $region14: #{dqn_forward.7} parent=0 // pred_check
    _
  $region15: #{dqn_forward.7} parent=0 // pred_check_branch
    %17 = sbr.rel (0) target = $region17
  $region16: #{dqn_forward.7} parent=0 // pred_region
    _
  $region17: #{dqn_forward.7} parent=0 // pred_fallthru
    _
  // Predicated region
  $region18: #{dqn_forward.7} parent=0 // pred_check
    _
  $region19: #{dqn_forward.7} parent=0 // pred_check_branch
    %19 = sbr.rel (0) target = $region21
  $region20: #{dqn_forward.7} parent=0 // pred_region
    _
  $region21: #{dqn_forward.7} parent=0 // pred_fallthru
    _
  %v21 = vld [vmem:[%s0] sm:$0xff]
  %v22 = vld [vmem:[%s0 + $0x8] sm:$0xff]
  %v23 = vld [vmem:[%s0 + $0x10] sm:$0xff]
  %v24 = vld [vmem:[%s0 + $0x18] sm:$0xff]
  %v25 = vld [vmem:[%s0 + $0x20] sm:$0xff]
  %v26 = vld [vmem:[%s0 + $0x28] sm:$0xff]
  %v27 = vld [vmem:[%s0 + $0x30] sm:$0xff]
  %v28 = vld [vmem:[%s0 + $0x38] sm:$0xff]
  %v29 = vld [vmem:[%s0 + $0x40] sm:$0xff]
  %v30 = vld [vmem:[%s0 + $0x48] sm:$0xff]
  %v31 = vld [vmem:[%s0 + $0x50] sm:$0xff]
  %v32 = vld [vmem:[%s0 + $0x58] sm:$0xff]
  %v33 = vld [vmem:[%s0 + $0x60] sm:$0xf]
  %v34 = vld [vmem:[%s1] sm:$0xff]
  %v35 = vld [vmem:[%s1 + $0x8] sm:$0xff]
  %v36 = vld [vmem:[%s1 + $0x10] sm:$0xff]
  %v37 = vld [vmem:[%s1 + $0x18] sm:$0xff]
  %v38 = vld [vmem:[%s1 + $0x20] sm:$0xff]
  %v39 = vld [vmem:[%s1 + $0x28] sm:$0xff]
  %v40 = vld [vmem:[%s1 + $0x30] sm:$0xff]
  %v41 = vld [vmem:[%s1 + $0x38] sm:$0xff]
  %v42 = vld [vmem:[%s1 + $0x40] sm:$0xff]
  %v43 = vld [vmem:[%s1 + $0x48] sm:$0xff]
  %v44 = vld [vmem:[%s1 + $0x50] sm:$0xff]
  %v45 = vld [vmem:[%s1 + $0x58] sm:$0xff]
  %v46 = vld [vmem:[%s1 + $0x60] sm:$0xff]
  %v47 = vld [vmem:[%s1 + $0x68] sm:$0xff]
  %v48 = vld [vmem:[%s1 + $0x70] sm:$0xff]
  %v49 = vld [vmem:[%s1 + $0x78] sm:$0xff]
  %v50 = vld [vmem:[%s1 + $0x80] sm:$0xff]
  %v51 = vld [vmem:[%s1 + $0x88] sm:$0xff]
  %v52 = vld [vmem:[%s1 + $0x90] sm:$0xff]
  %v53 = vld [vmem:[%s1 + $0x98] sm:$0xff]
  %v54 = vld [vmem:[%s1 + $0xa0] sm:$0xff]
  %v55 = vld [vmem:[%s1 + $0xa8] sm:$0xff]
  %v56 = vld [vmem:[%s1 + $0xb0] sm:$0xff]
  %v57 = vld [vmem:[%s1 + $0xb8] sm:$0xff]
  %v58 = vld [vmem:[%s1 + $0xc0] sm:$0xff]
  %v59 = vld [vmem:[%s1 + $0xc8] sm:$0xff]
  %v60 = vld [vmem:[%s1 + $0xd0] sm:$0xff]
  %v61 = vld [vmem:[%s1 + $0xd8] sm:$0xff]
  %v62 = vld [vmem:[%s1 + $0xe0] sm:$0xff]
  %v63 = vld [vmem:[%s1 + $0xe8] sm:$0xff]
  %v64 = vld [vmem:[%s1 + $0xf0] sm:$0xff]
  %v65 = vld [vmem:[%s1 + $0xf8] sm:$0xff]
  %v66 = vld [vmem:[%s1 + $0x100] sm:$0xff]
  %v67 = vld [vmem:[%s1 + $0x108] sm:$0xff]
  %v68 = vld [vmem:[%s1 + $0x110] sm:$0xff]
  %v69 = vld [vmem:[%s1 + $0x118] sm:$0xff]
  %v70 = vld [vmem:[%s1 + $0x120] sm:$0xff]
  %v71 = vld [vmem:[%s1 + $0x128] sm:$0xff]
  %v72 = vld [vmem:[%s1 + $0x130] sm:$0xff]
  %v73 = vld [vmem:[%s1 + $0x138] sm:$0xff]
  %v74 = vld [vmem:[%s1 + $0x140] sm:$0xff]
  %v75 = vld [vmem:[%s1 + $0x148] sm:$0xff]
  %v76 = vld [vmem:[%s1 + $0x150] sm:$0xff]
  %v77 = vld [vmem:[%s1 + $0x158] sm:$0xff]
  %v78 = vld [vmem:[%s1 + $0x160] sm:$0xff]
  %v79 = vld [vmem:[%s1 + $0x168] sm:$0xff]
  %v80 = vld [vmem:[%s1 + $0x170] sm:$0xff]
  %v81 = vld [vmem:[%s1 + $0x178] sm:$0xff]
  %v82 = vld [vmem:[%s1 + $0x180] sm:$0xff]
  %v83 = vld [vmem:[%s1 + $0x188] sm:$0xff]
  %v84 = vld [vmem:[%s1 + $0x190] sm:$0xff]
  %v85 = vld [vmem:[%s1 + $0x198] sm:$0xff]
  %v86 = vld [vmem:[%s1 + $0x1a0] sm:$0xff]
  %v87 = vld [vmem:[%s1 + $0x1a8] sm:$0xff]
  %v88 = vld [vmem:[%s1 + $0x1b0] sm:$0xff]
  %v89 = vld [vmem:[%s1 + $0x1b8] sm:$0xff]
  %v90 = vld [vmem:[%s1 + $0x1c0] sm:$0xff]
  %v91 = vld [vmem:[%s1 + $0x1c8] sm:$0xff]
  %v92 = vld [vmem:[%s1 + $0x1d0] sm:$0xff]
  %v93 = vld [vmem:[%s1 + $0x1d8] sm:$0xff]
  %v94 = vld [vmem:[%s1 + $0x1e0] sm:$0xff]
  %v95 = vld [vmem:[%s1 + $0x1e8] sm:$0xff]
  %v96 = vld [vmem:[%s1 + $0x1f0] sm:$0xff]
  %v97 = vld [vmem:[%s1 + $0x1f8] sm:$0xff]
  %v98 = vld [vmem:[%s1 + $0x200] sm:$0xff]
  %v99 = vld [vmem:[%s1 + $0x208] sm:$0xff]
  %v100 = vld [vmem:[%s1 + $0x210] sm:$0xff]
  %v101 = vld [vmem:[%s1 + $0x218] sm:$0xff]
  %v102 = vld [vmem:[%s1 + $0x220] sm:$0xff]
  %v103 = vld [vmem:[%s1 + $0x228] sm:$0xff]
  %v104 = vld [vmem:[%s1 + $0x230] sm:$0xff]
  %v105 = vld [vmem:[%s1 + $0x238] sm:$0xff]
  %v106 = vld [vmem:[%s1 + $0x240] sm:$0xff]
  %v107 = vld [vmem:[%s1 + $0x248] sm:$0xff]
  %v108 = vld [vmem:[%s1 + $0x250] sm:$0xff]
  %v109 = vld [vmem:[%s1 + $0x258] sm:$0xff]
  %v110 = vld [vmem:[%s1 + $0x260] sm:$0xff]
  %v111 = vld [vmem:[%s1 + $0x268] sm:$0xff]
  %v112 = vld [vmem:[%s1 + $0x270] sm:$0xff]
  %v113 = vld [vmem:[%s1 + $0x278] sm:$0xff]
  %v114 = vld [vmem:[%s1 + $0x280] sm:$0xff]
  %v115 = vld [vmem:[%s1 + $0x288] sm:$0xff]
  %v116 = vld [vmem:[%s1 + $0x290] sm:$0xff]
  %v117 = vld [vmem:[%s1 + $0x298] sm:$0xff]
  %v118 = vld [vmem:[%s1 + $0x2a0] sm:$0xff]
  %v119 = vld [vmem:[%s1 + $0x2a8] sm:$0xff]
  %v120 = vld [vmem:[%s1 + $0x2b0] sm:$0xff]
  %v121 = vld [vmem:[%s1 + $0x2b8] sm:$0xff]
  %v122 = vld [vmem:[%s1 + $0x2c0] sm:$0xff]
  %v123 = vld [vmem:[%s1 + $0x2c8] sm:$0xff]
  %v124 = vld [vmem:[%s1 + $0x2d0] sm:$0xff]
  %v125 = vld [vmem:[%s1 + $0x2d8] sm:$0xff]
  %v126 = vld [vmem:[%s1 + $0x2e0] sm:$0xff]
  %v127 = vld [vmem:[%s1 + $0x2e8] sm:$0xff]
  %v128 = vld [vmem:[%s1 + $0x2f0] sm:$0xff]
  %v129 = vld [vmem:[%s1 + $0x2f8] sm:$0xff]
  %v130 = vld [vmem:[%s1 + $0x300] sm:$0xff]
  %v131 = vld [vmem:[%s1 + $0x308] sm:$0xff]
  %v132 = vld [vmem:[%s1 + $0x310] sm:$0xff]
  %v133 = vld [vmem:[%s1 + $0x318] sm:$0xff]
  %v134 = vld [vmem:[%s1 + $0x320] sm:$0xff]
  %v135 = vld [vmem:[%s1 + $0x328] sm:$0xff]
  %v136 = vld [vmem:[%s1 + $0x330] sm:$0xff]
  %v137 = vld [vmem:[%s1 + $0x338] sm:$0xff]
  %v138 = vld [vmem:[%s1 + $0x340] sm:$0xff]
  %v139 = vld [vmem:[%s1 + $0x348] sm:$0xff]
  %v140 = vld [vmem:[%s1 + $0x350] sm:$0xff]
  %v141 = vld [vmem:[%s1 + $0x358] sm:$0xff]
  %v142 = vld [vmem:[%s1 + $0x360] sm:$0xff]
  %v143 = vld [vmem:[%s1 + $0x368] sm:$0xff]
  %v144 = vld [vmem:[%s1 + $0x370] sm:$0xff]
  %v145 = vld [vmem:[%s1 + $0x378] sm:$0xff]
  %v146 = vld [vmem:[%s1 + $0x380] sm:$0xff]
  %v147 = vld [vmem:[%s1 + $0x388] sm:$0xff]
  %v148 = vld [vmem:[%s1 + $0x390] sm:$0xff]
  %v149 = vld [vmem:[%s1 + $0x398] sm:$0xff]
  %v150 = vld [vmem:[%s1 + $0x3a0] sm:$0xff]
  %v151 = vld [vmem:[%s1 + $0x3a8] sm:$0xff]
  %v152 = vld [vmem:[%s1 + $0x3b0] sm:$0xff]
  %v153 = vld [vmem:[%s1 + $0x3b8] sm:$0xff]
  %v154 = vld [vmem:[%s1 + $0x3c0] sm:$0xff]
  %v155 = vld [vmem:[%s1 + $0x3c8] sm:$0xff]
  %v156 = vld [vmem:[%s1 + $0x3d0] sm:$0xff]
  %v157 = vld [vmem:[%s1 + $0x3d8] sm:$0xff]
  %v158 = vld [vmem:[%s1 + $0x3e0] sm:$0xff]
  %v159 = vld [vmem:[%s1 + $0x3e8] sm:$0xff]
  %v160 = vld [vmem:[%s1 + $0x3f0] sm:$0xff]
  %v161 = vld [vmem:[%s1 + $0x3f8] sm:$0xff]
  %v162 = vld [vmem:[%s1 + $0x400] sm:$0xff]
  %v163 = vld [vmem:[%s1 + $0x408] sm:$0xff]
  %v164 = vld [vmem:[%s1 + $0x410] sm:$0xff]
  %v165 = vld [vmem:[%s1 + $0x418] sm:$0xff]
  %v166 = vld [vmem:[%s1 + $0x420] sm:$0xff]
  %v167 = vld [vmem:[%s1 + $0x428] sm:$0xff]
  %v168 = vld [vmem:[%s1 + $0x430] sm:$0xff]
  %v169 = vld [vmem:[%s1 + $0x438] sm:$0xff]
  %v170 = vld [vmem:[%s1 + $0x440] sm:$0xff]
  %v171 = vld [vmem:[%s1 + $0x448] sm:$0xff]
  %v172 = vld [vmem:[%s1 + $0x450] sm:$0xff]
  %v173 = vld [vmem:[%s1 + $0x458] sm:$0xff]
  %v174 = vld [vmem:[%s1 + $0x460] sm:$0xff]
  %v175 = vld [vmem:[%s1 + $0x468] sm:$0xff]
  %v176 = vld [vmem:[%s1 + $0x470] sm:$0xff]
  %v177 = vld [vmem:[%s1 + $0x478] sm:$0xff]
  %v178 = vld [vmem:[%s1 + $0x480] sm:$0xff]
  %v179 = vld [vmem:[%s1 + $0x488] sm:$0xff]
  %v180 = vld [vmem:[%s1 + $0x490] sm:$0xff]
  %v181 = vld [vmem:[%s1 + $0x498] sm:$0xff]
  %v182 = vld [vmem:[%s1 + $0x4a0] sm:$0xff]
  %v183 = vld [vmem:[%s1 + $0x4a8] sm:$0xff]
  %v184 = vld [vmem:[%s1 + $0x4b0] sm:$0xff]
  %v185 = vld [vmem:[%s1 + $0x4b8] sm:$0xff]
  %v186 = vld [vmem:[%s1 + $0x4c0] sm:$0xff]
  %v187 = vld [vmem:[%s1 + $0x4c8] sm:$0xff]
  %v188 = vld [vmem:[%s1 + $0x4d0] sm:$0xff]
  %v189 = vld [vmem:[%s1 + $0x4d8] sm:$0xff]
  %v190 = vld [vmem:[%s1 + $0x4e0] sm:$0xff]
  %v191 = vld [vmem:[%s1 + $0x4e8] sm:$0xff]
  %v192 = vld [vmem:[%s1 + $0x4f0] sm:$0xff]
  %v193 = vld [vmem:[%s1 + $0x4f8] sm:$0xff]
  %v194 = vld [vmem:[%s1 + $0x500] sm:$0xff]
  %v195 = vld [vmem:[%s1 + $0x508] sm:$0xff]
  %v196 = vld [vmem:[%s1 + $0x510] sm:$0xff]
  %v197 = vld [vmem:[%s1 + $0x518] sm:$0xff]
  %v198 = vld [vmem:[%s1 + $0x520] sm:$0xff]
  %v199 = vld [vmem:[%s1 + $0x528] sm:$0xff]
  %v200 = vld [vmem:[%s1 + $0x530] sm:$0xff]
  %v201 = vld [vmem:[%s1 + $0x538] sm:$0xff]
  %v202 = vld [vmem:[%s1 + $0x540] sm:$0xff]
  %v203 = vld [vmem:[%s1 + $0x548] sm:$0xff]
  %v204 = vld [vmem:[%s1 + $0x550] sm:$0xff]
  %v205 = vld [vmem:[%s1 + $0x558] sm:$0xff]
  %v206 = vld [vmem:[%s1 + $0x560] sm:$0xff]
  %v207 = vld [vmem:[%s1 + $0x568] sm:$0xff]
  %v208 = vld [vmem:[%s1 + $0x570] sm:$0xff]
  %v209 = vld [vmem:[%s1 + $0x578] sm:$0xff]
  %v210 = vld [vmem:[%s1 + $0x580] sm:$0xff]
  %v211 = vld [vmem:[%s1 + $0x588] sm:$0xff]
  %v212 = vld [vmem:[%s1 + $0x590] sm:$0xff]
  %v213 = vld [vmem:[%s1 + $0x598] sm:$0xff]
  %v214 = vld [vmem:[%s1 + $0x5a0] sm:$0xff]
  %v215 = vld [vmem:[%s1 + $0x5a8] sm:$0xff]
  %v216 = vld [vmem:[%s1 + $0x5b0] sm:$0xff]
  %v217 = vld [vmem:[%s1 + $0x5b8] sm:$0xff]
  %v218 = vld [vmem:[%s1 + $0x5c0] sm:$0xff]
  %v219 = vld [vmem:[%s1 + $0x5c8] sm:$0xff]
  %v220 = vld [vmem:[%s1 + $0x5d0] sm:$0xff]
  %v221 = vld [vmem:[%s1 + $0x5d8] sm:$0xff]
  %v222 = vld [vmem:[%s1 + $0x5e0] sm:$0xff]
  %v223 = vld [vmem:[%s1 + $0x5e8] sm:$0xff]
  %v224 = vld [vmem:[%s1 + $0x5f0] sm:$0xff]
  %v225 = vld [vmem:[%s1 + $0x5f8] sm:$0xff]
  %v226 = vld [vmem:[%s1 + $0x600] sm:$0xff]
  %v227 = vld [vmem:[%s1 + $0x608] sm:$0xff]
  %v228 = vld [vmem:[%s1 + $0x610] sm:$0xff]
  %v229 = vld [vmem:[%s1 + $0x618] sm:$0xff]
  %v230 = vld [vmem:[%s1 + $0x620] sm:$0xff]
  %v231 = vld [vmem:[%s1 + $0x628] sm:$0xff]
  %v232 = vld [vmem:[%s1 + $0x630] sm:$0xff]
  %v233 = vld [vmem:[%s1 + $0x638] sm:$0xff]
  %v234 = vld [vmem:[%s1 + $0x640] sm:$0xff]
  %v235 = vld [vmem:[%s1 + $0x648] sm:$0xff]
  %v236 = vld [vmem:[%s1 + $0x650] sm:$0xff]
  %v237 = vld [vmem:[%s1 + $0x658] sm:$0xff]
  %v238 = vld [vmem:[%s1 + $0x660] sm:$0xff]
  %v239 = vld [vmem:[%s1 + $0x668] sm:$0xff]
  %v240 = vld [vmem:[%s1 + $0x670] sm:$0xff]
  %v241 = vld [vmem:[%s1 + $0x678] sm:$0xff]
  %v242 = vld [vmem:[%s1 + $0x680] sm:$0xff]
  %v243 = vld [vmem:[%s1 + $0x688] sm:$0xff]
  %v244 = vld [vmem:[%s1 + $0x690] sm:$0xff]
  %v245 = vld [vmem:[%s1 + $0x698] sm:$0xff]
  %v246 = vld [vmem:[%s1 + $0x6a0] sm:$0xff]
  %v247 = vld [vmem:[%s1 + $0x6a8] sm:$0xff]
  %v248 = vld [vmem:[%s1 + $0x6b0] sm:$0xff]
  %v249 = vld [vmem:[%s1 + $0x6b8] sm:$0xff]
  %v250 = vld [vmem:[%s1 + $0x6c0] sm:$0xff]
  %v251 = vld [vmem:[%s1 + $0x6c8] sm:$0xff]
  %v252 = vld [vmem:[%s1 + $0x6d0] sm:$0xff]
  %v253 = vld [vmem:[%s1 + $0x6d8] sm:$0xff]
  %v254 = vld [vmem:[%s1 + $0x6e0] sm:$0xff]
  %v255 = vld [vmem:[%s1 + $0x6e8] sm:$0xff]
  %v256 = vld [vmem:[%s1 + $0x6f0] sm:$0xff]
  %v257 = vld [vmem:[%s1 + $0x6f8] sm:$0xff]
  %v258 = vld [vmem:[%s1 + $0x700] sm:$0xff]
  %v259 = vld [vmem:[%s1 + $0x708] sm:$0xff]
  %v260 = vld [vmem:[%s1 + $0x710] sm:$0xff]
  %v261 = vld [vmem:[%s1 + $0x718] sm:$0xff]
  %v262 = vld [vmem:[%s1 + $0x720] sm:$0xff]
  %v263 = vld [vmem:[%s1 + $0x728] sm:$0xff]
  %v264 = vld [vmem:[%s1 + $0x730] sm:$0xff]
  %v265 = vld [vmem:[%s1 + $0x738] sm:$0xff]
  %v266 = vld [vmem:[%s1 + $0x740] sm:$0xff]
  %v267 = vld [vmem:[%s1 + $0x748] sm:$0xff]
  %v268 = vld [vmem:[%s1 + $0x750] sm:$0xff]
  %v269 = vld [vmem:[%s1 + $0x758] sm:$0xff]
  %v270 = vld [vmem:[%s1 + $0x760] sm:$0xff]
  %v271 = vld [vmem:[%s1 + $0x768] sm:$0xff]
  %v272 = vld [vmem:[%s1 + $0x770] sm:$0xff]
  %v273 = vld [vmem:[%s1 + $0x778] sm:$0xff]
  %v274 = vld [vmem:[%s1 + $0x780] sm:$0xff]
  %v275 = vld [vmem:[%s1 + $0x788] sm:$0xff]
  %v276 = vld [vmem:[%s1 + $0x790] sm:$0xff]
  %v277 = vld [vmem:[%s1 + $0x798] sm:$0xff]
  %v278 = vld [vmem:[%s1 + $0x7a0] sm:$0xff]
  %v279 = vld [vmem:[%s1 + $0x7a8] sm:$0xff]
  %v280 = vld [vmem:[%s1 + $0x7b0] sm:$0xff]
  %v281 = vld [vmem:[%s1 + $0x7b8] sm:$0xff]
  %v282 = vld [vmem:[%s1 + $0x7c0] sm:$0xff]
  %v283 = vld [vmem:[%s1 + $0x7c8] sm:$0xff]
  %v284 = vld [vmem:[%s1 + $0x7d0] sm:$0xff]
  %v285 = vld [vmem:[%s1 + $0x7d8] sm:$0xff]
  %v286 = vld [vmem:[%s1 + $0x7e0] sm:$0xff]
  %v287 = vld [vmem:[%s1 + $0x7e8] sm:$0xff]
  %v288 = vld [vmem:[%s1 + $0x7f0] sm:$0xff]
  %v289 = vld [vmem:[%s1 + $0x7f8] sm:$0xff]
  %v290 = vld [vmem:[%s1 + $0x800] sm:$0xff]
  %v291 = vld [vmem:[%s1 + $0x808] sm:$0xff]
  %v292 = vld [vmem:[%s1 + $0x810] sm:$0xff]
  %v293 = vld [vmem:[%s1 + $0x818] sm:$0xff]
  %v294 = vld [vmem:[%s1 + $0x820] sm:$0xff]
  %v295 = vld [vmem:[%s1 + $0x828] sm:$0xff]
  %v296 = vld [vmem:[%s1 + $0x830] sm:$0xff]
  %v297 = vld [vmem:[%s1 + $0x838] sm:$0xff]
  %v298 = vld [vmem:[%s1 + $0x840] sm:$0xff]
  %v299 = vld [vmem:[%s1 + $0x848] sm:$0xff]
  %v300 = vld [vmem:[%s1 + $0x850] sm:$0xff]
  %v301 = vld [vmem:[%s1 + $0x858] sm:$0xff]
  %v302 = vld [vmem:[%s1 + $0x860] sm:$0xff]
  %v303 = vld [vmem:[%s1 + $0x868] sm:$0xff]
  %v304 = vld [vmem:[%s1 + $0x870] sm:$0xff]
  %v305 = vld [vmem:[%s1 + $0x878] sm:$0xff]
  %v306 = vld [vmem:[%s1 + $0x880] sm:$0xff]
  %v307 = vld [vmem:[%s1 + $0x888] sm:$0xff]
  %v308 = vld [vmem:[%s1 + $0x890] sm:$0xff]
  %v309 = vld [vmem:[%s1 + $0x898] sm:$0xff]
  %v310 = vld [vmem:[%s1 + $0x8a0] sm:$0xff]
  %v311 = vld [vmem:[%s1 + $0x8a8] sm:$0xff]
  %v312 = vld [vmem:[%s1 + $0x8b0] sm:$0xff]
  %v313 = vld [vmem:[%s1 + $0x8b8] sm:$0xff]
  %v314 = vld [vmem:[%s1 + $0x8c0] sm:$0xff]
  %v315 = vld [vmem:[%s1 + $0x8c8] sm:$0xff]
  %v316 = vld [vmem:[%s1 + $0x8d0] sm:$0xff]
  %v317 = vld [vmem:[%s1 + $0x8d8] sm:$0xff]
  %v318 = vld [vmem:[%s1 + $0x8e0] sm:$0xff]
  %v319 = vld [vmem:[%s1 + $0x8e8] sm:$0xff]
  %v320 = vld [vmem:[%s1 + $0x8f0] sm:$0xff]
  %v321 = vld [vmem:[%s1 + $0x8f8] sm:$0xff]
  %v322 = vld [vmem:[%s1 + $0x900] sm:$0xff]
  %v323 = vld [vmem:[%s1 + $0x908] sm:$0xff]
  %v324 = vld [vmem:[%s1 + $0x910] sm:$0xff]
  %v325 = vld [vmem:[%s1 + $0x918] sm:$0xff]
  %v326 = vld [vmem:[%s1 + $0x920] sm:$0xff]
  %v327 = vld [vmem:[%s1 + $0x928] sm:$0xff]
  %v328 = vld [vmem:[%s1 + $0x930] sm:$0xff]
  %v329 = vld [vmem:[%s1 + $0x938] sm:$0xff]
  %v330 = vld [vmem:[%s1 + $0x940] sm:$0xff]
  %v331 = vld [vmem:[%s1 + $0x948] sm:$0xff]
  %v332 = vld [vmem:[%s1 + $0x950] sm:$0xff]
  %v333 = vld [vmem:[%s1 + $0x958] sm:$0xff]
  %v334 = vld [vmem:[%s1 + $0x960] sm:$0xff]
  %v335 = vld [vmem:[%s1 + $0x968] sm:$0xff]
  %v336 = vld [vmem:[%s1 + $0x970] sm:$0xff]
  %v337 = vld [vmem:[%s1 + $0x978] sm:$0xff]
  %v338 = vld [vmem:[%s1 + $0x980] sm:$0xff]
  %v339 = vld [vmem:[%s1 + $0x988] sm:$0xff]
  %v340 = vld [vmem:[%s1 + $0x990] sm:$0xff]
  %v341 = vld [vmem:[%s1 + $0x998] sm:$0xff]
  %v342 = vld [vmem:[%s1 + $0x9a0] sm:$0xff]
  %v343 = vld [vmem:[%s1 + $0x9a8] sm:$0xff]
  %v344 = vld [vmem:[%s1 + $0x9b0] sm:$0xff]
  %v345 = vld [vmem:[%s1 + $0x9b8] sm:$0xff]
  %v346 = vld [vmem:[%s1 + $0x9c0] sm:$0xff]
  %v347 = vld [vmem:[%s1 + $0x9c8] sm:$0xff]
  %v348 = vld [vmem:[%s1 + $0x9d0] sm:$0xff]
  %v349 = vld [vmem:[%s1 + $0x9d8] sm:$0xff]
  %v350 = vld [vmem:[%s1 + $0x9e0] sm:$0xff]
  %v351 = vld [vmem:[%s1 + $0x9e8] sm:$0xff]
  %v352 = vld [vmem:[%s1 + $0x9f0] sm:$0xff]
  %v353 = vld [vmem:[%s1 + $0x9f8] sm:$0xff]
  %v354 = vld [vmem:[%s1 + $0xa00] sm:$0xff]
  %v355 = vld [vmem:[%s1 + $0xa08] sm:$0xff]
  %v356 = vld [vmem:[%s1 + $0xa10] sm:$0xff]
  %v357 = vld [vmem:[%s1 + $0xa18] sm:$0xff]
  %v358 = vld [vmem:[%s1 + $0xa20] sm:$0xff]
  %v359 = vld [vmem:[%s1 + $0xa28] sm:$0xff]
  %v360 = vld [vmem:[%s1 + $0xa30] sm:$0xff]
  %v361 = vld [vmem:[%s1 + $0xa38] sm:$0xff]
  %v362 = vld [vmem:[%s1 + $0xa40] sm:$0xff]
  %v363 = vld [vmem:[%s1 + $0xa48] sm:$0xff]
  %v364 = vld [vmem:[%s1 + $0xa50] sm:$0xff]
  %v365 = vld [vmem:[%s1 + $0xa58] sm:$0xff]
  %v366 = vld [vmem:[%s1 + $0xa60] sm:$0xff]
  %v367 = vld [vmem:[%s1 + $0xa68] sm:$0xff]
  %v368 = vld [vmem:[%s1 + $0xa70] sm:$0xff]
  %v369 = vld [vmem:[%s1 + $0xa78] sm:$0xff]
  %v370 = vld [vmem:[%s1 + $0xa80] sm:$0xff]
  %v371 = vld [vmem:[%s1 + $0xa88] sm:$0xff]
  %v372 = vld [vmem:[%s1 + $0xa90] sm:$0xff]
  %v373 = vld [vmem:[%s1 + $0xa98] sm:$0xff]
  %v374 = vld [vmem:[%s1 + $0xaa0] sm:$0xff]
  %v375 = vld [vmem:[%s1 + $0xaa8] sm:$0xff]
  %v376 = vld [vmem:[%s1 + $0xab0] sm:$0xff]
  %v377 = vld [vmem:[%s1 + $0xab8] sm:$0xff]
  %v378 = vld [vmem:[%s1 + $0xac0] sm:$0xff]
  %v379 = vld [vmem:[%s1 + $0xac8] sm:$0xff]
  %v380 = vld [vmem:[%s1 + $0xad0] sm:$0xff]
  %v381 = vld [vmem:[%s1 + $0xad8] sm:$0xff]
  %v382 = vld [vmem:[%s1 + $0xae0] sm:$0xff]
  %v383 = vld [vmem:[%s1 + $0xae8] sm:$0xff]
  %v384 = vld [vmem:[%s1 + $0xaf0] sm:$0xff]
  %v385 = vld [vmem:[%s1 + $0xaf8] sm:$0xff]
  %v386 = vld [vmem:[%s1 + $0xb00] sm:$0xff]
  %v387 = vld [vmem:[%s1 + $0xb08] sm:$0xff]
  %v388 = vld [vmem:[%s1 + $0xb10] sm:$0xff]
  %v389 = vld [vmem:[%s1 + $0xb18] sm:$0xff]
  %v390 = vld [vmem:[%s1 + $0xb20] sm:$0xff]
  %v391 = vld [vmem:[%s1 + $0xb28] sm:$0xff]
  %v392 = vld [vmem:[%s1 + $0xb30] sm:$0xff]
  %v393 = vld [vmem:[%s1 + $0xb38] sm:$0xff]
  %v394 = vld [vmem:[%s1 + $0xb40] sm:$0xff]
  %v395 = vld [vmem:[%s1 + $0xb48] sm:$0xff]
  %v396 = vld [vmem:[%s1 + $0xb50] sm:$0xff]
  %v397 = vld [vmem:[%s1 + $0xb58] sm:$0xff]
  %v398 = vld [vmem:[%s1 + $0xb60] sm:$0xff]
  %v399 = vld [vmem:[%s1 + $0xb68] sm:$0xff]
  %v400 = vld [vmem:[%s1 + $0xb70] sm:$0xff]
  %v401 = vld [vmem:[%s1 + $0xb78] sm:$0xff]
  %v402 = vld [vmem:[%s1 + $0xb80] sm:$0xff]
  %v403 = vld [vmem:[%s1 + $0xb88] sm:$0xff]
  %v404 = vld [vmem:[%s1 + $0xb90] sm:$0xff]
  %v405 = vld [vmem:[%s1 + $0xb98] sm:$0xff]
  %v406 = vld [vmem:[%s1 + $0xba0] sm:$0xff]
  %v407 = vld [vmem:[%s1 + $0xba8] sm:$0xff]
  %v408 = vld [vmem:[%s1 + $0xbb0] sm:$0xff]
  %v409 = vld [vmem:[%s1 + $0xbb8] sm:$0xff]
  %v410 = vld [vmem:[%s1 + $0xbc0] sm:$0xff]
  %v411 = vld [vmem:[%s1 + $0xbc8] sm:$0xff]
  %v412 = vld [vmem:[%s1 + $0xbd0] sm:$0xff]
  %v413 = vld [vmem:[%s1 + $0xbd8] sm:$0xff]
  %v414 = vld [vmem:[%s1 + $0xbe0] sm:$0xff]
  %v415 = vld [vmem:[%s1 + $0xbe8] sm:$0xff]
  %v416 = vld [vmem:[%s1 + $0xbf0] sm:$0xff]
  %v417 = vld [vmem:[%s1 + $0xbf8] sm:$0xff]
  %v418 = vld [vmem:[%s1 + $0xc00] sm:$0xff]
  %v419 = vld [vmem:[%s1 + $0xc08] sm:$0xff]
  %v420 = vld [vmem:[%s1 + $0xc10] sm:$0xff]
  %v421 = vld [vmem:[%s1 + $0xc18] sm:$0xff]
  %v422 = vld [vmem:[%s1 + $0xc20] sm:$0xff]
  %v423 = vld [vmem:[%s1 + $0xc28] sm:$0xff]
  %v424 = vld [vmem:[%s1 + $0xc30] sm:$0xff]
  %v425 = vld [vmem:[%s1 + $0xc38] sm:$0xff]
  %v426 = vld [vmem:[%s1 + $0xc40] sm:$0xff]
  %v427 = vld [vmem:[%s1 + $0xc48] sm:$0xff]
  %v428 = vld [vmem:[%s1 + $0xc50] sm:$0xff]
  %v429 = vld [vmem:[%s1 + $0xc58] sm:$0xff]
  %v430 = vld [vmem:[%s1 + $0xc60] sm:$0xff]
  %v431 = vld [vmem:[%s1 + $0xc68] sm:$0xff]
  %v432 = vld [vmem:[%s1 + $0xc70] sm:$0xff]
  %v433 = vld [vmem:[%s1 + $0xc78] sm:$0xff]
  %v434 = vld [vmem:[%s1 + $0xc80] sm:$0xff]
  %v435 = vld [vmem:[%s1 + $0xc88] sm:$0xff]
  %v436 = vld [vmem:[%s1 + $0xc90] sm:$0xff]
  %v437 = vld [vmem:[%s1 + $0xc98] sm:$0xff]
  %v438 = vld [vmem:[%s1 + $0xca0] sm:$0xff]
  %v439 = vld [vmem:[%s1 + $0xca8] sm:$0xff]
  %v440 = vld [vmem:[%s1 + $0xcb0] sm:$0xff]
  %v441 = vld [vmem:[%s1 + $0xcb8] sm:$0xff]
  %v442 = vld [vmem:[%s1 + $0xcc0] sm:$0xff]
  %v443 = vld [vmem:[%s1 + $0xcc8] sm:$0xff]
  %v444 = vld [vmem:[%s1 + $0xcd0] sm:$0xff]
  %v445 = vld [vmem:[%s1 + $0xcd8] sm:$0xff]
  %v446 = vld [vmem:[%s1 + $0xce0] sm:$0xff]
  %v447 = vld [vmem:[%s1 + $0xce8] sm:$0xff]
  %v448 = vld [vmem:[%s1 + $0xcf0] sm:$0xff]
  %v449 = vld [vmem:[%s1 + $0xcf8] sm:$0xff]
  %v450 = vld [vmem:[%s1 + $0xd00] sm:$0xff]
  %v451 = vld [vmem:[%s1 + $0xd08] sm:$0xff]
  %v452 = vld [vmem:[%s1 + $0xd10] sm:$0xff]
  %v453 = vld [vmem:[%s1 + $0xd18] sm:$0xff]
  %v454 = vld [vmem:[%s1 + $0xd20] sm:$0xff]
  %v455 = vld [vmem:[%s1 + $0xd28] sm:$0xff]
  %v456 = vld [vmem:[%s1 + $0xd30] sm:$0xff]
  %v457 = vld [vmem:[%s1 + $0xd38] sm:$0xff]
  %v458 = vld [vmem:[%s1 + $0xd40] sm:$0xff]
  %v459 = vld [vmem:[%s1 + $0xd48] sm:$0xff]
  %v460 = vld [vmem:[%s1 + $0xd50] sm:$0xff]
  %v461 = vld [vmem:[%s1 + $0xd58] sm:$0xff]
  %v462 = vld [vmem:[%s1 + $0xd60] sm:$0xff]
  %v463 = vld [vmem:[%s1 + $0xd68] sm:$0xff]
  %v464 = vld [vmem:[%s1 + $0xd70] sm:$0xff]
  %v465 = vld [vmem:[%s1 + $0xd78] sm:$0xff]
  %v466 = vld [vmem:[%s1 + $0xd80] sm:$0xff]
  %v467 = vld [vmem:[%s1 + $0xd88] sm:$0xff]
  %v468 = vld [vmem:[%s1 + $0xd90] sm:$0xff]
  %v469 = vld [vmem:[%s1 + $0xd98] sm:$0xff]
  %v470 = vld [vmem:[%s1 + $0xda0] sm:$0xff]
  %v471 = vld [vmem:[%s1 + $0xda8] sm:$0xff]
  %v472 = vld [vmem:[%s1 + $0xdb0] sm:$0xff]
  %v473 = vld [vmem:[%s1 + $0xdb8] sm:$0xff]
  %v474 = vld [vmem:[%s1 + $0xdc0] sm:$0xff]
  %v475 = vld [vmem:[%s1 + $0xdc8] sm:$0xff]
  %v476 = vld [vmem:[%s1 + $0xdd0] sm:$0xff]
  %v477 = vld [vmem:[%s1 + $0xdd8] sm:$0xff]
  %v478 = vld [vmem:[%s1 + $0xde0] sm:$0xff]
  %v479 = vld [vmem:[%s1 + $0xde8] sm:$0xff]
  %v480 = vld [vmem:[%s1 + $0xdf0] sm:$0xff]
  %v481 = vld [vmem:[%s1 + $0xdf8] sm:$0xff]
  %v482 = vld [vmem:[%s1 + $0xe00] sm:$0xff]
  %v483 = vld [vmem:[%s1 + $0xe08] sm:$0xff]
  %v484 = vld [vmem:[%s1 + $0xe10] sm:$0xff]
  %v485 = vld [vmem:[%s1 + $0xe18] sm:$0xff]
  %v486 = vld [vmem:[%s1 + $0xe20] sm:$0xff]
  %v487 = vld [vmem:[%s1 + $0xe28] sm:$0xff]
  %v488 = vld [vmem:[%s1 + $0xe30] sm:$0xff]
  %v489 = vld [vmem:[%s1 + $0xe38] sm:$0xff]
  %v490 = vld [vmem:[%s1 + $0xe40] sm:$0xff]
  %v491 = vld [vmem:[%s1 + $0xe48] sm:$0xff]
  %v492 = vld [vmem:[%s1 + $0xe50] sm:$0xff]
  %v493 = vld [vmem:[%s1 + $0xe58] sm:$0xff]
  %v494 = vld [vmem:[%s1 + $0xe60] sm:$0xff]
  %v495 = vld [vmem:[%s1 + $0xe68] sm:$0xff]
  %v496 = vld [vmem:[%s1 + $0xe70] sm:$0xff]
  %v497 = vld [vmem:[%s1 + $0xe78] sm:$0xff]
  %v498 = vld [vmem:[%s1 + $0xe80] sm:$0xff]
  %v499 = vld [vmem:[%s1 + $0xe88] sm:$0xff]
  %v500 = vld [vmem:[%s1 + $0xe90] sm:$0xff]
  %v501 = vld [vmem:[%s1 + $0xe98] sm:$0xff]
  %v502 = vld [vmem:[%s1 + $0xea0] sm:$0xff]
  %v503 = vld [vmem:[%s1 + $0xea8] sm:$0xff]
  %v504 = vld [vmem:[%s1 + $0xeb0] sm:$0xff]
  %v505 = vld [vmem:[%s1 + $0xeb8] sm:$0xff]
  %v506 = vld [vmem:[%s1 + $0xec0] sm:$0xff]
  %v507 = vld [vmem:[%s1 + $0xec8] sm:$0xff]
  %v508 = vld [vmem:[%s1 + $0xed0] sm:$0xff]
  %v509 = vld [vmem:[%s1 + $0xed8] sm:$0xff]
  %v510 = vld [vmem:[%s1 + $0xee0] sm:$0xff]
  %v511 = vld [vmem:[%s1 + $0xee8] sm:$0xff]
  %v512 = vld [vmem:[%s1 + $0xef0] sm:$0xff]
  %v513 = vld [vmem:[%s1 + $0xef8] sm:$0xff]
  %v514 = vld [vmem:[%s1 + $0xf00] sm:$0xff]
  %v515 = vld [vmem:[%s1 + $0xf08] sm:$0xff]
  %v516 = vld [vmem:[%s1 + $0xf10] sm:$0xff]
  %v517 = vld [vmem:[%s1 + $0xf18] sm:$0xff]
  %v518 = vld [vmem:[%s1 + $0xf20] sm:$0xff]
  %v519 = vld [vmem:[%s1 + $0xf28] sm:$0xff]
  %v520 = vld [vmem:[%s1 + $0xf30] sm:$0xff]
  %v521 = vld [vmem:[%s1 + $0xf38] sm:$0xff]
  %v522 = vld [vmem:[%s1 + $0xf40] sm:$0xff]
  %v523 = vld [vmem:[%s1 + $0xf48] sm:$0xff]
  %v524 = vld [vmem:[%s1 + $0xf50] sm:$0xff]
  %v525 = vld [vmem:[%s1 + $0xf58] sm:$0xff]
  %v526 = vld [vmem:[%s1 + $0xf60] sm:$0xff]
  %v527 = vld [vmem:[%s1 + $0xf68] sm:$0xff]
  %v528 = vld [vmem:[%s1 + $0xf70] sm:$0xff]
  %v529 = vld [vmem:[%s1 + $0xf78] sm:$0xff]
  %v530 = vld [vmem:[%s1 + $0xf80] sm:$0xff]
  %v531 = vld [vmem:[%s1 + $0xf88] sm:$0xff]
  %v532 = vld [vmem:[%s1 + $0xf90] sm:$0xff]
  %v533 = vld [vmem:[%s1 + $0xf98] sm:$0xff]
  %v534 = vld [vmem:[%s1 + $0xfa0] sm:$0xff]
  %v535 = vld [vmem:[%s1 + $0xfa8] sm:$0xff]
  %v536 = vld [vmem:[%s1 + $0xfb0] sm:$0xff]
  %v537 = vld [vmem:[%s1 + $0xfb8] sm:$0xff]
  %v538 = vld [vmem:[%s1 + $0xfc0] sm:$0xff]
  %v539 = vld [vmem:[%s1 + $0xfc8] sm:$0xff]
  %v540 = vld [vmem:[%s1 + $0xfd0] sm:$0xff]
  %v541 = vld [vmem:[%s1 + $0xfd8] sm:$0xff]
  %v542 = vld [vmem:[%s1 + $0xfe0] sm:$0xff]
  %v543 = vld [vmem:[%s1 + $0xfe8] sm:$0xff]
  %v544 = vld [vmem:[%s1 + $0xff0] sm:$0xff]
  %v545 = vld [vmem:[%s1 + $0xff8] sm:$0xff]
  %v546 = vld [vmem:[%s1 + $0x1000] sm:$0xff]
  %v547 = vld [vmem:[%s1 + $0x1008] sm:$0xff]
  %v548 = vld [vmem:[%s1 + $0x1010] sm:$0xff]
  %v549 = vld [vmem:[%s1 + $0x1018] sm:$0xff]
  %v550 = vld [vmem:[%s1 + $0x1020] sm:$0xff]
  %v551 = vld [vmem:[%s1 + $0x1028] sm:$0xff]
  %v552 = vld [vmem:[%s1 + $0x1030] sm:$0xff]
  %v553 = vld [vmem:[%s1 + $0x1038] sm:$0xff]
  %v554 = vld [vmem:[%s1 + $0x1040] sm:$0xff]
  %v555 = vld [vmem:[%s1 + $0x1048] sm:$0xff]
  %v556 = vld [vmem:[%s1 + $0x1050] sm:$0xff]
  %v557 = vld [vmem:[%s1 + $0x1058] sm:$0xff]
  %v558 = vld [vmem:[%s1 + $0x1060] sm:$0xff]
  %v559 = vld [vmem:[%s1 + $0x1068] sm:$0xff]
  %v560 = vld [vmem:[%s1 + $0x1070] sm:$0xff]
  %v561 = vld [vmem:[%s1 + $0x1078] sm:$0xff]
  %v562 = vld [vmem:[%s1 + $0x1080] sm:$0xff]
  %v563 = vld [vmem:[%s1 + $0x1088] sm:$0xff]
  %v564 = vld [vmem:[%s1 + $0x1090] sm:$0xff]
  %v565 = vld [vmem:[%s1 + $0x1098] sm:$0xff]
  %v566 = vld [vmem:[%s1 + $0x10a0] sm:$0xff]
  %v567 = vld [vmem:[%s1 + $0x10a8] sm:$0xff]
  %v568 = vld [vmem:[%s1 + $0x10b0] sm:$0xff]
  %v569 = vld [vmem:[%s1 + $0x10b8] sm:$0xff]
  %v570 = vld [vmem:[%s1 + $0x10c0] sm:$0xff]
  %v571 = vld [vmem:[%s1 + $0x10c8] sm:$0xff]
  %v572 = vld [vmem:[%s1 + $0x10d0] sm:$0xff]
  %v573 = vld [vmem:[%s1 + $0x10d8] sm:$0xff]
  %v574 = vld [vmem:[%s1 + $0x10e0] sm:$0xff]
  %v575 = vld [vmem:[%s1 + $0x10e8] sm:$0xff]
  %v576 = vld [vmem:[%s1 + $0x10f0] sm:$0xff]
  %v577 = vld [vmem:[%s1 + $0x10f8] sm:$0xff]
  %v578 = vld [vmem:[%s1 + $0x1100] sm:$0xff]
  %v579 = vld [vmem:[%s1 + $0x1108] sm:$0xff]
  %v580 = vld [vmem:[%s1 + $0x1110] sm:$0xff]
  %v581 = vld [vmem:[%s1 + $0x1118] sm:$0xff]
  %v582 = vld [vmem:[%s1 + $0x1120] sm:$0xff]
  %v583 = vld [vmem:[%s1 + $0x1128] sm:$0xff]
  %v584 = vld [vmem:[%s1 + $0x1130] sm:$0xff]
  %v585 = vld [vmem:[%s1 + $0x1138] sm:$0xff]
  %v586 = vld [vmem:[%s1 + $0x1140] sm:$0xff]
  %v587 = vld [vmem:[%s1 + $0x1148] sm:$0xff]
  %v588 = vld [vmem:[%s1 + $0x1150] sm:$0xff]
  %v589 = vld [vmem:[%s1 + $0x1158] sm:$0xff]
  %v590 = vld [vmem:[%s1 + $0x1160] sm:$0xff]
  %v591 = vld [vmem:[%s1 + $0x1168] sm:$0xff]
  %v592 = vld [vmem:[%s1 + $0x1170] sm:$0xff]
  %v593 = vld [vmem:[%s1 + $0x1178] sm:$0xff]
  %v594 = vld [vmem:[%s1 + $0x1180] sm:$0xff]
  %v595 = vld [vmem:[%s1 + $0x1188] sm:$0xff]
  %v596 = vld [vmem:[%s1 + $0x1190] sm:$0xff]
  %v597 = vld [vmem:[%s1 + $0x1198] sm:$0xff]
  %v598 = vld [vmem:[%s1 + $0x11a0] sm:$0xff]
  %v599 = vld [vmem:[%s1 + $0x11a8] sm:$0xff]
  %v600 = vld [vmem:[%s1 + $0x11b0] sm:$0xff]
  %v601 = vld [vmem:[%s1 + $0x11b8] sm:$0xff]
  %v602 = vld [vmem:[%s1 + $0x11c0] sm:$0xff]
  %v603 = vld [vmem:[%s1 + $0x11c8] sm:$0xff]
  %v604 = vld [vmem:[%s1 + $0x11d0] sm:$0xff]
  %v605 = vld [vmem:[%s1 + $0x11d8] sm:$0xff]
  %v606 = vld [vmem:[%s1 + $0x11e0] sm:$0xff]
  %v607 = vld [vmem:[%s1 + $0x11e8] sm:$0xff]
  %v608 = vld [vmem:[%s1 + $0x11f0] sm:$0xff]
  %v609 = vld [vmem:[%s1 + $0x11f8] sm:$0xff]
  %v610 = vld [vmem:[%s1 + $0x1200] sm:$0xff]
  %v611 = vld [vmem:[%s1 + $0x1208] sm:$0xff]
  %v612 = vld [vmem:[%s1 + $0x1210] sm:$0xff]
  %v613 = vld [vmem:[%s1 + $0x1218] sm:$0xff]
  %v614 = vld [vmem:[%s1 + $0x1220] sm:$0xff]
  %v615 = vld [vmem:[%s1 + $0x1228] sm:$0xff]
  %v616 = vld [vmem:[%s1 + $0x1230] sm:$0xff]
  %v617 = vld [vmem:[%s1 + $0x1238] sm:$0xff]
  %v618 = vld [vmem:[%s1 + $0x1240] sm:$0xff]
  %v619 = vld [vmem:[%s1 + $0x1248] sm:$0xff]
  %v620 = vld [vmem:[%s1 + $0x1250] sm:$0xff]
  %v621 = vld [vmem:[%s1 + $0x1258] sm:$0xff]
  %v622 = vld [vmem:[%s1 + $0x1260] sm:$0xff]
  %v623 = vld [vmem:[%s1 + $0x1268] sm:$0xff]
  %v624 = vld [vmem:[%s1 + $0x1270] sm:$0xff]
  %v625 = vld [vmem:[%s1 + $0x1278] sm:$0xff]
  %v626 = vld [vmem:[%s1 + $0x1280] sm:$0xff]
  %v627 = vld [vmem:[%s1 + $0x1288] sm:$0xff]
  %v628 = vld [vmem:[%s1 + $0x1290] sm:$0xff]
  %v629 = vld [vmem:[%s1 + $0x1298] sm:$0xff]
  %v630 = vld [vmem:[%s1 + $0x12a0] sm:$0xff]
  %v631 = vld [vmem:[%s1 + $0x12a8] sm:$0xff]
  %v632 = vld [vmem:[%s1 + $0x12b0] sm:$0xff]
  %v633 = vld [vmem:[%s1 + $0x12b8] sm:$0xff]
  %v634 = vld [vmem:[%s1 + $0x12c0] sm:$0xff]
  %v635 = vld [vmem:[%s1 + $0x12c8] sm:$0xff]
  %v636 = vld [vmem:[%s1 + $0x12d0] sm:$0xff]
  %v637 = vld [vmem:[%s1 + $0x12d8] sm:$0xff]
  %v638 = vld [vmem:[%s1 + $0x12e0] sm:$0xff]
  %v639 = vld [vmem:[%s1 + $0x12e8] sm:$0xff]
  %v640 = vld [vmem:[%s1 + $0x12f0] sm:$0xff]
  %v641 = vld [vmem:[%s1 + $0x12f8] sm:$0xff]
  %v642 = vld [vmem:[%s1 + $0x1300] sm:$0xff]
  %v643 = vld [vmem:[%s1 + $0x1308] sm:$0xff]
  %v644 = vld [vmem:[%s1 + $0x1310] sm:$0xff]
  %v645 = vld [vmem:[%s1 + $0x1318] sm:$0xff]
  %v646 = vld [vmem:[%s1 + $0x1320] sm:$0xff]
  %v647 = vld [vmem:[%s1 + $0x1328] sm:$0xff]
  %v648 = vld [vmem:[%s1 + $0x1330] sm:$0xff]
  %v649 = vld [vmem:[%s1 + $0x1338] sm:$0xff]
  %v650 = vld [vmem:[%s1 + $0x1340] sm:$0xff]
  %v651 = vld [vmem:[%s1 + $0x1348] sm:$0xff]
  %v652 = vld [vmem:[%s1 + $0x1350] sm:$0xff]
  %v653 = vld [vmem:[%s1 + $0x1358] sm:$0xff]
  %v654 = vld [vmem:[%s1 + $0x1360] sm:$0xff]
  %v655 = vld [vmem:[%s1 + $0x1368] sm:$0xff]
  %v656 = vld [vmem:[%s1 + $0x1370] sm:$0xff]
  %v657 = vld [vmem:[%s1 + $0x1378] sm:$0xff]
  %v658 = vld [vmem:[%s1 + $0x1380] sm:$0xff]
  %v659 = vld [vmem:[%s1 + $0x1388] sm:$0xff]
  %v660 = vld [vmem:[%s1 + $0x1390] sm:$0xff]
  %v661 = vld [vmem:[%s1 + $0x1398] sm:$0xff]
  %v662 = vld [vmem:[%s1 + $0x13a0] sm:$0xff]
  %v663 = vld [vmem:[%s1 + $0x13a8] sm:$0xff]
  %v664 = vld [vmem:[%s1 + $0x13b0] sm:$0xff]
  %v665 = vld [vmem:[%s1 + $0x13b8] sm:$0xff]
  %v666 = vld [vmem:[%s1 + $0x13c0] sm:$0xff]
  %v667 = vld [vmem:[%s1 + $0x13c8] sm:$0xff]
  %v668 = vld [vmem:[%s1 + $0x13d0] sm:$0xff]
  %v669 = vld [vmem:[%s1 + $0x13d8] sm:$0xff]
  %v670 = vld [vmem:[%s1 + $0x13e0] sm:$0xff]
  %v671 = vld [vmem:[%s1 + $0x13e8] sm:$0xff]
  %v672 = vld [vmem:[%s1 + $0x13f0] sm:$0xff]
  %v673 = vld [vmem:[%s1 + $0x13f8] sm:$0xff]
  %v674 = vld [vmem:[%s1 + $0x1400] sm:$0xff]
  %v675 = vld [vmem:[%s1 + $0x1408] sm:$0xff]
  %v676 = vld [vmem:[%s1 + $0x1410] sm:$0xff]
  %v677 = vld [vmem:[%s1 + $0x1418] sm:$0xff]
  %v678 = vld [vmem:[%s1 + $0x1420] sm:$0xff]
  %v679 = vld [vmem:[%s1 + $0x1428] sm:$0xff]
  %v680 = vld [vmem:[%s1 + $0x1430] sm:$0xff]
  %v681 = vld [vmem:[%s1 + $0x1438] sm:$0xff]
  %v682 = vld [vmem:[%s1 + $0x1440] sm:$0xff]
  %v683 = vld [vmem:[%s1 + $0x1448] sm:$0xff]
  %v684 = vld [vmem:[%s1 + $0x1450] sm:$0xff]
  %v685 = vld [vmem:[%s1 + $0x1458] sm:$0xff]
  %v686 = vld [vmem:[%s1 + $0x1460] sm:$0xff]
  %v687 = vld [vmem:[%s1 + $0x1468] sm:$0xff]
  %v688 = vld [vmem:[%s1 + $0x1470] sm:$0xff]
  %v689 = vld [vmem:[%s1 + $0x1478] sm:$0xff]
  %v690 = vld [vmem:[%s1 + $0x1480] sm:$0xff]
  %v691 = vld [vmem:[%s1 + $0x1488] sm:$0xff]
  %v692 = vld [vmem:[%s1 + $0x1490] sm:$0xff]
  %v693 = vld [vmem:[%s1 + $0x1498] sm:$0xff]
  %v694 = vld [vmem:[%s1 + $0x14a0] sm:$0xff]
  %v695 = vld [vmem:[%s1 + $0x14a8] sm:$0xff]
  %v696 = vld [vmem:[%s1 + $0x14b0] sm:$0xff]
  %v697 = vld [vmem:[%s1 + $0x14b8] sm:$0xff]
  %v698 = vld [vmem:[%s1 + $0x14c0] sm:$0xff]
  %v699 = vld [vmem:[%s1 + $0x14c8] sm:$0xff]
  %v700 = vld [vmem:[%s1 + $0x14d0] sm:$0xff]
  %v701 = vld [vmem:[%s1 + $0x14d8] sm:$0xff]
  %v702 = vld [vmem:[%s1 + $0x14e0] sm:$0xff]
  %v703 = vld [vmem:[%s1 + $0x14e8] sm:$0xff]
  %v704 = vld [vmem:[%s1 + $0x14f0] sm:$0xff]
  %v705 = vld [vmem:[%s1 + $0x14f8] sm:$0xff]
  %v706 = vld [vmem:[%s1 + $0x1500] sm:$0xff]
  %v707 = vld [vmem:[%s1 + $0x1508] sm:$0xff]
  %v708 = vld [vmem:[%s1 + $0x1510] sm:$0xff]
  %v709 = vld [vmem:[%s1 + $0x1518] sm:$0xff]
  %v710 = vld [vmem:[%s1 + $0x1520] sm:$0xff]
  %v711 = vld [vmem:[%s1 + $0x1528] sm:$0xff]
  %v712 = vld [vmem:[%s1 + $0x1530] sm:$0xff]
  %v713 = vld [vmem:[%s1 + $0x1538] sm:$0xff]
  %v714 = vld [vmem:[%s1 + $0x1540] sm:$0xff]
  %v715 = vld [vmem:[%s1 + $0x1548] sm:$0xff]
  %v716 = vld [vmem:[%s1 + $0x1550] sm:$0xff]
  %v717 = vld [vmem:[%s1 + $0x1558] sm:$0xff]
  %v718 = vld [vmem:[%s1 + $0x1560] sm:$0xff]
  %v719 = vld [vmem:[%s1 + $0x1568] sm:$0xff]
  %v720 = vld [vmem:[%s1 + $0x1570] sm:$0xff]
  %v721 = vld [vmem:[%s1 + $0x1578] sm:$0xff]
  %v722 = vld [vmem:[%s1 + $0x1580] sm:$0xff]
  %v723 = vld [vmem:[%s1 + $0x1588] sm:$0xff]
  %v724 = vld [vmem:[%s1 + $0x1590] sm:$0xff]
  %v725 = vld [vmem:[%s1 + $0x1598] sm:$0xff]
  %v726 = vld [vmem:[%s1 + $0x15a0] sm:$0xff]
  %v727 = vld [vmem:[%s1 + $0x15a8] sm:$0xff]
  %v728 = vld [vmem:[%s1 + $0x15b0] sm:$0xff]
  %v729 = vld [vmem:[%s1 + $0x15b8] sm:$0xff]
  %v730 = vld [vmem:[%s1 + $0x15c0] sm:$0xff]
  %v731 = vld [vmem:[%s1 + $0x15c8] sm:$0xff]
  %v732 = vld [vmem:[%s1 + $0x15d0] sm:$0xff]
  %v733 = vld [vmem:[%s1 + $0x15d8] sm:$0xff]
  %v734 = vld [vmem:[%s1 + $0x15e0] sm:$0xff]
  %v735 = vld [vmem:[%s1 + $0x15e8] sm:$0xff]
  %v736 = vld [vmem:[%s1 + $0x15f0] sm:$0xff]
  %v737 = vld [vmem:[%s1 + $0x15f8] sm:$0xff]
  %v738 = vld [vmem:[%s1 + $0x1600] sm:$0xff]
  %v739 = vld [vmem:[%s1 + $0x1608] sm:$0xff]
  %v740 = vld [vmem:[%s1 + $0x1610] sm:$0xff]
  %v741 = vld [vmem:[%s1 + $0x1618] sm:$0xff]
  %v742 = vld [vmem:[%s1 + $0x1620] sm:$0xff]
  %v743 = vld [vmem:[%s1 + $0x1628] sm:$0xff]
  %v744 = vld [vmem:[%s1 + $0x1630] sm:$0xff]
  %v745 = vld [vmem:[%s1 + $0x1638] sm:$0xff]
  %v746 = vld [vmem:[%s1 + $0x1640] sm:$0xff]
  %v747 = vld [vmem:[%s1 + $0x1648] sm:$0xff]
  %v748 = vld [vmem:[%s1 + $0x1650] sm:$0xff]
  %v749 = vld [vmem:[%s1 + $0x1658] sm:$0xff]
  %v750 = vld [vmem:[%s1 + $0x1660] sm:$0xff]
  %v751 = vld [vmem:[%s1 + $0x1668] sm:$0xff]
  %v752 = vld [vmem:[%s1 + $0x1670] sm:$0xff]
  %v753 = vld [vmem:[%s1 + $0x1678] sm:$0xff]
  %v754 = vld [vmem:[%s1 + $0x1680] sm:$0xff]
  %v755 = vld [vmem:[%s1 + $0x1688] sm:$0xff]
  %v756 = vld [vmem:[%s1 + $0x1690] sm:$0xff]
  %v757 = vld [vmem:[%s1 + $0x1698] sm:$0xff]
  %v758 = vld [vmem:[%s1 + $0x16a0] sm:$0xff]
  %v759 = vld [vmem:[%s1 + $0x16a8] sm:$0xff]
  %v760 = vld [vmem:[%s1 + $0x16b0] sm:$0xff]
  %v761 = vld [vmem:[%s1 + $0x16b8] sm:$0xff]
  %v762 = vld [vmem:[%s1 + $0x16c0] sm:$0xff]
  %v763 = vld [vmem:[%s1 + $0x16c8] sm:$0xff]
  %v764 = vld [vmem:[%s1 + $0x16d0] sm:$0xff]
  %v765 = vld [vmem:[%s1 + $0x16d8] sm:$0xff]
  %v766 = vld [vmem:[%s1 + $0x16e0] sm:$0xff]
  %v767 = vld [vmem:[%s1 + $0x16e8] sm:$0xff]
  %v768 = vld [vmem:[%s1 + $0x16f0] sm:$0xff]
  %v769 = vld [vmem:[%s1 + $0x16f8] sm:$0xff]
  %v770 = vld [vmem:[%s1 + $0x1700] sm:$0xff]
  %v771 = vld [vmem:[%s1 + $0x1708] sm:$0xff]
  %v772 = vld [vmem:[%s1 + $0x1710] sm:$0xff]
  %v773 = vld [vmem:[%s1 + $0x1718] sm:$0xff]
  %v774 = vld [vmem:[%s1 + $0x1720] sm:$0xff]
  %v775 = vld [vmem:[%s1 + $0x1728] sm:$0xff]
  %v776 = vld [vmem:[%s1 + $0x1730] sm:$0xff]
  %v777 = vld [vmem:[%s1 + $0x1738] sm:$0xff]
  %v778 = vld [vmem:[%s1 + $0x1740] sm:$0xff]
  %v779 = vld [vmem:[%s1 + $0x1748] sm:$0xff]
  %v780 = vld [vmem:[%s1 + $0x1750] sm:$0xff]
  %v781 = vld [vmem:[%s1 + $0x1758] sm:$0xff]
  %v782 = vld [vmem:[%s1 + $0x1760] sm:$0xff]
  %v783 = vld [vmem:[%s1 + $0x1768] sm:$0xff]
  %v784 = vld [vmem:[%s1 + $0x1770] sm:$0xff]
  %v785 = vld [vmem:[%s1 + $0x1778] sm:$0xff]
  %v786 = vld [vmem:[%s1 + $0x1780] sm:$0xff]
  %v787 = vld [vmem:[%s1 + $0x1788] sm:$0xff]
  %v788 = vld [vmem:[%s1 + $0x1790] sm:$0xff]
  %v789 = vld [vmem:[%s1 + $0x1798] sm:$0xff]
  %v790 = vld [vmem:[%s1 + $0x17a0] sm:$0xff]
  %v791 = vld [vmem:[%s1 + $0x17a8] sm:$0xff]
  %v792 = vld [vmem:[%s1 + $0x17b0] sm:$0xff]
  %v793 = vld [vmem:[%s1 + $0x17b8] sm:$0xff]
  %v794 = vld [vmem:[%s1 + $0x17c0] sm:$0xff]
  %v795 = vld [vmem:[%s1 + $0x17c8] sm:$0xff]
  %v796 = vld [vmem:[%s1 + $0x17d0] sm:$0xff]
  %v797 = vld [vmem:[%s1 + $0x17d8] sm:$0xff]
  %v798 = vld [vmem:[%s1 + $0x17e0] sm:$0xff]
  %v799 = vld [vmem:[%s1 + $0x17e8] sm:$0xff]
  %v800 = vld [vmem:[%s1 + $0x17f0] sm:$0xff]
  %v801 = vld [vmem:[%s1 + $0x17f8] sm:$0xff]
  %v802 = vld [vmem:[%s1 + $0x1800] sm:$0xff]
  %v803 = vld [vmem:[%s1 + $0x1808] sm:$0xff]
  %v804 = vld [vmem:[%s1 + $0x1810] sm:$0xff]
  %v805 = vld [vmem:[%s1 + $0x1818] sm:$0xff]
  %v806 = vld [vmem:[%s1 + $0x1820] sm:$0xff]
  %v807 = vld [vmem:[%s1 + $0x1828] sm:$0xff]
  %v808 = vld [vmem:[%s1 + $0x1830] sm:$0xff]
  %v809 = vld [vmem:[%s1 + $0x1838] sm:$0xff]
  %v810 = vld [vmem:[%s1 + $0x1840] sm:$0xff]
  %v811 = vld [vmem:[%s1 + $0x1848] sm:$0xff]
  %v812 = vld [vmem:[%s1 + $0x1850] sm:$0xff]
  %v813 = vld [vmem:[%s1 + $0x1858] sm:$0xff]
  %v814 = vld [vmem:[%s1 + $0x1860] sm:$0xff]
  %v815 = vld [vmem:[%s1 + $0x1868] sm:$0xff]
  %v816 = vld [vmem:[%s1 + $0x1870] sm:$0xff]
  %v817 = vld [vmem:[%s1 + $0x1878] sm:$0xff]
  %v818 = vld [vmem:[%s1 + $0x1880] sm:$0xff]
  %v819 = vld [vmem:[%s1 + $0x1888] sm:$0xff]
  %v820 = vld [vmem:[%s1 + $0x1890] sm:$0xff]
  %v821 = vld [vmem:[%s1 + $0x1898] sm:$0xff]
  %v822 = vld [vmem:[%s1 + $0x18a0] sm:$0xff]
  %v823 = vld [vmem:[%s1 + $0x18a8] sm:$0xff]
  %v824 = vld [vmem:[%s1 + $0x18b0] sm:$0xff]
  %v825 = vld [vmem:[%s1 + $0x18b8] sm:$0xff]
  %v826 = vld [vmem:[%s1 + $0x18c0] sm:$0xff]
  %v827 = vld [vmem:[%s1 + $0x18c8] sm:$0xff]
  %v828 = vld [vmem:[%s1 + $0x18d0] sm:$0xff]
  %v829 = vld [vmem:[%s1 + $0x18d8] sm:$0xff]
  %v830 = vld [vmem:[%s1 + $0x18e0] sm:$0xff]
  %v831 = vld [vmem:[%s1 + $0x18e8] sm:$0xff]
  %v832 = vld [vmem:[%s1 + $0x18f0] sm:$0xff]
  %v833 = vld [vmem:[%s1 + $0x18f8] sm:$0xff]
  %v834 = vld [vmem:[%s2] sm:$0xf]
  %v836 = vlaneseq
  %v837 = vshrl.u32 %v836, 7
  %v838 = vsub.s32 0, %v837
  %v839 = vrot.slane %v834, %v838
  %v840 = vlaneseq
  %v841 = vshrl.u32 %v840, 7
  %v842 = vsub.s32 1, %v841
  %v843 = vrot.slane %v834, %v842
  %v844 = vlaneseq
  %v845 = vshrl.u32 %v844, 7
  %v846 = vsub.s32 2, %v845
  %v847 = vrot.slane %v834, %v846
  %v848 = vlaneseq
  %v849 = vshrl.u32 %v848, 7
  %v850 = vsub.s32 3, %v849
  %v851 = vrot.slane %v834, %v850
  %v869 = vunpack.c.l.b16 %v21
  %v870 = vunpack.c.h.b16 %v21
  %v871 = vunpack.c.l.b16 %v22
  %v872 = vunpack.c.h.b16 %v22
  %v873 = vunpack.c.l.b16 %v23
  %v874 = vunpack.c.h.b16 %v23
  %v875 = vunpack.c.l.b16 %v24
  %v876 = vunpack.c.h.b16 %v24
  %v877 = vunpack.c.l.b16 %v25
  %v878 = vunpack.c.h.b16 %v25
  %v879 = vunpack.c.l.b16 %v26
  %v880 = vunpack.c.h.b16 %v26
  %v881 = vunpack.c.l.b16 %v27
  %v882 = vunpack.c.h.b16 %v27
  %v883 = vunpack.c.l.b16 %v28
  %v884 = vunpack.c.h.b16 %v28
  %v885 = vunpack.c.l.b16 %v29
  %v886 = vunpack.c.h.b16 %v29
  %v887 = vunpack.c.l.b16 %v30
  %v888 = vunpack.c.h.b16 %v30
  %v889 = vunpack.c.l.b16 %v31
  %v890 = vunpack.c.h.b16 %v31
  %v891 = vunpack.c.l.b16 %v32
  %v892 = vunpack.c.h.b16 %v32
  %v893 = vunpack.c.l.b16 %v33
  %v894 = vpack.c.b16 %v869, %v869
  %v895 = vpack.c.b16 %v870, %v870
  %v896 = vpack.c.b16 %v871, %v871
  %v897 = vpack.c.b16 %v872, %v872
  %v898 = vpack.c.b16 %v873, %v873
  %v899 = vpack.c.b16 %v874, %v874
  %v900 = vpack.c.b16 %v875, %v875
  %v901 = vpack.c.b16 %v876, %v876
  %v902 = vpack.c.b16 %v877, %v877
  %v903 = vpack.c.b16 %v878, %v878
  %v904 = vpack.c.b16 %v879, %v879
  %v905 = vpack.c.b16 %v880, %v880
  %v906 = vpack.c.b16 %v881, %v881
  %v907 = vpack.c.b16 %v882, %v882
  %v908 = vpack.c.b16 %v883, %v883
  %v909 = vpack.c.b16 %v884, %v884
  %v910 = vpack.c.b16 %v885, %v885
  %v911 = vpack.c.b16 %v886, %v886
  %v912 = vpack.c.b16 %v887, %v887
  %v913 = vpack.c.b16 %v888, %v888
  %v914 = vpack.c.b16 %v889, %v889
  %v915 = vpack.c.b16 %v890, %v890
  %v916 = vpack.c.b16 %v891, %v891
  %v917 = vpack.c.b16 %v892, %v892
  %v918 = vpack.c.b16 %v893, %v893
  %v1744 = vunpack.c.l.b16 %v34
  %v1745 = vunpack.c.h.b16 %v34
  %v1746 = vunpack.c.l.b16 %v35
  %v1747 = vunpack.c.h.b16 %v35
  %v1748 = vunpack.c.l.b16 %v36
  %v1749 = vunpack.c.h.b16 %v36
  %v1750 = vunpack.c.l.b16 %v37
  %v1751 = vunpack.c.h.b16 %v37
  %v1752 = vunpack.c.l.b16 %v38
  %v1753 = vunpack.c.h.b16 %v38
  %v1754 = vunpack.c.l.b16 %v39
  %v1755 = vunpack.c.h.b16 %v39
  %v1756 = vunpack.c.l.b16 %v40
  %v1757 = vunpack.c.h.b16 %v40
  %v1758 = vunpack.c.l.b16 %v41
  %v1759 = vunpack.c.h.b16 %v41
  %v1760 = vunpack.c.l.b16 %v42
  %v1761 = vunpack.c.h.b16 %v42
  %v1762 = vunpack.c.l.b16 %v43
  %v1763 = vunpack.c.h.b16 %v43
  %v1764 = vunpack.c.l.b16 %v44
  %v1765 = vunpack.c.h.b16 %v44
  %v1766 = vunpack.c.l.b16 %v45
  %v1767 = vunpack.c.h.b16 %v45
  %v1768 = vunpack.c.l.b16 %v46
  %v1769 = vunpack.c.h.b16 %v46
  %v1770 = vunpack.c.l.b16 %v47
  %v1771 = vunpack.c.h.b16 %v47
  %v1772 = vunpack.c.l.b16 %v48
  %v1773 = vunpack.c.h.b16 %v48
  %v1774 = vunpack.c.l.b16 %v49
  %v1775 = vunpack.c.h.b16 %v49
  %v1776 = vunpack.c.l.b16 %v50
  %v1777 = vunpack.c.h.b16 %v50
  %v1778 = vunpack.c.l.b16 %v51
  %v1779 = vunpack.c.h.b16 %v51
  %v1780 = vunpack.c.l.b16 %v52
  %v1781 = vunpack.c.h.b16 %v52
  %v1782 = vunpack.c.l.b16 %v53
  %v1783 = vunpack.c.h.b16 %v53
  %v1784 = vunpack.c.l.b16 %v54
  %v1785 = vunpack.c.h.b16 %v54
  %v1786 = vunpack.c.l.b16 %v55
  %v1787 = vunpack.c.h.b16 %v55
  %v1788 = vunpack.c.l.b16 %v56
  %v1789 = vunpack.c.h.b16 %v56
  %v1790 = vunpack.c.l.b16 %v57
  %v1791 = vunpack.c.h.b16 %v57
  %v1792 = vunpack.c.l.b16 %v58
  %v1793 = vunpack.c.h.b16 %v58
  %v1794 = vunpack.c.l.b16 %v59
  %v1795 = vunpack.c.h.b16 %v59
  %v1796 = vunpack.c.l.b16 %v60
  %v1797 = vunpack.c.h.b16 %v60
  %v1798 = vunpack.c.l.b16 %v61
  %v1799 = vunpack.c.h.b16 %v61
  %v1800 = vunpack.c.l.b16 %v62
  %v1801 = vunpack.c.h.b16 %v62
  %v1802 = vunpack.c.l.b16 %v63
  %v1803 = vunpack.c.h.b16 %v63
  %v1804 = vunpack.c.l.b16 %v64
  %v1805 = vunpack.c.h.b16 %v64
  %v1806 = vunpack.c.l.b16 %v65
  %v1807 = vunpack.c.h.b16 %v65
  %v1808 = vunpack.c.l.b16 %v66
  %v1809 = vunpack.c.h.b16 %v66
  %v1810 = vunpack.c.l.b16 %v67
  %v1811 = vunpack.c.h.b16 %v67
  %v1812 = vunpack.c.l.b16 %v68
  %v1813 = vunpack.c.h.b16 %v68
  %v1814 = vunpack.c.l.b16 %v69
  %v1815 = vunpack.c.h.b16 %v69
  %v1816 = vunpack.c.l.b16 %v70
  %v1817 = vunpack.c.h.b16 %v70
  %v1818 = vunpack.c.l.b16 %v71
  %v1819 = vunpack.c.h.b16 %v71
  %v1820 = vunpack.c.l.b16 %v72
  %v1821 = vunpack.c.h.b16 %v72
  %v1822 = vunpack.c.l.b16 %v73
  %v1823 = vunpack.c.h.b16 %v73
  %v1824 = vunpack.c.l.b16 %v74
  %v1825 = vunpack.c.h.b16 %v74
  %v1826 = vunpack.c.l.b16 %v75
  %v1827 = vunpack.c.h.b16 %v75
  %v1828 = vunpack.c.l.b16 %v76
  %v1829 = vunpack.c.h.b16 %v76
  %v1830 = vunpack.c.l.b16 %v77
  %v1831 = vunpack.c.h.b16 %v77
  %v1832 = vunpack.c.l.b16 %v78
  %v1833 = vunpack.c.h.b16 %v78
  %v1834 = vunpack.c.l.b16 %v79
  %v1835 = vunpack.c.h.b16 %v79
  %v1836 = vunpack.c.l.b16 %v80
  %v1837 = vunpack.c.h.b16 %v80
  %v1838 = vunpack.c.l.b16 %v81
  %v1839 = vunpack.c.h.b16 %v81
  %v1840 = vunpack.c.l.b16 %v82
  %v1841 = vunpack.c.h.b16 %v82
  %v1842 = vunpack.c.l.b16 %v83
  %v1843 = vunpack.c.h.b16 %v83
  %v1844 = vunpack.c.l.b16 %v84
  %v1845 = vunpack.c.h.b16 %v84
  %v1846 = vunpack.c.l.b16 %v85
  %v1847 = vunpack.c.h.b16 %v85
  %v1848 = vunpack.c.l.b16 %v86
  %v1849 = vunpack.c.h.b16 %v86
  %v1850 = vunpack.c.l.b16 %v87
  %v1851 = vunpack.c.h.b16 %v87
  %v1852 = vunpack.c.l.b16 %v88
  %v1853 = vunpack.c.h.b16 %v88
  %v1854 = vunpack.c.l.b16 %v89
  %v1855 = vunpack.c.h.b16 %v89
  %v1856 = vunpack.c.l.b16 %v90
  %v1857 = vunpack.c.h.b16 %v90
  %v1858 = vunpack.c.l.b16 %v91
  %v1859 = vunpack.c.h.b16 %v91
  %v1860 = vunpack.c.l.b16 %v92
  %v1861 = vunpack.c.h.b16 %v92
  %v1862 = vunpack.c.l.b16 %v93
  %v1863 = vunpack.c.h.b16 %v93
  %v1864 = vunpack.c.l.b16 %v94
  %v1865 = vunpack.c.h.b16 %v94
  %v1866 = vunpack.c.l.b16 %v95
  %v1867 = vunpack.c.h.b16 %v95
  %v1868 = vunpack.c.l.b16 %v96
  %v1869 = vunpack.c.h.b16 %v96
  %v1870 = vunpack.c.l.b16 %v97
  %v1871 = vunpack.c.h.b16 %v97
  %v1872 = vunpack.c.l.b16 %v98
  %v1873 = vunpack.c.h.b16 %v98
  %v1874 = vunpack.c.l.b16 %v99
  %v1875 = vunpack.c.h.b16 %v99
  %v1876 = vunpack.c.l.b16 %v100
  %v1877 = vunpack.c.h.b16 %v100
  %v1878 = vunpack.c.l.b16 %v101
  %v1879 = vunpack.c.h.b16 %v101
  %v1880 = vunpack.c.l.b16 %v102
  %v1881 = vunpack.c.h.b16 %v102
  %v1882 = vunpack.c.l.b16 %v103
  %v1883 = vunpack.c.h.b16 %v103
  %v1884 = vunpack.c.l.b16 %v104
  %v1885 = vunpack.c.h.b16 %v104
  %v1886 = vunpack.c.l.b16 %v105
  %v1887 = vunpack.c.h.b16 %v105
  %v1888 = vunpack.c.l.b16 %v106
  %v1889 = vunpack.c.h.b16 %v106
  %v1890 = vunpack.c.l.b16 %v107
  %v1891 = vunpack.c.h.b16 %v107
  %v1892 = vunpack.c.l.b16 %v108
  %v1893 = vunpack.c.h.b16 %v108
  %v1894 = vunpack.c.l.b16 %v109
  %v1895 = vunpack.c.h.b16 %v109
  %v1896 = vunpack.c.l.b16 %v110
  %v1897 = vunpack.c.h.b16 %v110
  %v1898 = vunpack.c.l.b16 %v111
  %v1899 = vunpack.c.h.b16 %v111
  %v1900 = vunpack.c.l.b16 %v112
  %v1901 = vunpack.c.h.b16 %v112
  %v1902 = vunpack.c.l.b16 %v113
  %v1903 = vunpack.c.h.b16 %v113
  %v1904 = vunpack.c.l.b16 %v114
  %v1905 = vunpack.c.h.b16 %v114
  %v1906 = vunpack.c.l.b16 %v115
  %v1907 = vunpack.c.h.b16 %v115
  %v1908 = vunpack.c.l.b16 %v116
  %v1909 = vunpack.c.h.b16 %v116
  %v1910 = vunpack.c.l.b16 %v117
  %v1911 = vunpack.c.h.b16 %v117
  %v1912 = vunpack.c.l.b16 %v118
  %v1913 = vunpack.c.h.b16 %v118
  %v1914 = vunpack.c.l.b16 %v119
  %v1915 = vunpack.c.h.b16 %v119
  %v1916 = vunpack.c.l.b16 %v120
  %v1917 = vunpack.c.h.b16 %v120
  %v1918 = vunpack.c.l.b16 %v121
  %v1919 = vunpack.c.h.b16 %v121
  %v1920 = vunpack.c.l.b16 %v122
  %v1921 = vunpack.c.h.b16 %v122
  %v1922 = vunpack.c.l.b16 %v123
  %v1923 = vunpack.c.h.b16 %v123
  %v1924 = vunpack.c.l.b16 %v124
  %v1925 = vunpack.c.h.b16 %v124
  %v1926 = vunpack.c.l.b16 %v125
  %v1927 = vunpack.c.h.b16 %v125
  %v1928 = vunpack.c.l.b16 %v126
  %v1929 = vunpack.c.h.b16 %v126
  %v1930 = vunpack.c.l.b16 %v127
  %v1931 = vunpack.c.h.b16 %v127
  %v1932 = vunpack.c.l.b16 %v128
  %v1933 = vunpack.c.h.b16 %v128
  %v1934 = vunpack.c.l.b16 %v129
  %v1935 = vunpack.c.h.b16 %v129
  %v1936 = vunpack.c.l.b16 %v130
  %v1937 = vunpack.c.h.b16 %v130
  %v1938 = vunpack.c.l.b16 %v131
  %v1939 = vunpack.c.h.b16 %v131
  %v1940 = vunpack.c.l.b16 %v132
  %v1941 = vunpack.c.h.b16 %v132
  %v1942 = vunpack.c.l.b16 %v133
  %v1943 = vunpack.c.h.b16 %v133
  %v1944 = vunpack.c.l.b16 %v134
  %v1945 = vunpack.c.h.b16 %v134
  %v1946 = vunpack.c.l.b16 %v135
  %v1947 = vunpack.c.h.b16 %v135
  %v1948 = vunpack.c.l.b16 %v136
  %v1949 = vunpack.c.h.b16 %v136
  %v1950 = vunpack.c.l.b16 %v137
  %v1951 = vunpack.c.h.b16 %v137
  %v1952 = vunpack.c.l.b16 %v138
  %v1953 = vunpack.c.h.b16 %v138
  %v1954 = vunpack.c.l.b16 %v139
  %v1955 = vunpack.c.h.b16 %v139
  %v1956 = vunpack.c.l.b16 %v140
  %v1957 = vunpack.c.h.b16 %v140
  %v1958 = vunpack.c.l.b16 %v141
  %v1959 = vunpack.c.h.b16 %v141
  %v1960 = vunpack.c.l.b16 %v142
  %v1961 = vunpack.c.h.b16 %v142
  %v1962 = vunpack.c.l.b16 %v143
  %v1963 = vunpack.c.h.b16 %v143
  %v1964 = vunpack.c.l.b16 %v144
  %v1965 = vunpack.c.h.b16 %v144
  %v1966 = vunpack.c.l.b16 %v145
  %v1967 = vunpack.c.h.b16 %v145
  %v1968 = vunpack.c.l.b16 %v146
  %v1969 = vunpack.c.h.b16 %v146
  %v1970 = vunpack.c.l.b16 %v147
  %v1971 = vunpack.c.h.b16 %v147
  %v1972 = vunpack.c.l.b16 %v148
  %v1973 = vunpack.c.h.b16 %v148
  %v1974 = vunpack.c.l.b16 %v149
  %v1975 = vunpack.c.h.b16 %v149
  %v1976 = vunpack.c.l.b16 %v150
  %v1977 = vunpack.c.h.b16 %v150
  %v1978 = vunpack.c.l.b16 %v151
  %v1979 = vunpack.c.h.b16 %v151
  %v1980 = vunpack.c.l.b16 %v152
  %v1981 = vunpack.c.h.b16 %v152
  %v1982 = vunpack.c.l.b16 %v153
  %v1983 = vunpack.c.h.b16 %v153
  %v1984 = vunpack.c.l.b16 %v154
  %v1985 = vunpack.c.h.b16 %v154
  %v1986 = vunpack.c.l.b16 %v155
  %v1987 = vunpack.c.h.b16 %v155
  %v1988 = vunpack.c.l.b16 %v156
  %v1989 = vunpack.c.h.b16 %v156
  %v1990 = vunpack.c.l.b16 %v157
  %v1991 = vunpack.c.h.b16 %v157
  %v1992 = vunpack.c.l.b16 %v158
  %v1993 = vunpack.c.h.b16 %v158
  %v1994 = vunpack.c.l.b16 %v159
  %v1995 = vunpack.c.h.b16 %v159
  %v1996 = vunpack.c.l.b16 %v160
  %v1997 = vunpack.c.h.b16 %v160
  %v1998 = vunpack.c.l.b16 %v161
  %v1999 = vunpack.c.h.b16 %v161
  %v2000 = vunpack.c.l.b16 %v162
  %v2001 = vunpack.c.h.b16 %v162
  %v2002 = vunpack.c.l.b16 %v163
  %v2003 = vunpack.c.h.b16 %v163
  %v2004 = vunpack.c.l.b16 %v164
  %v2005 = vunpack.c.h.b16 %v164
  %v2006 = vunpack.c.l.b16 %v165
  %v2007 = vunpack.c.h.b16 %v165
  %v2008 = vunpack.c.l.b16 %v166
  %v2009 = vunpack.c.h.b16 %v166
  %v2010 = vunpack.c.l.b16 %v167
  %v2011 = vunpack.c.h.b16 %v167
  %v2012 = vunpack.c.l.b16 %v168
  %v2013 = vunpack.c.h.b16 %v168
  %v2014 = vunpack.c.l.b16 %v169
  %v2015 = vunpack.c.h.b16 %v169
  %v2016 = vunpack.c.l.b16 %v170
  %v2017 = vunpack.c.h.b16 %v170
  %v2018 = vunpack.c.l.b16 %v171
  %v2019 = vunpack.c.h.b16 %v171
  %v2020 = vunpack.c.l.b16 %v172
  %v2021 = vunpack.c.h.b16 %v172
  %v2022 = vunpack.c.l.b16 %v173
  %v2023 = vunpack.c.h.b16 %v173
  %v2024 = vunpack.c.l.b16 %v174
  %v2025 = vunpack.c.h.b16 %v174
  %v2026 = vunpack.c.l.b16 %v175
  %v2027 = vunpack.c.h.b16 %v175
  %v2028 = vunpack.c.l.b16 %v176
  %v2029 = vunpack.c.h.b16 %v176
  %v2030 = vunpack.c.l.b16 %v177
  %v2031 = vunpack.c.h.b16 %v177
  %v2032 = vunpack.c.l.b16 %v178
  %v2033 = vunpack.c.h.b16 %v178
  %v2034 = vunpack.c.l.b16 %v179
  %v2035 = vunpack.c.h.b16 %v179
  %v2036 = vunpack.c.l.b16 %v180
  %v2037 = vunpack.c.h.b16 %v180
  %v2038 = vunpack.c.l.b16 %v181
  %v2039 = vunpack.c.h.b16 %v181
  %v2040 = vunpack.c.l.b16 %v182
  %v2041 = vunpack.c.h.b16 %v182
  %v2042 = vunpack.c.l.b16 %v183
  %v2043 = vunpack.c.h.b16 %v183
  %v2044 = vunpack.c.l.b16 %v184
  %v2045 = vunpack.c.h.b16 %v184
  %v2046 = vunpack.c.l.b16 %v185
  %v2047 = vunpack.c.h.b16 %v185
  %v2048 = vunpack.c.l.b16 %v186
  %v2049 = vunpack.c.h.b16 %v186
  %v2050 = vunpack.c.l.b16 %v187
  %v2051 = vunpack.c.h.b16 %v187
  %v2052 = vunpack.c.l.b16 %v188
  %v2053 = vunpack.c.h.b16 %v188
  %v2054 = vunpack.c.l.b16 %v189
  %v2055 = vunpack.c.h.b16 %v189
  %v2056 = vunpack.c.l.b16 %v190
  %v2057 = vunpack.c.h.b16 %v190
  %v2058 = vunpack.c.l.b16 %v191
  %v2059 = vunpack.c.h.b16 %v191
  %v2060 = vunpack.c.l.b16 %v192
  %v2061 = vunpack.c.h.b16 %v192
  %v2062 = vunpack.c.l.b16 %v193
  %v2063 = vunpack.c.h.b16 %v193
  %v2064 = vunpack.c.l.b16 %v194
  %v2065 = vunpack.c.h.b16 %v194
  %v2066 = vunpack.c.l.b16 %v195
  %v2067 = vunpack.c.h.b16 %v195
  %v2068 = vunpack.c.l.b16 %v196
  %v2069 = vunpack.c.h.b16 %v196
  %v2070 = vunpack.c.l.b16 %v197
  %v2071 = vunpack.c.h.b16 %v197
  %v2072 = vunpack.c.l.b16 %v198
  %v2073 = vunpack.c.h.b16 %v198
  %v2074 = vunpack.c.l.b16 %v199
  %v2075 = vunpack.c.h.b16 %v199
  %v2076 = vunpack.c.l.b16 %v200
  %v2077 = vunpack.c.h.b16 %v200
  %v2078 = vunpack.c.l.b16 %v201
  %v2079 = vunpack.c.h.b16 %v201
  %v2080 = vunpack.c.l.b16 %v202
  %v2081 = vunpack.c.h.b16 %v202
  %v2082 = vunpack.c.l.b16 %v203
  %v2083 = vunpack.c.h.b16 %v203
  %v2084 = vunpack.c.l.b16 %v204
  %v2085 = vunpack.c.h.b16 %v204
  %v2086 = vunpack.c.l.b16 %v205
  %v2087 = vunpack.c.h.b16 %v205
  %v2088 = vunpack.c.l.b16 %v206
  %v2089 = vunpack.c.h.b16 %v206
  %v2090 = vunpack.c.l.b16 %v207
  %v2091 = vunpack.c.h.b16 %v207
  %v2092 = vunpack.c.l.b16 %v208
  %v2093 = vunpack.c.h.b16 %v208
  %v2094 = vunpack.c.l.b16 %v209
  %v2095 = vunpack.c.h.b16 %v209
  %v2096 = vunpack.c.l.b16 %v210
  %v2097 = vunpack.c.h.b16 %v210
  %v2098 = vunpack.c.l.b16 %v211
  %v2099 = vunpack.c.h.b16 %v211
  %v2100 = vunpack.c.l.b16 %v212
  %v2101 = vunpack.c.h.b16 %v212
  %v2102 = vunpack.c.l.b16 %v213
  %v2103 = vunpack.c.h.b16 %v213
  %v2104 = vunpack.c.l.b16 %v214
  %v2105 = vunpack.c.h.b16 %v214
  %v2106 = vunpack.c.l.b16 %v215
  %v2107 = vunpack.c.h.b16 %v215
  %v2108 = vunpack.c.l.b16 %v216
  %v2109 = vunpack.c.h.b16 %v216
  %v2110 = vunpack.c.l.b16 %v217
  %v2111 = vunpack.c.h.b16 %v217
  %v2112 = vunpack.c.l.b16 %v218
  %v2113 = vunpack.c.h.b16 %v218
  %v2114 = vunpack.c.l.b16 %v219
  %v2115 = vunpack.c.h.b16 %v219
  %v2116 = vunpack.c.l.b16 %v220
  %v2117 = vunpack.c.h.b16 %v220
  %v2118 = vunpack.c.l.b16 %v221
  %v2119 = vunpack.c.h.b16 %v221
  %v2120 = vunpack.c.l.b16 %v222
  %v2121 = vunpack.c.h.b16 %v222
  %v2122 = vunpack.c.l.b16 %v223
  %v2123 = vunpack.c.h.b16 %v223
  %v2124 = vunpack.c.l.b16 %v224
  %v2125 = vunpack.c.h.b16 %v224
  %v2126 = vunpack.c.l.b16 %v225
  %v2127 = vunpack.c.h.b16 %v225
  %v2128 = vunpack.c.l.b16 %v226
  %v2129 = vunpack.c.h.b16 %v226
  %v2130 = vunpack.c.l.b16 %v227
  %v2131 = vunpack.c.h.b16 %v227
  %v2132 = vunpack.c.l.b16 %v228
  %v2133 = vunpack.c.h.b16 %v228
  %v2134 = vunpack.c.l.b16 %v229
  %v2135 = vunpack.c.h.b16 %v229
  %v2136 = vunpack.c.l.b16 %v230
  %v2137 = vunpack.c.h.b16 %v230
  %v2138 = vunpack.c.l.b16 %v231
  %v2139 = vunpack.c.h.b16 %v231
  %v2140 = vunpack.c.l.b16 %v232
  %v2141 = vunpack.c.h.b16 %v232
  %v2142 = vunpack.c.l.b16 %v233
  %v2143 = vunpack.c.h.b16 %v233
  %v2144 = vunpack.c.l.b16 %v234
  %v2145 = vunpack.c.h.b16 %v234
  %v2146 = vunpack.c.l.b16 %v235
  %v2147 = vunpack.c.h.b16 %v235
  %v2148 = vunpack.c.l.b16 %v236
  %v2149 = vunpack.c.h.b16 %v236
  %v2150 = vunpack.c.l.b16 %v237
  %v2151 = vunpack.c.h.b16 %v237
  %v2152 = vunpack.c.l.b16 %v238
  %v2153 = vunpack.c.h.b16 %v238
  %v2154 = vunpack.c.l.b16 %v239
  %v2155 = vunpack.c.h.b16 %v239
  %v2156 = vunpack.c.l.b16 %v240
  %v2157 = vunpack.c.h.b16 %v240
  %v2158 = vunpack.c.l.b16 %v241
  %v2159 = vunpack.c.h.b16 %v241
  %v2160 = vunpack.c.l.b16 %v242
  %v2161 = vunpack.c.h.b16 %v242
  %v2162 = vunpack.c.l.b16 %v243
  %v2163 = vunpack.c.h.b16 %v243
  %v2164 = vunpack.c.l.b16 %v244
  %v2165 = vunpack.c.h.b16 %v244
  %v2166 = vunpack.c.l.b16 %v245
  %v2167 = vunpack.c.h.b16 %v245
  %v2168 = vunpack.c.l.b16 %v246
  %v2169 = vunpack.c.h.b16 %v246
  %v2170 = vunpack.c.l.b16 %v247
  %v2171 = vunpack.c.h.b16 %v247
  %v2172 = vunpack.c.l.b16 %v248
  %v2173 = vunpack.c.h.b16 %v248
  %v2174 = vunpack.c.l.b16 %v249
  %v2175 = vunpack.c.h.b16 %v249
  %v2176 = vunpack.c.l.b16 %v250
  %v2177 = vunpack.c.h.b16 %v250
  %v2178 = vunpack.c.l.b16 %v251
  %v2179 = vunpack.c.h.b16 %v251
  %v2180 = vunpack.c.l.b16 %v252
  %v2181 = vunpack.c.h.b16 %v252
  %v2182 = vunpack.c.l.b16 %v253
  %v2183 = vunpack.c.h.b16 %v253
  %v2184 = vunpack.c.l.b16 %v254
  %v2185 = vunpack.c.h.b16 %v254
  %v2186 = vunpack.c.l.b16 %v255
  %v2187 = vunpack.c.h.b16 %v255
  %v2188 = vunpack.c.l.b16 %v256
  %v2189 = vunpack.c.h.b16 %v256
  %v2190 = vunpack.c.l.b16 %v257
  %v2191 = vunpack.c.h.b16 %v257
  %v2192 = vunpack.c.l.b16 %v258
  %v2193 = vunpack.c.h.b16 %v258
  %v2194 = vunpack.c.l.b16 %v259
  %v2195 = vunpack.c.h.b16 %v259
  %v2196 = vunpack.c.l.b16 %v260
  %v2197 = vunpack.c.h.b16 %v260
  %v2198 = vunpack.c.l.b16 %v261
  %v2199 = vunpack.c.h.b16 %v261
  %v2200 = vunpack.c.l.b16 %v262
  %v2201 = vunpack.c.h.b16 %v262
  %v2202 = vunpack.c.l.b16 %v263
  %v2203 = vunpack.c.h.b16 %v263
  %v2204 = vunpack.c.l.b16 %v264
  %v2205 = vunpack.c.h.b16 %v264
  %v2206 = vunpack.c.l.b16 %v265
  %v2207 = vunpack.c.h.b16 %v265
  %v2208 = vunpack.c.l.b16 %v266
  %v2209 = vunpack.c.h.b16 %v266
  %v2210 = vunpack.c.l.b16 %v267
  %v2211 = vunpack.c.h.b16 %v267
  %v2212 = vunpack.c.l.b16 %v268
  %v2213 = vunpack.c.h.b16 %v268
  %v2214 = vunpack.c.l.b16 %v269
  %v2215 = vunpack.c.h.b16 %v269
  %v2216 = vunpack.c.l.b16 %v270
  %v2217 = vunpack.c.h.b16 %v270
  %v2218 = vunpack.c.l.b16 %v271
  %v2219 = vunpack.c.h.b16 %v271
  %v2220 = vunpack.c.l.b16 %v272
  %v2221 = vunpack.c.h.b16 %v272
  %v2222 = vunpack.c.l.b16 %v273
  %v2223 = vunpack.c.h.b16 %v273
  %v2224 = vunpack.c.l.b16 %v274
  %v2225 = vunpack.c.h.b16 %v274
  %v2226 = vunpack.c.l.b16 %v275
  %v2227 = vunpack.c.h.b16 %v275
  %v2228 = vunpack.c.l.b16 %v276
  %v2229 = vunpack.c.h.b16 %v276
  %v2230 = vunpack.c.l.b16 %v277
  %v2231 = vunpack.c.h.b16 %v277
  %v2232 = vunpack.c.l.b16 %v278
  %v2233 = vunpack.c.h.b16 %v278
  %v2234 = vunpack.c.l.b16 %v279
  %v2235 = vunpack.c.h.b16 %v279
  %v2236 = vunpack.c.l.b16 %v280
  %v2237 = vunpack.c.h.b16 %v280
  %v2238 = vunpack.c.l.b16 %v281
  %v2239 = vunpack.c.h.b16 %v281
  %v2240 = vunpack.c.l.b16 %v282
  %v2241 = vunpack.c.h.b16 %v282
  %v2242 = vunpack.c.l.b16 %v283
  %v2243 = vunpack.c.h.b16 %v283
  %v2244 = vunpack.c.l.b16 %v284
  %v2245 = vunpack.c.h.b16 %v284
  %v2246 = vunpack.c.l.b16 %v285
  %v2247 = vunpack.c.h.b16 %v285
  %v2248 = vunpack.c.l.b16 %v286
  %v2249 = vunpack.c.h.b16 %v286
  %v2250 = vunpack.c.l.b16 %v287
  %v2251 = vunpack.c.h.b16 %v287
  %v2252 = vunpack.c.l.b16 %v288
  %v2253 = vunpack.c.h.b16 %v288
  %v2254 = vunpack.c.l.b16 %v289
  %v2255 = vunpack.c.h.b16 %v289
  %v2256 = vunpack.c.l.b16 %v290
  %v2257 = vunpack.c.h.b16 %v290
  %v2258 = vunpack.c.l.b16 %v291
  %v2259 = vunpack.c.h.b16 %v291
  %v2260 = vunpack.c.l.b16 %v292
  %v2261 = vunpack.c.h.b16 %v292
  %v2262 = vunpack.c.l.b16 %v293
  %v2263 = vunpack.c.h.b16 %v293
  %v2264 = vunpack.c.l.b16 %v294
  %v2265 = vunpack.c.h.b16 %v294
  %v2266 = vunpack.c.l.b16 %v295
  %v2267 = vunpack.c.h.b16 %v295
  %v2268 = vunpack.c.l.b16 %v296
  %v2269 = vunpack.c.h.b16 %v296
  %v2270 = vunpack.c.l.b16 %v297
  %v2271 = vunpack.c.h.b16 %v297
  %v2272 = vunpack.c.l.b16 %v298
  %v2273 = vunpack.c.h.b16 %v298
  %v2274 = vunpack.c.l.b16 %v299
  %v2275 = vunpack.c.h.b16 %v299
  %v2276 = vunpack.c.l.b16 %v300
  %v2277 = vunpack.c.h.b16 %v300
  %v2278 = vunpack.c.l.b16 %v301
  %v2279 = vunpack.c.h.b16 %v301
  %v2280 = vunpack.c.l.b16 %v302
  %v2281 = vunpack.c.h.b16 %v302
  %v2282 = vunpack.c.l.b16 %v303
  %v2283 = vunpack.c.h.b16 %v303
  %v2284 = vunpack.c.l.b16 %v304
  %v2285 = vunpack.c.h.b16 %v304
  %v2286 = vunpack.c.l.b16 %v305
  %v2287 = vunpack.c.h.b16 %v305
  %v2288 = vunpack.c.l.b16 %v306
  %v2289 = vunpack.c.h.b16 %v306
  %v2290 = vunpack.c.l.b16 %v307
  %v2291 = vunpack.c.h.b16 %v307
  %v2292 = vunpack.c.l.b16 %v308
  %v2293 = vunpack.c.h.b16 %v308
  %v2294 = vunpack.c.l.b16 %v309
  %v2295 = vunpack.c.h.b16 %v309
  %v2296 = vunpack.c.l.b16 %v310
  %v2297 = vunpack.c.h.b16 %v310
  %v2298 = vunpack.c.l.b16 %v311
  %v2299 = vunpack.c.h.b16 %v311
  %v2300 = vunpack.c.l.b16 %v312
  %v2301 = vunpack.c.h.b16 %v312
  %v2302 = vunpack.c.l.b16 %v313
  %v2303 = vunpack.c.h.b16 %v313
  %v2304 = vunpack.c.l.b16 %v314
  %v2305 = vunpack.c.h.b16 %v314
  %v2306 = vunpack.c.l.b16 %v315
  %v2307 = vunpack.c.h.b16 %v315
  %v2308 = vunpack.c.l.b16 %v316
  %v2309 = vunpack.c.h.b16 %v316
  %v2310 = vunpack.c.l.b16 %v317
  %v2311 = vunpack.c.h.b16 %v317
  %v2312 = vunpack.c.l.b16 %v318
  %v2313 = vunpack.c.h.b16 %v318
  %v2314 = vunpack.c.l.b16 %v319
  %v2315 = vunpack.c.h.b16 %v319
  %v2316 = vunpack.c.l.b16 %v320
  %v2317 = vunpack.c.h.b16 %v320
  %v2318 = vunpack.c.l.b16 %v321
  %v2319 = vunpack.c.h.b16 %v321
  %v2320 = vunpack.c.l.b16 %v322
  %v2321 = vunpack.c.h.b16 %v322
  %v2322 = vunpack.c.l.b16 %v323
  %v2323 = vunpack.c.h.b16 %v323
  %v2324 = vunpack.c.l.b16 %v324
  %v2325 = vunpack.c.h.b16 %v324
  %v2326 = vunpack.c.l.b16 %v325
  %v2327 = vunpack.c.h.b16 %v325
  %v2328 = vunpack.c.l.b16 %v326
  %v2329 = vunpack.c.h.b16 %v326
  %v2330 = vunpack.c.l.b16 %v327
  %v2331 = vunpack.c.h.b16 %v327
  %v2332 = vunpack.c.l.b16 %v328
  %v2333 = vunpack.c.h.b16 %v328
  %v2334 = vunpack.c.l.b16 %v329
  %v2335 = vunpack.c.h.b16 %v329
  %v2336 = vunpack.c.l.b16 %v330
  %v2337 = vunpack.c.h.b16 %v330
  %v2338 = vunpack.c.l.b16 %v331
  %v2339 = vunpack.c.h.b16 %v331
  %v2340 = vunpack.c.l.b16 %v332
  %v2341 = vunpack.c.h.b16 %v332
  %v2342 = vunpack.c.l.b16 %v333
  %v2343 = vunpack.c.h.b16 %v333
  %v2344 = vunpack.c.l.b16 %v334
  %v2345 = vunpack.c.h.b16 %v334
  %v2346 = vunpack.c.l.b16 %v335
  %v2347 = vunpack.c.h.b16 %v335
  %v2348 = vunpack.c.l.b16 %v336
  %v2349 = vunpack.c.h.b16 %v336
  %v2350 = vunpack.c.l.b16 %v337
  %v2351 = vunpack.c.h.b16 %v337
  %v2352 = vunpack.c.l.b16 %v338
  %v2353 = vunpack.c.h.b16 %v338
  %v2354 = vunpack.c.l.b16 %v339
  %v2355 = vunpack.c.h.b16 %v339
  %v2356 = vunpack.c.l.b16 %v340
  %v2357 = vunpack.c.h.b16 %v340
  %v2358 = vunpack.c.l.b16 %v341
  %v2359 = vunpack.c.h.b16 %v341
  %v2360 = vunpack.c.l.b16 %v342
  %v2361 = vunpack.c.h.b16 %v342
  %v2362 = vunpack.c.l.b16 %v343
  %v2363 = vunpack.c.h.b16 %v343
  %v2364 = vunpack.c.l.b16 %v344
  %v2365 = vunpack.c.h.b16 %v344
  %v2366 = vunpack.c.l.b16 %v345
  %v2367 = vunpack.c.h.b16 %v345
  %v2368 = vunpack.c.l.b16 %v346
  %v2369 = vunpack.c.h.b16 %v346
  %v2370 = vunpack.c.l.b16 %v347
  %v2371 = vunpack.c.h.b16 %v347
  %v2372 = vunpack.c.l.b16 %v348
  %v2373 = vunpack.c.h.b16 %v348
  %v2374 = vunpack.c.l.b16 %v349
  %v2375 = vunpack.c.h.b16 %v349
  %v2376 = vunpack.c.l.b16 %v350
  %v2377 = vunpack.c.h.b16 %v350
  %v2378 = vunpack.c.l.b16 %v351
  %v2379 = vunpack.c.h.b16 %v351
  %v2380 = vunpack.c.l.b16 %v352
  %v2381 = vunpack.c.h.b16 %v352
  %v2382 = vunpack.c.l.b16 %v353
  %v2383 = vunpack.c.h.b16 %v353
  %v2384 = vunpack.c.l.b16 %v354
  %v2385 = vunpack.c.h.b16 %v354
  %v2386 = vunpack.c.l.b16 %v355
  %v2387 = vunpack.c.h.b16 %v355
  %v2388 = vunpack.c.l.b16 %v356
  %v2389 = vunpack.c.h.b16 %v356
  %v2390 = vunpack.c.l.b16 %v357
  %v2391 = vunpack.c.h.b16 %v357
  %v2392 = vunpack.c.l.b16 %v358
  %v2393 = vunpack.c.h.b16 %v358
  %v2394 = vunpack.c.l.b16 %v359
  %v2395 = vunpack.c.h.b16 %v359
  %v2396 = vunpack.c.l.b16 %v360
  %v2397 = vunpack.c.h.b16 %v360
  %v2398 = vunpack.c.l.b16 %v361
  %v2399 = vunpack.c.h.b16 %v361
  %v2400 = vunpack.c.l.b16 %v362
  %v2401 = vunpack.c.h.b16 %v362
  %v2402 = vunpack.c.l.b16 %v363
  %v2403 = vunpack.c.h.b16 %v363
  %v2404 = vunpack.c.l.b16 %v364
  %v2405 = vunpack.c.h.b16 %v364
  %v2406 = vunpack.c.l.b16 %v365
  %v2407 = vunpack.c.h.b16 %v365
  %v2408 = vunpack.c.l.b16 %v366
  %v2409 = vunpack.c.h.b16 %v366
  %v2410 = vunpack.c.l.b16 %v367
  %v2411 = vunpack.c.h.b16 %v367
  %v2412 = vunpack.c.l.b16 %v368
  %v2413 = vunpack.c.h.b16 %v368
  %v2414 = vunpack.c.l.b16 %v369
  %v2415 = vunpack.c.h.b16 %v369
  %v2416 = vunpack.c.l.b16 %v370
  %v2417 = vunpack.c.h.b16 %v370
  %v2418 = vunpack.c.l.b16 %v371
  %v2419 = vunpack.c.h.b16 %v371
  %v2420 = vunpack.c.l.b16 %v372
  %v2421 = vunpack.c.h.b16 %v372
  %v2422 = vunpack.c.l.b16 %v373
  %v2423 = vunpack.c.h.b16 %v373
  %v2424 = vunpack.c.l.b16 %v374
  %v2425 = vunpack.c.h.b16 %v374
  %v2426 = vunpack.c.l.b16 %v375
  %v2427 = vunpack.c.h.b16 %v375
  %v2428 = vunpack.c.l.b16 %v376
  %v2429 = vunpack.c.h.b16 %v376
  %v2430 = vunpack.c.l.b16 %v377
  %v2431 = vunpack.c.h.b16 %v377
  %v2432 = vunpack.c.l.b16 %v378
  %v2433 = vunpack.c.h.b16 %v378
  %v2434 = vunpack.c.l.b16 %v379
  %v2435 = vunpack.c.h.b16 %v379
  %v2436 = vunpack.c.l.b16 %v380
  %v2437 = vunpack.c.h.b16 %v380
  %v2438 = vunpack.c.l.b16 %v381
  %v2439 = vunpack.c.h.b16 %v381
  %v2440 = vunpack.c.l.b16 %v382
  %v2441 = vunpack.c.h.b16 %v382
  %v2442 = vunpack.c.l.b16 %v383
  %v2443 = vunpack.c.h.b16 %v383
  %v2444 = vunpack.c.l.b16 %v384
  %v2445 = vunpack.c.h.b16 %v384
  %v2446 = vunpack.c.l.b16 %v385
  %v2447 = vunpack.c.h.b16 %v385
  %v2448 = vunpack.c.l.b16 %v386
  %v2449 = vunpack.c.h.b16 %v386
  %v2450 = vunpack.c.l.b16 %v387
  %v2451 = vunpack.c.h.b16 %v387
  %v2452 = vunpack.c.l.b16 %v388
  %v2453 = vunpack.c.h.b16 %v388
  %v2454 = vunpack.c.l.b16 %v389
  %v2455 = vunpack.c.h.b16 %v389
  %v2456 = vunpack.c.l.b16 %v390
  %v2457 = vunpack.c.h.b16 %v390
  %v2458 = vunpack.c.l.b16 %v391
  %v2459 = vunpack.c.h.b16 %v391
  %v2460 = vunpack.c.l.b16 %v392
  %v2461 = vunpack.c.h.b16 %v392
  %v2462 = vunpack.c.l.b16 %v393
  %v2463 = vunpack.c.h.b16 %v393
  %v2464 = vunpack.c.l.b16 %v394
  %v2465 = vunpack.c.h.b16 %v394
  %v2466 = vunpack.c.l.b16 %v395
  %v2467 = vunpack.c.h.b16 %v395
  %v2468 = vunpack.c.l.b16 %v396
  %v2469 = vunpack.c.h.b16 %v396
  %v2470 = vunpack.c.l.b16 %v397
  %v2471 = vunpack.c.h.b16 %v397
  %v2472 = vunpack.c.l.b16 %v398
  %v2473 = vunpack.c.h.b16 %v398
  %v2474 = vunpack.c.l.b16 %v399
  %v2475 = vunpack.c.h.b16 %v399
  %v2476 = vunpack.c.l.b16 %v400
  %v2477 = vunpack.c.h.b16 %v400
  %v2478 = vunpack.c.l.b16 %v401
  %v2479 = vunpack.c.h.b16 %v401
  %v2480 = vunpack.c.l.b16 %v402
  %v2481 = vunpack.c.h.b16 %v402
  %v2482 = vunpack.c.l.b16 %v403
  %v2483 = vunpack.c.h.b16 %v403
  %v2484 = vunpack.c.l.b16 %v404
  %v2485 = vunpack.c.h.b16 %v404
  %v2486 = vunpack.c.l.b16 %v405
  %v2487 = vunpack.c.h.b16 %v405
  %v2488 = vunpack.c.l.b16 %v406
  %v2489 = vunpack.c.h.b16 %v406
  %v2490 = vunpack.c.l.b16 %v407
  %v2491 = vunpack.c.h.b16 %v407
  %v2492 = vunpack.c.l.b16 %v408
  %v2493 = vunpack.c.h.b16 %v408
  %v2494 = vunpack.c.l.b16 %v409
  %v2495 = vunpack.c.h.b16 %v409
  %v2496 = vunpack.c.l.b16 %v410
  %v2497 = vunpack.c.h.b16 %v410
  %v2498 = vunpack.c.l.b16 %v411
  %v2499 = vunpack.c.h.b16 %v411
  %v2500 = vunpack.c.l.b16 %v412
  %v2501 = vunpack.c.h.b16 %v412
  %v2502 = vunpack.c.l.b16 %v413
  %v2503 = vunpack.c.h.b16 %v413
  %v2504 = vunpack.c.l.b16 %v414
  %v2505 = vunpack.c.h.b16 %v414
  %v2506 = vunpack.c.l.b16 %v415
  %v2507 = vunpack.c.h.b16 %v415
  %v2508 = vunpack.c.l.b16 %v416
  %v2509 = vunpack.c.h.b16 %v416
  %v2510 = vunpack.c.l.b16 %v417
  %v2511 = vunpack.c.h.b16 %v417
  %v2512 = vunpack.c.l.b16 %v418
  %v2513 = vunpack.c.h.b16 %v418
  %v2514 = vunpack.c.l.b16 %v419
  %v2515 = vunpack.c.h.b16 %v419
  %v2516 = vunpack.c.l.b16 %v420
  %v2517 = vunpack.c.h.b16 %v420
  %v2518 = vunpack.c.l.b16 %v421
  %v2519 = vunpack.c.h.b16 %v421
  %v2520 = vunpack.c.l.b16 %v422
  %v2521 = vunpack.c.h.b16 %v422
  %v2522 = vunpack.c.l.b16 %v423
  %v2523 = vunpack.c.h.b16 %v423
  %v2524 = vunpack.c.l.b16 %v424
  %v2525 = vunpack.c.h.b16 %v424
  %v2526 = vunpack.c.l.b16 %v425
  %v2527 = vunpack.c.h.b16 %v425
  %v2528 = vunpack.c.l.b16 %v426
  %v2529 = vunpack.c.h.b16 %v426
  %v2530 = vunpack.c.l.b16 %v427
  %v2531 = vunpack.c.h.b16 %v427
  %v2532 = vunpack.c.l.b16 %v428
  %v2533 = vunpack.c.h.b16 %v428
  %v2534 = vunpack.c.l.b16 %v429
  %v2535 = vunpack.c.h.b16 %v429
  %v2536 = vunpack.c.l.b16 %v430
  %v2537 = vunpack.c.h.b16 %v430
  %v2538 = vunpack.c.l.b16 %v431
  %v2539 = vunpack.c.h.b16 %v431
  %v2540 = vunpack.c.l.b16 %v432
  %v2541 = vunpack.c.h.b16 %v432
  %v2542 = vunpack.c.l.b16 %v433
  %v2543 = vunpack.c.h.b16 %v433
  %v2544 = vunpack.c.l.b16 %v434
  %v2545 = vunpack.c.h.b16 %v434
  %v2546 = vunpack.c.l.b16 %v435
  %v2547 = vunpack.c.h.b16 %v435
  %v2548 = vunpack.c.l.b16 %v436
  %v2549 = vunpack.c.h.b16 %v436
  %v2550 = vunpack.c.l.b16 %v437
  %v2551 = vunpack.c.h.b16 %v437
  %v2552 = vunpack.c.l.b16 %v438
  %v2553 = vunpack.c.h.b16 %v438
  %v2554 = vunpack.c.l.b16 %v439
  %v2555 = vunpack.c.h.b16 %v439
  %v2556 = vunpack.c.l.b16 %v440
  %v2557 = vunpack.c.h.b16 %v440
  %v2558 = vunpack.c.l.b16 %v441
  %v2559 = vunpack.c.h.b16 %v441
  %v2560 = vunpack.c.l.b16 %v442
  %v2561 = vunpack.c.h.b16 %v442
  %v2562 = vunpack.c.l.b16 %v443
  %v2563 = vunpack.c.h.b16 %v443
  %v2564 = vunpack.c.l.b16 %v444
  %v2565 = vunpack.c.h.b16 %v444
  %v2566 = vunpack.c.l.b16 %v445
  %v2567 = vunpack.c.h.b16 %v445
  %v2568 = vunpack.c.l.b16 %v446
  %v2569 = vunpack.c.h.b16 %v446
  %v2570 = vunpack.c.l.b16 %v447
  %v2571 = vunpack.c.h.b16 %v447
  %v2572 = vunpack.c.l.b16 %v448
  %v2573 = vunpack.c.h.b16 %v448
  %v2574 = vunpack.c.l.b16 %v449
  %v2575 = vunpack.c.h.b16 %v449
  %v2576 = vunpack.c.l.b16 %v450
  %v2577 = vunpack.c.h.b16 %v450
  %v2578 = vunpack.c.l.b16 %v451
  %v2579 = vunpack.c.h.b16 %v451
  %v2580 = vunpack.c.l.b16 %v452
  %v2581 = vunpack.c.h.b16 %v452
  %v2582 = vunpack.c.l.b16 %v453
  %v2583 = vunpack.c.h.b16 %v453
  %v2584 = vunpack.c.l.b16 %v454
  %v2585 = vunpack.c.h.b16 %v454
  %v2586 = vunpack.c.l.b16 %v455
  %v2587 = vunpack.c.h.b16 %v455
  %v2588 = vunpack.c.l.b16 %v456
  %v2589 = vunpack.c.h.b16 %v456
  %v2590 = vunpack.c.l.b16 %v457
  %v2591 = vunpack.c.h.b16 %v457
  %v2592 = vunpack.c.l.b16 %v458
  %v2593 = vunpack.c.h.b16 %v458
  %v2594 = vunpack.c.l.b16 %v459
  %v2595 = vunpack.c.h.b16 %v459
  %v2596 = vunpack.c.l.b16 %v460
  %v2597 = vunpack.c.h.b16 %v460
  %v2598 = vunpack.c.l.b16 %v461
  %v2599 = vunpack.c.h.b16 %v461
  %v2600 = vunpack.c.l.b16 %v462
  %v2601 = vunpack.c.h.b16 %v462
  %v2602 = vunpack.c.l.b16 %v463
  %v2603 = vunpack.c.h.b16 %v463
  %v2604 = vunpack.c.l.b16 %v464
  %v2605 = vunpack.c.h.b16 %v464
  %v2606 = vunpack.c.l.b16 %v465
  %v2607 = vunpack.c.h.b16 %v465
  %v2608 = vunpack.c.l.b16 %v466
  %v2609 = vunpack.c.h.b16 %v466
  %v2610 = vunpack.c.l.b16 %v467
  %v2611 = vunpack.c.h.b16 %v467
  %v2612 = vunpack.c.l.b16 %v468
  %v2613 = vunpack.c.h.b16 %v468
  %v2614 = vunpack.c.l.b16 %v469
  %v2615 = vunpack.c.h.b16 %v469
  %v2616 = vunpack.c.l.b16 %v470
  %v2617 = vunpack.c.h.b16 %v470
  %v2618 = vunpack.c.l.b16 %v471
  %v2619 = vunpack.c.h.b16 %v471
  %v2620 = vunpack.c.l.b16 %v472
  %v2621 = vunpack.c.h.b16 %v472
  %v2622 = vunpack.c.l.b16 %v473
  %v2623 = vunpack.c.h.b16 %v473
  %v2624 = vunpack.c.l.b16 %v474
  %v2625 = vunpack.c.h.b16 %v474
  %v2626 = vunpack.c.l.b16 %v475
  %v2627 = vunpack.c.h.b16 %v475
  %v2628 = vunpack.c.l.b16 %v476
  %v2629 = vunpack.c.h.b16 %v476
  %v2630 = vunpack.c.l.b16 %v477
  %v2631 = vunpack.c.h.b16 %v477
  %v2632 = vunpack.c.l.b16 %v478
  %v2633 = vunpack.c.h.b16 %v478
  %v2634 = vunpack.c.l.b16 %v479
  %v2635 = vunpack.c.h.b16 %v479
  %v2636 = vunpack.c.l.b16 %v480
  %v2637 = vunpack.c.h.b16 %v480
  %v2638 = vunpack.c.l.b16 %v481
  %v2639 = vunpack.c.h.b16 %v481
  %v2640 = vunpack.c.l.b16 %v482
  %v2641 = vunpack.c.h.b16 %v482
  %v2642 = vunpack.c.l.b16 %v483
  %v2643 = vunpack.c.h.b16 %v483
  %v2644 = vunpack.c.l.b16 %v484
  %v2645 = vunpack.c.h.b16 %v484
  %v2646 = vunpack.c.l.b16 %v485
  %v2647 = vunpack.c.h.b16 %v485
  %v2648 = vunpack.c.l.b16 %v486
  %v2649 = vunpack.c.h.b16 %v486
  %v2650 = vunpack.c.l.b16 %v487
  %v2651 = vunpack.c.h.b16 %v487
  %v2652 = vunpack.c.l.b16 %v488
  %v2653 = vunpack.c.h.b16 %v488
  %v2654 = vunpack.c.l.b16 %v489
  %v2655 = vunpack.c.h.b16 %v489
  %v2656 = vunpack.c.l.b16 %v490
  %v2657 = vunpack.c.h.b16 %v490
  %v2658 = vunpack.c.l.b16 %v491
  %v2659 = vunpack.c.h.b16 %v491
  %v2660 = vunpack.c.l.b16 %v492
  %v2661 = vunpack.c.h.b16 %v492
  %v2662 = vunpack.c.l.b16 %v493
  %v2663 = vunpack.c.h.b16 %v493
  %v2664 = vunpack.c.l.b16 %v494
  %v2665 = vunpack.c.h.b16 %v494
  %v2666 = vunpack.c.l.b16 %v495
  %v2667 = vunpack.c.h.b16 %v495
  %v2668 = vunpack.c.l.b16 %v496
  %v2669 = vunpack.c.h.b16 %v496
  %v2670 = vunpack.c.l.b16 %v497
  %v2671 = vunpack.c.h.b16 %v497
  %v2672 = vunpack.c.l.b16 %v498
  %v2673 = vunpack.c.h.b16 %v498
  %v2674 = vunpack.c.l.b16 %v499
  %v2675 = vunpack.c.h.b16 %v499
  %v2676 = vunpack.c.l.b16 %v500
  %v2677 = vunpack.c.h.b16 %v500
  %v2678 = vunpack.c.l.b16 %v501
  %v2679 = vunpack.c.h.b16 %v501
  %v2680 = vunpack.c.l.b16 %v502
  %v2681 = vunpack.c.h.b16 %v502
  %v2682 = vunpack.c.l.b16 %v503
  %v2683 = vunpack.c.h.b16 %v503
  %v2684 = vunpack.c.l.b16 %v504
  %v2685 = vunpack.c.h.b16 %v504
  %v2686 = vunpack.c.l.b16 %v505
  %v2687 = vunpack.c.h.b16 %v505
  %v2688 = vunpack.c.l.b16 %v506
  %v2689 = vunpack.c.h.b16 %v506
  %v2690 = vunpack.c.l.b16 %v507
  %v2691 = vunpack.c.h.b16 %v507
  %v2692 = vunpack.c.l.b16 %v508
  %v2693 = vunpack.c.h.b16 %v508
  %v2694 = vunpack.c.l.b16 %v509
  %v2695 = vunpack.c.h.b16 %v509
  %v2696 = vunpack.c.l.b16 %v510
  %v2697 = vunpack.c.h.b16 %v510
  %v2698 = vunpack.c.l.b16 %v511
  %v2699 = vunpack.c.h.b16 %v511
  %v2700 = vunpack.c.l.b16 %v512
  %v2701 = vunpack.c.h.b16 %v512
  %v2702 = vunpack.c.l.b16 %v513
  %v2703 = vunpack.c.h.b16 %v513
  %v2704 = vunpack.c.l.b16 %v514
  %v2705 = vunpack.c.h.b16 %v514
  %v2706 = vunpack.c.l.b16 %v515
  %v2707 = vunpack.c.h.b16 %v515
  %v2708 = vunpack.c.l.b16 %v516
  %v2709 = vunpack.c.h.b16 %v516
  %v2710 = vunpack.c.l.b16 %v517
  %v2711 = vunpack.c.h.b16 %v517
  %v2712 = vunpack.c.l.b16 %v518
  %v2713 = vunpack.c.h.b16 %v518
  %v2714 = vunpack.c.l.b16 %v519
  %v2715 = vunpack.c.h.b16 %v519
  %v2716 = vunpack.c.l.b16 %v520
  %v2717 = vunpack.c.h.b16 %v520
  %v2718 = vunpack.c.l.b16 %v521
  %v2719 = vunpack.c.h.b16 %v521
  %v2720 = vunpack.c.l.b16 %v522
  %v2721 = vunpack.c.h.b16 %v522
  %v2722 = vunpack.c.l.b16 %v523
  %v2723 = vunpack.c.h.b16 %v523
  %v2724 = vunpack.c.l.b16 %v524
  %v2725 = vunpack.c.h.b16 %v524
  %v2726 = vunpack.c.l.b16 %v525
  %v2727 = vunpack.c.h.b16 %v525
  %v2728 = vunpack.c.l.b16 %v526
  %v2729 = vunpack.c.h.b16 %v526
  %v2730 = vunpack.c.l.b16 %v527
  %v2731 = vunpack.c.h.b16 %v527
  %v2732 = vunpack.c.l.b16 %v528
  %v2733 = vunpack.c.h.b16 %v528
  %v2734 = vunpack.c.l.b16 %v529
  %v2735 = vunpack.c.h.b16 %v529
  %v2736 = vunpack.c.l.b16 %v530
  %v2737 = vunpack.c.h.b16 %v530
  %v2738 = vunpack.c.l.b16 %v531
  %v2739 = vunpack.c.h.b16 %v531
  %v2740 = vunpack.c.l.b16 %v532
  %v2741 = vunpack.c.h.b16 %v532
  %v2742 = vunpack.c.l.b16 %v533
  %v2743 = vunpack.c.h.b16 %v533
  %v2744 = vunpack.c.l.b16 %v534
  %v2745 = vunpack.c.h.b16 %v534
  %v2746 = vunpack.c.l.b16 %v535
  %v2747 = vunpack.c.h.b16 %v535
  %v2748 = vunpack.c.l.b16 %v536
  %v2749 = vunpack.c.h.b16 %v536
  %v2750 = vunpack.c.l.b16 %v537
  %v2751 = vunpack.c.h.b16 %v537
  %v2752 = vunpack.c.l.b16 %v538
  %v2753 = vunpack.c.h.b16 %v538
  %v2754 = vunpack.c.l.b16 %v539
  %v2755 = vunpack.c.h.b16 %v539
  %v2756 = vunpack.c.l.b16 %v540
  %v2757 = vunpack.c.h.b16 %v540
  %v2758 = vunpack.c.l.b16 %v541
  %v2759 = vunpack.c.h.b16 %v541
  %v2760 = vunpack.c.l.b16 %v542
  %v2761 = vunpack.c.h.b16 %v542
  %v2762 = vunpack.c.l.b16 %v543
  %v2763 = vunpack.c.h.b16 %v543
  %v2764 = vunpack.c.l.b16 %v544
  %v2765 = vunpack.c.h.b16 %v544
  %v2766 = vunpack.c.l.b16 %v545
  %v2767 = vunpack.c.h.b16 %v545
  %v2768 = vunpack.c.l.b16 %v546
  %v2769 = vunpack.c.h.b16 %v546
  %v2770 = vunpack.c.l.b16 %v547
  %v2771 = vunpack.c.h.b16 %v547
  %v2772 = vunpack.c.l.b16 %v548
  %v2773 = vunpack.c.h.b16 %v548
  %v2774 = vunpack.c.l.b16 %v549
  %v2775 = vunpack.c.h.b16 %v549
  %v2776 = vunpack.c.l.b16 %v550
  %v2777 = vunpack.c.h.b16 %v550
  %v2778 = vunpack.c.l.b16 %v551
  %v2779 = vunpack.c.h.b16 %v551
  %v2780 = vunpack.c.l.b16 %v552
  %v2781 = vunpack.c.h.b16 %v552
  %v2782 = vunpack.c.l.b16 %v553
  %v2783 = vunpack.c.h.b16 %v553
  %v2784 = vunpack.c.l.b16 %v554
  %v2785 = vunpack.c.h.b16 %v554
  %v2786 = vunpack.c.l.b16 %v555
  %v2787 = vunpack.c.h.b16 %v555
  %v2788 = vunpack.c.l.b16 %v556
  %v2789 = vunpack.c.h.b16 %v556
  %v2790 = vunpack.c.l.b16 %v557
  %v2791 = vunpack.c.h.b16 %v557
  %v2792 = vunpack.c.l.b16 %v558
  %v2793 = vunpack.c.h.b16 %v558
  %v2794 = vunpack.c.l.b16 %v559
  %v2795 = vunpack.c.h.b16 %v559
  %v2796 = vunpack.c.l.b16 %v560
  %v2797 = vunpack.c.h.b16 %v560
  %v2798 = vunpack.c.l.b16 %v561
  %v2799 = vunpack.c.h.b16 %v561
  %v2800 = vunpack.c.l.b16 %v562
  %v2801 = vunpack.c.h.b16 %v562
  %v2802 = vunpack.c.l.b16 %v563
  %v2803 = vunpack.c.h.b16 %v563
  %v2804 = vunpack.c.l.b16 %v564
  %v2805 = vunpack.c.h.b16 %v564
  %v2806 = vunpack.c.l.b16 %v565
  %v2807 = vunpack.c.h.b16 %v565
  %v2808 = vunpack.c.l.b16 %v566
  %v2809 = vunpack.c.h.b16 %v566
  %v2810 = vunpack.c.l.b16 %v567
  %v2811 = vunpack.c.h.b16 %v567
  %v2812 = vunpack.c.l.b16 %v568
  %v2813 = vunpack.c.h.b16 %v568
  %v2814 = vunpack.c.l.b16 %v569
  %v2815 = vunpack.c.h.b16 %v569
  %v2816 = vunpack.c.l.b16 %v570
  %v2817 = vunpack.c.h.b16 %v570
  %v2818 = vunpack.c.l.b16 %v571
  %v2819 = vunpack.c.h.b16 %v571
  %v2820 = vunpack.c.l.b16 %v572
  %v2821 = vunpack.c.h.b16 %v572
  %v2822 = vunpack.c.l.b16 %v573
  %v2823 = vunpack.c.h.b16 %v573
  %v2824 = vunpack.c.l.b16 %v574
  %v2825 = vunpack.c.h.b16 %v574
  %v2826 = vunpack.c.l.b16 %v575
  %v2827 = vunpack.c.h.b16 %v575
  %v2828 = vunpack.c.l.b16 %v576
  %v2829 = vunpack.c.h.b16 %v576
  %v2830 = vunpack.c.l.b16 %v577
  %v2831 = vunpack.c.h.b16 %v577
  %v2832 = vunpack.c.l.b16 %v578
  %v2833 = vunpack.c.h.b16 %v578
  %v2834 = vunpack.c.l.b16 %v579
  %v2835 = vunpack.c.h.b16 %v579
  %v2836 = vunpack.c.l.b16 %v580
  %v2837 = vunpack.c.h.b16 %v580
  %v2838 = vunpack.c.l.b16 %v581
  %v2839 = vunpack.c.h.b16 %v581
  %v2840 = vunpack.c.l.b16 %v582
  %v2841 = vunpack.c.h.b16 %v582
  %v2842 = vunpack.c.l.b16 %v583
  %v2843 = vunpack.c.h.b16 %v583
  %v2844 = vunpack.c.l.b16 %v584
  %v2845 = vunpack.c.h.b16 %v584
  %v2846 = vunpack.c.l.b16 %v585
  %v2847 = vunpack.c.h.b16 %v585
  %v2848 = vunpack.c.l.b16 %v586
  %v2849 = vunpack.c.h.b16 %v586
  %v2850 = vunpack.c.l.b16 %v587
  %v2851 = vunpack.c.h.b16 %v587
  %v2852 = vunpack.c.l.b16 %v588
  %v2853 = vunpack.c.h.b16 %v588
  %v2854 = vunpack.c.l.b16 %v589
  %v2855 = vunpack.c.h.b16 %v589
  %v2856 = vunpack.c.l.b16 %v590
  %v2857 = vunpack.c.h.b16 %v590
  %v2858 = vunpack.c.l.b16 %v591
  %v2859 = vunpack.c.h.b16 %v591
  %v2860 = vunpack.c.l.b16 %v592
  %v2861 = vunpack.c.h.b16 %v592
  %v2862 = vunpack.c.l.b16 %v593
  %v2863 = vunpack.c.h.b16 %v593
  %v2864 = vunpack.c.l.b16 %v594
  %v2865 = vunpack.c.h.b16 %v594
  %v2866 = vunpack.c.l.b16 %v595
  %v2867 = vunpack.c.h.b16 %v595
  %v2868 = vunpack.c.l.b16 %v596
  %v2869 = vunpack.c.h.b16 %v596
  %v2870 = vunpack.c.l.b16 %v597
  %v2871 = vunpack.c.h.b16 %v597
  %v2872 = vunpack.c.l.b16 %v598
  %v2873 = vunpack.c.h.b16 %v598
  %v2874 = vunpack.c.l.b16 %v599
  %v2875 = vunpack.c.h.b16 %v599
  %v2876 = vunpack.c.l.b16 %v600
  %v2877 = vunpack.c.h.b16 %v600
  %v2878 = vunpack.c.l.b16 %v601
  %v2879 = vunpack.c.h.b16 %v601
  %v2880 = vunpack.c.l.b16 %v602
  %v2881 = vunpack.c.h.b16 %v602
  %v2882 = vunpack.c.l.b16 %v603
  %v2883 = vunpack.c.h.b16 %v603
  %v2884 = vunpack.c.l.b16 %v604
  %v2885 = vunpack.c.h.b16 %v604
  %v2886 = vunpack.c.l.b16 %v605
  %v2887 = vunpack.c.h.b16 %v605
  %v2888 = vunpack.c.l.b16 %v606
  %v2889 = vunpack.c.h.b16 %v606
  %v2890 = vunpack.c.l.b16 %v607
  %v2891 = vunpack.c.h.b16 %v607
  %v2892 = vunpack.c.l.b16 %v608
  %v2893 = vunpack.c.h.b16 %v608
  %v2894 = vunpack.c.l.b16 %v609
  %v2895 = vunpack.c.h.b16 %v609
  %v2896 = vunpack.c.l.b16 %v610
  %v2897 = vunpack.c.h.b16 %v610
  %v2898 = vunpack.c.l.b16 %v611
  %v2899 = vunpack.c.h.b16 %v611
  %v2900 = vunpack.c.l.b16 %v612
  %v2901 = vunpack.c.h.b16 %v612
  %v2902 = vunpack.c.l.b16 %v613
  %v2903 = vunpack.c.h.b16 %v613
  %v2904 = vunpack.c.l.b16 %v614
  %v2905 = vunpack.c.h.b16 %v614
  %v2906 = vunpack.c.l.b16 %v615
  %v2907 = vunpack.c.h.b16 %v615
  %v2908 = vunpack.c.l.b16 %v616
  %v2909 = vunpack.c.h.b16 %v616
  %v2910 = vunpack.c.l.b16 %v617
  %v2911 = vunpack.c.h.b16 %v617
  %v2912 = vunpack.c.l.b16 %v618
  %v2913 = vunpack.c.h.b16 %v618
  %v2914 = vunpack.c.l.b16 %v619
  %v2915 = vunpack.c.h.b16 %v619
  %v2916 = vunpack.c.l.b16 %v620
  %v2917 = vunpack.c.h.b16 %v620
  %v2918 = vunpack.c.l.b16 %v621
  %v2919 = vunpack.c.h.b16 %v621
  %v2920 = vunpack.c.l.b16 %v622
  %v2921 = vunpack.c.h.b16 %v622
  %v2922 = vunpack.c.l.b16 %v623
  %v2923 = vunpack.c.h.b16 %v623
  %v2924 = vunpack.c.l.b16 %v624
  %v2925 = vunpack.c.h.b16 %v624
  %v2926 = vunpack.c.l.b16 %v625
  %v2927 = vunpack.c.h.b16 %v625
  %v2928 = vunpack.c.l.b16 %v626
  %v2929 = vunpack.c.h.b16 %v626
  %v2930 = vunpack.c.l.b16 %v627
  %v2931 = vunpack.c.h.b16 %v627
  %v2932 = vunpack.c.l.b16 %v628
  %v2933 = vunpack.c.h.b16 %v628
  %v2934 = vunpack.c.l.b16 %v629
  %v2935 = vunpack.c.h.b16 %v629
  %v2936 = vunpack.c.l.b16 %v630
  %v2937 = vunpack.c.h.b16 %v630
  %v2938 = vunpack.c.l.b16 %v631
  %v2939 = vunpack.c.h.b16 %v631
  %v2940 = vunpack.c.l.b16 %v632
  %v2941 = vunpack.c.h.b16 %v632
  %v2942 = vunpack.c.l.b16 %v633
  %v2943 = vunpack.c.h.b16 %v633
  %v2944 = vunpack.c.l.b16 %v634
  %v2945 = vunpack.c.h.b16 %v634
  %v2946 = vunpack.c.l.b16 %v635
  %v2947 = vunpack.c.h.b16 %v635
  %v2948 = vunpack.c.l.b16 %v636
  %v2949 = vunpack.c.h.b16 %v636
  %v2950 = vunpack.c.l.b16 %v637
  %v2951 = vunpack.c.h.b16 %v637
  %v2952 = vunpack.c.l.b16 %v638
  %v2953 = vunpack.c.h.b16 %v638
  %v2954 = vunpack.c.l.b16 %v639
  %v2955 = vunpack.c.h.b16 %v639
  %v2956 = vunpack.c.l.b16 %v640
  %v2957 = vunpack.c.h.b16 %v640
  %v2958 = vunpack.c.l.b16 %v641
  %v2959 = vunpack.c.h.b16 %v641
  %v2960 = vunpack.c.l.b16 %v642
  %v2961 = vunpack.c.h.b16 %v642
  %v2962 = vunpack.c.l.b16 %v643
  %v2963 = vunpack.c.h.b16 %v643
  %v2964 = vunpack.c.l.b16 %v644
  %v2965 = vunpack.c.h.b16 %v644
  %v2966 = vunpack.c.l.b16 %v645
  %v2967 = vunpack.c.h.b16 %v645
  %v2968 = vunpack.c.l.b16 %v646
  %v2969 = vunpack.c.h.b16 %v646
  %v2970 = vunpack.c.l.b16 %v647
  %v2971 = vunpack.c.h.b16 %v647
  %v2972 = vunpack.c.l.b16 %v648
  %v2973 = vunpack.c.h.b16 %v648
  %v2974 = vunpack.c.l.b16 %v649
  %v2975 = vunpack.c.h.b16 %v649
  %v2976 = vunpack.c.l.b16 %v650
  %v2977 = vunpack.c.h.b16 %v650
  %v2978 = vunpack.c.l.b16 %v651
  %v2979 = vunpack.c.h.b16 %v651
  %v2980 = vunpack.c.l.b16 %v652
  %v2981 = vunpack.c.h.b16 %v652
  %v2982 = vunpack.c.l.b16 %v653
  %v2983 = vunpack.c.h.b16 %v653
  %v2984 = vunpack.c.l.b16 %v654
  %v2985 = vunpack.c.h.b16 %v654
  %v2986 = vunpack.c.l.b16 %v655
  %v2987 = vunpack.c.h.b16 %v655
  %v2988 = vunpack.c.l.b16 %v656
  %v2989 = vunpack.c.h.b16 %v656
  %v2990 = vunpack.c.l.b16 %v657
  %v2991 = vunpack.c.h.b16 %v657
  %v2992 = vunpack.c.l.b16 %v658
  %v2993 = vunpack.c.h.b16 %v658
  %v2994 = vunpack.c.l.b16 %v659
  %v2995 = vunpack.c.h.b16 %v659
  %v2996 = vunpack.c.l.b16 %v660
  %v2997 = vunpack.c.h.b16 %v660
  %v2998 = vunpack.c.l.b16 %v661
  %v2999 = vunpack.c.h.b16 %v661
  %v3000 = vunpack.c.l.b16 %v662
  %v3001 = vunpack.c.h.b16 %v662
  %v3002 = vunpack.c.l.b16 %v663
  %v3003 = vunpack.c.h.b16 %v663
  %v3004 = vunpack.c.l.b16 %v664
  %v3005 = vunpack.c.h.b16 %v664
  %v3006 = vunpack.c.l.b16 %v665
  %v3007 = vunpack.c.h.b16 %v665
  %v3008 = vunpack.c.l.b16 %v666
  %v3009 = vunpack.c.h.b16 %v666
  %v3010 = vunpack.c.l.b16 %v667
  %v3011 = vunpack.c.h.b16 %v667
  %v3012 = vunpack.c.l.b16 %v668
  %v3013 = vunpack.c.h.b16 %v668
  %v3014 = vunpack.c.l.b16 %v669
  %v3015 = vunpack.c.h.b16 %v669
  %v3016 = vunpack.c.l.b16 %v670
  %v3017 = vunpack.c.h.b16 %v670
  %v3018 = vunpack.c.l.b16 %v671
  %v3019 = vunpack.c.h.b16 %v671
  %v3020 = vunpack.c.l.b16 %v672
  %v3021 = vunpack.c.h.b16 %v672
  %v3022 = vunpack.c.l.b16 %v673
  %v3023 = vunpack.c.h.b16 %v673
  %v3024 = vunpack.c.l.b16 %v674
  %v3025 = vunpack.c.h.b16 %v674
  %v3026 = vunpack.c.l.b16 %v675
  %v3027 = vunpack.c.h.b16 %v675
  %v3028 = vunpack.c.l.b16 %v676
  %v3029 = vunpack.c.h.b16 %v676
  %v3030 = vunpack.c.l.b16 %v677
  %v3031 = vunpack.c.h.b16 %v677
  %v3032 = vunpack.c.l.b16 %v678
  %v3033 = vunpack.c.h.b16 %v678
  %v3034 = vunpack.c.l.b16 %v679
  %v3035 = vunpack.c.h.b16 %v679
  %v3036 = vunpack.c.l.b16 %v680
  %v3037 = vunpack.c.h.b16 %v680
  %v3038 = vunpack.c.l.b16 %v681
  %v3039 = vunpack.c.h.b16 %v681
  %v3040 = vunpack.c.l.b16 %v682
  %v3041 = vunpack.c.h.b16 %v682
  %v3042 = vunpack.c.l.b16 %v683
  %v3043 = vunpack.c.h.b16 %v683
  %v3044 = vunpack.c.l.b16 %v684
  %v3045 = vunpack.c.h.b16 %v684
  %v3046 = vunpack.c.l.b16 %v685
  %v3047 = vunpack.c.h.b16 %v685
  %v3048 = vunpack.c.l.b16 %v686
  %v3049 = vunpack.c.h.b16 %v686
  %v3050 = vunpack.c.l.b16 %v687
  %v3051 = vunpack.c.h.b16 %v687
  %v3052 = vunpack.c.l.b16 %v688
  %v3053 = vunpack.c.h.b16 %v688
  %v3054 = vunpack.c.l.b16 %v689
  %v3055 = vunpack.c.h.b16 %v689
  %v3056 = vunpack.c.l.b16 %v690
  %v3057 = vunpack.c.h.b16 %v690
  %v3058 = vunpack.c.l.b16 %v691
  %v3059 = vunpack.c.h.b16 %v691
  %v3060 = vunpack.c.l.b16 %v692
  %v3061 = vunpack.c.h.b16 %v692
  %v3062 = vunpack.c.l.b16 %v693
  %v3063 = vunpack.c.h.b16 %v693
  %v3064 = vunpack.c.l.b16 %v694
  %v3065 = vunpack.c.h.b16 %v694
  %v3066 = vunpack.c.l.b16 %v695
  %v3067 = vunpack.c.h.b16 %v695
  %v3068 = vunpack.c.l.b16 %v696
  %v3069 = vunpack.c.h.b16 %v696
  %v3070 = vunpack.c.l.b16 %v697
  %v3071 = vunpack.c.h.b16 %v697
  %v3072 = vunpack.c.l.b16 %v698
  %v3073 = vunpack.c.h.b16 %v698
  %v3074 = vunpack.c.l.b16 %v699
  %v3075 = vunpack.c.h.b16 %v699
  %v3076 = vunpack.c.l.b16 %v700
  %v3077 = vunpack.c.h.b16 %v700
  %v3078 = vunpack.c.l.b16 %v701
  %v3079 = vunpack.c.h.b16 %v701
  %v3080 = vunpack.c.l.b16 %v702
  %v3081 = vunpack.c.h.b16 %v702
  %v3082 = vunpack.c.l.b16 %v703
  %v3083 = vunpack.c.h.b16 %v703
  %v3084 = vunpack.c.l.b16 %v704
  %v3085 = vunpack.c.h.b16 %v704
  %v3086 = vunpack.c.l.b16 %v705
  %v3087 = vunpack.c.h.b16 %v705
  %v3088 = vunpack.c.l.b16 %v706
  %v3089 = vunpack.c.h.b16 %v706
  %v3090 = vunpack.c.l.b16 %v707
  %v3091 = vunpack.c.h.b16 %v707
  %v3092 = vunpack.c.l.b16 %v708
  %v3093 = vunpack.c.h.b16 %v708
  %v3094 = vunpack.c.l.b16 %v709
  %v3095 = vunpack.c.h.b16 %v709
  %v3096 = vunpack.c.l.b16 %v710
  %v3097 = vunpack.c.h.b16 %v710
  %v3098 = vunpack.c.l.b16 %v711
  %v3099 = vunpack.c.h.b16 %v711
  %v3100 = vunpack.c.l.b16 %v712
  %v3101 = vunpack.c.h.b16 %v712
  %v3102 = vunpack.c.l.b16 %v713
  %v3103 = vunpack.c.h.b16 %v713
  %v3104 = vunpack.c.l.b16 %v714
  %v3105 = vunpack.c.h.b16 %v714
  %v3106 = vunpack.c.l.b16 %v715
  %v3107 = vunpack.c.h.b16 %v715
  %v3108 = vunpack.c.l.b16 %v716
  %v3109 = vunpack.c.h.b16 %v716
  %v3110 = vunpack.c.l.b16 %v717
  %v3111 = vunpack.c.h.b16 %v717
  %v3112 = vunpack.c.l.b16 %v718
  %v3113 = vunpack.c.h.b16 %v718
  %v3114 = vunpack.c.l.b16 %v719
  %v3115 = vunpack.c.h.b16 %v719
  %v3116 = vunpack.c.l.b16 %v720
  %v3117 = vunpack.c.h.b16 %v720
  %v3118 = vunpack.c.l.b16 %v721
  %v3119 = vunpack.c.h.b16 %v721
  %v3120 = vunpack.c.l.b16 %v722
  %v3121 = vunpack.c.h.b16 %v722
  %v3122 = vunpack.c.l.b16 %v723
  %v3123 = vunpack.c.h.b16 %v723
  %v3124 = vunpack.c.l.b16 %v724
  %v3125 = vunpack.c.h.b16 %v724
  %v3126 = vunpack.c.l.b16 %v725
  %v3127 = vunpack.c.h.b16 %v725
  %v3128 = vunpack.c.l.b16 %v726
  %v3129 = vunpack.c.h.b16 %v726
  %v3130 = vunpack.c.l.b16 %v727
  %v3131 = vunpack.c.h.b16 %v727
  %v3132 = vunpack.c.l.b16 %v728
  %v3133 = vunpack.c.h.b16 %v728
  %v3134 = vunpack.c.l.b16 %v729
  %v3135 = vunpack.c.h.b16 %v729
  %v3136 = vunpack.c.l.b16 %v730
  %v3137 = vunpack.c.h.b16 %v730
  %v3138 = vunpack.c.l.b16 %v731
  %v3139 = vunpack.c.h.b16 %v731
  %v3140 = vunpack.c.l.b16 %v732
  %v3141 = vunpack.c.h.b16 %v732
  %v3142 = vunpack.c.l.b16 %v733
  %v3143 = vunpack.c.h.b16 %v733
  %v3144 = vunpack.c.l.b16 %v734
  %v3145 = vunpack.c.h.b16 %v734
  %v3146 = vunpack.c.l.b16 %v735
  %v3147 = vunpack.c.h.b16 %v735
  %v3148 = vunpack.c.l.b16 %v736
  %v3149 = vunpack.c.h.b16 %v736
  %v3150 = vunpack.c.l.b16 %v737
  %v3151 = vunpack.c.h.b16 %v737
  %v3152 = vunpack.c.l.b16 %v738
  %v3153 = vunpack.c.h.b16 %v738
  %v3154 = vunpack.c.l.b16 %v739
  %v3155 = vunpack.c.h.b16 %v739
  %v3156 = vunpack.c.l.b16 %v740
  %v3157 = vunpack.c.h.b16 %v740
  %v3158 = vunpack.c.l.b16 %v741
  %v3159 = vunpack.c.h.b16 %v741
  %v3160 = vunpack.c.l.b16 %v742
  %v3161 = vunpack.c.h.b16 %v742
  %v3162 = vunpack.c.l.b16 %v743
  %v3163 = vunpack.c.h.b16 %v743
  %v3164 = vunpack.c.l.b16 %v744
  %v3165 = vunpack.c.h.b16 %v744
  %v3166 = vunpack.c.l.b16 %v745
  %v3167 = vunpack.c.h.b16 %v745
  %v3168 = vunpack.c.l.b16 %v746
  %v3169 = vunpack.c.h.b16 %v746
  %v3170 = vunpack.c.l.b16 %v747
  %v3171 = vunpack.c.h.b16 %v747
  %v3172 = vunpack.c.l.b16 %v748
  %v3173 = vunpack.c.h.b16 %v748
  %v3174 = vunpack.c.l.b16 %v749
  %v3175 = vunpack.c.h.b16 %v749
  %v3176 = vunpack.c.l.b16 %v750
  %v3177 = vunpack.c.h.b16 %v750
  %v3178 = vunpack.c.l.b16 %v751
  %v3179 = vunpack.c.h.b16 %v751
  %v3180 = vunpack.c.l.b16 %v752
  %v3181 = vunpack.c.h.b16 %v752
  %v3182 = vunpack.c.l.b16 %v753
  %v3183 = vunpack.c.h.b16 %v753
  %v3184 = vunpack.c.l.b16 %v754
  %v3185 = vunpack.c.h.b16 %v754
  %v3186 = vunpack.c.l.b16 %v755
  %v3187 = vunpack.c.h.b16 %v755
  %v3188 = vunpack.c.l.b16 %v756
  %v3189 = vunpack.c.h.b16 %v756
  %v3190 = vunpack.c.l.b16 %v757
  %v3191 = vunpack.c.h.b16 %v757
  %v3192 = vunpack.c.l.b16 %v758
  %v3193 = vunpack.c.h.b16 %v758
  %v3194 = vunpack.c.l.b16 %v759
  %v3195 = vunpack.c.h.b16 %v759
  %v3196 = vunpack.c.l.b16 %v760
  %v3197 = vunpack.c.h.b16 %v760
  %v3198 = vunpack.c.l.b16 %v761
  %v3199 = vunpack.c.h.b16 %v761
  %v3200 = vunpack.c.l.b16 %v762
  %v3201 = vunpack.c.h.b16 %v762
  %v3202 = vunpack.c.l.b16 %v763
  %v3203 = vunpack.c.h.b16 %v763
  %v3204 = vunpack.c.l.b16 %v764
  %v3205 = vunpack.c.h.b16 %v764
  %v3206 = vunpack.c.l.b16 %v765
  %v3207 = vunpack.c.h.b16 %v765
  %v3208 = vunpack.c.l.b16 %v766
  %v3209 = vunpack.c.h.b16 %v766
  %v3210 = vunpack.c.l.b16 %v767
  %v3211 = vunpack.c.h.b16 %v767
  %v3212 = vunpack.c.l.b16 %v768
  %v3213 = vunpack.c.h.b16 %v768
  %v3214 = vunpack.c.l.b16 %v769
  %v3215 = vunpack.c.h.b16 %v769
  %v3216 = vunpack.c.l.b16 %v770
  %v3217 = vunpack.c.h.b16 %v770
  %v3218 = vunpack.c.l.b16 %v771
  %v3219 = vunpack.c.h.b16 %v771
  %v3220 = vunpack.c.l.b16 %v772
  %v3221 = vunpack.c.h.b16 %v772
  %v3222 = vunpack.c.l.b16 %v773
  %v3223 = vunpack.c.h.b16 %v773
  %v3224 = vunpack.c.l.b16 %v774
  %v3225 = vunpack.c.h.b16 %v774
  %v3226 = vunpack.c.l.b16 %v775
  %v3227 = vunpack.c.h.b16 %v775
  %v3228 = vunpack.c.l.b16 %v776
  %v3229 = vunpack.c.h.b16 %v776
  %v3230 = vunpack.c.l.b16 %v777
  %v3231 = vunpack.c.h.b16 %v777
  %v3232 = vunpack.c.l.b16 %v778
  %v3233 = vunpack.c.h.b16 %v778
  %v3234 = vunpack.c.l.b16 %v779
  %v3235 = vunpack.c.h.b16 %v779
  %v3236 = vunpack.c.l.b16 %v780
  %v3237 = vunpack.c.h.b16 %v780
  %v3238 = vunpack.c.l.b16 %v781
  %v3239 = vunpack.c.h.b16 %v781
  %v3240 = vunpack.c.l.b16 %v782
  %v3241 = vunpack.c.h.b16 %v782
  %v3242 = vunpack.c.l.b16 %v783
  %v3243 = vunpack.c.h.b16 %v783
  %v3244 = vunpack.c.l.b16 %v784
  %v3245 = vunpack.c.h.b16 %v784
  %v3246 = vunpack.c.l.b16 %v785
  %v3247 = vunpack.c.h.b16 %v785
  %v3248 = vunpack.c.l.b16 %v786
  %v3249 = vunpack.c.h.b16 %v786
  %v3250 = vunpack.c.l.b16 %v787
  %v3251 = vunpack.c.h.b16 %v787
  %v3252 = vunpack.c.l.b16 %v788
  %v3253 = vunpack.c.h.b16 %v788
  %v3254 = vunpack.c.l.b16 %v789
  %v3255 = vunpack.c.h.b16 %v789
  %v3256 = vunpack.c.l.b16 %v790
  %v3257 = vunpack.c.h.b16 %v790
  %v3258 = vunpack.c.l.b16 %v791
  %v3259 = vunpack.c.h.b16 %v791
  %v3260 = vunpack.c.l.b16 %v792
  %v3261 = vunpack.c.h.b16 %v792
  %v3262 = vunpack.c.l.b16 %v793
  %v3263 = vunpack.c.h.b16 %v793
  %v3264 = vunpack.c.l.b16 %v794
  %v3265 = vunpack.c.h.b16 %v794
  %v3266 = vunpack.c.l.b16 %v795
  %v3267 = vunpack.c.h.b16 %v795
  %v3268 = vunpack.c.l.b16 %v796
  %v3269 = vunpack.c.h.b16 %v796
  %v3270 = vunpack.c.l.b16 %v797
  %v3271 = vunpack.c.h.b16 %v797
  %v3272 = vunpack.c.l.b16 %v798
  %v3273 = vunpack.c.h.b16 %v798
  %v3274 = vunpack.c.l.b16 %v799
  %v3275 = vunpack.c.h.b16 %v799
  %v3276 = vunpack.c.l.b16 %v800
  %v3277 = vunpack.c.h.b16 %v800
  %v3278 = vunpack.c.l.b16 %v801
  %v3279 = vunpack.c.h.b16 %v801
  %v3280 = vunpack.c.l.b16 %v802
  %v3281 = vunpack.c.h.b16 %v802
  %v3282 = vunpack.c.l.b16 %v803
  %v3283 = vunpack.c.h.b16 %v803
  %v3284 = vunpack.c.l.b16 %v804
  %v3285 = vunpack.c.h.b16 %v804
  %v3286 = vunpack.c.l.b16 %v805
  %v3287 = vunpack.c.h.b16 %v805
  %v3288 = vunpack.c.l.b16 %v806
  %v3289 = vunpack.c.h.b16 %v806
  %v3290 = vunpack.c.l.b16 %v807
  %v3291 = vunpack.c.h.b16 %v807
  %v3292 = vunpack.c.l.b16 %v808
  %v3293 = vunpack.c.h.b16 %v808
  %v3294 = vunpack.c.l.b16 %v809
  %v3295 = vunpack.c.h.b16 %v809
  %v3296 = vunpack.c.l.b16 %v810
  %v3297 = vunpack.c.h.b16 %v810
  %v3298 = vunpack.c.l.b16 %v811
  %v3299 = vunpack.c.h.b16 %v811
  %v3300 = vunpack.c.l.b16 %v812
  %v3301 = vunpack.c.h.b16 %v812
  %v3302 = vunpack.c.l.b16 %v813
  %v3303 = vunpack.c.h.b16 %v813
  %v3304 = vunpack.c.l.b16 %v814
  %v3305 = vunpack.c.h.b16 %v814
  %v3306 = vunpack.c.l.b16 %v815
  %v3307 = vunpack.c.h.b16 %v815
  %v3308 = vunpack.c.l.b16 %v816
  %v3309 = vunpack.c.h.b16 %v816
  %v3310 = vunpack.c.l.b16 %v817
  %v3311 = vunpack.c.h.b16 %v817
  %v3312 = vunpack.c.l.b16 %v818
  %v3313 = vunpack.c.h.b16 %v818
  %v3314 = vunpack.c.l.b16 %v819
  %v3315 = vunpack.c.h.b16 %v819
  %v3316 = vunpack.c.l.b16 %v820
  %v3317 = vunpack.c.h.b16 %v820
  %v3318 = vunpack.c.l.b16 %v821
  %v3319 = vunpack.c.h.b16 %v821
  %v3320 = vunpack.c.l.b16 %v822
  %v3321 = vunpack.c.h.b16 %v822
  %v3322 = vunpack.c.l.b16 %v823
  %v3323 = vunpack.c.h.b16 %v823
  %v3324 = vunpack.c.l.b16 %v824
  %v3325 = vunpack.c.h.b16 %v824
  %v3326 = vunpack.c.l.b16 %v825
  %v3327 = vunpack.c.h.b16 %v825
  %v3328 = vunpack.c.l.b16 %v826
  %v3329 = vunpack.c.h.b16 %v826
  %v3330 = vunpack.c.l.b16 %v827
  %v3331 = vunpack.c.h.b16 %v827
  %v3332 = vunpack.c.l.b16 %v828
  %v3333 = vunpack.c.h.b16 %v828
  %v3334 = vunpack.c.l.b16 %v829
  %v3335 = vunpack.c.h.b16 %v829
  %v3336 = vunpack.c.l.b16 %v830
  %v3337 = vunpack.c.h.b16 %v830
  %v3338 = vunpack.c.l.b16 %v831
  %v3339 = vunpack.c.h.b16 %v831
  %v3340 = vunpack.c.l.b16 %v832
  %v3341 = vunpack.c.h.b16 %v832
  %v3342 = vunpack.c.l.b16 %v833
  %v3343 = vunpack.c.h.b16 %v833
  %v3344 = vpack.c.b16 %v1748, %v1744
  %v3345 = vpack.c.b16 %v1749, %v1745
  %v3346 = vpack.c.b16 %v1750, %v1746
  %v3347 = vpack.c.b16 %v1751, %v1747
  %v3348 = vpack.c.b16 %v1756, %v1752
  %v3349 = vpack.c.b16 %v1757, %v1753
  %v3350 = vpack.c.b16 %v1758, %v1754
  %v3351 = vpack.c.b16 %v1759, %v1755
  %v3352 = vpack.c.b16 %v1764, %v1760
  %v3353 = vpack.c.b16 %v1765, %v1761
  %v3354 = vpack.c.b16 %v1766, %v1762
  %v3355 = vpack.c.b16 %v1767, %v1763
  %v3356 = vpack.c.b16 %v1772, %v1768
  %v3357 = vpack.c.b16 %v1773, %v1769
  %v3358 = vpack.c.b16 %v1774, %v1770
  %v3359 = vpack.c.b16 %v1775, %v1771
  %v3360 = vpack.c.b16 %v1780, %v1776
  %v3361 = vpack.c.b16 %v1781, %v1777
  %v3362 = vpack.c.b16 %v1782, %v1778
  %v3363 = vpack.c.b16 %v1783, %v1779
  %v3364 = vpack.c.b16 %v1788, %v1784
  %v3365 = vpack.c.b16 %v1789, %v1785
  %v3366 = vpack.c.b16 %v1790, %v1786
  %v3367 = vpack.c.b16 %v1791, %v1787
  %v3368 = vpack.c.b16 %v1796, %v1792
  %v3369 = vpack.c.b16 %v1797, %v1793
  %v3370 = vpack.c.b16 %v1798, %v1794
  %v3371 = vpack.c.b16 %v1799, %v1795
  %v3372 = vpack.c.b16 %v1804, %v1800
  %v3373 = vpack.c.b16 %v1805, %v1801
  %v3374 = vpack.c.b16 %v1806, %v1802
  %v3375 = vpack.c.b16 %v1807, %v1803
  %v3376 = vpack.c.b16 %v1812, %v1808
  %v3377 = vpack.c.b16 %v1813, %v1809
  %v3378 = vpack.c.b16 %v1814, %v1810
  %v3379 = vpack.c.b16 %v1815, %v1811
  %v3380 = vpack.c.b16 %v1820, %v1816
  %v3381 = vpack.c.b16 %v1821, %v1817
  %v3382 = vpack.c.b16 %v1822, %v1818
  %v3383 = vpack.c.b16 %v1823, %v1819
  %v3384 = vpack.c.b16 %v1828, %v1824
  %v3385 = vpack.c.b16 %v1829, %v1825
  %v3386 = vpack.c.b16 %v1830, %v1826
  %v3387 = vpack.c.b16 %v1831, %v1827
  %v3388 = vpack.c.b16 %v1836, %v1832
  %v3389 = vpack.c.b16 %v1837, %v1833
  %v3390 = vpack.c.b16 %v1838, %v1834
  %v3391 = vpack.c.b16 %v1839, %v1835
  %v3392 = vpack.c.b16 %v1844, %v1840
  %v3393 = vpack.c.b16 %v1845, %v1841
  %v3394 = vpack.c.b16 %v1846, %v1842
  %v3395 = vpack.c.b16 %v1847, %v1843
  %v3396 = vpack.c.b16 %v1852, %v1848
  %v3397 = vpack.c.b16 %v1853, %v1849
  %v3398 = vpack.c.b16 %v1854, %v1850
  %v3399 = vpack.c.b16 %v1855, %v1851
  %v3400 = vpack.c.b16 %v1860, %v1856
  %v3401 = vpack.c.b16 %v1861, %v1857
  %v3402 = vpack.c.b16 %v1862, %v1858
  %v3403 = vpack.c.b16 %v1863, %v1859
  %v3404 = vpack.c.b16 %v1868, %v1864
  %v3405 = vpack.c.b16 %v1869, %v1865
  %v3406 = vpack.c.b16 %v1870, %v1866
  %v3407 = vpack.c.b16 %v1871, %v1867
  %v3408 = vpack.c.b16 %v1876, %v1872
  %v3409 = vpack.c.b16 %v1877, %v1873
  %v3410 = vpack.c.b16 %v1878, %v1874
  %v3411 = vpack.c.b16 %v1879, %v1875
  %v3412 = vpack.c.b16 %v1884, %v1880
  %v3413 = vpack.c.b16 %v1885, %v1881
  %v3414 = vpack.c.b16 %v1886, %v1882
  %v3415 = vpack.c.b16 %v1887, %v1883
  %v3416 = vpack.c.b16 %v1892, %v1888
  %v3417 = vpack.c.b16 %v1893, %v1889
  %v3418 = vpack.c.b16 %v1894, %v1890
  %v3419 = vpack.c.b16 %v1895, %v1891
  %v3420 = vpack.c.b16 %v1900, %v1896
  %v3421 = vpack.c.b16 %v1901, %v1897
  %v3422 = vpack.c.b16 %v1902, %v1898
  %v3423 = vpack.c.b16 %v1903, %v1899
  %v3424 = vpack.c.b16 %v1908, %v1904
  %v3425 = vpack.c.b16 %v1909, %v1905
  %v3426 = vpack.c.b16 %v1910, %v1906
  %v3427 = vpack.c.b16 %v1911, %v1907
  %v3428 = vpack.c.b16 %v1916, %v1912
  %v3429 = vpack.c.b16 %v1917, %v1913
  %v3430 = vpack.c.b16 %v1918, %v1914
  %v3431 = vpack.c.b16 %v1919, %v1915
  %v3432 = vpack.c.b16 %v1924, %v1920
  %v3433 = vpack.c.b16 %v1925, %v1921
  %v3434 = vpack.c.b16 %v1926, %v1922
  %v3435 = vpack.c.b16 %v1927, %v1923
  %v3436 = vpack.c.b16 %v1932, %v1928
  %v3437 = vpack.c.b16 %v1933, %v1929
  %v3438 = vpack.c.b16 %v1934, %v1930
  %v3439 = vpack.c.b16 %v1935, %v1931
  %v3440 = vpack.c.b16 %v1940, %v1936
  %v3441 = vpack.c.b16 %v1941, %v1937
  %v3442 = vpack.c.b16 %v1942, %v1938
  %v3443 = vpack.c.b16 %v1943, %v1939
  %v3444 = vpack.c.b16 %v1948, %v1944
  %v3445 = vpack.c.b16 %v1949, %v1945
  %v3446 = vpack.c.b16 %v1950, %v1946
  %v3447 = vpack.c.b16 %v1951, %v1947
  %v3448 = vpack.c.b16 %v1956, %v1952
  %v3449 = vpack.c.b16 %v1957, %v1953
  %v3450 = vpack.c.b16 %v1958, %v1954
  %v3451 = vpack.c.b16 %v1959, %v1955
  %v3452 = vpack.c.b16 %v1964, %v1960
  %v3453 = vpack.c.b16 %v1965, %v1961
  %v3454 = vpack.c.b16 %v1966, %v1962
  %v3455 = vpack.c.b16 %v1967, %v1963
  %v3456 = vpack.c.b16 %v1972, %v1968
  %v3457 = vpack.c.b16 %v1973, %v1969
  %v3458 = vpack.c.b16 %v1974, %v1970
  %v3459 = vpack.c.b16 %v1975, %v1971
  %v3460 = vpack.c.b16 %v1980, %v1976
  %v3461 = vpack.c.b16 %v1981, %v1977
  %v3462 = vpack.c.b16 %v1982, %v1978
  %v3463 = vpack.c.b16 %v1983, %v1979
  %v3464 = vpack.c.b16 %v1988, %v1984
  %v3465 = vpack.c.b16 %v1989, %v1985
  %v3466 = vpack.c.b16 %v1990, %v1986
  %v3467 = vpack.c.b16 %v1991, %v1987
  %v3468 = vpack.c.b16 %v1996, %v1992
  %v3469 = vpack.c.b16 %v1997, %v1993
  %v3470 = vpack.c.b16 %v1998, %v1994
  %v3471 = vpack.c.b16 %v1999, %v1995
  %v3472 = vpack.c.b16 %v2004, %v2000
  %v3473 = vpack.c.b16 %v2005, %v2001
  %v3474 = vpack.c.b16 %v2006, %v2002
  %v3475 = vpack.c.b16 %v2007, %v2003
  %v3476 = vpack.c.b16 %v2012, %v2008
  %v3477 = vpack.c.b16 %v2013, %v2009
  %v3478 = vpack.c.b16 %v2014, %v2010
  %v3479 = vpack.c.b16 %v2015, %v2011
  %v3480 = vpack.c.b16 %v2020, %v2016
  %v3481 = vpack.c.b16 %v2021, %v2017
  %v3482 = vpack.c.b16 %v2022, %v2018
  %v3483 = vpack.c.b16 %v2023, %v2019
  %v3484 = vpack.c.b16 %v2028, %v2024
  %v3485 = vpack.c.b16 %v2029, %v2025
  %v3486 = vpack.c.b16 %v2030, %v2026
  %v3487 = vpack.c.b16 %v2031, %v2027
  %v3488 = vpack.c.b16 %v2036, %v2032
  %v3489 = vpack.c.b16 %v2037, %v2033
  %v3490 = vpack.c.b16 %v2038, %v2034
  %v3491 = vpack.c.b16 %v2039, %v2035
  %v3492 = vpack.c.b16 %v2044, %v2040
  %v3493 = vpack.c.b16 %v2045, %v2041
  %v3494 = vpack.c.b16 %v2046, %v2042
  %v3495 = vpack.c.b16 %v2047, %v2043
  %v3496 = vpack.c.b16 %v2052, %v2048
  %v3497 = vpack.c.b16 %v2053, %v2049
  %v3498 = vpack.c.b16 %v2054, %v2050
  %v3499 = vpack.c.b16 %v2055, %v2051
  %v3500 = vpack.c.b16 %v2060, %v2056
  %v3501 = vpack.c.b16 %v2061, %v2057
  %v3502 = vpack.c.b16 %v2062, %v2058
  %v3503 = vpack.c.b16 %v2063, %v2059
  %v3504 = vpack.c.b16 %v2068, %v2064
  %v3505 = vpack.c.b16 %v2069, %v2065
  %v3506 = vpack.c.b16 %v2070, %v2066
  %v3507 = vpack.c.b16 %v2071, %v2067
  %v3508 = vpack.c.b16 %v2076, %v2072
  %v3509 = vpack.c.b16 %v2077, %v2073
  %v3510 = vpack.c.b16 %v2078, %v2074
  %v3511 = vpack.c.b16 %v2079, %v2075
  %v3512 = vpack.c.b16 %v2084, %v2080
  %v3513 = vpack.c.b16 %v2085, %v2081
  %v3514 = vpack.c.b16 %v2086, %v2082
  %v3515 = vpack.c.b16 %v2087, %v2083
  %v3516 = vpack.c.b16 %v2092, %v2088
  %v3517 = vpack.c.b16 %v2093, %v2089
  %v3518 = vpack.c.b16 %v2094, %v2090
  %v3519 = vpack.c.b16 %v2095, %v2091
  %v3520 = vpack.c.b16 %v2100, %v2096
  %v3521 = vpack.c.b16 %v2101, %v2097
  %v3522 = vpack.c.b16 %v2102, %v2098
  %v3523 = vpack.c.b16 %v2103, %v2099
  %v3524 = vpack.c.b16 %v2108, %v2104
  %v3525 = vpack.c.b16 %v2109, %v2105
  %v3526 = vpack.c.b16 %v2110, %v2106
  %v3527 = vpack.c.b16 %v2111, %v2107
  %v3528 = vpack.c.b16 %v2116, %v2112
  %v3529 = vpack.c.b16 %v2117, %v2113
  %v3530 = vpack.c.b16 %v2118, %v2114
  %v3531 = vpack.c.b16 %v2119, %v2115
  %v3532 = vpack.c.b16 %v2124, %v2120
  %v3533 = vpack.c.b16 %v2125, %v2121
  %v3534 = vpack.c.b16 %v2126, %v2122
  %v3535 = vpack.c.b16 %v2127, %v2123
  %v3536 = vpack.c.b16 %v2132, %v2128
  %v3537 = vpack.c.b16 %v2133, %v2129
  %v3538 = vpack.c.b16 %v2134, %v2130
  %v3539 = vpack.c.b16 %v2135, %v2131
  %v3540 = vpack.c.b16 %v2140, %v2136
  %v3541 = vpack.c.b16 %v2141, %v2137
  %v3542 = vpack.c.b16 %v2142, %v2138
  %v3543 = vpack.c.b16 %v2143, %v2139
  %v3544 = vpack.c.b16 %v2148, %v2144
  %v3545 = vpack.c.b16 %v2149, %v2145
  %v3546 = vpack.c.b16 %v2150, %v2146
  %v3547 = vpack.c.b16 %v2151, %v2147
  %v3548 = vpack.c.b16 %v2156, %v2152
  %v3549 = vpack.c.b16 %v2157, %v2153
  %v3550 = vpack.c.b16 %v2158, %v2154
  %v3551 = vpack.c.b16 %v2159, %v2155
  %v3552 = vpack.c.b16 %v2164, %v2160
  %v3553 = vpack.c.b16 %v2165, %v2161
  %v3554 = vpack.c.b16 %v2166, %v2162
  %v3555 = vpack.c.b16 %v2167, %v2163
  %v3556 = vpack.c.b16 %v2172, %v2168
  %v3557 = vpack.c.b16 %v2173, %v2169
  %v3558 = vpack.c.b16 %v2174, %v2170
  %v3559 = vpack.c.b16 %v2175, %v2171
  %v3560 = vpack.c.b16 %v2180, %v2176
  %v3561 = vpack.c.b16 %v2181, %v2177
  %v3562 = vpack.c.b16 %v2182, %v2178
  %v3563 = vpack.c.b16 %v2183, %v2179
  %v3564 = vpack.c.b16 %v2188, %v2184
  %v3565 = vpack.c.b16 %v2189, %v2185
  %v3566 = vpack.c.b16 %v2190, %v2186
  %v3567 = vpack.c.b16 %v2191, %v2187
  %v3568 = vpack.c.b16 %v2196, %v2192
  %v3569 = vpack.c.b16 %v2197, %v2193
  %v3570 = vpack.c.b16 %v2198, %v2194
  %v3571 = vpack.c.b16 %v2199, %v2195
  %v3572 = vpack.c.b16 %v2204, %v2200
  %v3573 = vpack.c.b16 %v2205, %v2201
  %v3574 = vpack.c.b16 %v2206, %v2202
  %v3575 = vpack.c.b16 %v2207, %v2203
  %v3576 = vpack.c.b16 %v2212, %v2208
  %v3577 = vpack.c.b16 %v2213, %v2209
  %v3578 = vpack.c.b16 %v2214, %v2210
  %v3579 = vpack.c.b16 %v2215, %v2211
  %v3580 = vpack.c.b16 %v2220, %v2216
  %v3581 = vpack.c.b16 %v2221, %v2217
  %v3582 = vpack.c.b16 %v2222, %v2218
  %v3583 = vpack.c.b16 %v2223, %v2219
  %v3584 = vpack.c.b16 %v2228, %v2224
  %v3585 = vpack.c.b16 %v2229, %v2225
  %v3586 = vpack.c.b16 %v2230, %v2226
  %v3587 = vpack.c.b16 %v2231, %v2227
  %v3588 = vpack.c.b16 %v2236, %v2232
  %v3589 = vpack.c.b16 %v2237, %v2233
  %v3590 = vpack.c.b16 %v2238, %v2234
  %v3591 = vpack.c.b16 %v2239, %v2235
  %v3592 = vpack.c.b16 %v2244, %v2240
  %v3593 = vpack.c.b16 %v2245, %v2241
  %v3594 = vpack.c.b16 %v2246, %v2242
  %v3595 = vpack.c.b16 %v2247, %v2243
  %v3596 = vpack.c.b16 %v2252, %v2248
  %v3597 = vpack.c.b16 %v2253, %v2249
  %v3598 = vpack.c.b16 %v2254, %v2250
  %v3599 = vpack.c.b16 %v2255, %v2251
  %v3600 = vpack.c.b16 %v2260, %v2256
  %v3601 = vpack.c.b16 %v2261, %v2257
  %v3602 = vpack.c.b16 %v2262, %v2258
  %v3603 = vpack.c.b16 %v2263, %v2259
  %v3604 = vpack.c.b16 %v2268, %v2264
  %v3605 = vpack.c.b16 %v2269, %v2265
  %v3606 = vpack.c.b16 %v2270, %v2266
  %v3607 = vpack.c.b16 %v2271, %v2267
  %v3608 = vpack.c.b16 %v2276, %v2272
  %v3609 = vpack.c.b16 %v2277, %v2273
  %v3610 = vpack.c.b16 %v2278, %v2274
  %v3611 = vpack.c.b16 %v2279, %v2275
  %v3612 = vpack.c.b16 %v2284, %v2280
  %v3613 = vpack.c.b16 %v2285, %v2281
  %v3614 = vpack.c.b16 %v2286, %v2282
  %v3615 = vpack.c.b16 %v2287, %v2283
  %v3616 = vpack.c.b16 %v2292, %v2288
  %v3617 = vpack.c.b16 %v2293, %v2289
  %v3618 = vpack.c.b16 %v2294, %v2290
  %v3619 = vpack.c.b16 %v2295, %v2291
  %v3620 = vpack.c.b16 %v2300, %v2296
  %v3621 = vpack.c.b16 %v2301, %v2297
  %v3622 = vpack.c.b16 %v2302, %v2298
  %v3623 = vpack.c.b16 %v2303, %v2299
  %v3624 = vpack.c.b16 %v2308, %v2304
  %v3625 = vpack.c.b16 %v2309, %v2305
  %v3626 = vpack.c.b16 %v2310, %v2306
  %v3627 = vpack.c.b16 %v2311, %v2307
  %v3628 = vpack.c.b16 %v2316, %v2312
  %v3629 = vpack.c.b16 %v2317, %v2313
  %v3630 = vpack.c.b16 %v2318, %v2314
  %v3631 = vpack.c.b16 %v2319, %v2315
  %v3632 = vpack.c.b16 %v2324, %v2320
  %v3633 = vpack.c.b16 %v2325, %v2321
  %v3634 = vpack.c.b16 %v2326, %v2322
  %v3635 = vpack.c.b16 %v2327, %v2323
  %v3636 = vpack.c.b16 %v2332, %v2328
  %v3637 = vpack.c.b16 %v2333, %v2329
  %v3638 = vpack.c.b16 %v2334, %v2330
  %v3639 = vpack.c.b16 %v2335, %v2331
  %v3640 = vpack.c.b16 %v2340, %v2336
  %v3641 = vpack.c.b16 %v2341, %v2337
  %v3642 = vpack.c.b16 %v2342, %v2338
  %v3643 = vpack.c.b16 %v2343, %v2339
  %v3644 = vpack.c.b16 %v2348, %v2344
  %v3645 = vpack.c.b16 %v2349, %v2345
  %v3646 = vpack.c.b16 %v2350, %v2346
  %v3647 = vpack.c.b16 %v2351, %v2347
  %v3648 = vpack.c.b16 %v2356, %v2352
  %v3649 = vpack.c.b16 %v2357, %v2353
  %v3650 = vpack.c.b16 %v2358, %v2354
  %v3651 = vpack.c.b16 %v2359, %v2355
  %v3652 = vpack.c.b16 %v2364, %v2360
  %v3653 = vpack.c.b16 %v2365, %v2361
  %v3654 = vpack.c.b16 %v2366, %v2362
  %v3655 = vpack.c.b16 %v2367, %v2363
  %v3656 = vpack.c.b16 %v2372, %v2368
  %v3657 = vpack.c.b16 %v2373, %v2369
  %v3658 = vpack.c.b16 %v2374, %v2370
  %v3659 = vpack.c.b16 %v2375, %v2371
  %v3660 = vpack.c.b16 %v2380, %v2376
  %v3661 = vpack.c.b16 %v2381, %v2377
  %v3662 = vpack.c.b16 %v2382, %v2378
  %v3663 = vpack.c.b16 %v2383, %v2379
  %v3664 = vpack.c.b16 %v2388, %v2384
  %v3665 = vpack.c.b16 %v2389, %v2385
  %v3666 = vpack.c.b16 %v2390, %v2386
  %v3667 = vpack.c.b16 %v2391, %v2387
  %v3668 = vpack.c.b16 %v2396, %v2392
  %v3669 = vpack.c.b16 %v2397, %v2393
  %v3670 = vpack.c.b16 %v2398, %v2394
  %v3671 = vpack.c.b16 %v2399, %v2395
  %v3672 = vpack.c.b16 %v2404, %v2400
  %v3673 = vpack.c.b16 %v2405, %v2401
  %v3674 = vpack.c.b16 %v2406, %v2402
  %v3675 = vpack.c.b16 %v2407, %v2403
  %v3676 = vpack.c.b16 %v2412, %v2408
  %v3677 = vpack.c.b16 %v2413, %v2409
  %v3678 = vpack.c.b16 %v2414, %v2410
  %v3679 = vpack.c.b16 %v2415, %v2411
  %v3680 = vpack.c.b16 %v2420, %v2416
  %v3681 = vpack.c.b16 %v2421, %v2417
  %v3682 = vpack.c.b16 %v2422, %v2418
  %v3683 = vpack.c.b16 %v2423, %v2419
  %v3684 = vpack.c.b16 %v2428, %v2424
  %v3685 = vpack.c.b16 %v2429, %v2425
  %v3686 = vpack.c.b16 %v2430, %v2426
  %v3687 = vpack.c.b16 %v2431, %v2427
  %v3688 = vpack.c.b16 %v2436, %v2432
  %v3689 = vpack.c.b16 %v2437, %v2433
  %v3690 = vpack.c.b16 %v2438, %v2434
  %v3691 = vpack.c.b16 %v2439, %v2435
  %v3692 = vpack.c.b16 %v2444, %v2440
  %v3693 = vpack.c.b16 %v2445, %v2441
  %v3694 = vpack.c.b16 %v2446, %v2442
  %v3695 = vpack.c.b16 %v2447, %v2443
  %v3696 = vpack.c.b16 %v2452, %v2448
  %v3697 = vpack.c.b16 %v2453, %v2449
  %v3698 = vpack.c.b16 %v2454, %v2450
  %v3699 = vpack.c.b16 %v2455, %v2451
  %v3700 = vpack.c.b16 %v2460, %v2456
  %v3701 = vpack.c.b16 %v2461, %v2457
  %v3702 = vpack.c.b16 %v2462, %v2458
  %v3703 = vpack.c.b16 %v2463, %v2459
  %v3704 = vpack.c.b16 %v2468, %v2464
  %v3705 = vpack.c.b16 %v2469, %v2465
  %v3706 = vpack.c.b16 %v2470, %v2466
  %v3707 = vpack.c.b16 %v2471, %v2467
  %v3708 = vpack.c.b16 %v2476, %v2472
  %v3709 = vpack.c.b16 %v2477, %v2473
  %v3710 = vpack.c.b16 %v2478, %v2474
  %v3711 = vpack.c.b16 %v2479, %v2475
  %v3712 = vpack.c.b16 %v2484, %v2480
  %v3713 = vpack.c.b16 %v2485, %v2481
  %v3714 = vpack.c.b16 %v2486, %v2482
  %v3715 = vpack.c.b16 %v2487, %v2483
  %v3716 = vpack.c.b16 %v2492, %v2488
  %v3717 = vpack.c.b16 %v2493, %v2489
  %v3718 = vpack.c.b16 %v2494, %v2490
  %v3719 = vpack.c.b16 %v2495, %v2491
  %v3720 = vpack.c.b16 %v2500, %v2496
  %v3721 = vpack.c.b16 %v2501, %v2497
  %v3722 = vpack.c.b16 %v2502, %v2498
  %v3723 = vpack.c.b16 %v2503, %v2499
  %v3724 = vpack.c.b16 %v2508, %v2504
  %v3725 = vpack.c.b16 %v2509, %v2505
  %v3726 = vpack.c.b16 %v2510, %v2506
  %v3727 = vpack.c.b16 %v2511, %v2507
  %v3728 = vpack.c.b16 %v2516, %v2512
  %v3729 = vpack.c.b16 %v2517, %v2513
  %v3730 = vpack.c.b16 %v2518, %v2514
  %v3731 = vpack.c.b16 %v2519, %v2515
  %v3732 = vpack.c.b16 %v2524, %v2520
  %v3733 = vpack.c.b16 %v2525, %v2521
  %v3734 = vpack.c.b16 %v2526, %v2522
  %v3735 = vpack.c.b16 %v2527, %v2523
  %v3736 = vpack.c.b16 %v2532, %v2528
  %v3737 = vpack.c.b16 %v2533, %v2529
  %v3738 = vpack.c.b16 %v2534, %v2530
  %v3739 = vpack.c.b16 %v2535, %v2531
  %v3740 = vpack.c.b16 %v2540, %v2536
  %v3741 = vpack.c.b16 %v2541, %v2537
  %v3742 = vpack.c.b16 %v2542, %v2538
  %v3743 = vpack.c.b16 %v2543, %v2539
  %v3744 = vpack.c.b16 %v2548, %v2544
  %v3745 = vpack.c.b16 %v2549, %v2545
  %v3746 = vpack.c.b16 %v2550, %v2546
  %v3747 = vpack.c.b16 %v2551, %v2547
  %v3748 = vpack.c.b16 %v2556, %v2552
  %v3749 = vpack.c.b16 %v2557, %v2553
  %v3750 = vpack.c.b16 %v2558, %v2554
  %v3751 = vpack.c.b16 %v2559, %v2555
  %v3752 = vpack.c.b16 %v2564, %v2560
  %v3753 = vpack.c.b16 %v2565, %v2561
  %v3754 = vpack.c.b16 %v2566, %v2562
  %v3755 = vpack.c.b16 %v2567, %v2563
  %v3756 = vpack.c.b16 %v2572, %v2568
  %v3757 = vpack.c.b16 %v2573, %v2569
  %v3758 = vpack.c.b16 %v2574, %v2570
  %v3759 = vpack.c.b16 %v2575, %v2571
  %v3760 = vpack.c.b16 %v2580, %v2576
  %v3761 = vpack.c.b16 %v2581, %v2577
  %v3762 = vpack.c.b16 %v2582, %v2578
  %v3763 = vpack.c.b16 %v2583, %v2579
  %v3764 = vpack.c.b16 %v2588, %v2584
  %v3765 = vpack.c.b16 %v2589, %v2585
  %v3766 = vpack.c.b16 %v2590, %v2586
  %v3767 = vpack.c.b16 %v2591, %v2587
  %v3768 = vpack.c.b16 %v2596, %v2592
  %v3769 = vpack.c.b16 %v2597, %v2593
  %v3770 = vpack.c.b16 %v2598, %v2594
  %v3771 = vpack.c.b16 %v2599, %v2595
  %v3772 = vpack.c.b16 %v2604, %v2600
  %v3773 = vpack.c.b16 %v2605, %v2601
  %v3774 = vpack.c.b16 %v2606, %v2602
  %v3775 = vpack.c.b16 %v2607, %v2603
  %v3776 = vpack.c.b16 %v2612, %v2608
  %v3777 = vpack.c.b16 %v2613, %v2609
  %v3778 = vpack.c.b16 %v2614, %v2610
  %v3779 = vpack.c.b16 %v2615, %v2611
  %v3780 = vpack.c.b16 %v2620, %v2616
  %v3781 = vpack.c.b16 %v2621, %v2617
  %v3782 = vpack.c.b16 %v2622, %v2618
  %v3783 = vpack.c.b16 %v2623, %v2619
  %v3784 = vpack.c.b16 %v2628, %v2624
  %v3785 = vpack.c.b16 %v2629, %v2625
  %v3786 = vpack.c.b16 %v2630, %v2626
  %v3787 = vpack.c.b16 %v2631, %v2627
  %v3788 = vpack.c.b16 %v2636, %v2632
  %v3789 = vpack.c.b16 %v2637, %v2633
  %v3790 = vpack.c.b16 %v2638, %v2634
  %v3791 = vpack.c.b16 %v2639, %v2635
  %v3792 = vpack.c.b16 %v2644, %v2640
  %v3793 = vpack.c.b16 %v2645, %v2641
  %v3794 = vpack.c.b16 %v2646, %v2642
  %v3795 = vpack.c.b16 %v2647, %v2643
  %v3796 = vpack.c.b16 %v2652, %v2648
  %v3797 = vpack.c.b16 %v2653, %v2649
  %v3798 = vpack.c.b16 %v2654, %v2650
  %v3799 = vpack.c.b16 %v2655, %v2651
  %v3800 = vpack.c.b16 %v2660, %v2656
  %v3801 = vpack.c.b16 %v2661, %v2657
  %v3802 = vpack.c.b16 %v2662, %v2658
  %v3803 = vpack.c.b16 %v2663, %v2659
  %v3804 = vpack.c.b16 %v2668, %v2664
  %v3805 = vpack.c.b16 %v2669, %v2665
  %v3806 = vpack.c.b16 %v2670, %v2666
  %v3807 = vpack.c.b16 %v2671, %v2667
  %v3808 = vpack.c.b16 %v2676, %v2672
  %v3809 = vpack.c.b16 %v2677, %v2673
  %v3810 = vpack.c.b16 %v2678, %v2674
  %v3811 = vpack.c.b16 %v2679, %v2675
  %v3812 = vpack.c.b16 %v2684, %v2680
  %v3813 = vpack.c.b16 %v2685, %v2681
  %v3814 = vpack.c.b16 %v2686, %v2682
  %v3815 = vpack.c.b16 %v2687, %v2683
  %v3816 = vpack.c.b16 %v2692, %v2688
  %v3817 = vpack.c.b16 %v2693, %v2689
  %v3818 = vpack.c.b16 %v2694, %v2690
  %v3819 = vpack.c.b16 %v2695, %v2691
  %v3820 = vpack.c.b16 %v2700, %v2696
  %v3821 = vpack.c.b16 %v2701, %v2697
  %v3822 = vpack.c.b16 %v2702, %v2698
  %v3823 = vpack.c.b16 %v2703, %v2699
  %v3824 = vpack.c.b16 %v2708, %v2704
  %v3825 = vpack.c.b16 %v2709, %v2705
  %v3826 = vpack.c.b16 %v2710, %v2706
  %v3827 = vpack.c.b16 %v2711, %v2707
  %v3828 = vpack.c.b16 %v2716, %v2712
  %v3829 = vpack.c.b16 %v2717, %v2713
  %v3830 = vpack.c.b16 %v2718, %v2714
  %v3831 = vpack.c.b16 %v2719, %v2715
  %v3832 = vpack.c.b16 %v2724, %v2720
  %v3833 = vpack.c.b16 %v2725, %v2721
  %v3834 = vpack.c.b16 %v2726, %v2722
  %v3835 = vpack.c.b16 %v2727, %v2723
  %v3836 = vpack.c.b16 %v2732, %v2728
  %v3837 = vpack.c.b16 %v2733, %v2729
  %v3838 = vpack.c.b16 %v2734, %v2730
  %v3839 = vpack.c.b16 %v2735, %v2731
  %v3840 = vpack.c.b16 %v2740, %v2736
  %v3841 = vpack.c.b16 %v2741, %v2737
  %v3842 = vpack.c.b16 %v2742, %v2738
  %v3843 = vpack.c.b16 %v2743, %v2739
  %v3844 = vpack.c.b16 %v2748, %v2744
  %v3845 = vpack.c.b16 %v2749, %v2745
  %v3846 = vpack.c.b16 %v2750, %v2746
  %v3847 = vpack.c.b16 %v2751, %v2747
  %v3848 = vpack.c.b16 %v2756, %v2752
  %v3849 = vpack.c.b16 %v2757, %v2753
  %v3850 = vpack.c.b16 %v2758, %v2754
  %v3851 = vpack.c.b16 %v2759, %v2755
  %v3852 = vpack.c.b16 %v2764, %v2760
  %v3853 = vpack.c.b16 %v2765, %v2761
  %v3854 = vpack.c.b16 %v2766, %v2762
  %v3855 = vpack.c.b16 %v2767, %v2763
  %v3856 = vpack.c.b16 %v2772, %v2768
  %v3857 = vpack.c.b16 %v2773, %v2769
  %v3858 = vpack.c.b16 %v2774, %v2770
  %v3859 = vpack.c.b16 %v2775, %v2771
  %v3860 = vpack.c.b16 %v2780, %v2776
  %v3861 = vpack.c.b16 %v2781, %v2777
  %v3862 = vpack.c.b16 %v2782, %v2778
  %v3863 = vpack.c.b16 %v2783, %v2779
  %v3864 = vpack.c.b16 %v2788, %v2784
  %v3865 = vpack.c.b16 %v2789, %v2785
  %v3866 = vpack.c.b16 %v2790, %v2786
  %v3867 = vpack.c.b16 %v2791, %v2787
  %v3868 = vpack.c.b16 %v2796, %v2792
  %v3869 = vpack.c.b16 %v2797, %v2793
  %v3870 = vpack.c.b16 %v2798, %v2794
  %v3871 = vpack.c.b16 %v2799, %v2795
  %v3872 = vpack.c.b16 %v2804, %v2800
  %v3873 = vpack.c.b16 %v2805, %v2801
  %v3874 = vpack.c.b16 %v2806, %v2802
  %v3875 = vpack.c.b16 %v2807, %v2803
  %v3876 = vpack.c.b16 %v2812, %v2808
  %v3877 = vpack.c.b16 %v2813, %v2809
  %v3878 = vpack.c.b16 %v2814, %v2810
  %v3879 = vpack.c.b16 %v2815, %v2811
  %v3880 = vpack.c.b16 %v2820, %v2816
  %v3881 = vpack.c.b16 %v2821, %v2817
  %v3882 = vpack.c.b16 %v2822, %v2818
  %v3883 = vpack.c.b16 %v2823, %v2819
  %v3884 = vpack.c.b16 %v2828, %v2824
  %v3885 = vpack.c.b16 %v2829, %v2825
  %v3886 = vpack.c.b16 %v2830, %v2826
  %v3887 = vpack.c.b16 %v2831, %v2827
  %v3888 = vpack.c.b16 %v2836, %v2832
  %v3889 = vpack.c.b16 %v2837, %v2833
  %v3890 = vpack.c.b16 %v2838, %v2834
  %v3891 = vpack.c.b16 %v2839, %v2835
  %v3892 = vpack.c.b16 %v2844, %v2840
  %v3893 = vpack.c.b16 %v2845, %v2841
  %v3894 = vpack.c.b16 %v2846, %v2842
  %v3895 = vpack.c.b16 %v2847, %v2843
  %v3896 = vpack.c.b16 %v2852, %v2848
  %v3897 = vpack.c.b16 %v2853, %v2849
  %v3898 = vpack.c.b16 %v2854, %v2850
  %v3899 = vpack.c.b16 %v2855, %v2851
  %v3900 = vpack.c.b16 %v2860, %v2856
  %v3901 = vpack.c.b16 %v2861, %v2857
  %v3902 = vpack.c.b16 %v2862, %v2858
  %v3903 = vpack.c.b16 %v2863, %v2859
  %v3904 = vpack.c.b16 %v2868, %v2864
  %v3905 = vpack.c.b16 %v2869, %v2865
  %v3906 = vpack.c.b16 %v2870, %v2866
  %v3907 = vpack.c.b16 %v2871, %v2867
  %v3908 = vpack.c.b16 %v2876, %v2872
  %v3909 = vpack.c.b16 %v2877, %v2873
  %v3910 = vpack.c.b16 %v2878, %v2874
  %v3911 = vpack.c.b16 %v2879, %v2875
  %v3912 = vpack.c.b16 %v2884, %v2880
  %v3913 = vpack.c.b16 %v2885, %v2881
  %v3914 = vpack.c.b16 %v2886, %v2882
  %v3915 = vpack.c.b16 %v2887, %v2883
  %v3916 = vpack.c.b16 %v2892, %v2888
  %v3917 = vpack.c.b16 %v2893, %v2889
  %v3918 = vpack.c.b16 %v2894, %v2890
  %v3919 = vpack.c.b16 %v2895, %v2891
  %v3920 = vpack.c.b16 %v2900, %v2896
  %v3921 = vpack.c.b16 %v2901, %v2897
  %v3922 = vpack.c.b16 %v2902, %v2898
  %v3923 = vpack.c.b16 %v2903, %v2899
  %v3924 = vpack.c.b16 %v2908, %v2904
  %v3925 = vpack.c.b16 %v2909, %v2905
  %v3926 = vpack.c.b16 %v2910, %v2906
  %v3927 = vpack.c.b16 %v2911, %v2907
  %v3928 = vpack.c.b16 %v2916, %v2912
  %v3929 = vpack.c.b16 %v2917, %v2913
  %v3930 = vpack.c.b16 %v2918, %v2914
  %v3931 = vpack.c.b16 %v2919, %v2915
  %v3932 = vpack.c.b16 %v2924, %v2920
  %v3933 = vpack.c.b16 %v2925, %v2921
  %v3934 = vpack.c.b16 %v2926, %v2922
  %v3935 = vpack.c.b16 %v2927, %v2923
  %v3936 = vpack.c.b16 %v2932, %v2928
  %v3937 = vpack.c.b16 %v2933, %v2929
  %v3938 = vpack.c.b16 %v2934, %v2930
  %v3939 = vpack.c.b16 %v2935, %v2931
  %v3940 = vpack.c.b16 %v2940, %v2936
  %v3941 = vpack.c.b16 %v2941, %v2937
  %v3942 = vpack.c.b16 %v2942, %v2938
  %v3943 = vpack.c.b16 %v2943, %v2939
  %v3944 = vpack.c.b16 %v2948, %v2944
  %v3945 = vpack.c.b16 %v2949, %v2945
  %v3946 = vpack.c.b16 %v2950, %v2946
  %v3947 = vpack.c.b16 %v2951, %v2947
  %v3948 = vpack.c.b16 %v2956, %v2952
  %v3949 = vpack.c.b16 %v2957, %v2953
  %v3950 = vpack.c.b16 %v2958, %v2954
  %v3951 = vpack.c.b16 %v2959, %v2955
  %v3952 = vpack.c.b16 %v2964, %v2960
  %v3953 = vpack.c.b16 %v2965, %v2961
  %v3954 = vpack.c.b16 %v2966, %v2962
  %v3955 = vpack.c.b16 %v2967, %v2963
  %v3956 = vpack.c.b16 %v2972, %v2968
  %v3957 = vpack.c.b16 %v2973, %v2969
  %v3958 = vpack.c.b16 %v2974, %v2970
  %v3959 = vpack.c.b16 %v2975, %v2971
  %v3960 = vpack.c.b16 %v2980, %v2976
  %v3961 = vpack.c.b16 %v2981, %v2977
  %v3962 = vpack.c.b16 %v2982, %v2978
  %v3963 = vpack.c.b16 %v2983, %v2979
  %v3964 = vpack.c.b16 %v2988, %v2984
  %v3965 = vpack.c.b16 %v2989, %v2985
  %v3966 = vpack.c.b16 %v2990, %v2986
  %v3967 = vpack.c.b16 %v2991, %v2987
  %v3968 = vpack.c.b16 %v2996, %v2992
  %v3969 = vpack.c.b16 %v2997, %v2993
  %v3970 = vpack.c.b16 %v2998, %v2994
  %v3971 = vpack.c.b16 %v2999, %v2995
  %v3972 = vpack.c.b16 %v3004, %v3000
  %v3973 = vpack.c.b16 %v3005, %v3001
  %v3974 = vpack.c.b16 %v3006, %v3002
  %v3975 = vpack.c.b16 %v3007, %v3003
  %v3976 = vpack.c.b16 %v3012, %v3008
  %v3977 = vpack.c.b16 %v3013, %v3009
  %v3978 = vpack.c.b16 %v3014, %v3010
  %v3979 = vpack.c.b16 %v3015, %v3011
  %v3980 = vpack.c.b16 %v3020, %v3016
  %v3981 = vpack.c.b16 %v3021, %v3017
  %v3982 = vpack.c.b16 %v3022, %v3018
  %v3983 = vpack.c.b16 %v3023, %v3019
  %v3984 = vpack.c.b16 %v3028, %v3024
  %v3985 = vpack.c.b16 %v3029, %v3025
  %v3986 = vpack.c.b16 %v3030, %v3026
  %v3987 = vpack.c.b16 %v3031, %v3027
  %v3988 = vpack.c.b16 %v3036, %v3032
  %v3989 = vpack.c.b16 %v3037, %v3033
  %v3990 = vpack.c.b16 %v3038, %v3034
  %v3991 = vpack.c.b16 %v3039, %v3035
  %v3992 = vpack.c.b16 %v3044, %v3040
  %v3993 = vpack.c.b16 %v3045, %v3041
  %v3994 = vpack.c.b16 %v3046, %v3042
  %v3995 = vpack.c.b16 %v3047, %v3043
  %v3996 = vpack.c.b16 %v3052, %v3048
  %v3997 = vpack.c.b16 %v3053, %v3049
  %v3998 = vpack.c.b16 %v3054, %v3050
  %v3999 = vpack.c.b16 %v3055, %v3051
  %v4000 = vpack.c.b16 %v3060, %v3056
  %v4001 = vpack.c.b16 %v3061, %v3057
  %v4002 = vpack.c.b16 %v3062, %v3058
  %v4003 = vpack.c.b16 %v3063, %v3059
  %v4004 = vpack.c.b16 %v3068, %v3064
  %v4005 = vpack.c.b16 %v3069, %v3065
  %v4006 = vpack.c.b16 %v3070, %v3066
  %v4007 = vpack.c.b16 %v3071, %v3067
  %v4008 = vpack.c.b16 %v3076, %v3072
  %v4009 = vpack.c.b16 %v3077, %v3073
  %v4010 = vpack.c.b16 %v3078, %v3074
  %v4011 = vpack.c.b16 %v3079, %v3075
  %v4012 = vpack.c.b16 %v3084, %v3080
  %v4013 = vpack.c.b16 %v3085, %v3081
  %v4014 = vpack.c.b16 %v3086, %v3082
  %v4015 = vpack.c.b16 %v3087, %v3083
  %v4016 = vpack.c.b16 %v3092, %v3088
  %v4017 = vpack.c.b16 %v3093, %v3089
  %v4018 = vpack.c.b16 %v3094, %v3090
  %v4019 = vpack.c.b16 %v3095, %v3091
  %v4020 = vpack.c.b16 %v3100, %v3096
  %v4021 = vpack.c.b16 %v3101, %v3097
  %v4022 = vpack.c.b16 %v3102, %v3098
  %v4023 = vpack.c.b16 %v3103, %v3099
  %v4024 = vpack.c.b16 %v3108, %v3104
  %v4025 = vpack.c.b16 %v3109, %v3105
  %v4026 = vpack.c.b16 %v3110, %v3106
  %v4027 = vpack.c.b16 %v3111, %v3107
  %v4028 = vpack.c.b16 %v3116, %v3112
  %v4029 = vpack.c.b16 %v3117, %v3113
  %v4030 = vpack.c.b16 %v3118, %v3114
  %v4031 = vpack.c.b16 %v3119, %v3115
  %v4032 = vpack.c.b16 %v3124, %v3120
  %v4033 = vpack.c.b16 %v3125, %v3121
  %v4034 = vpack.c.b16 %v3126, %v3122
  %v4035 = vpack.c.b16 %v3127, %v3123
  %v4036 = vpack.c.b16 %v3132, %v3128
  %v4037 = vpack.c.b16 %v3133, %v3129
  %v4038 = vpack.c.b16 %v3134, %v3130
  %v4039 = vpack.c.b16 %v3135, %v3131
  %v4040 = vpack.c.b16 %v3140, %v3136
  %v4041 = vpack.c.b16 %v3141, %v3137
  %v4042 = vpack.c.b16 %v3142, %v3138
  %v4043 = vpack.c.b16 %v3143, %v3139
  %v4044 = vpack.c.b16 %v3148, %v3144
  %v4045 = vpack.c.b16 %v3149, %v3145
  %v4046 = vpack.c.b16 %v3150, %v3146
  %v4047 = vpack.c.b16 %v3151, %v3147
  %v4048 = vpack.c.b16 %v3156, %v3152
  %v4049 = vpack.c.b16 %v3157, %v3153
  %v4050 = vpack.c.b16 %v3158, %v3154
  %v4051 = vpack.c.b16 %v3159, %v3155
  %v4052 = vpack.c.b16 %v3164, %v3160
  %v4053 = vpack.c.b16 %v3165, %v3161
  %v4054 = vpack.c.b16 %v3166, %v3162
  %v4055 = vpack.c.b16 %v3167, %v3163
  %v4056 = vpack.c.b16 %v3172, %v3168
  %v4057 = vpack.c.b16 %v3173, %v3169
  %v4058 = vpack.c.b16 %v3174, %v3170
  %v4059 = vpack.c.b16 %v3175, %v3171
  %v4060 = vpack.c.b16 %v3180, %v3176
  %v4061 = vpack.c.b16 %v3181, %v3177
  %v4062 = vpack.c.b16 %v3182, %v3178
  %v4063 = vpack.c.b16 %v3183, %v3179
  %v4064 = vpack.c.b16 %v3188, %v3184
  %v4065 = vpack.c.b16 %v3189, %v3185
  %v4066 = vpack.c.b16 %v3190, %v3186
  %v4067 = vpack.c.b16 %v3191, %v3187
  %v4068 = vpack.c.b16 %v3196, %v3192
  %v4069 = vpack.c.b16 %v3197, %v3193
  %v4070 = vpack.c.b16 %v3198, %v3194
  %v4071 = vpack.c.b16 %v3199, %v3195
  %v4072 = vpack.c.b16 %v3204, %v3200
  %v4073 = vpack.c.b16 %v3205, %v3201
  %v4074 = vpack.c.b16 %v3206, %v3202
  %v4075 = vpack.c.b16 %v3207, %v3203
  %v4076 = vpack.c.b16 %v3212, %v3208
  %v4077 = vpack.c.b16 %v3213, %v3209
  %v4078 = vpack.c.b16 %v3214, %v3210
  %v4079 = vpack.c.b16 %v3215, %v3211
  %v4080 = vpack.c.b16 %v3220, %v3216
  %v4081 = vpack.c.b16 %v3221, %v3217
  %v4082 = vpack.c.b16 %v3222, %v3218
  %v4083 = vpack.c.b16 %v3223, %v3219
  %v4084 = vpack.c.b16 %v3228, %v3224
  %v4085 = vpack.c.b16 %v3229, %v3225
  %v4086 = vpack.c.b16 %v3230, %v3226
  %v4087 = vpack.c.b16 %v3231, %v3227
  %v4088 = vpack.c.b16 %v3236, %v3232
  %v4089 = vpack.c.b16 %v3237, %v3233
  %v4090 = vpack.c.b16 %v3238, %v3234
  %v4091 = vpack.c.b16 %v3239, %v3235
  %v4092 = vpack.c.b16 %v3244, %v3240
  %v4093 = vpack.c.b16 %v3245, %v3241
  %v4094 = vpack.c.b16 %v3246, %v3242
  %v4095 = vpack.c.b16 %v3247, %v3243
  %v4096 = vpack.c.b16 %v3252, %v3248
  %v4097 = vpack.c.b16 %v3253, %v3249
  %v4098 = vpack.c.b16 %v3254, %v3250
  %v4099 = vpack.c.b16 %v3255, %v3251
  %v4100 = vpack.c.b16 %v3260, %v3256
  %v4101 = vpack.c.b16 %v3261, %v3257
  %v4102 = vpack.c.b16 %v3262, %v3258
  %v4103 = vpack.c.b16 %v3263, %v3259
  %v4104 = vpack.c.b16 %v3268, %v3264
  %v4105 = vpack.c.b16 %v3269, %v3265
  %v4106 = vpack.c.b16 %v3270, %v3266
  %v4107 = vpack.c.b16 %v3271, %v3267
  %v4108 = vpack.c.b16 %v3276, %v3272
  %v4109 = vpack.c.b16 %v3277, %v3273
  %v4110 = vpack.c.b16 %v3278, %v3274
  %v4111 = vpack.c.b16 %v3279, %v3275
  %v4112 = vpack.c.b16 %v3284, %v3280
  %v4113 = vpack.c.b16 %v3285, %v3281
  %v4114 = vpack.c.b16 %v3286, %v3282
  %v4115 = vpack.c.b16 %v3287, %v3283
  %v4116 = vpack.c.b16 %v3292, %v3288
  %v4117 = vpack.c.b16 %v3293, %v3289
  %v4118 = vpack.c.b16 %v3294, %v3290
  %v4119 = vpack.c.b16 %v3295, %v3291
  %v4120 = vpack.c.b16 %v3300, %v3296
  %v4121 = vpack.c.b16 %v3301, %v3297
  %v4122 = vpack.c.b16 %v3302, %v3298
  %v4123 = vpack.c.b16 %v3303, %v3299
  %v4124 = vpack.c.b16 %v3308, %v3304
  %v4125 = vpack.c.b16 %v3309, %v3305
  %v4126 = vpack.c.b16 %v3310, %v3306
  %v4127 = vpack.c.b16 %v3311, %v3307
  %v4128 = vpack.c.b16 %v3316, %v3312
  %v4129 = vpack.c.b16 %v3317, %v3313
  %v4130 = vpack.c.b16 %v3318, %v3314
  %v4131 = vpack.c.b16 %v3319, %v3315
  %v4132 = vpack.c.b16 %v3324, %v3320
  %v4133 = vpack.c.b16 %v3325, %v3321
  %v4134 = vpack.c.b16 %v3326, %v3322
  %v4135 = vpack.c.b16 %v3327, %v3323
  %v4136 = vpack.c.b16 %v3332, %v3328
  %v4137 = vpack.c.b16 %v3333, %v3329
  %v4138 = vpack.c.b16 %v3334, %v3330
  %v4139 = vpack.c.b16 %v3335, %v3331
  %v4140 = vpack.c.b16 %v3340, %v3336
  %v4141 = vpack.c.b16 %v3341, %v3337
  %v4142 = vpack.c.b16 %v3342, %v3338
  %v4143 = vpack.c.b16 %v3343, %v3339
  %4944 = vmatprep.subr.bf16.mxu0 %v3373
  %4945 = vmatpush1.bf16.msra.mxu0 %v3372
  %4946 = vmatprep.subr.bf16.mxu0 %v3369
  %4947 = vmatpush1.bf16.msra.mxu0 %v3368
  %4948 = vmatprep.subr.bf16.mxu0 %v3365
  %4949 = vmatpush1.bf16.msra.mxu0 %v3364
  %4950 = vmatprep.subr.bf16.mxu0 %v3361
  %4951 = vmatpush1.bf16.msra.mxu0 %v3360
  %4952 = vmatprep.subr.bf16.mxu0 %v3357
  %4953 = vmatpush1.bf16.msra.mxu0 %v3356
  %4954 = vmatprep.subr.bf16.mxu0 %v3353
  %4955 = vmatpush1.bf16.msra.mxu0 %v3352
  %4956 = vmatprep.subr.bf16.mxu0 %v3349
  %4957 = vmatpush1.bf16.msra.mxu0 %v3348
  %4958 = vmatprep.subr.bf16.mxu0 %v3345
  %4959 = vmatpush1.bf16.msra.mxu0 %v3344
  %4960 = vmatprep.subr.bf16.mxu0 %v3405
  %4961 = vmatpush2.bf16.msra.mxu0 %v3404
  %4962 = vmatprep.subr.bf16.mxu0 %v3401
  %4963 = vmatpush2.bf16.msra.mxu0 %v3400
  %4964 = vmatprep.subr.bf16.mxu0 %v3397
  %4965 = vmatpush2.bf16.msra.mxu0 %v3396
  %4966 = vmatprep.subr.bf16.mxu0 %v3393
  %4967 = vmatpush2.bf16.msra.mxu0 %v3392
  %4968 = vmatprep.subr.bf16.mxu0 %v3389
  %4969 = vmatpush2.bf16.msra.mxu0 %v3388
  %4970 = vmatprep.subr.bf16.mxu0 %v3385
  %4971 = vmatpush2.bf16.msra.mxu0 %v3384
  %4972 = vmatprep.subr.bf16.mxu0 %v3381
  %4973 = vmatpush2.bf16.msra.mxu0 %v3380
  %4974 = vmatprep.subr.bf16.mxu0 %v3377
  %4975 = vmatpush2.bf16.msra.mxu0 %v3376
  %4976 = vmatprep.mubr.bf16.mxu0 %v895
  %4977 = vmatmul.mubr.bf16.gmra.mxu0 %v894
  %v4978 = vpop.f32.mrf.mxu0
  %v4979 = vadd.f32 %v839, %v4978
  %v4980 = vpop.f32.mrf.mxu0
  %v4981 = vadd.f32 %v843, %v4980
  %v4982 = vpop.f32.mrf.mxu0
  %v4983 = vpop.f32.mrf.mxu0
  %4984 = vdwg.mxu0
  %4985 = vmatprep.subr.bf16.mxu0 %v3437
  %4986 = vmatpush1.bf16.msra.mxu0 %v3436
  %4987 = vmatprep.subr.bf16.mxu0 %v3433
  %4988 = vmatpush1.bf16.msra.mxu0 %v3432
  %4989 = vmatprep.subr.bf16.mxu0 %v3429
  %4990 = vmatpush1.bf16.msra.mxu0 %v3428
  %4991 = vmatprep.subr.bf16.mxu0 %v3425
  %4992 = vmatpush1.bf16.msra.mxu0 %v3424
  %4993 = vmatprep.subr.bf16.mxu0 %v3421
  %4994 = vmatpush1.bf16.msra.mxu0 %v3420
  %4995 = vmatprep.subr.bf16.mxu0 %v3417
  %4996 = vmatpush1.bf16.msra.mxu0 %v3416
  %4997 = vmatprep.subr.bf16.mxu0 %v3413
  %4998 = vmatpush1.bf16.msra.mxu0 %v3412
  %4999 = vmatprep.subr.bf16.mxu0 %v3409
  %5000 = vmatpush1.bf16.msra.mxu0 %v3408
  %5001 = vmatprep.subr.bf16.mxu0 %v3469
  %5002 = vmatpush2.bf16.msra.mxu0 %v3468
  %5003 = vmatprep.subr.bf16.mxu0 %v3465
  %5004 = vmatpush2.bf16.msra.mxu0 %v3464
  %5005 = vmatprep.subr.bf16.mxu0 %v3461
  %5006 = vmatpush2.bf16.msra.mxu0 %v3460
  %5007 = vmatprep.subr.bf16.mxu0 %v3457
  %5008 = vmatpush2.bf16.msra.mxu0 %v3456
  %5009 = vmatprep.subr.bf16.mxu0 %v3453
  %5010 = vmatpush2.bf16.msra.mxu0 %v3452
  %5011 = vmatprep.subr.bf16.mxu0 %v3449
  %5012 = vmatpush2.bf16.msra.mxu0 %v3448
  %5013 = vmatprep.subr.bf16.mxu0 %v3445
  %5014 = vmatpush2.bf16.msra.mxu0 %v3444
  %5015 = vmatprep.subr.bf16.mxu0 %v3441
  %5016 = vmatpush2.bf16.msra.mxu0 %v3440
  %5017 = vmatprep.mubr.bf16.mxu0 %v897
  %5018 = vmatmul.mubr.bf16.gmra.mxu0 %v896
  %v5019 = vpop.f32.mrf.mxu0
  %v5020 = vadd.f32 %v4979, %v5019
  %v5021 = vpop.f32.mrf.mxu0
  %v5022 = vadd.f32 %v4981, %v5021
  %v5023 = vpop.f32.mrf.mxu0
  %v5024 = vpop.f32.mrf.mxu0
  %5025 = vdwg.mxu0
  %5026 = vmatprep.subr.bf16.mxu0 %v3501
  %5027 = vmatpush1.bf16.msra.mxu0 %v3500
  %5028 = vmatprep.subr.bf16.mxu0 %v3497
  %5029 = vmatpush1.bf16.msra.mxu0 %v3496
  %5030 = vmatprep.subr.bf16.mxu0 %v3493
  %5031 = vmatpush1.bf16.msra.mxu0 %v3492
  %5032 = vmatprep.subr.bf16.mxu0 %v3489
  %5033 = vmatpush1.bf16.msra.mxu0 %v3488
  %5034 = vmatprep.subr.bf16.mxu0 %v3485
  %5035 = vmatpush1.bf16.msra.mxu0 %v3484
  %5036 = vmatprep.subr.bf16.mxu0 %v3481
  %5037 = vmatpush1.bf16.msra.mxu0 %v3480
  %5038 = vmatprep.subr.bf16.mxu0 %v3477
  %5039 = vmatpush1.bf16.msra.mxu0 %v3476
  %5040 = vmatprep.subr.bf16.mxu0 %v3473
  %5041 = vmatpush1.bf16.msra.mxu0 %v3472
  %5042 = vmatprep.subr.bf16.mxu0 %v3533
  %5043 = vmatpush2.bf16.msra.mxu0 %v3532
  %5044 = vmatprep.subr.bf16.mxu0 %v3529
  %5045 = vmatpush2.bf16.msra.mxu0 %v3528
  %5046 = vmatprep.subr.bf16.mxu0 %v3525
  %5047 = vmatpush2.bf16.msra.mxu0 %v3524
  %5048 = vmatprep.subr.bf16.mxu0 %v3521
  %5049 = vmatpush2.bf16.msra.mxu0 %v3520
  %5050 = vmatprep.subr.bf16.mxu0 %v3517
  %5051 = vmatpush2.bf16.msra.mxu0 %v3516
  %5052 = vmatprep.subr.bf16.mxu0 %v3513
  %5053 = vmatpush2.bf16.msra.mxu0 %v3512
  %5054 = vmatprep.subr.bf16.mxu0 %v3509
  %5055 = vmatpush2.bf16.msra.mxu0 %v3508
  %5056 = vmatprep.subr.bf16.mxu0 %v3505
  %5057 = vmatpush2.bf16.msra.mxu0 %v3504
  %5058 = vmatprep.mubr.bf16.mxu0 %v899
  %5059 = vmatmul.mubr.bf16.gmra.mxu0 %v898
  %v5060 = vpop.f32.mrf.mxu0
  %v5061 = vadd.f32 %v5020, %v5060
  %v5062 = vpop.f32.mrf.mxu0
  %v5063 = vadd.f32 %v5022, %v5062
  %v5064 = vpop.f32.mrf.mxu0
  %v5065 = vpop.f32.mrf.mxu0
  %5066 = vdwg.mxu0
  %5067 = vmatprep.subr.bf16.mxu0 %v3565
  %5068 = vmatpush1.bf16.msra.mxu0 %v3564
  %5069 = vmatprep.subr.bf16.mxu0 %v3561
  %5070 = vmatpush1.bf16.msra.mxu0 %v3560
  %5071 = vmatprep.subr.bf16.mxu0 %v3557
  %5072 = vmatpush1.bf16.msra.mxu0 %v3556
  %5073 = vmatprep.subr.bf16.mxu0 %v3553
  %5074 = vmatpush1.bf16.msra.mxu0 %v3552
  %5075 = vmatprep.subr.bf16.mxu0 %v3549
  %5076 = vmatpush1.bf16.msra.mxu0 %v3548
  %5077 = vmatprep.subr.bf16.mxu0 %v3545
  %5078 = vmatpush1.bf16.msra.mxu0 %v3544
  %5079 = vmatprep.subr.bf16.mxu0 %v3541
  %5080 = vmatpush1.bf16.msra.mxu0 %v3540
  %5081 = vmatprep.subr.bf16.mxu0 %v3537
  %5082 = vmatpush1.bf16.msra.mxu0 %v3536
  %5083 = vmatprep.subr.bf16.mxu0 %v3597
  %5084 = vmatpush2.bf16.msra.mxu0 %v3596
  %5085 = vmatprep.subr.bf16.mxu0 %v3593
  %5086 = vmatpush2.bf16.msra.mxu0 %v3592
  %5087 = vmatprep.subr.bf16.mxu0 %v3589
  %5088 = vmatpush2.bf16.msra.mxu0 %v3588
  %5089 = vmatprep.subr.bf16.mxu0 %v3585
  %5090 = vmatpush2.bf16.msra.mxu0 %v3584
  %5091 = vmatprep.subr.bf16.mxu0 %v3581
  %5092 = vmatpush2.bf16.msra.mxu0 %v3580
  %5093 = vmatprep.subr.bf16.mxu0 %v3577
  %5094 = vmatpush2.bf16.msra.mxu0 %v3576
  %5095 = vmatprep.subr.bf16.mxu0 %v3573
  %5096 = vmatpush2.bf16.msra.mxu0 %v3572
  %5097 = vmatprep.subr.bf16.mxu0 %v3569
  %5098 = vmatpush2.bf16.msra.mxu0 %v3568
  %5099 = vmatprep.mubr.bf16.mxu0 %v901
  %5100 = vmatmul.mubr.bf16.gmra.mxu0 %v900
  %v5101 = vpop.f32.mrf.mxu0
  %v5102 = vadd.f32 %v5061, %v5101
  %v5103 = vpop.f32.mrf.mxu0
  %v5104 = vadd.f32 %v5063, %v5103
  %v5105 = vpop.f32.mrf.mxu0
  %v5106 = vpop.f32.mrf.mxu0
  %5107 = vdwg.mxu0
  %5108 = vmatprep.subr.bf16.mxu0 %v3629
  %5109 = vmatpush1.bf16.msra.mxu0 %v3628
  %5110 = vmatprep.subr.bf16.mxu0 %v3625
  %5111 = vmatpush1.bf16.msra.mxu0 %v3624
  %5112 = vmatprep.subr.bf16.mxu0 %v3621
  %5113 = vmatpush1.bf16.msra.mxu0 %v3620
  %5114 = vmatprep.subr.bf16.mxu0 %v3617
  %5115 = vmatpush1.bf16.msra.mxu0 %v3616
  %5116 = vmatprep.subr.bf16.mxu0 %v3613
  %5117 = vmatpush1.bf16.msra.mxu0 %v3612
  %5118 = vmatprep.subr.bf16.mxu0 %v3609
  %5119 = vmatpush1.bf16.msra.mxu0 %v3608
  %5120 = vmatprep.subr.bf16.mxu0 %v3605
  %5121 = vmatpush1.bf16.msra.mxu0 %v3604
  %5122 = vmatprep.subr.bf16.mxu0 %v3601
  %5123 = vmatpush1.bf16.msra.mxu0 %v3600
  %5124 = vmatprep.subr.bf16.mxu0 %v3661
  %5125 = vmatpush2.bf16.msra.mxu0 %v3660
  %5126 = vmatprep.subr.bf16.mxu0 %v3657
  %5127 = vmatpush2.bf16.msra.mxu0 %v3656
  %5128 = vmatprep.subr.bf16.mxu0 %v3653
  %5129 = vmatpush2.bf16.msra.mxu0 %v3652
  %5130 = vmatprep.subr.bf16.mxu0 %v3649
  %5131 = vmatpush2.bf16.msra.mxu0 %v3648
  %5132 = vmatprep.subr.bf16.mxu0 %v3645
  %5133 = vmatpush2.bf16.msra.mxu0 %v3644
  %5134 = vmatprep.subr.bf16.mxu0 %v3641
  %5135 = vmatpush2.bf16.msra.mxu0 %v3640
  %5136 = vmatprep.subr.bf16.mxu0 %v3637
  %5137 = vmatpush2.bf16.msra.mxu0 %v3636
  %5138 = vmatprep.subr.bf16.mxu0 %v3633
  %5139 = vmatpush2.bf16.msra.mxu0 %v3632
  %5140 = vmatprep.mubr.bf16.mxu0 %v903
  %5141 = vmatmul.mubr.bf16.gmra.mxu0 %v902
  %v5142 = vpop.f32.mrf.mxu0
  %v5143 = vadd.f32 %v5102, %v5142
  %v5144 = vpop.f32.mrf.mxu0
  %v5145 = vadd.f32 %v5104, %v5144
  %v5146 = vpop.f32.mrf.mxu0
  %v5147 = vpop.f32.mrf.mxu0
  %5148 = vdwg.mxu0
  %5149 = vmatprep.subr.bf16.mxu0 %v3693
  %5150 = vmatpush1.bf16.msra.mxu0 %v3692
  %5151 = vmatprep.subr.bf16.mxu0 %v3689
  %5152 = vmatpush1.bf16.msra.mxu0 %v3688
  %5153 = vmatprep.subr.bf16.mxu0 %v3685
  %5154 = vmatpush1.bf16.msra.mxu0 %v3684
  %5155 = vmatprep.subr.bf16.mxu0 %v3681
  %5156 = vmatpush1.bf16.msra.mxu0 %v3680
  %5157 = vmatprep.subr.bf16.mxu0 %v3677
  %5158 = vmatpush1.bf16.msra.mxu0 %v3676
  %5159 = vmatprep.subr.bf16.mxu0 %v3673
  %5160 = vmatpush1.bf16.msra.mxu0 %v3672
  %5161 = vmatprep.subr.bf16.mxu0 %v3669
  %5162 = vmatpush1.bf16.msra.mxu0 %v3668
  %5163 = vmatprep.subr.bf16.mxu0 %v3665
  %5164 = vmatpush1.bf16.msra.mxu0 %v3664
  %5165 = vmatprep.subr.bf16.mxu0 %v3725
  %5166 = vmatpush2.bf16.msra.mxu0 %v3724
  %5167 = vmatprep.subr.bf16.mxu0 %v3721
  %5168 = vmatpush2.bf16.msra.mxu0 %v3720
  %5169 = vmatprep.subr.bf16.mxu0 %v3717
  %5170 = vmatpush2.bf16.msra.mxu0 %v3716
  %5171 = vmatprep.subr.bf16.mxu0 %v3713
  %5172 = vmatpush2.bf16.msra.mxu0 %v3712
  %5173 = vmatprep.subr.bf16.mxu0 %v3709
  %5174 = vmatpush2.bf16.msra.mxu0 %v3708
  %5175 = vmatprep.subr.bf16.mxu0 %v3705
  %5176 = vmatpush2.bf16.msra.mxu0 %v3704
  %5177 = vmatprep.subr.bf16.mxu0 %v3701
  %5178 = vmatpush2.bf16.msra.mxu0 %v3700
  %5179 = vmatprep.subr.bf16.mxu0 %v3697
  %5180 = vmatpush2.bf16.msra.mxu0 %v3696
  %5181 = vmatprep.mubr.bf16.mxu0 %v905
  %5182 = vmatmul.mubr.bf16.gmra.mxu0 %v904
  %v5183 = vpop.f32.mrf.mxu0
  %v5184 = vadd.f32 %v5143, %v5183
  %v5185 = vpop.f32.mrf.mxu0
  %v5186 = vadd.f32 %v5145, %v5185
  %v5187 = vpop.f32.mrf.mxu0
  %v5188 = vpop.f32.mrf.mxu0
  %5189 = vdwg.mxu0
  %5190 = vmatprep.subr.bf16.mxu0 %v3757
  %5191 = vmatpush1.bf16.msra.mxu0 %v3756
  %5192 = vmatprep.subr.bf16.mxu0 %v3753
  %5193 = vmatpush1.bf16.msra.mxu0 %v3752
  %5194 = vmatprep.subr.bf16.mxu0 %v3749
  %5195 = vmatpush1.bf16.msra.mxu0 %v3748
  %5196 = vmatprep.subr.bf16.mxu0 %v3745
  %5197 = vmatpush1.bf16.msra.mxu0 %v3744
  %5198 = vmatprep.subr.bf16.mxu0 %v3741
  %5199 = vmatpush1.bf16.msra.mxu0 %v3740
  %5200 = vmatprep.subr.bf16.mxu0 %v3737
  %5201 = vmatpush1.bf16.msra.mxu0 %v3736
  %5202 = vmatprep.subr.bf16.mxu0 %v3733
  %5203 = vmatpush1.bf16.msra.mxu0 %v3732
  %5204 = vmatprep.subr.bf16.mxu0 %v3729
  %5205 = vmatpush1.bf16.msra.mxu0 %v3728
  %5206 = vmatprep.subr.bf16.mxu0 %v3789
  %5207 = vmatpush2.bf16.msra.mxu0 %v3788
  %5208 = vmatprep.subr.bf16.mxu0 %v3785
  %5209 = vmatpush2.bf16.msra.mxu0 %v3784
  %5210 = vmatprep.subr.bf16.mxu0 %v3781
  %5211 = vmatpush2.bf16.msra.mxu0 %v3780
  %5212 = vmatprep.subr.bf16.mxu0 %v3777
  %5213 = vmatpush2.bf16.msra.mxu0 %v3776
  %5214 = vmatprep.subr.bf16.mxu0 %v3773
  %5215 = vmatpush2.bf16.msra.mxu0 %v3772
  %5216 = vmatprep.subr.bf16.mxu0 %v3769
  %5217 = vmatpush2.bf16.msra.mxu0 %v3768
  %5218 = vmatprep.subr.bf16.mxu0 %v3765
  %5219 = vmatpush2.bf16.msra.mxu0 %v3764
  %5220 = vmatprep.subr.bf16.mxu0 %v3761
  %5221 = vmatpush2.bf16.msra.mxu0 %v3760
  %5222 = vmatprep.mubr.bf16.mxu0 %v907
  %5223 = vmatmul.mubr.bf16.gmra.mxu0 %v906
  %v5224 = vpop.f32.mrf.mxu0
  %v5225 = vadd.f32 %v5184, %v5224
  %v5226 = vpop.f32.mrf.mxu0
  %v5227 = vadd.f32 %v5186, %v5226
  %v5228 = vpop.f32.mrf.mxu0
  %v5229 = vpop.f32.mrf.mxu0
  %5230 = vdwg.mxu0
  %5231 = vmatprep.subr.bf16.mxu0 %v3821
  %5232 = vmatpush1.bf16.msra.mxu0 %v3820
  %5233 = vmatprep.subr.bf16.mxu0 %v3817
  %5234 = vmatpush1.bf16.msra.mxu0 %v3816
  %5235 = vmatprep.subr.bf16.mxu0 %v3813
  %5236 = vmatpush1.bf16.msra.mxu0 %v3812
  %5237 = vmatprep.subr.bf16.mxu0 %v3809
  %5238 = vmatpush1.bf16.msra.mxu0 %v3808
  %5239 = vmatprep.subr.bf16.mxu0 %v3805
  %5240 = vmatpush1.bf16.msra.mxu0 %v3804
  %5241 = vmatprep.subr.bf16.mxu0 %v3801
  %5242 = vmatpush1.bf16.msra.mxu0 %v3800
  %5243 = vmatprep.subr.bf16.mxu0 %v3797
  %5244 = vmatpush1.bf16.msra.mxu0 %v3796
  %5245 = vmatprep.subr.bf16.mxu0 %v3793
  %5246 = vmatpush1.bf16.msra.mxu0 %v3792
  %5247 = vmatprep.subr.bf16.mxu0 %v3853
  %5248 = vmatpush2.bf16.msra.mxu0 %v3852
  %5249 = vmatprep.subr.bf16.mxu0 %v3849
  %5250 = vmatpush2.bf16.msra.mxu0 %v3848
  %5251 = vmatprep.subr.bf16.mxu0 %v3845
  %5252 = vmatpush2.bf16.msra.mxu0 %v3844
  %5253 = vmatprep.subr.bf16.mxu0 %v3841
  %5254 = vmatpush2.bf16.msra.mxu0 %v3840
  %5255 = vmatprep.subr.bf16.mxu0 %v3837
  %5256 = vmatpush2.bf16.msra.mxu0 %v3836
  %5257 = vmatprep.subr.bf16.mxu0 %v3833
  %5258 = vmatpush2.bf16.msra.mxu0 %v3832
  %5259 = vmatprep.subr.bf16.mxu0 %v3829
  %5260 = vmatpush2.bf16.msra.mxu0 %v3828
  %5261 = vmatprep.subr.bf16.mxu0 %v3825
  %5262 = vmatpush2.bf16.msra.mxu0 %v3824
  %5263 = vmatprep.mubr.bf16.mxu0 %v909
  %5264 = vmatmul.mubr.bf16.gmra.mxu0 %v908
  %v5265 = vpop.f32.mrf.mxu0
  %v5266 = vadd.f32 %v5225, %v5265
  %v5267 = vpop.f32.mrf.mxu0
  %v5268 = vadd.f32 %v5227, %v5267
  %v5269 = vpop.f32.mrf.mxu0
  %v5270 = vpop.f32.mrf.mxu0
  %5271 = vdwg.mxu0
  %5272 = vmatprep.subr.bf16.mxu0 %v3885
  %5273 = vmatpush1.bf16.msra.mxu0 %v3884
  %5274 = vmatprep.subr.bf16.mxu0 %v3881
  %5275 = vmatpush1.bf16.msra.mxu0 %v3880
  %5276 = vmatprep.subr.bf16.mxu0 %v3877
  %5277 = vmatpush1.bf16.msra.mxu0 %v3876
  %5278 = vmatprep.subr.bf16.mxu0 %v3873
  %5279 = vmatpush1.bf16.msra.mxu0 %v3872
  %5280 = vmatprep.subr.bf16.mxu0 %v3869
  %5281 = vmatpush1.bf16.msra.mxu0 %v3868
  %5282 = vmatprep.subr.bf16.mxu0 %v3865
  %5283 = vmatpush1.bf16.msra.mxu0 %v3864
  %5284 = vmatprep.subr.bf16.mxu0 %v3861
  %5285 = vmatpush1.bf16.msra.mxu0 %v3860
  %5286 = vmatprep.subr.bf16.mxu0 %v3857
  %5287 = vmatpush1.bf16.msra.mxu0 %v3856
  %5288 = vmatprep.subr.bf16.mxu0 %v3917
  %5289 = vmatpush2.bf16.msra.mxu0 %v3916
  %5290 = vmatprep.subr.bf16.mxu0 %v3913
  %5291 = vmatpush2.bf16.msra.mxu0 %v3912
  %5292 = vmatprep.subr.bf16.mxu0 %v3909
  %5293 = vmatpush2.bf16.msra.mxu0 %v3908
  %5294 = vmatprep.subr.bf16.mxu0 %v3905
  %5295 = vmatpush2.bf16.msra.mxu0 %v3904
  %5296 = vmatprep.subr.bf16.mxu0 %v3901
  %5297 = vmatpush2.bf16.msra.mxu0 %v3900
  %5298 = vmatprep.subr.bf16.mxu0 %v3897
  %5299 = vmatpush2.bf16.msra.mxu0 %v3896
  %5300 = vmatprep.subr.bf16.mxu0 %v3893
  %5301 = vmatpush2.bf16.msra.mxu0 %v3892
  %5302 = vmatprep.subr.bf16.mxu0 %v3889
  %5303 = vmatpush2.bf16.msra.mxu0 %v3888
  %5304 = vmatprep.mubr.bf16.mxu0 %v911
  %5305 = vmatmul.mubr.bf16.gmra.mxu0 %v910
  %v5306 = vpop.f32.mrf.mxu0
  %v5307 = vadd.f32 %v5266, %v5306
  %v5308 = vpop.f32.mrf.mxu0
  %v5309 = vadd.f32 %v5268, %v5308
  %v5310 = vpop.f32.mrf.mxu0
  %v5311 = vpop.f32.mrf.mxu0
  %5312 = vdwg.mxu0
  %5313 = vmatprep.subr.bf16.mxu0 %v3949
  %5314 = vmatpush1.bf16.msra.mxu0 %v3948
  %5315 = vmatprep.subr.bf16.mxu0 %v3945
  %5316 = vmatpush1.bf16.msra.mxu0 %v3944
  %5317 = vmatprep.subr.bf16.mxu0 %v3941
  %5318 = vmatpush1.bf16.msra.mxu0 %v3940
  %5319 = vmatprep.subr.bf16.mxu0 %v3937
  %5320 = vmatpush1.bf16.msra.mxu0 %v3936
  %5321 = vmatprep.subr.bf16.mxu0 %v3933
  %5322 = vmatpush1.bf16.msra.mxu0 %v3932
  %5323 = vmatprep.subr.bf16.mxu0 %v3929
  %5324 = vmatpush1.bf16.msra.mxu0 %v3928
  %5325 = vmatprep.subr.bf16.mxu0 %v3925
  %5326 = vmatpush1.bf16.msra.mxu0 %v3924
  %5327 = vmatprep.subr.bf16.mxu0 %v3921
  %5328 = vmatpush1.bf16.msra.mxu0 %v3920
  %5329 = vmatprep.subr.bf16.mxu0 %v3981
  %5330 = vmatpush2.bf16.msra.mxu0 %v3980
  %5331 = vmatprep.subr.bf16.mxu0 %v3977
  %5332 = vmatpush2.bf16.msra.mxu0 %v3976
  %5333 = vmatprep.subr.bf16.mxu0 %v3973
  %5334 = vmatpush2.bf16.msra.mxu0 %v3972
  %5335 = vmatprep.subr.bf16.mxu0 %v3969
  %5336 = vmatpush2.bf16.msra.mxu0 %v3968
  %5337 = vmatprep.subr.bf16.mxu0 %v3965
  %5338 = vmatpush2.bf16.msra.mxu0 %v3964
  %5339 = vmatprep.subr.bf16.mxu0 %v3961
  %5340 = vmatpush2.bf16.msra.mxu0 %v3960
  %5341 = vmatprep.subr.bf16.mxu0 %v3957
  %5342 = vmatpush2.bf16.msra.mxu0 %v3956
  %5343 = vmatprep.subr.bf16.mxu0 %v3953
  %5344 = vmatpush2.bf16.msra.mxu0 %v3952
  %5345 = vmatprep.mubr.bf16.mxu0 %v913
  %5346 = vmatmul.mubr.bf16.gmra.mxu0 %v912
  %v5347 = vpop.f32.mrf.mxu0
  %v5348 = vadd.f32 %v5307, %v5347
  %v5349 = vpop.f32.mrf.mxu0
  %v5350 = vadd.f32 %v5309, %v5349
  %v5351 = vpop.f32.mrf.mxu0
  %v5352 = vpop.f32.mrf.mxu0
  %5353 = vdwg.mxu0
  %5354 = vmatprep.subr.bf16.mxu0 %v4013
  %5355 = vmatpush1.bf16.msra.mxu0 %v4012
  %5356 = vmatprep.subr.bf16.mxu0 %v4009
  %5357 = vmatpush1.bf16.msra.mxu0 %v4008
  %5358 = vmatprep.subr.bf16.mxu0 %v4005
  %5359 = vmatpush1.bf16.msra.mxu0 %v4004
  %5360 = vmatprep.subr.bf16.mxu0 %v4001
  %5361 = vmatpush1.bf16.msra.mxu0 %v4000
  %5362 = vmatprep.subr.bf16.mxu0 %v3997
  %5363 = vmatpush1.bf16.msra.mxu0 %v3996
  %5364 = vmatprep.subr.bf16.mxu0 %v3993
  %5365 = vmatpush1.bf16.msra.mxu0 %v3992
  %5366 = vmatprep.subr.bf16.mxu0 %v3989
  %5367 = vmatpush1.bf16.msra.mxu0 %v3988
  %5368 = vmatprep.subr.bf16.mxu0 %v3985
  %5369 = vmatpush1.bf16.msra.mxu0 %v3984
  %5370 = vmatprep.subr.bf16.mxu0 %v4045
  %5371 = vmatpush2.bf16.msra.mxu0 %v4044
  %5372 = vmatprep.subr.bf16.mxu0 %v4041
  %5373 = vmatpush2.bf16.msra.mxu0 %v4040
  %5374 = vmatprep.subr.bf16.mxu0 %v4037
  %5375 = vmatpush2.bf16.msra.mxu0 %v4036
  %5376 = vmatprep.subr.bf16.mxu0 %v4033
  %5377 = vmatpush2.bf16.msra.mxu0 %v4032
  %5378 = vmatprep.subr.bf16.mxu0 %v4029
  %5379 = vmatpush2.bf16.msra.mxu0 %v4028
  %5380 = vmatprep.subr.bf16.mxu0 %v4025
  %5381 = vmatpush2.bf16.msra.mxu0 %v4024
  %5382 = vmatprep.subr.bf16.mxu0 %v4021
  %5383 = vmatpush2.bf16.msra.mxu0 %v4020
  %5384 = vmatprep.subr.bf16.mxu0 %v4017
  %5385 = vmatpush2.bf16.msra.mxu0 %v4016
  %5386 = vmatprep.mubr.bf16.mxu0 %v915
  %5387 = vmatmul.mubr.bf16.gmra.mxu0 %v914
  %v5388 = vpop.f32.mrf.mxu0
  %v5389 = vadd.f32 %v5348, %v5388
  %v5390 = vpop.f32.mrf.mxu0
  %v5391 = vadd.f32 %v5350, %v5390
  %v5392 = vpop.f32.mrf.mxu0
  %v5393 = vpop.f32.mrf.mxu0
  %5394 = vdwg.mxu0
  %5395 = vmatprep.subr.bf16.mxu0 %v4077
  %5396 = vmatpush1.bf16.msra.mxu0 %v4076
  %5397 = vmatprep.subr.bf16.mxu0 %v4073
  %5398 = vmatpush1.bf16.msra.mxu0 %v4072
  %5399 = vmatprep.subr.bf16.mxu0 %v4069
  %5400 = vmatpush1.bf16.msra.mxu0 %v4068
  %5401 = vmatprep.subr.bf16.mxu0 %v4065
  %5402 = vmatpush1.bf16.msra.mxu0 %v4064
  %5403 = vmatprep.subr.bf16.mxu0 %v4061
  %5404 = vmatpush1.bf16.msra.mxu0 %v4060
  %5405 = vmatprep.subr.bf16.mxu0 %v4057
  %5406 = vmatpush1.bf16.msra.mxu0 %v4056
  %5407 = vmatprep.subr.bf16.mxu0 %v4053
  %5408 = vmatpush1.bf16.msra.mxu0 %v4052
  %5409 = vmatprep.subr.bf16.mxu0 %v4049
  %5410 = vmatpush1.bf16.msra.mxu0 %v4048
  %5411 = vmatprep.subr.bf16.mxu0 %v4109
  %5412 = vmatpush2.bf16.msra.mxu0 %v4108
  %5413 = vmatprep.subr.bf16.mxu0 %v4105
  %5414 = vmatpush2.bf16.msra.mxu0 %v4104
  %5415 = vmatprep.subr.bf16.mxu0 %v4101
  %5416 = vmatpush2.bf16.msra.mxu0 %v4100
  %5417 = vmatprep.subr.bf16.mxu0 %v4097
  %5418 = vmatpush2.bf16.msra.mxu0 %v4096
  %5419 = vmatprep.subr.bf16.mxu0 %v4093
  %5420 = vmatpush2.bf16.msra.mxu0 %v4092
  %5421 = vmatprep.subr.bf16.mxu0 %v4089
  %5422 = vmatpush2.bf16.msra.mxu0 %v4088
  %5423 = vmatprep.subr.bf16.mxu0 %v4085
  %5424 = vmatpush2.bf16.msra.mxu0 %v4084
  %5425 = vmatprep.subr.bf16.mxu0 %v4081
  %5426 = vmatpush2.bf16.msra.mxu0 %v4080
  %5427 = vmatprep.mubr.bf16.mxu0 %v917
  %5428 = vmatmul.mubr.bf16.gmra.mxu0 %v916
  %v5429 = vpop.f32.mrf.mxu0
  %v5430 = vadd.f32 %v5389, %v5429
  %v5431 = vpop.f32.mrf.mxu0
  %v5432 = vadd.f32 %v5391, %v5431
  %v5433 = vpop.f32.mrf.mxu0
  %v5434 = vpop.f32.mrf.mxu0
  %5435 = vdwg.mxu0
  %5436 = vmatprep.subr.bf16.mxu0 %v4141
  %5437 = vmatpush1.bf16.msra.mxu0 %v4140
  %5438 = vmatprep.subr.bf16.mxu0 %v4137
  %5439 = vmatpush1.bf16.msra.mxu0 %v4136
  %5440 = vmatprep.subr.bf16.mxu0 %v4133
  %5441 = vmatpush1.bf16.msra.mxu0 %v4132
  %5442 = vmatprep.subr.bf16.mxu0 %v4129
  %5443 = vmatpush1.bf16.msra.mxu0 %v4128
  %5444 = vmatprep.subr.bf16.mxu0 %v4125
  %5445 = vmatpush1.bf16.msra.mxu0 %v4124
  %5446 = vmatprep.subr.bf16.mxu0 %v4121
  %5447 = vmatpush1.bf16.msra.mxu0 %v4120
  %5448 = vmatprep.subr.bf16.mxu0 %v4117
  %5449 = vmatpush1.bf16.msra.mxu0 %v4116
  %5450 = vmatprep.subr.bf16.mxu0 %v4113
  %5451 = vmatpush1.bf16.msra.mxu0 %v4112
  %5452 = vmatprep.subr.bf16.mxu0 0
  %5453 = vmatpush2.bf16.msra.mxu0 0
  %5454 = vmatprep.subr.bf16.mxu0 0
  %5455 = vmatpush2.bf16.msra.mxu0 0
  %5456 = vmatprep.subr.bf16.mxu0 0
  %5457 = vmatpush2.bf16.msra.mxu0 0
  %5458 = vmatprep.subr.bf16.mxu0 0
  %5459 = vmatpush2.bf16.msra.mxu0 0
  %5460 = vmatprep.subr.bf16.mxu0 0
  %5461 = vmatpush2.bf16.msra.mxu0 0
  %5462 = vmatprep.subr.bf16.mxu0 0
  %5463 = vmatpush2.bf16.msra.mxu0 0
  %5464 = vmatprep.subr.bf16.mxu0 0
  %5465 = vmatpush2.bf16.msra.mxu0 0
  %5466 = vmatprep.subr.bf16.mxu0 0
  %5467 = vmatpush2.bf16.msra.mxu0 0
  %5468 = vmatprep.mubr.bf16.mxu0 0
  %5469 = vmatmul.mubr.bf16.gmra.mxu0 %v918
  %v5470 = vpop.f32.mrf.mxu0
  %v5471 = vadd.f32 %v5430, %v5470
  %v5472 = vpop.f32.mrf.mxu0
  %v5473 = vadd.f32 %v5432, %v5472
  %v5474 = vpop.f32.mrf.mxu0
  %v5475 = vpop.f32.mrf.mxu0
  %5476 = vdwg.mxu0
  %5477 = vmatprep.subr.bf16.mxu0 %v3375
  %5478 = vmatpush1.bf16.msra.mxu0 %v3374
  %5479 = vmatprep.subr.bf16.mxu0 %v3371
  %5480 = vmatpush1.bf16.msra.mxu0 %v3370
  %5481 = vmatprep.subr.bf16.mxu0 %v3367
  %5482 = vmatpush1.bf16.msra.mxu0 %v3366
  %5483 = vmatprep.subr.bf16.mxu0 %v3363
  %5484 = vmatpush1.bf16.msra.mxu0 %v3362
  %5485 = vmatprep.subr.bf16.mxu0 %v3359
  %5486 = vmatpush1.bf16.msra.mxu0 %v3358
  %5487 = vmatprep.subr.bf16.mxu0 %v3355
  %5488 = vmatpush1.bf16.msra.mxu0 %v3354
  %5489 = vmatprep.subr.bf16.mxu0 %v3351
  %5490 = vmatpush1.bf16.msra.mxu0 %v3350
  %5491 = vmatprep.subr.bf16.mxu0 %v3347
  %5492 = vmatpush1.bf16.msra.mxu0 %v3346
  %5493 = vmatprep.subr.bf16.mxu0 %v3407
  %5494 = vmatpush2.bf16.msra.mxu0 %v3406
  %5495 = vmatprep.subr.bf16.mxu0 %v3403
  %5496 = vmatpush2.bf16.msra.mxu0 %v3402
  %5497 = vmatprep.subr.bf16.mxu0 %v3399
  %5498 = vmatpush2.bf16.msra.mxu0 %v3398
  %5499 = vmatprep.subr.bf16.mxu0 %v3395
  %5500 = vmatpush2.bf16.msra.mxu0 %v3394
  %5501 = vmatprep.subr.bf16.mxu0 %v3391
  %5502 = vmatpush2.bf16.msra.mxu0 %v3390
  %5503 = vmatprep.subr.bf16.mxu0 %v3387
  %5504 = vmatpush2.bf16.msra.mxu0 %v3386
  %5505 = vmatprep.subr.bf16.mxu0 %v3383
  %5506 = vmatpush2.bf16.msra.mxu0 %v3382
  %5507 = vmatprep.subr.bf16.mxu0 %v3379
  %5508 = vmatpush2.bf16.msra.mxu0 %v3378
  %5509 = vmatprep.mubr.bf16.mxu0 %v895
  %5510 = vmatmul.mubr.bf16.gmra.mxu0 %v894
  %v5511 = vpop.f32.mrf.mxu0
  %v5512 = vadd.f32 %v847, %v5511
  %v5513 = vpop.f32.mrf.mxu0
  %v5514 = vadd.f32 %v851, %v5513
  %v5515 = vpop.f32.mrf.mxu0
  %v5516 = vpop.f32.mrf.mxu0
  %5517 = vdwg.mxu0
  %5518 = vmatprep.subr.bf16.mxu0 %v3439
  %5519 = vmatpush1.bf16.msra.mxu0 %v3438
  %5520 = vmatprep.subr.bf16.mxu0 %v3435
  %5521 = vmatpush1.bf16.msra.mxu0 %v3434
  %5522 = vmatprep.subr.bf16.mxu0 %v3431
  %5523 = vmatpush1.bf16.msra.mxu0 %v3430
  %5524 = vmatprep.subr.bf16.mxu0 %v3427
  %5525 = vmatpush1.bf16.msra.mxu0 %v3426
  %5526 = vmatprep.subr.bf16.mxu0 %v3423
  %5527 = vmatpush1.bf16.msra.mxu0 %v3422
  %5528 = vmatprep.subr.bf16.mxu0 %v3419
  %5529 = vmatpush1.bf16.msra.mxu0 %v3418
  %5530 = vmatprep.subr.bf16.mxu0 %v3415
  %5531 = vmatpush1.bf16.msra.mxu0 %v3414
  %5532 = vmatprep.subr.bf16.mxu0 %v3411
  %5533 = vmatpush1.bf16.msra.mxu0 %v3410
  %5534 = vmatprep.subr.bf16.mxu0 %v3471
  %5535 = vmatpush2.bf16.msra.mxu0 %v3470
  %5536 = vmatprep.subr.bf16.mxu0 %v3467
  %5537 = vmatpush2.bf16.msra.mxu0 %v3466
  %5538 = vmatprep.subr.bf16.mxu0 %v3463
  %5539 = vmatpush2.bf16.msra.mxu0 %v3462
  %5540 = vmatprep.subr.bf16.mxu0 %v3459
  %5541 = vmatpush2.bf16.msra.mxu0 %v3458
  %5542 = vmatprep.subr.bf16.mxu0 %v3455
  %5543 = vmatpush2.bf16.msra.mxu0 %v3454
  %5544 = vmatprep.subr.bf16.mxu0 %v3451
  %5545 = vmatpush2.bf16.msra.mxu0 %v3450
  %5546 = vmatprep.subr.bf16.mxu0 %v3447
  %5547 = vmatpush2.bf16.msra.mxu0 %v3446
  %5548 = vmatprep.subr.bf16.mxu0 %v3443
  %5549 = vmatpush2.bf16.msra.mxu0 %v3442
  %5550 = vmatprep.mubr.bf16.mxu0 %v897
  %5551 = vmatmul.mubr.bf16.gmra.mxu0 %v896
  %v5552 = vpop.f32.mrf.mxu0
  %v5553 = vadd.f32 %v5512, %v5552
  %v5554 = vpop.f32.mrf.mxu0
  %v5555 = vadd.f32 %v5514, %v5554
  %v5556 = vpop.f32.mrf.mxu0
  %v5557 = vpop.f32.mrf.mxu0
  %5558 = vdwg.mxu0
  %5559 = vmatprep.subr.bf16.mxu0 %v3503
  %5560 = vmatpush1.bf16.msra.mxu0 %v3502
  %5561 = vmatprep.subr.bf16.mxu0 %v3499
  %5562 = vmatpush1.bf16.msra.mxu0 %v3498
  %5563 = vmatprep.subr.bf16.mxu0 %v3495
  %5564 = vmatpush1.bf16.msra.mxu0 %v3494
  %5565 = vmatprep.subr.bf16.mxu0 %v3491
  %5566 = vmatpush1.bf16.msra.mxu0 %v3490
  %5567 = vmatprep.subr.bf16.mxu0 %v3487
  %5568 = vmatpush1.bf16.msra.mxu0 %v3486
  %5569 = vmatprep.subr.bf16.mxu0 %v3483
  %5570 = vmatpush1.bf16.msra.mxu0 %v3482
  %5571 = vmatprep.subr.bf16.mxu0 %v3479
  %5572 = vmatpush1.bf16.msra.mxu0 %v3478
  %5573 = vmatprep.subr.bf16.mxu0 %v3475
  %5574 = vmatpush1.bf16.msra.mxu0 %v3474
  %5575 = vmatprep.subr.bf16.mxu0 %v3535
  %5576 = vmatpush2.bf16.msra.mxu0 %v3534
  %5577 = vmatprep.subr.bf16.mxu0 %v3531
  %5578 = vmatpush2.bf16.msra.mxu0 %v3530
  %5579 = vmatprep.subr.bf16.mxu0 %v3527
  %5580 = vmatpush2.bf16.msra.mxu0 %v3526
  %5581 = vmatprep.subr.bf16.mxu0 %v3523
  %5582 = vmatpush2.bf16.msra.mxu0 %v3522
  %5583 = vmatprep.subr.bf16.mxu0 %v3519
  %5584 = vmatpush2.bf16.msra.mxu0 %v3518
  %5585 = vmatprep.subr.bf16.mxu0 %v3515
  %5586 = vmatpush2.bf16.msra.mxu0 %v3514
  %5587 = vmatprep.subr.bf16.mxu0 %v3511
  %5588 = vmatpush2.bf16.msra.mxu0 %v3510
  %5589 = vmatprep.subr.bf16.mxu0 %v3507
  %5590 = vmatpush2.bf16.msra.mxu0 %v3506
  %5591 = vmatprep.mubr.bf16.mxu0 %v899
  %5592 = vmatmul.mubr.bf16.gmra.mxu0 %v898
  %v5593 = vpop.f32.mrf.mxu0
  %v5594 = vadd.f32 %v5553, %v5593
  %v5595 = vpop.f32.mrf.mxu0
  %v5596 = vadd.f32 %v5555, %v5595
  %v5597 = vpop.f32.mrf.mxu0
  %v5598 = vpop.f32.mrf.mxu0
  %5599 = vdwg.mxu0
  %5600 = vmatprep.subr.bf16.mxu0 %v3567
  %5601 = vmatpush1.bf16.msra.mxu0 %v3566
  %5602 = vmatprep.subr.bf16.mxu0 %v3563
  %5603 = vmatpush1.bf16.msra.mxu0 %v3562
  %5604 = vmatprep.subr.bf16.mxu0 %v3559
  %5605 = vmatpush1.bf16.msra.mxu0 %v3558
  %5606 = vmatprep.subr.bf16.mxu0 %v3555
  %5607 = vmatpush1.bf16.msra.mxu0 %v3554
  %5608 = vmatprep.subr.bf16.mxu0 %v3551
  %5609 = vmatpush1.bf16.msra.mxu0 %v3550
  %5610 = vmatprep.subr.bf16.mxu0 %v3547
  %5611 = vmatpush1.bf16.msra.mxu0 %v3546
  %5612 = vmatprep.subr.bf16.mxu0 %v3543
  %5613 = vmatpush1.bf16.msra.mxu0 %v3542
  %5614 = vmatprep.subr.bf16.mxu0 %v3539
  %5615 = vmatpush1.bf16.msra.mxu0 %v3538
  %5616 = vmatprep.subr.bf16.mxu0 %v3599
  %5617 = vmatpush2.bf16.msra.mxu0 %v3598
  %5618 = vmatprep.subr.bf16.mxu0 %v3595
  %5619 = vmatpush2.bf16.msra.mxu0 %v3594
  %5620 = vmatprep.subr.bf16.mxu0 %v3591
  %5621 = vmatpush2.bf16.msra.mxu0 %v3590
  %5622 = vmatprep.subr.bf16.mxu0 %v3587
  %5623 = vmatpush2.bf16.msra.mxu0 %v3586
  %5624 = vmatprep.subr.bf16.mxu0 %v3583
  %5625 = vmatpush2.bf16.msra.mxu0 %v3582
  %5626 = vmatprep.subr.bf16.mxu0 %v3579
  %5627 = vmatpush2.bf16.msra.mxu0 %v3578
  %5628 = vmatprep.subr.bf16.mxu0 %v3575
  %5629 = vmatpush2.bf16.msra.mxu0 %v3574
  %5630 = vmatprep.subr.bf16.mxu0 %v3571
  %5631 = vmatpush2.bf16.msra.mxu0 %v3570
  %5632 = vmatprep.mubr.bf16.mxu0 %v901
  %5633 = vmatmul.mubr.bf16.gmra.mxu0 %v900
  %v5634 = vpop.f32.mrf.mxu0
  %v5635 = vadd.f32 %v5594, %v5634
  %v5636 = vpop.f32.mrf.mxu0
  %v5637 = vadd.f32 %v5596, %v5636
  %v5638 = vpop.f32.mrf.mxu0
  %v5639 = vpop.f32.mrf.mxu0
  %5640 = vdwg.mxu0
  %5641 = vmatprep.subr.bf16.mxu0 %v3631
  %5642 = vmatpush1.bf16.msra.mxu0 %v3630
  %5643 = vmatprep.subr.bf16.mxu0 %v3627
  %5644 = vmatpush1.bf16.msra.mxu0 %v3626
  %5645 = vmatprep.subr.bf16.mxu0 %v3623
  %5646 = vmatpush1.bf16.msra.mxu0 %v3622
  %5647 = vmatprep.subr.bf16.mxu0 %v3619
  %5648 = vmatpush1.bf16.msra.mxu0 %v3618
  %5649 = vmatprep.subr.bf16.mxu0 %v3615
  %5650 = vmatpush1.bf16.msra.mxu0 %v3614
  %5651 = vmatprep.subr.bf16.mxu0 %v3611
  %5652 = vmatpush1.bf16.msra.mxu0 %v3610
  %5653 = vmatprep.subr.bf16.mxu0 %v3607
  %5654 = vmatpush1.bf16.msra.mxu0 %v3606
  %5655 = vmatprep.subr.bf16.mxu0 %v3603
  %5656 = vmatpush1.bf16.msra.mxu0 %v3602
  %5657 = vmatprep.subr.bf16.mxu0 %v3663
  %5658 = vmatpush2.bf16.msra.mxu0 %v3662
  %5659 = vmatprep.subr.bf16.mxu0 %v3659
  %5660 = vmatpush2.bf16.msra.mxu0 %v3658
  %5661 = vmatprep.subr.bf16.mxu0 %v3655
  %5662 = vmatpush2.bf16.msra.mxu0 %v3654
  %5663 = vmatprep.subr.bf16.mxu0 %v3651
  %5664 = vmatpush2.bf16.msra.mxu0 %v3650
  %5665 = vmatprep.subr.bf16.mxu0 %v3647
  %5666 = vmatpush2.bf16.msra.mxu0 %v3646
  %5667 = vmatprep.subr.bf16.mxu0 %v3643
  %5668 = vmatpush2.bf16.msra.mxu0 %v3642
  %5669 = vmatprep.subr.bf16.mxu0 %v3639
  %5670 = vmatpush2.bf16.msra.mxu0 %v3638
  %5671 = vmatprep.subr.bf16.mxu0 %v3635
  %5672 = vmatpush2.bf16.msra.mxu0 %v3634
  %5673 = vmatprep.mubr.bf16.mxu0 %v903
  %5674 = vmatmul.mubr.bf16.gmra.mxu0 %v902
  %v5675 = vpop.f32.mrf.mxu0
  %v5676 = vadd.f32 %v5635, %v5675
  %v5677 = vpop.f32.mrf.mxu0
  %v5678 = vadd.f32 %v5637, %v5677
  %v5679 = vpop.f32.mrf.mxu0
  %v5680 = vpop.f32.mrf.mxu0
  %5681 = vdwg.mxu0
  %5682 = vmatprep.subr.bf16.mxu0 %v3695
  %5683 = vmatpush1.bf16.msra.mxu0 %v3694
  %5684 = vmatprep.subr.bf16.mxu0 %v3691
  %5685 = vmatpush1.bf16.msra.mxu0 %v3690
  %5686 = vmatprep.subr.bf16.mxu0 %v3687
  %5687 = vmatpush1.bf16.msra.mxu0 %v3686
  %5688 = vmatprep.subr.bf16.mxu0 %v3683
  %5689 = vmatpush1.bf16.msra.mxu0 %v3682
  %5690 = vmatprep.subr.bf16.mxu0 %v3679
  %5691 = vmatpush1.bf16.msra.mxu0 %v3678
  %5692 = vmatprep.subr.bf16.mxu0 %v3675
  %5693 = vmatpush1.bf16.msra.mxu0 %v3674
  %5694 = vmatprep.subr.bf16.mxu0 %v3671
  %5695 = vmatpush1.bf16.msra.mxu0 %v3670
  %5696 = vmatprep.subr.bf16.mxu0 %v3667
  %5697 = vmatpush1.bf16.msra.mxu0 %v3666
  %5698 = vmatprep.subr.bf16.mxu0 %v3727
  %5699 = vmatpush2.bf16.msra.mxu0 %v3726
  %5700 = vmatprep.subr.bf16.mxu0 %v3723
  %5701 = vmatpush2.bf16.msra.mxu0 %v3722
  %5702 = vmatprep.subr.bf16.mxu0 %v3719
  %5703 = vmatpush2.bf16.msra.mxu0 %v3718
  %5704 = vmatprep.subr.bf16.mxu0 %v3715
  %5705 = vmatpush2.bf16.msra.mxu0 %v3714
  %5706 = vmatprep.subr.bf16.mxu0 %v3711
  %5707 = vmatpush2.bf16.msra.mxu0 %v3710
  %5708 = vmatprep.subr.bf16.mxu0 %v3707
  %5709 = vmatpush2.bf16.msra.mxu0 %v3706
  %5710 = vmatprep.subr.bf16.mxu0 %v3703
  %5711 = vmatpush2.bf16.msra.mxu0 %v3702
  %5712 = vmatprep.subr.bf16.mxu0 %v3699
  %5713 = vmatpush2.bf16.msra.mxu0 %v3698
  %5714 = vmatprep.mubr.bf16.mxu0 %v905
  %5715 = vmatmul.mubr.bf16.gmra.mxu0 %v904
  %v5716 = vpop.f32.mrf.mxu0
  %v5717 = vadd.f32 %v5676, %v5716
  %v5718 = vpop.f32.mrf.mxu0
  %v5719 = vadd.f32 %v5678, %v5718
  %v5720 = vpop.f32.mrf.mxu0
  %v5721 = vpop.f32.mrf.mxu0
  %5722 = vdwg.mxu0
  %5723 = vmatprep.subr.bf16.mxu0 %v3759
  %5724 = vmatpush1.bf16.msra.mxu0 %v3758
  %5725 = vmatprep.subr.bf16.mxu0 %v3755
  %5726 = vmatpush1.bf16.msra.mxu0 %v3754
  %5727 = vmatprep.subr.bf16.mxu0 %v3751
  %5728 = vmatpush1.bf16.msra.mxu0 %v3750
  %5729 = vmatprep.subr.bf16.mxu0 %v3747
  %5730 = vmatpush1.bf16.msra.mxu0 %v3746
  %5731 = vmatprep.subr.bf16.mxu0 %v3743
  %5732 = vmatpush1.bf16.msra.mxu0 %v3742
  %5733 = vmatprep.subr.bf16.mxu0 %v3739
  %5734 = vmatpush1.bf16.msra.mxu0 %v3738
  %5735 = vmatprep.subr.bf16.mxu0 %v3735
  %5736 = vmatpush1.bf16.msra.mxu0 %v3734
  %5737 = vmatprep.subr.bf16.mxu0 %v3731
  %5738 = vmatpush1.bf16.msra.mxu0 %v3730
  %5739 = vmatprep.subr.bf16.mxu0 %v3791
  %5740 = vmatpush2.bf16.msra.mxu0 %v3790
  %5741 = vmatprep.subr.bf16.mxu0 %v3787
  %5742 = vmatpush2.bf16.msra.mxu0 %v3786
  %5743 = vmatprep.subr.bf16.mxu0 %v3783
  %5744 = vmatpush2.bf16.msra.mxu0 %v3782
  %5745 = vmatprep.subr.bf16.mxu0 %v3779
  %5746 = vmatpush2.bf16.msra.mxu0 %v3778
  %5747 = vmatprep.subr.bf16.mxu0 %v3775
  %5748 = vmatpush2.bf16.msra.mxu0 %v3774
  %5749 = vmatprep.subr.bf16.mxu0 %v3771
  %5750 = vmatpush2.bf16.msra.mxu0 %v3770
  %5751 = vmatprep.subr.bf16.mxu0 %v3767
  %5752 = vmatpush2.bf16.msra.mxu0 %v3766
  %5753 = vmatprep.subr.bf16.mxu0 %v3763
  %5754 = vmatpush2.bf16.msra.mxu0 %v3762
  %5755 = vmatprep.mubr.bf16.mxu0 %v907
  %5756 = vmatmul.mubr.bf16.gmra.mxu0 %v906
  %v5757 = vpop.f32.mrf.mxu0
  %v5758 = vadd.f32 %v5717, %v5757
  %v5759 = vpop.f32.mrf.mxu0
  %v5760 = vadd.f32 %v5719, %v5759
  %v5761 = vpop.f32.mrf.mxu0
  %v5762 = vpop.f32.mrf.mxu0
  %5763 = vdwg.mxu0
  %5764 = vmatprep.subr.bf16.mxu0 %v3823
  %5765 = vmatpush1.bf16.msra.mxu0 %v3822
  %5766 = vmatprep.subr.bf16.mxu0 %v3819
  %5767 = vmatpush1.bf16.msra.mxu0 %v3818
  %5768 = vmatprep.subr.bf16.mxu0 %v3815
  %5769 = vmatpush1.bf16.msra.mxu0 %v3814
  %5770 = vmatprep.subr.bf16.mxu0 %v3811
  %5771 = vmatpush1.bf16.msra.mxu0 %v3810
  %5772 = vmatprep.subr.bf16.mxu0 %v3807
  %5773 = vmatpush1.bf16.msra.mxu0 %v3806
  %5774 = vmatprep.subr.bf16.mxu0 %v3803
  %5775 = vmatpush1.bf16.msra.mxu0 %v3802
  %5776 = vmatprep.subr.bf16.mxu0 %v3799
  %5777 = vmatpush1.bf16.msra.mxu0 %v3798
  %5778 = vmatprep.subr.bf16.mxu0 %v3795
  %5779 = vmatpush1.bf16.msra.mxu0 %v3794
  %5780 = vmatprep.subr.bf16.mxu0 %v3855
  %5781 = vmatpush2.bf16.msra.mxu0 %v3854
  %5782 = vmatprep.subr.bf16.mxu0 %v3851
  %5783 = vmatpush2.bf16.msra.mxu0 %v3850
  %5784 = vmatprep.subr.bf16.mxu0 %v3847
  %5785 = vmatpush2.bf16.msra.mxu0 %v3846
  %5786 = vmatprep.subr.bf16.mxu0 %v3843
  %5787 = vmatpush2.bf16.msra.mxu0 %v3842
  %5788 = vmatprep.subr.bf16.mxu0 %v3839
  %5789 = vmatpush2.bf16.msra.mxu0 %v3838
  %5790 = vmatprep.subr.bf16.mxu0 %v3835
  %5791 = vmatpush2.bf16.msra.mxu0 %v3834
  %5792 = vmatprep.subr.bf16.mxu0 %v3831
  %5793 = vmatpush2.bf16.msra.mxu0 %v3830
  %5794 = vmatprep.subr.bf16.mxu0 %v3827
  %5795 = vmatpush2.bf16.msra.mxu0 %v3826
  %5796 = vmatprep.mubr.bf16.mxu0 %v909
  %5797 = vmatmul.mubr.bf16.gmra.mxu0 %v908
  %v5798 = vpop.f32.mrf.mxu0
  %v5799 = vadd.f32 %v5758, %v5798
  %v5800 = vpop.f32.mrf.mxu0
  %v5801 = vadd.f32 %v5760, %v5800
  %v5802 = vpop.f32.mrf.mxu0
  %v5803 = vpop.f32.mrf.mxu0
  %5804 = vdwg.mxu0
  %5805 = vmatprep.subr.bf16.mxu0 %v3887
  %5806 = vmatpush1.bf16.msra.mxu0 %v3886
  %5807 = vmatprep.subr.bf16.mxu0 %v3883
  %5808 = vmatpush1.bf16.msra.mxu0 %v3882
  %5809 = vmatprep.subr.bf16.mxu0 %v3879
  %5810 = vmatpush1.bf16.msra.mxu0 %v3878
  %5811 = vmatprep.subr.bf16.mxu0 %v3875
  %5812 = vmatpush1.bf16.msra.mxu0 %v3874
  %5813 = vmatprep.subr.bf16.mxu0 %v3871
  %5814 = vmatpush1.bf16.msra.mxu0 %v3870
  %5815 = vmatprep.subr.bf16.mxu0 %v3867
  %5816 = vmatpush1.bf16.msra.mxu0 %v3866
  %5817 = vmatprep.subr.bf16.mxu0 %v3863
  %5818 = vmatpush1.bf16.msra.mxu0 %v3862
  %5819 = vmatprep.subr.bf16.mxu0 %v3859
  %5820 = vmatpush1.bf16.msra.mxu0 %v3858
  %5821 = vmatprep.subr.bf16.mxu0 %v3919
  %5822 = vmatpush2.bf16.msra.mxu0 %v3918
  %5823 = vmatprep.subr.bf16.mxu0 %v3915
  %5824 = vmatpush2.bf16.msra.mxu0 %v3914
  %5825 = vmatprep.subr.bf16.mxu0 %v3911
  %5826 = vmatpush2.bf16.msra.mxu0 %v3910
  %5827 = vmatprep.subr.bf16.mxu0 %v3907
  %5828 = vmatpush2.bf16.msra.mxu0 %v3906
  %5829 = vmatprep.subr.bf16.mxu0 %v3903
  %5830 = vmatpush2.bf16.msra.mxu0 %v3902
  %5831 = vmatprep.subr.bf16.mxu0 %v3899
  %5832 = vmatpush2.bf16.msra.mxu0 %v3898
  %5833 = vmatprep.subr.bf16.mxu0 %v3895
  %5834 = vmatpush2.bf16.msra.mxu0 %v3894
  %5835 = vmatprep.subr.bf16.mxu0 %v3891
  %5836 = vmatpush2.bf16.msra.mxu0 %v3890
  %5837 = vmatprep.mubr.bf16.mxu0 %v911
  %5838 = vmatmul.mubr.bf16.gmra.mxu0 %v910
  %v5839 = vpop.f32.mrf.mxu0
  %v5840 = vadd.f32 %v5799, %v5839
  %v5841 = vpop.f32.mrf.mxu0
  %v5842 = vadd.f32 %v5801, %v5841
  %v5843 = vpop.f32.mrf.mxu0
  %v5844 = vpop.f32.mrf.mxu0
  %5845 = vdwg.mxu0
  %5846 = vmatprep.subr.bf16.mxu0 %v3951
  %5847 = vmatpush1.bf16.msra.mxu0 %v3950
  %5848 = vmatprep.subr.bf16.mxu0 %v3947
  %5849 = vmatpush1.bf16.msra.mxu0 %v3946
  %5850 = vmatprep.subr.bf16.mxu0 %v3943
  %5851 = vmatpush1.bf16.msra.mxu0 %v3942
  %5852 = vmatprep.subr.bf16.mxu0 %v3939
  %5853 = vmatpush1.bf16.msra.mxu0 %v3938
  %5854 = vmatprep.subr.bf16.mxu0 %v3935
  %5855 = vmatpush1.bf16.msra.mxu0 %v3934
  %5856 = vmatprep.subr.bf16.mxu0 %v3931
  %5857 = vmatpush1.bf16.msra.mxu0 %v3930
  %5858 = vmatprep.subr.bf16.mxu0 %v3927
  %5859 = vmatpush1.bf16.msra.mxu0 %v3926
  %5860 = vmatprep.subr.bf16.mxu0 %v3923
  %5861 = vmatpush1.bf16.msra.mxu0 %v3922
  %5862 = vmatprep.subr.bf16.mxu0 %v3983
  %5863 = vmatpush2.bf16.msra.mxu0 %v3982
  %5864 = vmatprep.subr.bf16.mxu0 %v3979
  %5865 = vmatpush2.bf16.msra.mxu0 %v3978
  %5866 = vmatprep.subr.bf16.mxu0 %v3975
  %5867 = vmatpush2.bf16.msra.mxu0 %v3974
  %5868 = vmatprep.subr.bf16.mxu0 %v3971
  %5869 = vmatpush2.bf16.msra.mxu0 %v3970
  %5870 = vmatprep.subr.bf16.mxu0 %v3967
  %5871 = vmatpush2.bf16.msra.mxu0 %v3966
  %5872 = vmatprep.subr.bf16.mxu0 %v3963
  %5873 = vmatpush2.bf16.msra.mxu0 %v3962
  %5874 = vmatprep.subr.bf16.mxu0 %v3959
  %5875 = vmatpush2.bf16.msra.mxu0 %v3958
  %5876 = vmatprep.subr.bf16.mxu0 %v3955
  %5877 = vmatpush2.bf16.msra.mxu0 %v3954
  %5878 = vmatprep.mubr.bf16.mxu0 %v913
  %5879 = vmatmul.mubr.bf16.gmra.mxu0 %v912
  %v5880 = vpop.f32.mrf.mxu0
  %v5881 = vadd.f32 %v5840, %v5880
  %v5882 = vpop.f32.mrf.mxu0
  %v5883 = vadd.f32 %v5842, %v5882
  %v5884 = vpop.f32.mrf.mxu0
  %v5885 = vpop.f32.mrf.mxu0
  %5886 = vdwg.mxu0
  %5887 = vmatprep.subr.bf16.mxu0 %v4015
  %5888 = vmatpush1.bf16.msra.mxu0 %v4014
  %5889 = vmatprep.subr.bf16.mxu0 %v4011
  %5890 = vmatpush1.bf16.msra.mxu0 %v4010
  %5891 = vmatprep.subr.bf16.mxu0 %v4007
  %5892 = vmatpush1.bf16.msra.mxu0 %v4006
  %5893 = vmatprep.subr.bf16.mxu0 %v4003
  %5894 = vmatpush1.bf16.msra.mxu0 %v4002
  %5895 = vmatprep.subr.bf16.mxu0 %v3999
  %5896 = vmatpush1.bf16.msra.mxu0 %v3998
  %5897 = vmatprep.subr.bf16.mxu0 %v3995
  %5898 = vmatpush1.bf16.msra.mxu0 %v3994
  %5899 = vmatprep.subr.bf16.mxu0 %v3991
  %5900 = vmatpush1.bf16.msra.mxu0 %v3990
  %5901 = vmatprep.subr.bf16.mxu0 %v3987
  %5902 = vmatpush1.bf16.msra.mxu0 %v3986
  %5903 = vmatprep.subr.bf16.mxu0 %v4047
  %5904 = vmatpush2.bf16.msra.mxu0 %v4046
  %5905 = vmatprep.subr.bf16.mxu0 %v4043
  %5906 = vmatpush2.bf16.msra.mxu0 %v4042
  %5907 = vmatprep.subr.bf16.mxu0 %v4039
  %5908 = vmatpush2.bf16.msra.mxu0 %v4038
  %5909 = vmatprep.subr.bf16.mxu0 %v4035
  %5910 = vmatpush2.bf16.msra.mxu0 %v4034
  %5911 = vmatprep.subr.bf16.mxu0 %v4031
  %5912 = vmatpush2.bf16.msra.mxu0 %v4030
  %5913 = vmatprep.subr.bf16.mxu0 %v4027
  %5914 = vmatpush2.bf16.msra.mxu0 %v4026
  %5915 = vmatprep.subr.bf16.mxu0 %v4023
  %5916 = vmatpush2.bf16.msra.mxu0 %v4022
  %5917 = vmatprep.subr.bf16.mxu0 %v4019
  %5918 = vmatpush2.bf16.msra.mxu0 %v4018
  %5919 = vmatprep.mubr.bf16.mxu0 %v915
  %5920 = vmatmul.mubr.bf16.gmra.mxu0 %v914
  %v5921 = vpop.f32.mrf.mxu0
  %v5922 = vadd.f32 %v5881, %v5921
  %v5923 = vpop.f32.mrf.mxu0
  %v5924 = vadd.f32 %v5883, %v5923
  %v5925 = vpop.f32.mrf.mxu0
  %v5926 = vpop.f32.mrf.mxu0
  %5927 = vdwg.mxu0
  %5928 = vmatprep.subr.bf16.mxu0 %v4079
  %5929 = vmatpush1.bf16.msra.mxu0 %v4078
  %5930 = vmatprep.subr.bf16.mxu0 %v4075
  %5931 = vmatpush1.bf16.msra.mxu0 %v4074
  %5932 = vmatprep.subr.bf16.mxu0 %v4071
  %5933 = vmatpush1.bf16.msra.mxu0 %v4070
  %5934 = vmatprep.subr.bf16.mxu0 %v4067
  %5935 = vmatpush1.bf16.msra.mxu0 %v4066
  %5936 = vmatprep.subr.bf16.mxu0 %v4063
  %5937 = vmatpush1.bf16.msra.mxu0 %v4062
  %5938 = vmatprep.subr.bf16.mxu0 %v4059
  %5939 = vmatpush1.bf16.msra.mxu0 %v4058
  %5940 = vmatprep.subr.bf16.mxu0 %v4055
  %5941 = vmatpush1.bf16.msra.mxu0 %v4054
  %5942 = vmatprep.subr.bf16.mxu0 %v4051
  %5943 = vmatpush1.bf16.msra.mxu0 %v4050
  %5944 = vmatprep.subr.bf16.mxu0 %v4111
  %5945 = vmatpush2.bf16.msra.mxu0 %v4110
  %5946 = vmatprep.subr.bf16.mxu0 %v4107
  %5947 = vmatpush2.bf16.msra.mxu0 %v4106
  %5948 = vmatprep.subr.bf16.mxu0 %v4103
  %5949 = vmatpush2.bf16.msra.mxu0 %v4102
  %5950 = vmatprep.subr.bf16.mxu0 %v4099
  %5951 = vmatpush2.bf16.msra.mxu0 %v4098
  %5952 = vmatprep.subr.bf16.mxu0 %v4095
  %5953 = vmatpush2.bf16.msra.mxu0 %v4094
  %5954 = vmatprep.subr.bf16.mxu0 %v4091
  %5955 = vmatpush2.bf16.msra.mxu0 %v4090
  %5956 = vmatprep.subr.bf16.mxu0 %v4087
  %5957 = vmatpush2.bf16.msra.mxu0 %v4086
  %5958 = vmatprep.subr.bf16.mxu0 %v4083
  %5959 = vmatpush2.bf16.msra.mxu0 %v4082
  %5960 = vmatprep.mubr.bf16.mxu0 %v917
  %5961 = vmatmul.mubr.bf16.gmra.mxu0 %v916
  %v5962 = vpop.f32.mrf.mxu0
  %v5963 = vadd.f32 %v5922, %v5962
  %v5964 = vpop.f32.mrf.mxu0
  %v5965 = vadd.f32 %v5924, %v5964
  %v5966 = vpop.f32.mrf.mxu0
  %v5967 = vpop.f32.mrf.mxu0
  %5968 = vdwg.mxu0
  %5969 = vmatprep.subr.bf16.mxu0 %v4143
  %5970 = vmatpush1.bf16.msra.mxu0 %v4142
  %5971 = vmatprep.subr.bf16.mxu0 %v4139
  %5972 = vmatpush1.bf16.msra.mxu0 %v4138
  %5973 = vmatprep.subr.bf16.mxu0 %v4135
  %5974 = vmatpush1.bf16.msra.mxu0 %v4134
  %5975 = vmatprep.subr.bf16.mxu0 %v4131
  %5976 = vmatpush1.bf16.msra.mxu0 %v4130
  %5977 = vmatprep.subr.bf16.mxu0 %v4127
  %5978 = vmatpush1.bf16.msra.mxu0 %v4126
  %5979 = vmatprep.subr.bf16.mxu0 %v4123
  %5980 = vmatpush1.bf16.msra.mxu0 %v4122
  %5981 = vmatprep.subr.bf16.mxu0 %v4119
  %5982 = vmatpush1.bf16.msra.mxu0 %v4118
  %5983 = vmatprep.subr.bf16.mxu0 %v4115
  %5984 = vmatpush1.bf16.msra.mxu0 %v4114
  %5985 = vmatprep.subr.bf16.mxu0 0
  %5986 = vmatpush2.bf16.msra.mxu0 0
  %5987 = vmatprep.subr.bf16.mxu0 0
  %5988 = vmatpush2.bf16.msra.mxu0 0
  %5989 = vmatprep.subr.bf16.mxu0 0
  %5990 = vmatpush2.bf16.msra.mxu0 0
  %5991 = vmatprep.subr.bf16.mxu0 0
  %5992 = vmatpush2.bf16.msra.mxu0 0
  %5993 = vmatprep.subr.bf16.mxu0 0
  %5994 = vmatpush2.bf16.msra.mxu0 0
  %5995 = vmatprep.subr.bf16.mxu0 0
  %5996 = vmatpush2.bf16.msra.mxu0 0
  %5997 = vmatprep.subr.bf16.mxu0 0
  %5998 = vmatpush2.bf16.msra.mxu0 0
  %5999 = vmatprep.subr.bf16.mxu0 0
  %6000 = vmatpush2.bf16.msra.mxu0 0
  %6001 = vmatprep.mubr.bf16.mxu0 0
  %6002 = vmatmul.mubr.bf16.gmra.mxu0 %v918
  %v6003 = vpop.f32.mrf.mxu0
  %v6004 = vadd.f32 %v5963, %v6003
  %v6005 = vpop.f32.mrf.mxu0
  %v6006 = vadd.f32 %v5965, %v6005
  %v6007 = vpop.f32.mrf.mxu0
  %v6008 = vpop.f32.mrf.mxu0
  %6009 = vdwg.mxu0
  %v6010 = vmax.f32 %v5471, 0.0
  %v6011 = vmax.f32 %v5473, 0.0
  %v6012 = vmax.f32 %v6004, 0.0
  %v6013 = vmax.f32 %v6006, 0.0
  %v6014 = vpack.c.bf16 %v6010, %v6010
  %v6015 = vpack.c.bf16 %v6011, %v6011
  %v6016 = vpack.c.bf16 %v6012, %v6012
  %v6017 = vpack.c.bf16 %v6013, %v6013
  %v6018 = vld [vmem:[%s3] sm:$0xf]
  %v6019 = vld [vmem:[%s3 + $0x4] sm:$0xf]
  %v6020 = vld [vmem:[%s3 + $0x8] sm:$0xf]
  %v6021 = vld [vmem:[%s3 + $0xc] sm:$0xf]
  %v6022 = vld [vmem:[%s3 + $0x10] sm:$0xf]
  %v6023 = vld [vmem:[%s3 + $0x14] sm:$0xf]
  %v6024 = vld [vmem:[%s3 + $0x18] sm:$0xf]
  %v6025 = vld [vmem:[%s3 + $0x1c] sm:$0xf]
  %v6026 = vld [vmem:[%s3 + $0x20] sm:$0xf]
  %v6027 = vld [vmem:[%s3 + $0x24] sm:$0xf]
  %v6028 = vld [vmem:[%s3 + $0x28] sm:$0xf]
  %v6029 = vld [vmem:[%s3 + $0x2c] sm:$0xf]
  %v6030 = vld [vmem:[%s3 + $0x30] sm:$0xf]
  %v6031 = vld [vmem:[%s3 + $0x34] sm:$0xf]
  %v6032 = vld [vmem:[%s3 + $0x38] sm:$0xf]
  %v6033 = vld [vmem:[%s3 + $0x3c] sm:$0xf]
  %v6034 = vld [vmem:[%s3 + $0x40] sm:$0xf]
  %v6035 = vld [vmem:[%s3 + $0x44] sm:$0xf]
  %v6036 = vld [vmem:[%s3 + $0x48] sm:$0xf]
  %v6037 = vld [vmem:[%s3 + $0x4c] sm:$0xf]
  %v6038 = vld [vmem:[%s3 + $0x50] sm:$0xf]
  %v6039 = vld [vmem:[%s3 + $0x54] sm:$0xf]
  %v6040 = vld [vmem:[%s3 + $0x58] sm:$0xf]
  %v6041 = vld [vmem:[%s3 + $0x5c] sm:$0xf]
  %v6042 = vld [vmem:[%s3 + $0x60] sm:$0xf]
  %v6043 = vld [vmem:[%s3 + $0x64] sm:$0xf]
  %v6044 = vld [vmem:[%s3 + $0x68] sm:$0xf]
  %v6045 = vld [vmem:[%s3 + $0x6c] sm:$0xf]
  %v6046 = vld [vmem:[%s3 + $0x70] sm:$0xf]
  %v6047 = vld [vmem:[%s3 + $0x74] sm:$0xf]
  %v6048 = vld [vmem:[%s3 + $0x78] sm:$0xf]
  %v6049 = vld [vmem:[%s3 + $0x7c] sm:$0xf]
  %v6050 = vld [vmem:[%s3 + $0x80] sm:$0xf]
  %v6051 = vld [vmem:[%s3 + $0x84] sm:$0xf]
  %v6052 = vld [vmem:[%s3 + $0x88] sm:$0xf]
  %v6053 = vld [vmem:[%s3 + $0x8c] sm:$0xf]
  %v6054 = vld [vmem:[%s3 + $0x90] sm:$0xf]
  %v6055 = vld [vmem:[%s3 + $0x94] sm:$0xf]
  %v6056 = vld [vmem:[%s3 + $0x98] sm:$0xf]
  %v6057 = vld [vmem:[%s3 + $0x9c] sm:$0xf]
  %v6058 = vld [vmem:[%s3 + $0xa0] sm:$0xf]
  %v6059 = vld [vmem:[%s3 + $0xa4] sm:$0xf]
  %v6060 = vld [vmem:[%s3 + $0xa8] sm:$0xf]
  %v6061 = vld [vmem:[%s3 + $0xac] sm:$0xf]
  %v6062 = vld [vmem:[%s3 + $0xb0] sm:$0xf]
  %v6063 = vld [vmem:[%s3 + $0xb4] sm:$0xf]
  %v6064 = vld [vmem:[%s3 + $0xb8] sm:$0xf]
  %v6065 = vld [vmem:[%s3 + $0xbc] sm:$0xf]
  %v6066 = vld [vmem:[%s3 + $0xc0] sm:$0xf]
  %v6067 = vld [vmem:[%s3 + $0xc4] sm:$0xf]
  %v6068 = vld [vmem:[%s3 + $0xc8] sm:$0xf]
  %v6069 = vld [vmem:[%s3 + $0xcc] sm:$0xf]
  %v6070 = vld [vmem:[%s3 + $0xd0] sm:$0xf]
  %v6071 = vld [vmem:[%s3 + $0xd4] sm:$0xf]
  %v6072 = vld [vmem:[%s3 + $0xd8] sm:$0xf]
  %v6073 = vld [vmem:[%s3 + $0xdc] sm:$0xf]
  %v6074 = vld [vmem:[%s3 + $0xe0] sm:$0xf]
  %v6075 = vld [vmem:[%s3 + $0xe4] sm:$0xf]
  %v6076 = vld [vmem:[%s3 + $0xe8] sm:$0xf]
  %v6077 = vld [vmem:[%s3 + $0xec] sm:$0xf]
  %v6078 = vld [vmem:[%s3 + $0xf0] sm:$0xf]
  %v6079 = vld [vmem:[%s3 + $0xf4] sm:$0xf]
  %v6080 = vld [vmem:[%s3 + $0xf8] sm:$0xf]
  %v6081 = vld [vmem:[%s3 + $0xfc] sm:$0xf]
  %v6082 = vld [vmem:[%s4] sm:$0x1]
  %v6084 = vlaneseq
  %v6085 = vshrl.u32 %v6084, 7
  %v6086 = vsub.s32 0, %v6085
  %v6087 = vrot.slane %v6082, %v6086
  %v6153 = vunpack.c.l.b16 %v6018
  %v6154 = vunpack.c.l.b16 %v6019
  %v6155 = vunpack.c.l.b16 %v6020
  %v6156 = vunpack.c.l.b16 %v6021
  %v6157 = vunpack.c.l.b16 %v6022
  %v6158 = vunpack.c.l.b16 %v6023
  %v6159 = vunpack.c.l.b16 %v6024
  %v6160 = vunpack.c.l.b16 %v6025
  %v6161 = vunpack.c.l.b16 %v6026
  %v6162 = vunpack.c.l.b16 %v6027
  %v6163 = vunpack.c.l.b16 %v6028
  %v6164 = vunpack.c.l.b16 %v6029
  %v6165 = vunpack.c.l.b16 %v6030
  %v6166 = vunpack.c.l.b16 %v6031
  %v6167 = vunpack.c.l.b16 %v6032
  %v6168 = vunpack.c.l.b16 %v6033
  %v6169 = vunpack.c.l.b16 %v6034
  %v6170 = vunpack.c.l.b16 %v6035
  %v6171 = vunpack.c.l.b16 %v6036
  %v6172 = vunpack.c.l.b16 %v6037
  %v6173 = vunpack.c.l.b16 %v6038
  %v6174 = vunpack.c.l.b16 %v6039
  %v6175 = vunpack.c.l.b16 %v6040
  %v6176 = vunpack.c.l.b16 %v6041
  %v6177 = vunpack.c.l.b16 %v6042
  %v6178 = vunpack.c.l.b16 %v6043
  %v6179 = vunpack.c.l.b16 %v6044
  %v6180 = vunpack.c.l.b16 %v6045
  %v6181 = vunpack.c.l.b16 %v6046
  %v6182 = vunpack.c.l.b16 %v6047
  %v6183 = vunpack.c.l.b16 %v6048
  %v6184 = vunpack.c.l.b16 %v6049
  %v6185 = vunpack.c.l.b16 %v6050
  %v6186 = vunpack.c.l.b16 %v6051
  %v6187 = vunpack.c.l.b16 %v6052
  %v6188 = vunpack.c.l.b16 %v6053
  %v6189 = vunpack.c.l.b16 %v6054
  %v6190 = vunpack.c.l.b16 %v6055
  %v6191 = vunpack.c.l.b16 %v6056
  %v6192 = vunpack.c.l.b16 %v6057
  %v6193 = vunpack.c.l.b16 %v6058
  %v6194 = vunpack.c.l.b16 %v6059
  %v6195 = vunpack.c.l.b16 %v6060
  %v6196 = vunpack.c.l.b16 %v6061
  %v6197 = vunpack.c.l.b16 %v6062
  %v6198 = vunpack.c.l.b16 %v6063
  %v6199 = vunpack.c.l.b16 %v6064
  %v6200 = vunpack.c.l.b16 %v6065
  %v6201 = vunpack.c.l.b16 %v6066
  %v6202 = vunpack.c.l.b16 %v6067
  %v6203 = vunpack.c.l.b16 %v6068
  %v6204 = vunpack.c.l.b16 %v6069
  %v6205 = vunpack.c.l.b16 %v6070
  %v6206 = vunpack.c.l.b16 %v6071
  %v6207 = vunpack.c.l.b16 %v6072
  %v6208 = vunpack.c.l.b16 %v6073
  %v6209 = vunpack.c.l.b16 %v6074
  %v6210 = vunpack.c.l.b16 %v6075
  %v6211 = vunpack.c.l.b16 %v6076
  %v6212 = vunpack.c.l.b16 %v6077
  %v6213 = vunpack.c.l.b16 %v6078
  %v6214 = vunpack.c.l.b16 %v6079
  %v6215 = vunpack.c.l.b16 %v6080
  %v6216 = vunpack.c.l.b16 %v6081
  %v6217 = vpack.c.b16 %v6154, %v6153
  %v6218 = vpack.c.b16 %v6156, %v6155
  %v6219 = vpack.c.b16 %v6158, %v6157
  %v6220 = vpack.c.b16 %v6160, %v6159
  %v6221 = vpack.c.b16 %v6162, %v6161
  %v6222 = vpack.c.b16 %v6164, %v6163
  %v6223 = vpack.c.b16 %v6166, %v6165
  %v6224 = vpack.c.b16 %v6168, %v6167
  %v6225 = vpack.c.b16 %v6170, %v6169
  %v6226 = vpack.c.b16 %v6172, %v6171
  %v6227 = vpack.c.b16 %v6174, %v6173
  %v6228 = vpack.c.b16 %v6176, %v6175
  %v6229 = vpack.c.b16 %v6178, %v6177
  %v6230 = vpack.c.b16 %v6180, %v6179
  %v6231 = vpack.c.b16 %v6182, %v6181
  %v6232 = vpack.c.b16 %v6184, %v6183
  %v6233 = vpack.c.b16 %v6186, %v6185
  %v6234 = vpack.c.b16 %v6188, %v6187
  %v6235 = vpack.c.b16 %v6190, %v6189
  %v6236 = vpack.c.b16 %v6192, %v6191
  %v6237 = vpack.c.b16 %v6194, %v6193
  %v6238 = vpack.c.b16 %v6196, %v6195
  %v6239 = vpack.c.b16 %v6198, %v6197
  %v6240 = vpack.c.b16 %v6200, %v6199
  %v6241 = vpack.c.b16 %v6202, %v6201
  %v6242 = vpack.c.b16 %v6204, %v6203
  %v6243 = vpack.c.b16 %v6206, %v6205
  %v6244 = vpack.c.b16 %v6208, %v6207
  %v6245 = vpack.c.b16 %v6210, %v6209
  %v6246 = vpack.c.b16 %v6212, %v6211
  %v6247 = vpack.c.b16 %v6214, %v6213
  %v6248 = vpack.c.b16 %v6216, %v6215
  %6281 = vmatprep.subr.bf16.mxu0 0
  %6282 = vmatpush1.bf16.msra.mxu0 %v6224
  %6283 = vmatprep.subr.bf16.mxu0 0
  %6284 = vmatpush1.bf16.msra.mxu0 %v6223
  %6285 = vmatprep.subr.bf16.mxu0 0
  %6286 = vmatpush1.bf16.msra.mxu0 %v6222
  %6287 = vmatprep.subr.bf16.mxu0 0
  %6288 = vmatpush1.bf16.msra.mxu0 %v6221
  %6289 = vmatprep.subr.bf16.mxu0 0
  %6290 = vmatpush1.bf16.msra.mxu0 %v6220
  %6291 = vmatprep.subr.bf16.mxu0 0
  %6292 = vmatpush1.bf16.msra.mxu0 %v6219
  %6293 = vmatprep.subr.bf16.mxu0 0
  %6294 = vmatpush1.bf16.msra.mxu0 %v6218
  %6295 = vmatprep.subr.bf16.mxu0 0
  %6296 = vmatpush1.bf16.msra.mxu0 %v6217
  %6297 = vmatprep.subr.bf16.mxu0 0
  %6298 = vmatpush2.bf16.msra.mxu0 %v6232
  %6299 = vmatprep.subr.bf16.mxu0 0
  %6300 = vmatpush2.bf16.msra.mxu0 %v6231
  %6301 = vmatprep.subr.bf16.mxu0 0
  %6302 = vmatpush2.bf16.msra.mxu0 %v6230
  %6303 = vmatprep.subr.bf16.mxu0 0
  %6304 = vmatpush2.bf16.msra.mxu0 %v6229
  %6305 = vmatprep.subr.bf16.mxu0 0
  %6306 = vmatpush2.bf16.msra.mxu0 %v6228
  %6307 = vmatprep.subr.bf16.mxu0 0
  %6308 = vmatpush2.bf16.msra.mxu0 %v6227
  %6309 = vmatprep.subr.bf16.mxu0 0
  %6310 = vmatpush2.bf16.msra.mxu0 %v6226
  %6311 = vmatprep.subr.bf16.mxu0 0
  %6312 = vmatpush2.bf16.msra.mxu0 %v6225
  %6313 = vmatprep.mubr.bf16.mxu0 %v6015
  %6314 = vmatmul.mubr.bf16.gmra.mxu0 %v6014
  %v6315 = vpop.f32.mrf.mxu0
  %v6316 = vadd.f32 %v6087, %v6315
  %v6317 = vpop.f32.mrf.mxu0
  %v6318 = vpop.f32.mrf.mxu0
  %v6319 = vpop.f32.mrf.mxu0
  %6320 = vdwg.mxu0
  %6321 = vmatprep.subr.bf16.mxu0 0
  %6322 = vmatpush1.bf16.msra.mxu0 %v6240
  %6323 = vmatprep.subr.bf16.mxu0 0
  %6324 = vmatpush1.bf16.msra.mxu0 %v6239
  %6325 = vmatprep.subr.bf16.mxu0 0
  %6326 = vmatpush1.bf16.msra.mxu0 %v6238
  %6327 = vmatprep.subr.bf16.mxu0 0
  %6328 = vmatpush1.bf16.msra.mxu0 %v6237
  %6329 = vmatprep.subr.bf16.mxu0 0
  %6330 = vmatpush1.bf16.msra.mxu0 %v6236
  %6331 = vmatprep.subr.bf16.mxu0 0
  %6332 = vmatpush1.bf16.msra.mxu0 %v6235
  %6333 = vmatprep.subr.bf16.mxu0 0
  %6334 = vmatpush1.bf16.msra.mxu0 %v6234
  %6335 = vmatprep.subr.bf16.mxu0 0
  %6336 = vmatpush1.bf16.msra.mxu0 %v6233
  %6337 = vmatprep.subr.bf16.mxu0 0
  %6338 = vmatpush2.bf16.msra.mxu0 %v6248
  %6339 = vmatprep.subr.bf16.mxu0 0
  %6340 = vmatpush2.bf16.msra.mxu0 %v6247
  %6341 = vmatprep.subr.bf16.mxu0 0
  %6342 = vmatpush2.bf16.msra.mxu0 %v6246
  %6343 = vmatprep.subr.bf16.mxu0 0
  %6344 = vmatpush2.bf16.msra.mxu0 %v6245
  %6345 = vmatprep.subr.bf16.mxu0 0
  %6346 = vmatpush2.bf16.msra.mxu0 %v6244
  %6347 = vmatprep.subr.bf16.mxu0 0
  %6348 = vmatpush2.bf16.msra.mxu0 %v6243
  %6349 = vmatprep.subr.bf16.mxu0 0
  %6350 = vmatpush2.bf16.msra.mxu0 %v6242
  %6351 = vmatprep.subr.bf16.mxu0 0
  %6352 = vmatpush2.bf16.msra.mxu0 %v6241
  %6353 = vmatprep.mubr.bf16.mxu0 %v6017
  %6354 = vmatmul.mubr.bf16.gmra.mxu0 %v6016
  %v6355 = vpop.f32.mrf.mxu0
  %v6356 = vadd.f32 %v6316, %v6355
  %v6357 = vpop.f32.mrf.mxu0
  %v6358 = vpop.f32.mrf.mxu0
  %v6359 = vpop.f32.mrf.mxu0
  %6360 = vdwg.mxu0
  %6361 = vst [vmem:[%s5] sm:$0xff] %v6356
  // Predicated region
  $region22: #{dqn_forward.7} parent=0 // pred_check
    _
  $region23: #{dqn_forward.7} parent=0 // pred_check_branch
    %6363 = sbr.rel (0) target = $region25
  $region24: #{dqn_forward.7} parent=0 // pred_region
    _
  $region25: #{dqn_forward.7} parent=0 // pred_fallthru
    _
  // Predicated region
  $region26: #{dqn_forward.7} parent=0 // pred_check
    _
  $region27: #{dqn_forward.7} parent=0 // pred_check_branch
    %6365 = sbr.rel (0) target = $region29
  $region28: #{dqn_forward.7} parent=0 // pred_region
    _
  $region29: #{dqn_forward.7} parent=0 // pred_fallthru
    _

</llo_original>
